<compile_context>
chip_gen: v7x
topology: tpu7x:2x2x1
jax: 0.10.0
libtpu: 0.0.40
codegen_flags: <defaults>
</compile_context>

<pallas_src>
import numpy as np

import jax
import jax.numpy as jnp
from jax.experimental import pallas as pl
from jax.experimental.pallas import tpu as pltpu


_BN_EPS = 1e-5

# (name, Cout, Cin, K, has_bn)
_CONV_LAYERS = (
    ("conv1", 64, 2, 5, True),
    ("conv2", 128, 64, 5, True),
    ("conv3", 256, 128, 3, True),
    ("bottleneck", 256, 256, 3, True),
    ("deconv1", 256, 512, 3, True),
    ("deconv2", 128, 384, 5, True),
    ("deconv3", 64, 192, 5, True),
    ("conv4", 2, 64, 5, False),
)


# ----------------------------------------------------------------------------
# In-kernel building blocks ((L, C) length-major layout, channels on lanes)
# ----------------------------------------------------------------------------
def _conv_block(x, w_ref, b_ref, K, act):
    """'same' Conv1d (stride 1) + folded-BN shift + activation.

    K accumulating lane-aligned matmuls (one per tap) against a
    (K, Cin, Cout) bf16 weight ref; accumulation in f32.
    """
    L, Cin = x.shape
    p = (K - 1) // 2
    xb = x.astype(jnp.bfloat16)
    pad = jnp.zeros((p, Cin), jnp.bfloat16)
    xp = jnp.concatenate([pad, xb, pad], axis=0)            # (L + 2p, Cin)

    acc = None
    for k in range(K):
        lhs = xb if k == p else xp[k:k + L, :]              # shifted tap window
        y = jnp.dot(lhs, w_ref[k], preferred_element_type=jnp.float32)
        acc = y if acc is None else acc + y
    acc = acc + b_ref[...]                                  # (1, Cout) BN shift / bias
    if act == "relu":
        return jnp.maximum(acc, 0.0)
    return jnp.tanh(acc)


def _maxpool2(x, sel_ref):
    """MaxPool1d(kernel=2, stride=2) along rows of an (L, C) activation."""
    xs = jnp.concatenate([x[1:, :], x[-1:, :]], axis=0)     # x shifted up by 1
    m = jnp.maximum(x, xs)                                  # m[j] = max(x[j], x[j+1])
    # Select rows 0, 2, 4, ... via a constant bf16 0/1 matrix on the MXU.
    return jnp.dot(sel_ref[...], m.astype(jnp.bfloat16),
                   preferred_element_type=jnp.float32)


def _upsample2(x, up_ref):
    """x2 linear upsample (align_corners=False) as a constant-matrix matmul."""
    return jnp.dot(up_ref[...], x.astype(jnp.bfloat16),
                   preferred_element_type=jnp.float32)


# ----------------------------------------------------------------------------
# Fused kernel: conv1..conv4 + BN + ReLU, 3 pools, 3 upsamples, 3 skip
# concats, tanh and the flow/mask blend — all in VMEM/vregs.
# ----------------------------------------------------------------------------
def _voxel_flow_kernel(
    xlm_ref, xraw_ref,
    w1_ref, b1_ref, w2_ref, b2_ref, w3_ref, b3_ref, wbn_ref, bbn_ref,
    wd1_ref, bd1_ref, wd2_ref, bd2_ref, wd3_ref, bd3_ref, w4_ref, b4_ref,
    p1_ref, p2_ref, p3_ref, u1_ref, u2_ref, u3_ref,
    o_ref,
):
    x_in = xlm_ref[0]                                       # (L, 2) f32

    conv1 = _conv_block(x_in, w1_ref, b1_ref, 5, "relu")    # (L, 64)
    h = _maxpool2(conv1, p1_ref)                            # (L/2, 64)
    conv2 = _conv_block(h, w2_ref, b2_ref, 5, "relu")       # (L/2, 128)
    h = _maxpool2(conv2, p2_ref)                            # (L/4, 128)
    conv3 = _conv_block(h, w3_ref, b3_ref, 3, "relu")       # (L/4, 256)
    h = _maxpool2(conv3, p3_ref)                            # (L/8, 256)
    h = _conv_block(h, wbn_ref, bbn_ref, 3, "relu")         # (L/8, 256)

    h = _upsample2(h, u1_ref)                               # (L/4, 256)
    h = jnp.concatenate([h, conv3], axis=1)                 # (L/4, 512)
    h = _conv_block(h, wd1_ref, bd1_ref, 3, "relu")         # (L/4, 256)

    h = _upsample2(h, u2_ref)                               # (L/2, 256)
    h = jnp.concatenate([h, conv2], axis=1)                 # (L/2, 384)
    h = _conv_block(h, wd2_ref, bd2_ref, 5, "relu")         # (L/2, 128)

    h = _upsample2(h, u3_ref)                               # (L, 128)
    h = jnp.concatenate([h, conv1], axis=1)                 # (L, 192)
    h = _conv_block(h, wd3_ref, bd3_ref, 5, "relu")         # (L, 64)

    y = _conv_block(h, w4_ref, b4_ref, 5, "tanh")           # (L, 2)

    # Flow/mask blend epilogue, computed lane-dense ((1, L) rows).
    # torch: flow = 0.5*y0; out1 = in0 - flow*2; out2 = in1 - flow;
    #        mask = 0.5*(1+y1); out = mask*out1 + (1-mask)*out2.
    yt = jnp.transpose(y)                                   # (2, L)
    flow_raw = yt[0:1, :]                                   # (1, L)
    mask = 0.5 * (1.0 + yt[1:2, :])                         # (1, L)
    x_raw = xraw_ref[0]                                     # (2, L)
    out1 = x_raw[0:1, :] - flow_raw                         # in0 - (0.5*y0)*2
    out2 = x_raw[1:2, :] - 0.5 * flow_raw                   # in1 - 0.5*y0
    o_ref[0] = (mask * out1 + (1.0 - mask) * out2).astype(o_ref.dtype)


# ----------------------------------------------------------------------------
# Host-side parameter / constant-matrix preparation (one time, not per call)
# ----------------------------------------------------------------------------
def _pool_select_matrix(lin):
    s = np.zeros((lin // 2, lin), np.float32)
    s[np.arange(lin // 2), 2 * np.arange(lin // 2)] = 1.0
    return jnp.asarray(s, dtype=jnp.bfloat16)               # 0/1 exact in bf16


def _upsample_matrix(lin):
    """Exact x2 linear interpolation (align_corners=False), shape (2*lin, lin)."""
    lout = 2 * lin
    u = np.zeros((lout, lin), np.float32)
    i = np.arange(lout, dtype=np.float64)
    src = np.maximum((i + 0.5) * 0.5 - 0.5, 0.0)
    i0 = np.floor(src).astype(np.int64)
    i1 = np.minimum(i0 + 1, lin - 1)
    w1 = (src - i0).astype(np.float32)
    u[np.arange(lout), i0] += 1.0 - w1
    u[np.arange(lout), i1] += w1
    return jnp.asarray(u, dtype=jnp.bfloat16)                # 0.25/0.75/0.5/1 exact


def init_params(key):
    """Deterministic init matching the module's __init__ (inference-mode BN)."""
    params = {}
    keys = jax.random.split(key, len(_CONV_LAYERS))
    for k, (name, cout, cin, ksz, has_bn) in zip(keys, _CONV_LAYERS):
        # nn.Conv1d weights: normal_(0, 0.01); biases zeroed.
        params[name] = 0.01 * jax.random.normal(k, (cout, cin, ksz), jnp.float32)
        if has_bn:
            params[name + "_bn"] = (
                jnp.ones((cout,), jnp.float32),    # gamma
                jnp.zeros((cout,), jnp.float32),   # beta
                jnp.zeros((cout,), jnp.float32),   # running_mean
                jnp.ones((cout,), jnp.float32),    # running_var
            )
        else:
            params[name + "_bias"] = jnp.zeros((cout,), jnp.float32)
    # TODO(synk): hidden_layer1..8 (nn.Linear) are only used in forward2, not
    # in forward(); they are not instantiated here.
    return params


def prepare_params(params, L):
    """Fold BN (eval mode) into conv weights, reshape to per-tap (K, Cin, Cout)
    bf16 form and build the constant pool/upsample matrices.  Returns the flat
    tuple of kernel operands (everything after x), hoisted out of the call."""
    ops = []
    for name, cout, cin, ksz, has_bn in _CONV_LAYERS:
        w = params[name].astype(jnp.float32)                 # (Cout, Cin, K)
        if has_bn:
            gamma, beta, rmean, rvar = params[name + "_bn"]
            scale = gamma / jnp.sqrt(rvar + _BN_EPS)
            shift = beta - rmean * scale
        else:
            scale = jnp.ones((cout,), jnp.float32)
            shift = params[name + "_bias"]
        # w_taps[k, ci, co] = W[co, ci, k] * scale[co]   (BN scale folded in)
        w_taps = jnp.transpose(w, (2, 1, 0)) * scale[None, None, :]
        ops.append(w_taps.astype(jnp.bfloat16))               # (K, Cin, Cout) bf16
        ops.append(shift.reshape(1, cout).astype(jnp.float32))  # (1, Cout) f32
    for lin in (L, L // 2, L // 4):          # pool selection: L->L/2->L/4->L/8
        ops.append(_pool_select_matrix(lin))
    for lin in (L // 8, L // 4, L // 2):     # upsample: L/8->L/4->L/2->L
        ops.append(_upsample_matrix(lin))
    return tuple(ops)


# ----------------------------------------------------------------------------
# Forward
# ----------------------------------------------------------------------------
def voxel_flow_forward(x, prepped):
    """x: (B, 2, L) with L divisible by 8.  Returns (B, 1, L)."""
    B, cin, L = x.shape
    assert cin == 2 and L % 8 == 0   # guarantees even lengths at all 3 pools

    x_raw = x.astype(jnp.float32)                            # (B, 2, L) lane-dense
    x_lm = jnp.transpose(x_raw, (0, 2, 1))                   # (B, L, 2) conv layout

    def _const_spec(a):
        nd = a.ndim

        def idx(b):
            return (0,) * nd

        return pl.BlockSpec(a.shape, idx)

    in_specs = [pl.BlockSpec((1, L, 2), lambda b: (b, 0, 0)),
                pl.BlockSpec((1, 2, L), lambda b: (b, 0, 0))]
    in_specs += [_const_spec(a) for a in prepped]

    out = pl.pallas_call(
        _voxel_flow_kernel,
        out_shape=jax.ShapeDtypeStruct((B, 1, L), jnp.float32),
        grid=(B,),
        in_specs=in_specs,
        out_specs=pl.BlockSpec((1, 1, L), lambda b: (b, 0, 0)),
        compiler_params=pltpu.CompilerParams(
            dimension_semantics=("parallel",),
            vmem_limit_bytes=32 * 1024 * 1024,
        ),
    )(x_lm, x_raw, *prepped)

    return out                                               # (B, 1, L)


# ----------------------------------------------------------------------------
if __name__ == "__main__":
    key = jax.random.PRNGKey(0)
    pkey, xkey = jax.random.split(key)
    params = init_params(pkey)

    # (B, 2, 136): 2 input channels, length 136 = 68 landmarks * 2 coords
    # (consistent with the module's 68*2*2 flattened size); divisible by 8 so
    # the 3 pool / 3 upsample stages round-trip exactly.
    B, L = 2, 136
    prepped = prepare_params(params, L)
    x = jax.random.normal(xkey, (B, 2, L), dtype=jnp.float32)

    out = voxel_flow_forward(x, prepped)
    out = jax.block_until_ready(out)

    assert out.shape == (B, 1, L), out.shape
    assert bool(jnp.all(jnp.isfinite(out)))
    print("KERNEL_OK")
</pallas_src>

<mosaic_0001>
module attributes {stable_mosaic.version = 11 : i64} {
  func.func @_voxel_flow_kernel(%arg0: i32, %arg1: memref<1x136x2xf32, #tpu.memory_space<vmem>>, %arg2: memref<1x2x136xf32, #tpu.memory_space<vmem>>, %arg3: memref<5x2x64xbf16, #tpu.memory_space<vmem>>, %arg4: memref<1x64xf32, #tpu.memory_space<vmem>>, %arg5: memref<5x64x128xbf16, #tpu.memory_space<vmem>>, %arg6: memref<1x128xf32, #tpu.memory_space<vmem>>, %arg7: memref<3x128x256xbf16, #tpu.memory_space<vmem>>, %arg8: memref<1x256xf32, #tpu.memory_space<vmem>>, %arg9: memref<3x256x256xbf16, #tpu.memory_space<vmem>>, %arg10: memref<1x256xf32, #tpu.memory_space<vmem>>, %arg11: memref<3x512x256xbf16, #tpu.memory_space<vmem>>, %arg12: memref<1x256xf32, #tpu.memory_space<vmem>>, %arg13: memref<5x384x128xbf16, #tpu.memory_space<vmem>>, %arg14: memref<1x128xf32, #tpu.memory_space<vmem>>, %arg15: memref<5x192x64xbf16, #tpu.memory_space<vmem>>, %arg16: memref<1x64xf32, #tpu.memory_space<vmem>>, %arg17: memref<5x64x2xbf16, #tpu.memory_space<vmem>>, %arg18: memref<1x2xf32, #tpu.memory_space<vmem>>, %arg19: memref<68x136xbf16, #tpu.memory_space<vmem>>, %arg20: memref<34x68xbf16, #tpu.memory_space<vmem>>, %arg21: memref<17x34xbf16, #tpu.memory_space<vmem>>, %arg22: memref<34x17xbf16, #tpu.memory_space<vmem>>, %arg23: memref<68x34xbf16, #tpu.memory_space<vmem>>, %arg24: memref<136x68xbf16, #tpu.memory_space<vmem>>, %arg25: memref<1x1x136xf32, #tpu.memory_space<vmem>>) attributes {dimension_semantics = [#tpu.dimension_semantics<parallel>], iteration_bounds = array<i64: 2>, scalar_prefetch = 0 : i64, scratch_operands = 0 : i64, tpu.core_type = #tpu.core_type<tc>, window_params = [{transform_indices = @transform_0, window_bounds = array<i64: 1, 136, 2>}, {transform_indices = @transform_1, window_bounds = array<i64: 1, 2, 136>}, {pipeline_mode = #tpu.pipeline_mode<synchronous>, transform_indices = @transform_2, window_bounds = array<i64: 5, 2, 64>}, {pipeline_mode = #tpu.pipeline_mode<synchronous>, transform_indices = @transform_3, window_bounds = array<i64: 1, 64>}, {pipeline_mode = #tpu.pipeline_mode<synchronous>, transform_indices = @transform_4, window_bounds = array<i64: 5, 64, 128>}, {pipeline_mode = #tpu.pipeline_mode<synchronous>, transform_indices = @transform_5, window_bounds = array<i64: 1, 128>}, {pipeline_mode = #tpu.pipeline_mode<synchronous>, transform_indices = @transform_6, window_bounds = array<i64: 3, 128, 256>}, {pipeline_mode = #tpu.pipeline_mode<synchronous>, transform_indices = @transform_7, window_bounds = array<i64: 1, 256>}, {pipeline_mode = #tpu.pipeline_mode<synchronous>, transform_indices = @transform_8, window_bounds = array<i64: 3, 256, 256>}, {pipeline_mode = #tpu.pipeline_mode<synchronous>, transform_indices = @transform_9, window_bounds = array<i64: 1, 256>}, {pipeline_mode = #tpu.pipeline_mode<synchronous>, transform_indices = @transform_10, window_bounds = array<i64: 3, 512, 256>}, {pipeline_mode = #tpu.pipeline_mode<synchronous>, transform_indices = @transform_11, window_bounds = array<i64: 1, 256>}, {pipeline_mode = #tpu.pipeline_mode<synchronous>, transform_indices = @transform_12, window_bounds = array<i64: 5, 384, 128>}, {pipeline_mode = #tpu.pipeline_mode<synchronous>, transform_indices = @transform_13, window_bounds = array<i64: 1, 128>}, {pipeline_mode = #tpu.pipeline_mode<synchronous>, transform_indices = @transform_14, window_bounds = array<i64: 5, 192, 64>}, {pipeline_mode = #tpu.pipeline_mode<synchronous>, transform_indices = @transform_15, window_bounds = array<i64: 1, 64>}, {pipeline_mode = #tpu.pipeline_mode<synchronous>, transform_indices = @transform_16, window_bounds = array<i64: 5, 64, 2>}, {pipeline_mode = #tpu.pipeline_mode<synchronous>, transform_indices = @transform_17, window_bounds = array<i64: 1, 2>}, {pipeline_mode = #tpu.pipeline_mode<synchronous>, transform_indices = @transform_18, window_bounds = array<i64: 68, 136>}, {pipeline_mode = #tpu.pipeline_mode<synchronous>, transform_indices = @transform_19, window_bounds = array<i64: 34, 68>}, {pipeline_mode = #tpu.pipeline_mode<synchronous>, transform_indices = @transform_20, window_bounds = array<i64: 17, 34>}, {pipeline_mode = #tpu.pipeline_mode<synchronous>, transform_indices = @transform_21, window_bounds = array<i64: 34, 17>}, {pipeline_mode = #tpu.pipeline_mode<synchronous>, transform_indices = @transform_22, window_bounds = array<i64: 68, 34>}, {pipeline_mode = #tpu.pipeline_mode<synchronous>, transform_indices = @transform_23, window_bounds = array<i64: 136, 68>}, {transform_indices = @transform_24, window_bounds = array<i64: 1, 1, 136>}]} {
    %c0 = arith.constant 0 : index
    %c0_0 = arith.constant 0 : index
    %c0_1 = arith.constant 0 : index
    %0 = vector.load %arg1[%c0, %c0_0, %c0_1] : memref<1x136x2xf32, #tpu.memory_space<vmem>>, vector<1x136x2xf32>
    %1 = vector.shape_cast %0 : vector<1x136x2xf32> to vector<136x2xf32>
    %2 = arith.truncf %1 : vector<136x2xf32> to vector<136x2xbf16>
    %cst = arith.constant 0.000000e+00 : bf16
    %3 = vector.broadcast %cst : bf16 to vector<2x2xbf16>
    %4 = tpu.concatenate %3, %2, %3 in 0 : vector<2x2xbf16>, vector<136x2xbf16>, vector<2x2xbf16> -> vector<140x2xbf16>
    %5 = vector.extract_strided_slice %4 {offsets = [0, 0], sizes = [136, 2], strides = [1, 1]} : vector<140x2xbf16> to vector<136x2xbf16>
    %c0_2 = arith.constant 0 : index
    %c0_3 = arith.constant 0 : index
    %c0_4 = arith.constant 0 : index
    %6 = vector.load %arg3[%c0_2, %c0_3, %c0_4] : memref<5x2x64xbf16, #tpu.memory_space<vmem>>, vector<1x2x64xbf16>
    %7 = vector.shape_cast %6 : vector<1x2x64xbf16> to vector<2x64xbf16>
    %cst_5 = arith.constant dense<0.000000e+00> : vector<136x64xf32>
    %8 = tpu.matmul %5, %7, %cst_5 {dimension_numbers = #tpu.dot_dimension_numbers<[1], [0], [0], [1], [0, 0, 1, 1], [], []>} : vector<136x2xbf16>, vector<2x64xbf16>, vector<136x64xf32> -> vector<136x64xf32>
    %9 = vector.extract_strided_slice %4 {offsets = [1, 0], sizes = [136, 2], strides = [1, 1]} : vector<140x2xbf16> to vector<136x2xbf16>
    %c1 = arith.constant 1 : index
    %c0_6 = arith.constant 0 : index
    %c0_7 = arith.constant 0 : index
    %10 = vector.load %arg3[%c1, %c0_6, %c0_7] : memref<5x2x64xbf16, #tpu.memory_space<vmem>>, vector<1x2x64xbf16>
    %11 = vector.shape_cast %10 : vector<1x2x64xbf16> to vector<2x64xbf16>
    %cst_8 = arith.constant dense<0.000000e+00> : vector<136x64xf32>
    %12 = tpu.matmul %9, %11, %cst_8 {dimension_numbers = #tpu.dot_dimension_numbers<[1], [0], [0], [1], [0, 0, 1, 1], [], []>} : vector<136x2xbf16>, vector<2x64xbf16>, vector<136x64xf32> -> vector<136x64xf32>
    %13 = arith.addf %8, %12 : vector<136x64xf32>
    %c2 = arith.constant 2 : index
    %c0_9 = arith.constant 0 : index
    %c0_10 = arith.constant 0 : index
    %14 = vector.load %arg3[%c2, %c0_9, %c0_10] : memref<5x2x64xbf16, #tpu.memory_space<vmem>>, vector<1x2x64xbf16>
    %15 = vector.shape_cast %14 : vector<1x2x64xbf16> to vector<2x64xbf16>
    %cst_11 = arith.constant dense<0.000000e+00> : vector<136x64xf32>
    %16 = tpu.matmul %2, %15, %cst_11 {dimension_numbers = #tpu.dot_dimension_numbers<[1], [0], [0], [1], [0, 0, 1, 1], [], []>} : vector<136x2xbf16>, vector<2x64xbf16>, vector<136x64xf32> -> vector<136x64xf32>
    %17 = arith.addf %13, %16 : vector<136x64xf32>
    %18 = vector.extract_strided_slice %4 {offsets = [3, 0], sizes = [136, 2], strides = [1, 1]} : vector<140x2xbf16> to vector<136x2xbf16>
    %c3 = arith.constant 3 : index
    %c0_12 = arith.constant 0 : index
    %c0_13 = arith.constant 0 : index
    %19 = vector.load %arg3[%c3, %c0_12, %c0_13] : memref<5x2x64xbf16, #tpu.memory_space<vmem>>, vector<1x2x64xbf16>
    %20 = vector.shape_cast %19 : vector<1x2x64xbf16> to vector<2x64xbf16>
    %cst_14 = arith.constant dense<0.000000e+00> : vector<136x64xf32>
    %21 = tpu.matmul %18, %20, %cst_14 {dimension_numbers = #tpu.dot_dimension_numbers<[1], [0], [0], [1], [0, 0, 1, 1], [], []>} : vector<136x2xbf16>, vector<2x64xbf16>, vector<136x64xf32> -> vector<136x64xf32>
    %22 = arith.addf %17, %21 : vector<136x64xf32>
    %23 = vector.extract_strided_slice %4 {offsets = [4, 0], sizes = [136, 2], strides = [1, 1]} : vector<140x2xbf16> to vector<136x2xbf16>
    %c4 = arith.constant 4 : index
    %c0_15 = arith.constant 0 : index
    %c0_16 = arith.constant 0 : index
    %24 = vector.load %arg3[%c4, %c0_15, %c0_16] : memref<5x2x64xbf16, #tpu.memory_space<vmem>>, vector<1x2x64xbf16>
    %25 = vector.shape_cast %24 : vector<1x2x64xbf16> to vector<2x64xbf16>
    %cst_17 = arith.constant dense<0.000000e+00> : vector<136x64xf32>
    %26 = tpu.matmul %23, %25, %cst_17 {dimension_numbers = #tpu.dot_dimension_numbers<[1], [0], [0], [1], [0, 0, 1, 1], [], []>} : vector<136x2xbf16>, vector<2x64xbf16>, vector<136x64xf32> -> vector<136x64xf32>
    %27 = arith.addf %22, %26 : vector<136x64xf32>
    %c0_18 = arith.constant 0 : index
    %c0_19 = arith.constant 0 : index
    %28 = vector.load %arg4[%c0_18, %c0_19] : memref<1x64xf32, #tpu.memory_space<vmem>>, vector<1x64xf32>
    %29 = vector.broadcast %28 : vector<1x64xf32> to vector<136x64xf32>
    %30 = arith.addf %27, %29 : vector<136x64xf32>
    %cst_20 = arith.constant 0.000000e+00 : f32
    %31 = vector.broadcast %cst_20 : f32 to vector<136x64xf32>
    %32 = arith.maximumf %30, %31 : vector<136x64xf32>
    %33 = vector.extract_strided_slice %32 {offsets = [1, 0], sizes = [135, 64], strides = [1, 1]} : vector<136x64xf32> to vector<135x64xf32>
    %34 = vector.extract_strided_slice %32 {offsets = [135, 0], sizes = [1, 64], strides = [1, 1]} : vector<136x64xf32> to vector<1x64xf32>
    %35 = tpu.concatenate %33, %34 in 0 : vector<135x64xf32>, vector<1x64xf32> -> vector<136x64xf32>
    %36 = arith.maximumf %32, %35 : vector<136x64xf32>
    %c0_21 = arith.constant 0 : index
    %c0_22 = arith.constant 0 : index
    %37 = vector.load %arg19[%c0_21, %c0_22] : memref<68x136xbf16, #tpu.memory_space<vmem>>, vector<68x136xbf16>
    %38 = arith.truncf %36 : vector<136x64xf32> to vector<136x64xbf16>
    %cst_23 = arith.constant dense<0.000000e+00> : vector<68x64xf32>
    %39 = tpu.matmul %37, %38, %cst_23 {dimension_numbers = #tpu.dot_dimension_numbers<[1], [0], [0], [1], [0, 0, 1, 1], [], []>} : vector<68x136xbf16>, vector<136x64xbf16>, vector<68x64xf32> -> vector<68x64xf32>
    %40 = arith.truncf %39 : vector<68x64xf32> to vector<68x64xbf16>
    %cst_24 = arith.constant 0.000000e+00 : bf16
    %41 = vector.broadcast %cst_24 : bf16 to vector<2x64xbf16>
    %42 = tpu.concatenate %41, %40, %41 in 0 : vector<2x64xbf16>, vector<68x64xbf16>, vector<2x64xbf16> -> vector<72x64xbf16>
    %43 = vector.extract_strided_slice %42 {offsets = [0, 0], sizes = [68, 64], strides = [1, 1]} : vector<72x64xbf16> to vector<68x64xbf16>
    %c0_25 = arith.constant 0 : index
    %c0_26 = arith.constant 0 : index
    %c0_27 = arith.constant 0 : index
    %44 = vector.load %arg5[%c0_25, %c0_26, %c0_27] : memref<5x64x128xbf16, #tpu.memory_space<vmem>>, vector<1x64x128xbf16>
    %45 = vector.shape_cast %44 : vector<1x64x128xbf16> to vector<64x128xbf16>
    %cst_28 = arith.constant dense<0.000000e+00> : vector<68x128xf32>
    %46 = tpu.matmul %43, %45, %cst_28 {dimension_numbers = #tpu.dot_dimension_numbers<[1], [0], [0], [1], [0, 0, 1, 1], [], []>} : vector<68x64xbf16>, vector<64x128xbf16>, vector<68x128xf32> -> vector<68x128xf32>
    %47 = vector.extract_strided_slice %42 {offsets = [1, 0], sizes = [68, 64], strides = [1, 1]} : vector<72x64xbf16> to vector<68x64xbf16>
    %c1_29 = arith.constant 1 : index
    %c0_30 = arith.constant 0 : index
    %c0_31 = arith.constant 0 : index
    %48 = vector.load %arg5[%c1_29, %c0_30, %c0_31] : memref<5x64x128xbf16, #tpu.memory_space<vmem>>, vector<1x64x128xbf16>
    %49 = vector.shape_cast %48 : vector<1x64x128xbf16> to vector<64x128xbf16>
    %cst_32 = arith.constant dense<0.000000e+00> : vector<68x128xf32>
    %50 = tpu.matmul %47, %49, %cst_32 {dimension_numbers = #tpu.dot_dimension_numbers<[1], [0], [0], [1], [0, 0, 1, 1], [], []>} : vector<68x64xbf16>, vector<64x128xbf16>, vector<68x128xf32> -> vector<68x128xf32>
    %51 = arith.addf %46, %50 : vector<68x128xf32>
    %c2_33 = arith.constant 2 : index
    %c0_34 = arith.constant 0 : index
    %c0_35 = arith.constant 0 : index
    %52 = vector.load %arg5[%c2_33, %c0_34, %c0_35] : memref<5x64x128xbf16, #tpu.memory_space<vmem>>, vector<1x64x128xbf16>
    %53 = vector.shape_cast %52 : vector<1x64x128xbf16> to vector<64x128xbf16>
    %cst_36 = arith.constant dense<0.000000e+00> : vector<68x128xf32>
    %54 = tpu.matmul %40, %53, %cst_36 {dimension_numbers = #tpu.dot_dimension_numbers<[1], [0], [0], [1], [0, 0, 1, 1], [], []>} : vector<68x64xbf16>, vector<64x128xbf16>, vector<68x128xf32> -> vector<68x128xf32>
    %55 = arith.addf %51, %54 : vector<68x128xf32>
    %56 = vector.extract_strided_slice %42 {offsets = [3, 0], sizes = [68, 64], strides = [1, 1]} : vector<72x64xbf16> to vector<68x64xbf16>
    %c3_37 = arith.constant 3 : index
    %c0_38 = arith.constant 0 : index
    %c0_39 = arith.constant 0 : index
    %57 = vector.load %arg5[%c3_37, %c0_38, %c0_39] : memref<5x64x128xbf16, #tpu.memory_space<vmem>>, vector<1x64x128xbf16>
    %58 = vector.shape_cast %57 : vector<1x64x128xbf16> to vector<64x128xbf16>
    %cst_40 = arith.constant dense<0.000000e+00> : vector<68x128xf32>
    %59 = tpu.matmul %56, %58, %cst_40 {dimension_numbers = #tpu.dot_dimension_numbers<[1], [0], [0], [1], [0, 0, 1, 1], [], []>} : vector<68x64xbf16>, vector<64x128xbf16>, vector<68x128xf32> -> vector<68x128xf32>
    %60 = arith.addf %55, %59 : vector<68x128xf32>
    %61 = vector.extract_strided_slice %42 {offsets = [4, 0], sizes = [68, 64], strides = [1, 1]} : vector<72x64xbf16> to vector<68x64xbf16>
    %c4_41 = arith.constant 4 : index
    %c0_42 = arith.constant 0 : index
    %c0_43 = arith.constant 0 : index
    %62 = vector.load %arg5[%c4_41, %c0_42, %c0_43] : memref<5x64x128xbf16, #tpu.memory_space<vmem>>, vector<1x64x128xbf16>
    %63 = vector.shape_cast %62 : vector<1x64x128xbf16> to vector<64x128xbf16>
    %cst_44 = arith.constant dense<0.000000e+00> : vector<68x128xf32>
    %64 = tpu.matmul %61, %63, %cst_44 {dimension_numbers = #tpu.dot_dimension_numbers<[1], [0], [0], [1], [0, 0, 1, 1], [], []>} : vector<68x64xbf16>, vector<64x128xbf16>, vector<68x128xf32> -> vector<68x128xf32>
    %65 = arith.addf %60, %64 : vector<68x128xf32>
    %c0_45 = arith.constant 0 : index
    %c0_46 = arith.constant 0 : index
    %66 = vector.load %arg6[%c0_45, %c0_46] : memref<1x128xf32, #tpu.memory_space<vmem>>, vector<1x128xf32>
    %67 = vector.broadcast %66 : vector<1x128xf32> to vector<68x128xf32>
    %68 = arith.addf %65, %67 : vector<68x128xf32>
    %cst_47 = arith.constant 0.000000e+00 : f32
    %69 = vector.broadcast %cst_47 : f32 to vector<68x128xf32>
    %70 = arith.maximumf %68, %69 : vector<68x128xf32>
    %71 = vector.extract_strided_slice %70 {offsets = [1, 0], sizes = [67, 128], strides = [1, 1]} : vector<68x128xf32> to vector<67x128xf32>
    %72 = vector.extract_strided_slice %70 {offsets = [67, 0], sizes = [1, 128], strides = [1, 1]} : vector<68x128xf32> to vector<1x128xf32>
    %73 = tpu.concatenate %71, %72 in 0 : vector<67x128xf32>, vector<1x128xf32> -> vector<68x128xf32>
    %74 = arith.maximumf %70, %73 : vector<68x128xf32>
    %c0_48 = arith.constant 0 : index
    %c0_49 = arith.constant 0 : index
    %75 = vector.load %arg20[%c0_48, %c0_49] : memref<34x68xbf16, #tpu.memory_space<vmem>>, vector<34x68xbf16>
    %76 = arith.truncf %74 : vector<68x128xf32> to vector<68x128xbf16>
    %cst_50 = arith.constant dense<0.000000e+00> : vector<34x128xf32>
    %77 = tpu.matmul %75, %76, %cst_50 {dimension_numbers = #tpu.dot_dimension_numbers<[1], [0], [0], [1], [0, 0, 1, 1], [], []>} : vector<34x68xbf16>, vector<68x128xbf16>, vector<34x128xf32> -> vector<34x128xf32>
    %78 = arith.truncf %77 : vector<34x128xf32> to vector<34x128xbf16>
    %cst_51 = arith.constant 0.000000e+00 : bf16
    %79 = vector.broadcast %cst_51 : bf16 to vector<1x128xbf16>
    %80 = tpu.concatenate %79, %78, %79 in 0 : vector<1x128xbf16>, vector<34x128xbf16>, vector<1x128xbf16> -> vector<36x128xbf16>
    %81 = vector.extract_strided_slice %80 {offsets = [0, 0], sizes = [34, 128], strides = [1, 1]} : vector<36x128xbf16> to vector<34x128xbf16>
    %c0_52 = arith.constant 0 : index
    %c0_53 = arith.constant 0 : index
    %c0_54 = arith.constant 0 : index
    %82 = vector.load %arg7[%c0_52, %c0_53, %c0_54] : memref<3x128x256xbf16, #tpu.memory_space<vmem>>, vector<1x128x256xbf16>
    %83 = vector.shape_cast %82 : vector<1x128x256xbf16> to vector<128x256xbf16>
    %cst_55 = arith.constant dense<0.000000e+00> : vector<34x256xf32>
    %84 = tpu.matmul %81, %83, %cst_55 {dimension_numbers = #tpu.dot_dimension_numbers<[1], [0], [0], [1], [0, 0, 1, 1], [], []>} : vector<34x128xbf16>, vector<128x256xbf16>, vector<34x256xf32> -> vector<34x256xf32>
    %c1_56 = arith.constant 1 : index
    %c0_57 = arith.constant 0 : index
    %c0_58 = arith.constant 0 : index
    %85 = vector.load %arg7[%c1_56, %c0_57, %c0_58] : memref<3x128x256xbf16, #tpu.memory_space<vmem>>, vector<1x128x256xbf16>
    %86 = vector.shape_cast %85 : vector<1x128x256xbf16> to vector<128x256xbf16>
    %cst_59 = arith.constant dense<0.000000e+00> : vector<34x256xf32>
    %87 = tpu.matmul %78, %86, %cst_59 {dimension_numbers = #tpu.dot_dimension_numbers<[1], [0], [0], [1], [0, 0, 1, 1], [], []>} : vector<34x128xbf16>, vector<128x256xbf16>, vector<34x256xf32> -> vector<34x256xf32>
    %88 = arith.addf %84, %87 : vector<34x256xf32>
    %89 = vector.extract_strided_slice %80 {offsets = [2, 0], sizes = [34, 128], strides = [1, 1]} : vector<36x128xbf16> to vector<34x128xbf16>
    %c2_60 = arith.constant 2 : index
    %c0_61 = arith.constant 0 : index
    %c0_62 = arith.constant 0 : index
    %90 = vector.load %arg7[%c2_60, %c0_61, %c0_62] : memref<3x128x256xbf16, #tpu.memory_space<vmem>>, vector<1x128x256xbf16>
    %91 = vector.shape_cast %90 : vector<1x128x256xbf16> to vector<128x256xbf16>
    %cst_63 = arith.constant dense<0.000000e+00> : vector<34x256xf32>
    %92 = tpu.matmul %89, %91, %cst_63 {dimension_numbers = #tpu.dot_dimension_numbers<[1], [0], [0], [1], [0, 0, 1, 1], [], []>} : vector<34x128xbf16>, vector<128x256xbf16>, vector<34x256xf32> -> vector<34x256xf32>
    %93 = arith.addf %88, %92 : vector<34x256xf32>
    %c0_64 = arith.constant 0 : index
    %c0_65 = arith.constant 0 : index
    %94 = vector.load %arg8[%c0_64, %c0_65] : memref<1x256xf32, #tpu.memory_space<vmem>>, vector<1x256xf32>
    %95 = vector.broadcast %94 : vector<1x256xf32> to vector<34x256xf32>
    %96 = arith.addf %93, %95 : vector<34x256xf32>
    %cst_66 = arith.constant 0.000000e+00 : f32
    %97 = vector.broadcast %cst_66 : f32 to vector<34x256xf32>
    %98 = arith.maximumf %96, %97 : vector<34x256xf32>
    %99 = vector.extract_strided_slice %98 {offsets = [1, 0], sizes = [33, 256], strides = [1, 1]} : vector<34x256xf32> to vector<33x256xf32>
    %100 = vector.extract_strided_slice %98 {offsets = [33, 0], sizes = [1, 256], strides = [1, 1]} : vector<34x256xf32> to vector<1x256xf32>
    %101 = tpu.concatenate %99, %100 in 0 : vector<33x256xf32>, vector<1x256xf32> -> vector<34x256xf32>
    %102 = arith.maximumf %98, %101 : vector<34x256xf32>
    %c0_67 = arith.constant 0 : index
    %c0_68 = arith.constant 0 : index
    %103 = vector.load %arg21[%c0_67, %c0_68] : memref<17x34xbf16, #tpu.memory_space<vmem>>, vector<17x34xbf16>
    %104 = arith.truncf %102 : vector<34x256xf32> to vector<34x256xbf16>
    %cst_69 = arith.constant dense<0.000000e+00> : vector<17x256xf32>
    %105 = tpu.matmul %103, %104, %cst_69 {dimension_numbers = #tpu.dot_dimension_numbers<[1], [0], [0], [1], [0, 0, 1, 1], [], []>} : vector<17x34xbf16>, vector<34x256xbf16>, vector<17x256xf32> -> vector<17x256xf32>
    %106 = arith.truncf %105 : vector<17x256xf32> to vector<17x256xbf16>
    %cst_70 = arith.constant 0.000000e+00 : bf16
    %107 = vector.broadcast %cst_70 : bf16 to vector<1x256xbf16>
    %108 = tpu.concatenate %107, %106, %107 in 0 : vector<1x256xbf16>, vector<17x256xbf16>, vector<1x256xbf16> -> vector<19x256xbf16>
    %109 = vector.extract_strided_slice %108 {offsets = [0, 0], sizes = [17, 256], strides = [1, 1]} : vector<19x256xbf16> to vector<17x256xbf16>
    %c0_71 = arith.constant 0 : index
    %c0_72 = arith.constant 0 : index
    %c0_73 = arith.constant 0 : index
    %110 = vector.load %arg9[%c0_71, %c0_72, %c0_73] : memref<3x256x256xbf16, #tpu.memory_space<vmem>>, vector<1x256x256xbf16>
    %111 = vector.shape_cast %110 : vector<1x256x256xbf16> to vector<256x256xbf16>
    %cst_74 = arith.constant dense<0.000000e+00> : vector<17x256xf32>
    %112 = tpu.matmul %109, %111, %cst_74 {dimension_numbers = #tpu.dot_dimension_numbers<[1], [0], [0], [1], [0, 0, 1, 1], [], []>} : vector<17x256xbf16>, vector<256x256xbf16>, vector<17x256xf32> -> vector<17x256xf32>
    %c1_75 = arith.constant 1 : index
    %c0_76 = arith.constant 0 : index
    %c0_77 = arith.constant 0 : index
    %113 = vector.load %arg9[%c1_75, %c0_76, %c0_77] : memref<3x256x256xbf16, #tpu.memory_space<vmem>>, vector<1x256x256xbf16>
    %114 = vector.shape_cast %113 : vector<1x256x256xbf16> to vector<256x256xbf16>
    %cst_78 = arith.constant dense<0.000000e+00> : vector<17x256xf32>
    %115 = tpu.matmul %106, %114, %cst_78 {dimension_numbers = #tpu.dot_dimension_numbers<[1], [0], [0], [1], [0, 0, 1, 1], [], []>} : vector<17x256xbf16>, vector<256x256xbf16>, vector<17x256xf32> -> vector<17x256xf32>
    %116 = arith.addf %112, %115 : vector<17x256xf32>
    %117 = vector.extract_strided_slice %108 {offsets = [2, 0], sizes = [17, 256], strides = [1, 1]} : vector<19x256xbf16> to vector<17x256xbf16>
    %c2_79 = arith.constant 2 : index
    %c0_80 = arith.constant 0 : index
    %c0_81 = arith.constant 0 : index
    %118 = vector.load %arg9[%c2_79, %c0_80, %c0_81] : memref<3x256x256xbf16, #tpu.memory_space<vmem>>, vector<1x256x256xbf16>
    %119 = vector.shape_cast %118 : vector<1x256x256xbf16> to vector<256x256xbf16>
    %cst_82 = arith.constant dense<0.000000e+00> : vector<17x256xf32>
    %120 = tpu.matmul %117, %119, %cst_82 {dimension_numbers = #tpu.dot_dimension_numbers<[1], [0], [0], [1], [0, 0, 1, 1], [], []>} : vector<17x256xbf16>, vector<256x256xbf16>, vector<17x256xf32> -> vector<17x256xf32>
    %121 = arith.addf %116, %120 : vector<17x256xf32>
    %c0_83 = arith.constant 0 : index
    %c0_84 = arith.constant 0 : index
    %122 = vector.load %arg10[%c0_83, %c0_84] : memref<1x256xf32, #tpu.memory_space<vmem>>, vector<1x256xf32>
    %123 = vector.broadcast %122 : vector<1x256xf32> to vector<17x256xf32>
    %124 = arith.addf %121, %123 : vector<17x256xf32>
    %cst_85 = arith.constant 0.000000e+00 : f32
    %125 = vector.broadcast %cst_85 : f32 to vector<17x256xf32>
    %126 = arith.maximumf %124, %125 : vector<17x256xf32>
    %c0_86 = arith.constant 0 : index
    %c0_87 = arith.constant 0 : index
    %127 = vector.load %arg22[%c0_86, %c0_87] : memref<34x17xbf16, #tpu.memory_space<vmem>>, vector<34x17xbf16>
    %128 = arith.truncf %126 : vector<17x256xf32> to vector<17x256xbf16>
    %cst_88 = arith.constant dense<0.000000e+00> : vector<34x256xf32>
    %129 = tpu.matmul %127, %128, %cst_88 {dimension_numbers = #tpu.dot_dimension_numbers<[1], [0], [0], [1], [0, 0, 1, 1], [], []>} : vector<34x17xbf16>, vector<17x256xbf16>, vector<34x256xf32> -> vector<34x256xf32>
    %130 = tpu.concatenate %129, %98 in 1 : vector<34x256xf32>, vector<34x256xf32> -> vector<34x512xf32>
    %131 = arith.truncf %130 : vector<34x512xf32> to vector<34x512xbf16>
    %cst_89 = arith.constant 0.000000e+00 : bf16
    %132 = vector.broadcast %cst_89 : bf16 to vector<1x512xbf16>
    %133 = tpu.concatenate %132, %131, %132 in 0 : vector<1x512xbf16>, vector<34x512xbf16>, vector<1x512xbf16> -> vector<36x512xbf16>
    %134 = vector.extract_strided_slice %133 {offsets = [0, 0], sizes = [34, 512], strides = [1, 1]} : vector<36x512xbf16> to vector<34x512xbf16>
    %c0_90 = arith.constant 0 : index
    %c0_91 = arith.constant 0 : index
    %c0_92 = arith.constant 0 : index
    %135 = vector.load %arg11[%c0_90, %c0_91, %c0_92] : memref<3x512x256xbf16, #tpu.memory_space<vmem>>, vector<1x512x256xbf16>
    %136 = vector.shape_cast %135 : vector<1x512x256xbf16> to vector<512x256xbf16>
    %cst_93 = arith.constant dense<0.000000e+00> : vector<34x256xf32>
    %137 = tpu.matmul %134, %136, %cst_93 {dimension_numbers = #tpu.dot_dimension_numbers<[1], [0], [0], [1], [0, 0, 1, 1], [], []>} : vector<34x512xbf16>, vector<512x256xbf16>, vector<34x256xf32> -> vector<34x256xf32>
    %c1_94 = arith.constant 1 : index
    %c0_95 = arith.constant 0 : index
    %c0_96 = arith.constant 0 : index
    %138 = vector.load %arg11[%c1_94, %c0_95, %c0_96] : memref<3x512x256xbf16, #tpu.memory_space<vmem>>, vector<1x512x256xbf16>
    %139 = vector.shape_cast %138 : vector<1x512x256xbf16> to vector<512x256xbf16>
    %cst_97 = arith.constant dense<0.000000e+00> : vector<34x256xf32>
    %140 = tpu.matmul %131, %139, %cst_97 {dimension_numbers = #tpu.dot_dimension_numbers<[1], [0], [0], [1], [0, 0, 1, 1], [], []>} : vector<34x512xbf16>, vector<512x256xbf16>, vector<34x256xf32> -> vector<34x256xf32>
    %141 = arith.addf %137, %140 : vector<34x256xf32>
    %142 = vector.extract_strided_slice %133 {offsets = [2, 0], sizes = [34, 512], strides = [1, 1]} : vector<36x512xbf16> to vector<34x512xbf16>
    %c2_98 = arith.constant 2 : index
    %c0_99 = arith.constant 0 : index
    %c0_100 = arith.constant 0 : index
    %143 = vector.load %arg11[%c2_98, %c0_99, %c0_100] : memref<3x512x256xbf16, #tpu.memory_space<vmem>>, vector<1x512x256xbf16>
    %144 = vector.shape_cast %143 : vector<1x512x256xbf16> to vector<512x256xbf16>
    %cst_101 = arith.constant dense<0.000000e+00> : vector<34x256xf32>
    %145 = tpu.matmul %142, %144, %cst_101 {dimension_numbers = #tpu.dot_dimension_numbers<[1], [0], [0], [1], [0, 0, 1, 1], [], []>} : vector<34x512xbf16>, vector<512x256xbf16>, vector<34x256xf32> -> vector<34x256xf32>
    %146 = arith.addf %141, %145 : vector<34x256xf32>
    %c0_102 = arith.constant 0 : index
    %c0_103 = arith.constant 0 : index
    %147 = vector.load %arg12[%c0_102, %c0_103] : memref<1x256xf32, #tpu.memory_space<vmem>>, vector<1x256xf32>
    %148 = vector.broadcast %147 : vector<1x256xf32> to vector<34x256xf32>
    %149 = arith.addf %146, %148 : vector<34x256xf32>
    %cst_104 = arith.constant 0.000000e+00 : f32
    %150 = vector.broadcast %cst_104 : f32 to vector<34x256xf32>
    %151 = arith.maximumf %149, %150 : vector<34x256xf32>
    %c0_105 = arith.constant 0 : index
    %c0_106 = arith.constant 0 : index
    %152 = vector.load %arg23[%c0_105, %c0_106] : memref<68x34xbf16, #tpu.memory_space<vmem>>, vector<68x34xbf16>
    %153 = arith.truncf %151 : vector<34x256xf32> to vector<34x256xbf16>
    %cst_107 = arith.constant dense<0.000000e+00> : vector<68x256xf32>
    %154 = tpu.matmul %152, %153, %cst_107 {dimension_numbers = #tpu.dot_dimension_numbers<[1], [0], [0], [1], [0, 0, 1, 1], [], []>} : vector<68x34xbf16>, vector<34x256xbf16>, vector<68x256xf32> -> vector<68x256xf32>
    %155 = tpu.concatenate %154, %70 in 1 : vector<68x256xf32>, vector<68x128xf32> -> vector<68x384xf32>
    %156 = arith.truncf %155 : vector<68x384xf32> to vector<68x384xbf16>
    %cst_108 = arith.constant 0.000000e+00 : bf16
    %157 = vector.broadcast %cst_108 : bf16 to vector<2x384xbf16>
    %158 = tpu.concatenate %157, %156, %157 in 0 : vector<2x384xbf16>, vector<68x384xbf16>, vector<2x384xbf16> -> vector<72x384xbf16>
    %159 = vector.extract_strided_slice %158 {offsets = [0, 0], sizes = [68, 384], strides = [1, 1]} : vector<72x384xbf16> to vector<68x384xbf16>
    %c0_109 = arith.constant 0 : index
    %c0_110 = arith.constant 0 : index
    %c0_111 = arith.constant 0 : index
    %160 = vector.load %arg13[%c0_109, %c0_110, %c0_111] : memref<5x384x128xbf16, #tpu.memory_space<vmem>>, vector<1x384x128xbf16>
    %161 = vector.shape_cast %160 : vector<1x384x128xbf16> to vector<384x128xbf16>
    %cst_112 = arith.constant dense<0.000000e+00> : vector<68x128xf32>
    %162 = tpu.matmul %159, %161, %cst_112 {dimension_numbers = #tpu.dot_dimension_numbers<[1], [0], [0], [1], [0, 0, 1, 1], [], []>} : vector<68x384xbf16>, vector<384x128xbf16>, vector<68x128xf32> -> vector<68x128xf32>
    %163 = vector.extract_strided_slice %158 {offsets = [1, 0], sizes = [68, 384], strides = [1, 1]} : vector<72x384xbf16> to vector<68x384xbf16>
    %c1_113 = arith.constant 1 : index
    %c0_114 = arith.constant 0 : index
    %c0_115 = arith.constant 0 : index
    %164 = vector.load %arg13[%c1_113, %c0_114, %c0_115] : memref<5x384x128xbf16, #tpu.memory_space<vmem>>, vector<1x384x128xbf16>
    %165 = vector.shape_cast %164 : vector<1x384x128xbf16> to vector<384x128xbf16>
    %cst_116 = arith.constant dense<0.000000e+00> : vector<68x128xf32>
    %166 = tpu.matmul %163, %165, %cst_116 {dimension_numbers = #tpu.dot_dimension_numbers<[1], [0], [0], [1], [0, 0, 1, 1], [], []>} : vector<68x384xbf16>, vector<384x128xbf16>, vector<68x128xf32> -> vector<68x128xf32>
    %167 = arith.addf %162, %166 : vector<68x128xf32>
    %c2_117 = arith.constant 2 : index
    %c0_118 = arith.constant 0 : index
    %c0_119 = arith.constant 0 : index
    %168 = vector.load %arg13[%c2_117, %c0_118, %c0_119] : memref<5x384x128xbf16, #tpu.memory_space<vmem>>, vector<1x384x128xbf16>
    %169 = vector.shape_cast %168 : vector<1x384x128xbf16> to vector<384x128xbf16>
    %cst_120 = arith.constant dense<0.000000e+00> : vector<68x128xf32>
    %170 = tpu.matmul %156, %169, %cst_120 {dimension_numbers = #tpu.dot_dimension_numbers<[1], [0], [0], [1], [0, 0, 1, 1], [], []>} : vector<68x384xbf16>, vector<384x128xbf16>, vector<68x128xf32> -> vector<68x128xf32>
    %171 = arith.addf %167, %170 : vector<68x128xf32>
    %172 = vector.extract_strided_slice %158 {offsets = [3, 0], sizes = [68, 384], strides = [1, 1]} : vector<72x384xbf16> to vector<68x384xbf16>
    %c3_121 = arith.constant 3 : index
    %c0_122 = arith.constant 0 : index
    %c0_123 = arith.constant 0 : index
    %173 = vector.load %arg13[%c3_121, %c0_122, %c0_123] : memref<5x384x128xbf16, #tpu.memory_space<vmem>>, vector<1x384x128xbf16>
    %174 = vector.shape_cast %173 : vector<1x384x128xbf16> to vector<384x128xbf16>
    %cst_124 = arith.constant dense<0.000000e+00> : vector<68x128xf32>
    %175 = tpu.matmul %172, %174, %cst_124 {dimension_numbers = #tpu.dot_dimension_numbers<[1], [0], [0], [1], [0, 0, 1, 1], [], []>} : vector<68x384xbf16>, vector<384x128xbf16>, vector<68x128xf32> -> vector<68x128xf32>
    %176 = arith.addf %171, %175 : vector<68x128xf32>
    %177 = vector.extract_strided_slice %158 {offsets = [4, 0], sizes = [68, 384], strides = [1, 1]} : vector<72x384xbf16> to vector<68x384xbf16>
    %c4_125 = arith.constant 4 : index
    %c0_126 = arith.constant 0 : index
    %c0_127 = arith.constant 0 : index
    %178 = vector.load %arg13[%c4_125, %c0_126, %c0_127] : memref<5x384x128xbf16, #tpu.memory_space<vmem>>, vector<1x384x128xbf16>
    %179 = vector.shape_cast %178 : vector<1x384x128xbf16> to vector<384x128xbf16>
    %cst_128 = arith.constant dense<0.000000e+00> : vector<68x128xf32>
    %180 = tpu.matmul %177, %179, %cst_128 {dimension_numbers = #tpu.dot_dimension_numbers<[1], [0], [0], [1], [0, 0, 1, 1], [], []>} : vector<68x384xbf16>, vector<384x128xbf16>, vector<68x128xf32> -> vector<68x128xf32>
    %181 = arith.addf %176, %180 : vector<68x128xf32>
    %c0_129 = arith.constant 0 : index
    %c0_130 = arith.constant 0 : index
    %182 = vector.load %arg14[%c0_129, %c0_130] : memref<1x128xf32, #tpu.memory_space<vmem>>, vector<1x128xf32>
    %183 = vector.broadcast %182 : vector<1x128xf32> to vector<68x128xf32>
    %184 = arith.addf %181, %183 : vector<68x128xf32>
    %cst_131 = arith.constant 0.000000e+00 : f32
    %185 = vector.broadcast %cst_131 : f32 to vector<68x128xf32>
    %186 = arith.maximumf %184, %185 : vector<68x128xf32>
    %c0_132 = arith.constant 0 : index
    %c0_133 = arith.constant 0 : index
    %187 = vector.load %arg24[%c0_132, %c0_133] : memref<136x68xbf16, #tpu.memory_space<vmem>>, vector<136x68xbf16>
    %188 = arith.truncf %186 : vector<68x128xf32> to vector<68x128xbf16>
    %cst_134 = arith.constant dense<0.000000e+00> : vector<136x128xf32>
    %189 = tpu.matmul %187, %188, %cst_134 {dimension_numbers = #tpu.dot_dimension_numbers<[1], [0], [0], [1], [0, 0, 1, 1], [], []>} : vector<136x68xbf16>, vector<68x128xbf16>, vector<136x128xf32> -> vector<136x128xf32>
    %190 = tpu.concatenate %189, %32 in 1 : vector<136x128xf32>, vector<136x64xf32> -> vector<136x192xf32>
    %191 = arith.truncf %190 : vector<136x192xf32> to vector<136x192xbf16>
    %cst_135 = arith.constant 0.000000e+00 : bf16
    %192 = vector.broadcast %cst_135 : bf16 to vector<2x192xbf16>
    %193 = tpu.concatenate %192, %191, %192 in 0 : vector<2x192xbf16>, vector<136x192xbf16>, vector<2x192xbf16> -> vector<140x192xbf16>
    %194 = vector.extract_strided_slice %193 {offsets = [0, 0], sizes = [136, 192], strides = [1, 1]} : vector<140x192xbf16> to vector<136x192xbf16>
    %c0_136 = arith.constant 0 : index
    %c0_137 = arith.constant 0 : index
    %c0_138 = arith.constant 0 : index
    %195 = vector.load %arg15[%c0_136, %c0_137, %c0_138] : memref<5x192x64xbf16, #tpu.memory_space<vmem>>, vector<1x192x64xbf16>
    %196 = vector.shape_cast %195 : vector<1x192x64xbf16> to vector<192x64xbf16>
    %cst_139 = arith.constant dense<0.000000e+00> : vector<136x64xf32>
    %197 = tpu.matmul %194, %196, %cst_139 {dimension_numbers = #tpu.dot_dimension_numbers<[1], [0], [0], [1], [0, 0, 1, 1], [], []>} : vector<136x192xbf16>, vector<192x64xbf16>, vector<136x64xf32> -> vector<136x64xf32>
    %198 = vector.extract_strided_slice %193 {offsets = [1, 0], sizes = [136, 192], strides = [1, 1]} : vector<140x192xbf16> to vector<136x192xbf16>
    %c1_140 = arith.constant 1 : index
    %c0_141 = arith.constant 0 : index
    %c0_142 = arith.constant 0 : index
    %199 = vector.load %arg15[%c1_140, %c0_141, %c0_142] : memref<5x192x64xbf16, #tpu.memory_space<vmem>>, vector<1x192x64xbf16>
    %200 = vector.shape_cast %199 : vector<1x192x64xbf16> to vector<192x64xbf16>
    %cst_143 = arith.constant dense<0.000000e+00> : vector<136x64xf32>
    %201 = tpu.matmul %198, %200, %cst_143 {dimension_numbers = #tpu.dot_dimension_numbers<[1], [0], [0], [1], [0, 0, 1, 1], [], []>} : vector<136x192xbf16>, vector<192x64xbf16>, vector<136x64xf32> -> vector<136x64xf32>
    %202 = arith.addf %197, %201 : vector<136x64xf32>
    %c2_144 = arith.constant 2 : index
    %c0_145 = arith.constant 0 : index
    %c0_146 = arith.constant 0 : index
    %203 = vector.load %arg15[%c2_144, %c0_145, %c0_146] : memref<5x192x64xbf16, #tpu.memory_space<vmem>>, vector<1x192x64xbf16>
    %204 = vector.shape_cast %203 : vector<1x192x64xbf16> to vector<192x64xbf16>
    %cst_147 = arith.constant dense<0.000000e+00> : vector<136x64xf32>
    %205 = tpu.matmul %191, %204, %cst_147 {dimension_numbers = #tpu.dot_dimension_numbers<[1], [0], [0], [1], [0, 0, 1, 1], [], []>} : vector<136x192xbf16>, vector<192x64xbf16>, vector<136x64xf32> -> vector<136x64xf32>
    %206 = arith.addf %202, %205 : vector<136x64xf32>
    %207 = vector.extract_strided_slice %193 {offsets = [3, 0], sizes = [136, 192], strides = [1, 1]} : vector<140x192xbf16> to vector<136x192xbf16>
    %c3_148 = arith.constant 3 : index
    %c0_149 = arith.constant 0 : index
    %c0_150 = arith.constant 0 : index
    %208 = vector.load %arg15[%c3_148, %c0_149, %c0_150] : memref<5x192x64xbf16, #tpu.memory_space<vmem>>, vector<1x192x64xbf16>
    %209 = vector.shape_cast %208 : vector<1x192x64xbf16> to vector<192x64xbf16>
    %cst_151 = arith.constant dense<0.000000e+00> : vector<136x64xf32>
    %210 = tpu.matmul %207, %209, %cst_151 {dimension_numbers = #tpu.dot_dimension_numbers<[1], [0], [0], [1], [0, 0, 1, 1], [], []>} : vector<136x192xbf16>, vector<192x64xbf16>, vector<136x64xf32> -> vector<136x64xf32>
    %211 = arith.addf %206, %210 : vector<136x64xf32>
    %212 = vector.extract_strided_slice %193 {offsets = [4, 0], sizes = [136, 192], strides = [1, 1]} : vector<140x192xbf16> to vector<136x192xbf16>
    %c4_152 = arith.constant 4 : index
    %c0_153 = arith.constant 0 : index
    %c0_154 = arith.constant 0 : index
    %213 = vector.load %arg15[%c4_152, %c0_153, %c0_154] : memref<5x192x64xbf16, #tpu.memory_space<vmem>>, vector<1x192x64xbf16>
    %214 = vector.shape_cast %213 : vector<1x192x64xbf16> to vector<192x64xbf16>
    %cst_155 = arith.constant dense<0.000000e+00> : vector<136x64xf32>
    %215 = tpu.matmul %212, %214, %cst_155 {dimension_numbers = #tpu.dot_dimension_numbers<[1], [0], [0], [1], [0, 0, 1, 1], [], []>} : vector<136x192xbf16>, vector<192x64xbf16>, vector<136x64xf32> -> vector<136x64xf32>
    %216 = arith.addf %211, %215 : vector<136x64xf32>
    %c0_156 = arith.constant 0 : index
    %c0_157 = arith.constant 0 : index
    %217 = vector.load %arg16[%c0_156, %c0_157] : memref<1x64xf32, #tpu.memory_space<vmem>>, vector<1x64xf32>
    %218 = vector.broadcast %217 : vector<1x64xf32> to vector<136x64xf32>
    %219 = arith.addf %216, %218 : vector<136x64xf32>
    %cst_158 = arith.constant 0.000000e+00 : f32
    %220 = vector.broadcast %cst_158 : f32 to vector<136x64xf32>
    %221 = arith.maximumf %219, %220 : vector<136x64xf32>
    %222 = arith.truncf %221 : vector<136x64xf32> to vector<136x64xbf16>
    %cst_159 = arith.constant 0.000000e+00 : bf16
    %223 = vector.broadcast %cst_159 : bf16 to vector<2x64xbf16>
    %224 = tpu.concatenate %223, %222, %223 in 0 : vector<2x64xbf16>, vector<136x64xbf16>, vector<2x64xbf16> -> vector<140x64xbf16>
    %225 = vector.extract_strided_slice %224 {offsets = [0, 0], sizes = [136, 64], strides = [1, 1]} : vector<140x64xbf16> to vector<136x64xbf16>
    %c0_160 = arith.constant 0 : index
    %c0_161 = arith.constant 0 : index
    %c0_162 = arith.constant 0 : index
    %226 = vector.load %arg17[%c0_160, %c0_161, %c0_162] : memref<5x64x2xbf16, #tpu.memory_space<vmem>>, vector<1x64x2xbf16>
    %227 = vector.shape_cast %226 : vector<1x64x2xbf16> to vector<64x2xbf16>
    %cst_163 = arith.constant dense<0.000000e+00> : vector<136x2xf32>
    %228 = tpu.matmul %225, %227, %cst_163 {dimension_numbers = #tpu.dot_dimension_numbers<[1], [0], [0], [1], [0, 0, 1, 1], [], []>} : vector<136x64xbf16>, vector<64x2xbf16>, vector<136x2xf32> -> vector<136x2xf32>
    %229 = vector.extract_strided_slice %224 {offsets = [1, 0], sizes = [136, 64], strides = [1, 1]} : vector<140x64xbf16> to vector<136x64xbf16>
    %c1_164 = arith.constant 1 : index
    %c0_165 = arith.constant 0 : index
    %c0_166 = arith.constant 0 : index
    %230 = vector.load %arg17[%c1_164, %c0_165, %c0_166] : memref<5x64x2xbf16, #tpu.memory_space<vmem>>, vector<1x64x2xbf16>
    %231 = vector.shape_cast %230 : vector<1x64x2xbf16> to vector<64x2xbf16>
    %cst_167 = arith.constant dense<0.000000e+00> : vector<136x2xf32>
    %232 = tpu.matmul %229, %231, %cst_167 {dimension_numbers = #tpu.dot_dimension_numbers<[1], [0], [0], [1], [0, 0, 1, 1], [], []>} : vector<136x64xbf16>, vector<64x2xbf16>, vector<136x2xf32> -> vector<136x2xf32>
    %233 = arith.addf %228, %232 : vector<136x2xf32>
    %c2_168 = arith.constant 2 : index
    %c0_169 = arith.constant 0 : index
    %c0_170 = arith.constant 0 : index
    %234 = vector.load %arg17[%c2_168, %c0_169, %c0_170] : memref<5x64x2xbf16, #tpu.memory_space<vmem>>, vector<1x64x2xbf16>
    %235 = vector.shape_cast %234 : vector<1x64x2xbf16> to vector<64x2xbf16>
    %cst_171 = arith.constant dense<0.000000e+00> : vector<136x2xf32>
    %236 = tpu.matmul %222, %235, %cst_171 {dimension_numbers = #tpu.dot_dimension_numbers<[1], [0], [0], [1], [0, 0, 1, 1], [], []>} : vector<136x64xbf16>, vector<64x2xbf16>, vector<136x2xf32> -> vector<136x2xf32>
    %237 = arith.addf %233, %236 : vector<136x2xf32>
    %238 = vector.extract_strided_slice %224 {offsets = [3, 0], sizes = [136, 64], strides = [1, 1]} : vector<140x64xbf16> to vector<136x64xbf16>
    %c3_172 = arith.constant 3 : index
    %c0_173 = arith.constant 0 : index
    %c0_174 = arith.constant 0 : index
    %239 = vector.load %arg17[%c3_172, %c0_173, %c0_174] : memref<5x64x2xbf16, #tpu.memory_space<vmem>>, vector<1x64x2xbf16>
    %240 = vector.shape_cast %239 : vector<1x64x2xbf16> to vector<64x2xbf16>
    %cst_175 = arith.constant dense<0.000000e+00> : vector<136x2xf32>
    %241 = tpu.matmul %238, %240, %cst_175 {dimension_numbers = #tpu.dot_dimension_numbers<[1], [0], [0], [1], [0, 0, 1, 1], [], []>} : vector<136x64xbf16>, vector<64x2xbf16>, vector<136x2xf32> -> vector<136x2xf32>
    %242 = arith.addf %237, %241 : vector<136x2xf32>
    %243 = vector.extract_strided_slice %224 {offsets = [4, 0], sizes = [136, 64], strides = [1, 1]} : vector<140x64xbf16> to vector<136x64xbf16>
    %c4_176 = arith.constant 4 : index
    %c0_177 = arith.constant 0 : index
    %c0_178 = arith.constant 0 : index
    %244 = vector.load %arg17[%c4_176, %c0_177, %c0_178] : memref<5x64x2xbf16, #tpu.memory_space<vmem>>, vector<1x64x2xbf16>
    %245 = vector.shape_cast %244 : vector<1x64x2xbf16> to vector<64x2xbf16>
    %cst_179 = arith.constant dense<0.000000e+00> : vector<136x2xf32>
    %246 = tpu.matmul %243, %245, %cst_179 {dimension_numbers = #tpu.dot_dimension_numbers<[1], [0], [0], [1], [0, 0, 1, 1], [], []>} : vector<136x64xbf16>, vector<64x2xbf16>, vector<136x2xf32> -> vector<136x2xf32>
    %247 = arith.addf %242, %246 : vector<136x2xf32>
    %c0_180 = arith.constant 0 : index
    %c0_181 = arith.constant 0 : index
    %248 = vector.load %arg18[%c0_180, %c0_181] : memref<1x2xf32, #tpu.memory_space<vmem>>, vector<1x2xf32>
    %249 = vector.broadcast %248 : vector<1x2xf32> to vector<136x2xf32>
    %250 = arith.addf %247, %249 : vector<136x2xf32>
    %251 = math.tanh %250 : vector<136x2xf32>
    %252 = tpu.transpose %251, [1, 0] : vector<136x2xf32> -> vector<2x136xf32>
    %253 = vector.extract_strided_slice %252 {offsets = [0, 0], sizes = [1, 136], strides = [1, 1]} : vector<2x136xf32> to vector<1x136xf32>
    %254 = vector.extract_strided_slice %252 {offsets = [1, 0], sizes = [1, 136], strides = [1, 1]} : vector<2x136xf32> to vector<1x136xf32>
    %cst_182 = arith.constant 1.000000e+00 : f32
    %255 = vector.broadcast %cst_182 : f32 to vector<1x136xf32>
    %256 = arith.addf %255, %254 : vector<1x136xf32>
    %cst_183 = arith.constant 5.000000e-01 : f32
    %257 = vector.broadcast %cst_183 : f32 to vector<1x136xf32>
    %258 = arith.mulf %257, %256 : vector<1x136xf32>
    %c0_184 = arith.constant 0 : index
    %c0_185 = arith.constant 0 : index
    %c0_186 = arith.constant 0 : index
    %259 = vector.load %arg2[%c0_184, %c0_185, %c0_186] : memref<1x2x136xf32, #tpu.memory_space<vmem>>, vector<1x2x136xf32>
    %260 = vector.shape_cast %259 : vector<1x2x136xf32> to vector<2x136xf32>
    %261 = vector.extract_strided_slice %260 {offsets = [0, 0], sizes = [1, 136], strides = [1, 1]} : vector<2x136xf32> to vector<1x136xf32>
    %262 = arith.subf %261, %253 : vector<1x136xf32>
    %263 = vector.extract_strided_slice %260 {offsets = [1, 0], sizes = [1, 136], strides = [1, 1]} : vector<2x136xf32> to vector<1x136xf32>
    %cst_187 = arith.constant 5.000000e-01 : f32
    %264 = vector.broadcast %cst_187 : f32 to vector<1x136xf32>
    %265 = arith.mulf %264, %253 : vector<1x136xf32>
    %266 = arith.subf %263, %265 : vector<1x136xf32>
    %267 = arith.mulf %258, %262 : vector<1x136xf32>
    %cst_188 = arith.constant 1.000000e+00 : f32
    %268 = vector.broadcast %cst_188 : f32 to vector<1x136xf32>
    %269 = arith.subf %268, %258 : vector<1x136xf32>
    %270 = arith.mulf %269, %266 : vector<1x136xf32>
    %271 = arith.addf %267, %270 : vector<1x136xf32>
    %c0_189 = arith.constant 0 : index
    %c0_190 = arith.constant 0 : index
    %c0_191 = arith.constant 0 : index
    %272 = vector.load %arg25[%c0_189, %c0_190, %c0_191] : memref<1x1x136xf32, #tpu.memory_space<vmem>>, vector<1x1x136xf32>
    %273 = vector.shape_cast %272 : vector<1x1x136xf32> to vector<1x136xf32>
    %274 = vector.shape_cast %271 : vector<1x136xf32> to vector<1x1x136xf32>
    tpu.vector_store %arg25[%c0_189, %c0_190, %c0_191], %274 {strides = array<i32>} : memref<1x1x136xf32, #tpu.memory_space<vmem>>, vector<1x1x136xf32>,
    return
  }
  func.func @transform_0(%arg0: i32) -> (i32, i32, i32) {
    %c0_i32 = arith.constant 0 : i32
    %c0_i32_0 = arith.constant 0 : i32
    %c0_i32_1 = arith.constant 0 : i32
    return %arg0, %c0_i32, %c0_i32_0 : i32, i32, i32
  }
  func.func @transform_1(%arg0: i32) -> (i32, i32, i32) {
    %c0_i32 = arith.constant 0 : i32
    %c0_i32_0 = arith.constant 0 : i32
    %c0_i32_1 = arith.constant 0 : i32
    return %arg0, %c0_i32, %c0_i32_0 : i32, i32, i32
  }
  func.func @transform_2(%arg0: i32) -> (i32, i32, i32) {
    %c0_i32 = arith.constant 0 : i32
    %c0_i32_0 = arith.constant 0 : i32
    %c0_i32_1 = arith.constant 0 : i32
    %c0_i32_2 = arith.constant 0 : i32
    return %c0_i32, %c0_i32_0, %c0_i32_1 : i32, i32, i32
  }
  func.func @transform_3(%arg0: i32) -> (i32, i32) {
    %c0_i32 = arith.constant 0 : i32
    %c0_i32_0 = arith.constant 0 : i32
    %c0_i32_1 = arith.constant 0 : i32
    return %c0_i32, %c0_i32_0 : i32, i32
  }
  func.func @transform_4(%arg0: i32) -> (i32, i32, i32) {
    %c0_i32 = arith.constant 0 : i32
    %c0_i32_0 = arith.constant 0 : i32
    %c0_i32_1 = arith.constant 0 : i32
    %c0_i32_2 = arith.constant 0 : i32
    return %c0_i32, %c0_i32_0, %c0_i32_1 : i32, i32, i32
  }
  func.func @transform_5(%arg0: i32) -> (i32, i32) {
    %c0_i32 = arith.constant 0 : i32
    %c0_i32_0 = arith.constant 0 : i32
    %c0_i32_1 = arith.constant 0 : i32
    return %c0_i32, %c0_i32_0 : i32, i32
  }
  func.func @transform_6(%arg0: i32) -> (i32, i32, i32) {
    %c0_i32 = arith.constant 0 : i32
    %c0_i32_0 = arith.constant 0 : i32
    %c0_i32_1 = arith.constant 0 : i32
    %c0_i32_2 = arith.constant 0 : i32
    return %c0_i32, %c0_i32_0, %c0_i32_1 : i32, i32, i32
  }
  func.func @transform_7(%arg0: i32) -> (i32, i32) {
    %c0_i32 = arith.constant 0 : i32
    %c0_i32_0 = arith.constant 0 : i32
    %c0_i32_1 = arith.constant 0 : i32
    return %c0_i32, %c0_i32_0 : i32, i32
  }
  func.func @transform_8(%arg0: i32) -> (i32, i32, i32) {
    %c0_i32 = arith.constant 0 : i32
    %c0_i32_0 = arith.constant 0 : i32
    %c0_i32_1 = arith.constant 0 : i32
    %c0_i32_2 = arith.constant 0 : i32
    return %c0_i32, %c0_i32_0, %c0_i32_1 : i32, i32, i32
  }
  func.func @transform_9(%arg0: i32) -> (i32, i32) {
    %c0_i32 = arith.constant 0 : i32
    %c0_i32_0 = arith.constant 0 : i32
    %c0_i32_1 = arith.constant 0 : i32
    return %c0_i32, %c0_i32_0 : i32, i32
  }
  func.func @transform_10(%arg0: i32) -> (i32, i32, i32) {
    %c0_i32 = arith.constant 0 : i32
    %c0_i32_0 = arith.constant 0 : i32
    %c0_i32_1 = arith.constant 0 : i32
    %c0_i32_2 = arith.constant 0 : i32
    return %c0_i32, %c0_i32_0, %c0_i32_1 : i32, i32, i32
  }
  func.func @transform_11(%arg0: i32) -> (i32, i32) {
    %c0_i32 = arith.constant 0 : i32
    %c0_i32_0 = arith.constant 0 : i32
    %c0_i32_1 = arith.constant 0 : i32
    return %c0_i32, %c0_i32_0 : i32, i32
  }
  func.func @transform_12(%arg0: i32) -> (i32, i32, i32) {
    %c0_i32 = arith.constant 0 : i32
    %c0_i32_0 = arith.constant 0 : i32
    %c0_i32_1 = arith.constant 0 : i32
    %c0_i32_2 = arith.constant 0 : i32
    return %c0_i32, %c0_i32_0, %c0_i32_1 : i32, i32, i32
  }
  func.func @transform_13(%arg0: i32) -> (i32, i32) {
    %c0_i32 = arith.constant 0 : i32
    %c0_i32_0 = arith.constant 0 : i32
    %c0_i32_1 = arith.constant 0 : i32
    return %c0_i32, %c0_i32_0 : i32, i32
  }
  func.func @transform_14(%arg0: i32) -> (i32, i32, i32) {
    %c0_i32 = arith.constant 0 : i32
    %c0_i32_0 = arith.constant 0 : i32
    %c0_i32_1 = arith.constant 0 : i32
    %c0_i32_2 = arith.constant 0 : i32
    return %c0_i32, %c0_i32_0, %c0_i32_1 : i32, i32, i32
  }
  func.func @transform_15(%arg0: i32) -> (i32, i32) {
    %c0_i32 = arith.constant 0 : i32
    %c0_i32_0 = arith.constant 0 : i32
    %c0_i32_1 = arith.constant 0 : i32
    return %c0_i32, %c0_i32_0 : i32, i32
  }
  func.func @transform_16(%arg0: i32) -> (i32, i32, i32) {
    %c0_i32 = arith.constant 0 : i32
    %c0_i32_0 = arith.constant 0 : i32
    %c0_i32_1 = arith.constant 0 : i32
    %c0_i32_2 = arith.constant 0 : i32
    return %c0_i32, %c0_i32_0, %c0_i32_1 : i32, i32, i32
  }
  func.func @transform_17(%arg0: i32) -> (i32, i32) {
    %c0_i32 = arith.constant 0 : i32
    %c0_i32_0 = arith.constant 0 : i32
    %c0_i32_1 = arith.constant 0 : i32
    return %c0_i32, %c0_i32_0 : i32, i32
  }
  func.func @transform_18(%arg0: i32) -> (i32, i32) {
    %c0_i32 = arith.constant 0 : i32
    %c0_i32_0 = arith.constant 0 : i32
    %c0_i32_1 = arith.constant 0 : i32
    return %c0_i32, %c0_i32_0 : i32, i32
  }
  func.func @transform_19(%arg0: i32) -> (i32, i32) {
    %c0_i32 = arith.constant 0 : i32
    %c0_i32_0 = arith.constant 0 : i32
    %c0_i32_1 = arith.constant 0 : i32
    return %c0_i32, %c0_i32_0 : i32, i32
  }
  func.func @transform_20(%arg0: i32) -> (i32, i32) {
    %c0_i32 = arith.constant 0 : i32
    %c0_i32_0 = arith.constant 0 : i32
    %c0_i32_1 = arith.constant 0 : i32
    return %c0_i32, %c0_i32_0 : i32, i32
  }
  func.func @transform_21(%arg0: i32) -> (i32, i32) {
    %c0_i32 = arith.constant 0 : i32
    %c0_i32_0 = arith.constant 0 : i32
    %c0_i32_1 = arith.constant 0 : i32
    return %c0_i32, %c0_i32_0 : i32, i32
  }
  func.func @transform_22(%arg0: i32) -> (i32, i32) {
    %c0_i32 = arith.constant 0 : i32
    %c0_i32_0 = arith.constant 0 : i32
    %c0_i32_1 = arith.constant 0 : i32
    return %c0_i32, %c0_i32_0 : i32, i32
  }
  func.func @transform_23(%arg0: i32) -> (i32, i32) {
    %c0_i32 = arith.constant 0 : i32
    %c0_i32_0 = arith.constant 0 : i32
    %c0_i32_1 = arith.constant 0 : i32
    return %c0_i32, %c0_i32_0 : i32, i32
  }
  func.func @transform_24(%arg0: i32) -> (i32, i32, i32) {
    %c0_i32 = arith.constant 0 : i32
    %c0_i32_0 = arith.constant 0 : i32
    %c0_i32_1 = arith.constant 0 : i32
    return %arg0, %c0_i32, %c0_i32_0 : i32, i32, i32
  }
}

</mosaic_0001>

<llo_original>
// kernel: tpu_custom_call.1
$region0: #{tpu_custom_call.1}
  #allocation0 [shape = 'u32[]', space=smem, size = 0x4, offset = 0x4, fixed_abs, tag = 'smem constant byte address 0x4 - core index']
  #allocation1 [shape = 'u32[144,128]{1,0:T(1,128)}', space=vmem, size = 0x12000, scoped, tag = 'internal scratch']
  %s0 = inlined_call_operand.vmem [shape: f32[2,136,2], index: 0, kind: input, shape index: {}]
  %s1 = inlined_call_operand.hbm [shape: f32[2,2,136], index: 1, kind: input, shape index: {}]
  %s2 = inlined_call_operand.hbm [shape: bf16[5,2,64], index: 2, kind: input, shape index: {}]
  %s3 = inlined_call_operand.hbm [shape: f32[1,64], index: 3, kind: input, shape index: {}]
  %s4 = inlined_call_operand.vmem [shape: bf16[5,64,128], index: 4, kind: input, shape index: {}]
  %s5 = inlined_call_operand.hbm [shape: f32[1,128], index: 5, kind: input, shape index: {}]
  %s6 = inlined_call_operand.vmem [shape: bf16[3,128,256], index: 6, kind: input, shape index: {}]
  %s7 = inlined_call_operand.hbm [shape: f32[1,256], index: 7, kind: input, shape index: {}]
  %s8 = inlined_call_operand.hbm [shape: bf16[3,256,256], index: 8, kind: input, shape index: {}]
  %s9 = inlined_call_operand.hbm [shape: f32[1,256], index: 9, kind: input, shape index: {}]
  %s10 = inlined_call_operand.hbm [shape: bf16[3,512,256], index: 10, kind: input, shape index: {}]
  %s11 = inlined_call_operand.hbm [shape: f32[1,256], index: 11, kind: input, shape index: {}]
  %s12 = inlined_call_operand.vmem [shape: bf16[5,384,128], index: 12, kind: input, shape index: {}]
  %s13 = inlined_call_operand.hbm [shape: f32[1,128], index: 13, kind: input, shape index: {}]
  %s14 = inlined_call_operand.vmem [shape: bf16[5,192,64], index: 14, kind: input, shape index: {}]
  %s15 = inlined_call_operand.hbm [shape: f32[1,64], index: 15, kind: input, shape index: {}]
  %s16 = inlined_call_operand.vmem [shape: bf16[5,64,2], index: 16, kind: input, shape index: {}]
  %s17 = inlined_call_operand.hbm [shape: f32[1,2], index: 17, kind: input, shape index: {}]
  %s18 = inlined_call_operand.vmem [shape: bf16[68,136], index: 18, kind: input, shape index: {}]
  %s19 = inlined_call_operand.vmem [shape: bf16[34,68], index: 19, kind: input, shape index: {}]
  %s20 = inlined_call_operand.hbm [shape: bf16[17,34], index: 20, kind: input, shape index: {}]
  %s21 = inlined_call_operand.vmem [shape: bf16[34,17], index: 21, kind: input, shape index: {}]
  %s22 = inlined_call_operand.vmem [shape: bf16[68,34], index: 22, kind: input, shape index: {}]
  %s23 = inlined_call_operand.hbm [shape: bf16[136,68], index: 23, kind: input, shape index: {}]
  %s24 = inlined_call_operand.hbm [shape: f32[2,1,136], index: 24, kind: output, shape index: {}]
  %s25 = sld [smem:[#allocation0]]
  $region185: #{tpu_custom_call.1} parent=0
    _
  %s27 = ssub.s32 1, %s25
  %s28 = scalar_select 0, %s27, %s25
  $region1: #{tpu_custom_call.1} parent=0
    #allocation2 [shape = 'u8[4096]{0}', space=vmem, size = 0x1000, scoped, tag = 'input window, operand 1']
    #allocation3 [shape = 's32[2]{0}', space=sflag, size = 0x8, scoped, tag = 'scoped memory for tpu_custom_call.1']
    #allocation4 [shape = 's32[2]{0}', space=sflag, size = 0x8, scoped, tag = 'scoped memory for tpu_custom_call.1']
    #allocation5 [shape = 'u8[2560]{0}', space=vmem, size = 0xc00, scoped, tag = 'input window, operand 2, single buffered']
    #allocation6 [shape = 's32[1]{0}', space=sflag, size = 0x4, scoped, tag = 'scoped memory for tpu_custom_call.1']
    #allocation7 [shape = 'u8[512]{0}', space=vmem, size = 0x400, scoped, tag = 'input window, operand 3, single buffered']
    #allocation8 [shape = 'u8[512]{0}', space=vmem, size = 0x400, scoped, tag = 'input window, operand 5, single buffered']
    #allocation9 [shape = 's32[1]{0}', space=sflag, size = 0x4, scoped, tag = 'scoped memory for tpu_custom_call.1']
    #allocation10 [shape = 'u8[1024]{0}', space=vmem, size = 0x400, scoped, tag = 'input window, operand 7, single buffered']
    #allocation11 [shape = 'u8[393216]{0}', space=vmem, size = 0x60000, scoped, tag = 'input window, operand 8, single buffered']
    #allocation12 [shape = 's32[1]{0}', space=sflag, size = 0x4, scoped, tag = 'scoped memory for tpu_custom_call.1']
    #allocation13 [shape = 'u8[1024]{0}', space=vmem, size = 0x400, scoped, tag = 'input window, operand 9, single buffered']
    #allocation14 [shape = 'u8[786432]{0}', space=vmem, size = 0xc0000, scoped, tag = 'input window, operand 10, single buffered']
    #allocation15 [shape = 's32[1]{0}', space=sflag, size = 0x4, scoped, tag = 'scoped memory for tpu_custom_call.1']
    #allocation16 [shape = 'u8[1024]{0}', space=vmem, size = 0x400, scoped, tag = 'input window, operand 11, single buffered']
    #allocation17 [shape = 'u8[512]{0}', space=vmem, size = 0x400, scoped, tag = 'input window, operand 13, single buffered']
    #allocation18 [shape = 's32[1]{0}', space=sflag, size = 0x4, scoped, tag = 'scoped memory for tpu_custom_call.1']
    #allocation19 [shape = 'u8[512]{0}', space=vmem, size = 0x400, scoped, tag = 'input window, operand 15, single buffered']
    #allocation20 [shape = 'u8[512]{0}', space=vmem, size = 0x400, scoped, tag = 'input window, operand 17, single buffered']
    #allocation21 [shape = 's32[1]{0}', space=sflag, size = 0x4, scoped, tag = 'scoped memory for tpu_custom_call.1']
    #allocation22 [shape = 'u8[6144]{0}', space=vmem, size = 0x1800, scoped, tag = 'input window, operand 20, single buffered']
    #allocation23 [shape = 'u8[34816]{0}', space=vmem, size = 0x8800, scoped, tag = 'input window, operand 23, single buffered']
    #allocation24 [shape = 's32[1]{0}', space=sflag, size = 0x4, scoped, tag = 'scoped memory for tpu_custom_call.1']
    #allocation25 [shape = 'u8[2048]{0}', space=vmem, size = 0x800, scoped, tag = 'output window, operand 0']
    %29 = vsyncpa [#allocation3], 0
    %s30 = scalar_lea.sflag [#allocation3], 1
    %31 = vsyncpa %s30, 0
    %32 = vsyncpa [#allocation6], 0
    %33 = vsyncpa [#allocation9], 0
    %34 = vsyncpa [#allocation12], 0
    %35 = vsyncpa [#allocation15], 0
    %36 = vsyncpa [#allocation18], 0
    %37 = vsyncpa [#allocation21], 0
    %38 = vsyncpa [#allocation24], 0
    %39 = vsyncpa [#allocation4], 0
    %s40 = scalar_lea.sflag [#allocation4], 1
    %41 = vsyncpa %s40, 0
    loop: start=0, step=1, limit=4
    $region2: #{tpu_custom_call.1} parent=1 // loop_pre_header
      _
    $region3: #{tpu_custom_call.1} parent=1 // loop_header
      %s43 = sphi 0, %s47
      %p44 = scmp.ge.s32.totalorder %s43, 4
      %s53 = sphi 0, %s55
      %s56 = sphi 0, %s53
      %s57 = sphi 0, %s56
      %s73 = sphi 0, %s57
      %s79 = sphi 0, %s81
      %s82 = sphi 0, %s79
      %s83 = sphi 0, %s82
      %s99 = sphi 0, %s83
      %s103 = sphi 0, %s103
      %s105 = sphi 0, %s103
      %s106 = sphi 0, %s105
      %s120 = sphi 0, %s106
      %s124 = sphi 0, %s124
      %s126 = sphi 0, %s124
      %s127 = sphi 0, %s126
      %s141 = sphi 0, %s127
      %s145 = sphi 0, %s145
      %s147 = sphi 0, %s145
      %s148 = sphi 0, %s147
      %s162 = sphi 0, %s148
      %s166 = sphi 0, %s166
      %s168 = sphi 0, %s166
      %s169 = sphi 0, %s168
      %s183 = sphi 0, %s169
      %s187 = sphi 0, %s187
      %s189 = sphi 0, %s187
      %s190 = sphi 0, %s189
      %s204 = sphi 0, %s190
      %s208 = sphi 0, %s208
      %s210 = sphi 0, %s208
      %s211 = sphi 0, %s210
      %s225 = sphi 0, %s211
      %s229 = sphi 0, %s229
      %s231 = sphi 0, %s229
      %s232 = sphi 0, %s231
      %s246 = sphi 0, %s232
      %s250 = sphi 0, %s250
      %s252 = sphi 0, %s250
      %s253 = sphi 0, %s252
      %s267 = sphi 0, %s253
      %s271 = sphi 0, %s271
      %s273 = sphi 0, %s271
      %s274 = sphi 0, %s273
      %s288 = sphi 0, %s274
      %s292 = sphi 0, %s292
      %s294 = sphi 0, %s292
      %s295 = sphi 0, %s294
      %s309 = sphi 0, %s295
      %s313 = sphi 0, %s313
      %s315 = sphi 0, %s313
      %s316 = sphi 0, %s315
      %s330 = sphi 0, %s316
      %s334 = sphi 0, %s334
      %s336 = sphi 0, %s334
      %s337 = sphi 0, %s336
      %s351 = sphi 0, %s337
      %s355 = sphi 0, %s355
      %s357 = sphi 0, %s355
      %s358 = sphi 0, %s357
      %s372 = sphi 0, %s358
      %s376 = sphi 0, %s376
      %s378 = sphi 0, %s376
      %s379 = sphi 0, %s378
      %s393 = sphi 0, %s379
      %s397 = sphi 0, %s397
      %s399 = sphi 0, %s397
      %s400 = sphi 0, %s399
      %s414 = sphi 0, %s400
      %s418 = sphi 0, %s418
      %s420 = sphi 0, %s418
      %s421 = sphi 0, %s420
      %s435 = sphi 0, %s421
      %s439 = sphi 0, %s439
      %s441 = sphi 0, %s439
      %s442 = sphi 0, %s441
      %s456 = sphi 0, %s442
      %s460 = sphi 0, %s460
      %s462 = sphi 0, %s460
      %s463 = sphi 0, %s462
      %s477 = sphi 0, %s463
      %s481 = sphi 0, %s481
      %s483 = sphi 0, %s481
      %s484 = sphi 0, %s483
      %s498 = sphi 0, %s484
      %s502 = sphi 0, %s502
      %s504 = sphi 0, %s502
      %s505 = sphi 0, %s504
      %s519 = sphi 0, %s505
      %s523 = sphi 0, %s523
      %s525 = sphi 0, %s523
      %s526 = sphi 0, %s525
      %s540 = sphi 0, %s526
      %s544 = sphi 0, %s544
      %s546 = sphi 0, %s544
      %s547 = sphi 0, %s546
      %s561 = sphi 0, %s547
      %s567 = sphi 0, %s569
      %s570 = sphi 0, %s567
      %s571 = sphi 0, %s570
      %s587 = sphi 0, %s571
    $region4: #{tpu_custom_call.1} parent=1 // loop_header_branch
      %46 = sbr.rel (%p44) target = $region8
    $region5: #{tpu_custom_call.1} parent=1 // loop_body
      %s48 = ssub.s32 %s43, 1
      %s49 = ssub.s32 %s43, 2
      %s50 = sadd.s32 %s43, 1
      %s51 = ssub.s32 %s43, %s50
      %p52 = scmp.eq.s32.totalorder %s51, 0
      %s54 = sadd.s32 %s53, 1
      %s55 = scalar_select %p52, %s53, %s54
      %p58 = pneg %p52
      %p59 = scmp.eq.s32.totalorder %s43, 1
      %p60 = por %p58, %p59
      %p61 = scmp.ne.s32.totalorder %s53, %s56
      %p62 = scmp.eq.s32.totalorder %s43, 0
      %p63 = por %p61, %p62
      %p64 = scmp.ne.s32.totalorder %s53, %s56
      %p65 = scmp.eq.s32.totalorder %s48, 1
      %p66 = por %p64, %p65
      %p67 = scmp.ne.s32.totalorder %s56, %s57
      %p68 = scmp.eq.s32.totalorder %s48, 0
      %p69 = por %p67, %p68
      %p70 = scmp.ne.s32.totalorder %s56, %s57
      %p71 = scmp.eq.s32.totalorder %s49, 1
      %p72 = por %p70, %p71
      %p74 = scmp.ne.s32.totalorder %s57, %s73
      %p75 = scmp.eq.s32.totalorder %s49, 0
      %p76 = por %p74, %p75
      %s77 = ssub.s32 %s43, %s50
      %p78 = scmp.eq.s32.totalorder %s77, 0
      %s80 = sadd.s32 %s79, 1
      %s81 = scalar_select %p78, %s79, %s80
      %p84 = pneg %p78
      %p85 = scmp.eq.s32.totalorder %s43, 1
      %p86 = por %p84, %p85
      %p87 = scmp.ne.s32.totalorder %s79, %s82
      %p88 = scmp.eq.s32.totalorder %s43, 0
      %p89 = por %p87, %p88
      %p90 = scmp.ne.s32.totalorder %s79, %s82
      %p91 = scmp.eq.s32.totalorder %s48, 1
      %p92 = por %p90, %p91
      %p93 = scmp.ne.s32.totalorder %s82, %s83
      %p94 = scmp.eq.s32.totalorder %s48, 0
      %p95 = por %p93, %p94
      %p96 = scmp.ne.s32.totalorder %s82, %s83
      %p97 = scmp.eq.s32.totalorder %s49, 1
      %p98 = por %p96, %p97
      %p100 = scmp.ne.s32.totalorder %s83, %s99
      %p101 = scmp.eq.s32.totalorder %s49, 0
      %p102 = por %p100, %p101
      %s104 = sadd.s32 %s103, 1
      %p107 = scmp.eq.s32.totalorder %s43, 1
      %p108 = scmp.ne.s32.totalorder %s103, %s105
      %p109 = scmp.eq.s32.totalorder %s43, 0
      %p110 = por %p108, %p109
      %p111 = scmp.ne.s32.totalorder %s103, %s105
      %p112 = scmp.eq.s32.totalorder %s48, 1
      %p113 = por %p111, %p112
      %p114 = scmp.ne.s32.totalorder %s105, %s106
      %p115 = scmp.eq.s32.totalorder %s48, 0
      %p116 = por %p114, %p115
      %p117 = scmp.ne.s32.totalorder %s105, %s106
      %p118 = scmp.eq.s32.totalorder %s49, 1
      %p119 = por %p117, %p118
      %p121 = scmp.ne.s32.totalorder %s106, %s120
      %p122 = scmp.eq.s32.totalorder %s49, 0
      %p123 = por %p121, %p122
      %s125 = sadd.s32 %s124, 1
      %p128 = scmp.eq.s32.totalorder %s43, 1
      %p129 = scmp.ne.s32.totalorder %s124, %s126
      %p130 = scmp.eq.s32.totalorder %s43, 0
      %p131 = por %p129, %p130
      %p132 = scmp.ne.s32.totalorder %s124, %s126
      %p133 = scmp.eq.s32.totalorder %s48, 1
      %p134 = por %p132, %p133
      %p135 = scmp.ne.s32.totalorder %s126, %s127
      %p136 = scmp.eq.s32.totalorder %s48, 0
      %p137 = por %p135, %p136
      %p138 = scmp.ne.s32.totalorder %s126, %s127
      %p139 = scmp.eq.s32.totalorder %s49, 1
      %p140 = por %p138, %p139
      %p142 = scmp.ne.s32.totalorder %s127, %s141
      %p143 = scmp.eq.s32.totalorder %s49, 0
      %p144 = por %p142, %p143
      %s146 = sadd.s32 %s145, 1
      %p149 = scmp.eq.s32.totalorder %s43, 1
      %p150 = scmp.ne.s32.totalorder %s145, %s147
      %p151 = scmp.eq.s32.totalorder %s43, 0
      %p152 = por %p150, %p151
      %p153 = scmp.ne.s32.totalorder %s145, %s147
      %p154 = scmp.eq.s32.totalorder %s48, 1
      %p155 = por %p153, %p154
      %p156 = scmp.ne.s32.totalorder %s147, %s148
      %p157 = scmp.eq.s32.totalorder %s48, 0
      %p158 = por %p156, %p157
      %p159 = scmp.ne.s32.totalorder %s147, %s148
      %p160 = scmp.eq.s32.totalorder %s49, 1
      %p161 = por %p159, %p160
      %p163 = scmp.ne.s32.totalorder %s148, %s162
      %p164 = scmp.eq.s32.totalorder %s49, 0
      %p165 = por %p163, %p164
      %s167 = sadd.s32 %s166, 1
      %p170 = scmp.eq.s32.totalorder %s43, 1
      %p171 = scmp.ne.s32.totalorder %s166, %s168
      %p172 = scmp.eq.s32.totalorder %s43, 0
      %p173 = por %p171, %p172
      %p174 = scmp.ne.s32.totalorder %s166, %s168
      %p175 = scmp.eq.s32.totalorder %s48, 1
      %p176 = por %p174, %p175
      %p177 = scmp.ne.s32.totalorder %s168, %s169
      %p178 = scmp.eq.s32.totalorder %s48, 0
      %p179 = por %p177, %p178
      %p180 = scmp.ne.s32.totalorder %s168, %s169
      %p181 = scmp.eq.s32.totalorder %s49, 1
      %p182 = por %p180, %p181
      %p184 = scmp.ne.s32.totalorder %s169, %s183
      %p185 = scmp.eq.s32.totalorder %s49, 0
      %p186 = por %p184, %p185
      %s188 = sadd.s32 %s187, 1
      %p191 = scmp.eq.s32.totalorder %s43, 1
      %p192 = scmp.ne.s32.totalorder %s187, %s189
      %p193 = scmp.eq.s32.totalorder %s43, 0
      %p194 = por %p192, %p193
      %p195 = scmp.ne.s32.totalorder %s187, %s189
      %p196 = scmp.eq.s32.totalorder %s48, 1
      %p197 = por %p195, %p196
      %p198 = scmp.ne.s32.totalorder %s189, %s190
      %p199 = scmp.eq.s32.totalorder %s48, 0
      %p200 = por %p198, %p199
      %p201 = scmp.ne.s32.totalorder %s189, %s190
      %p202 = scmp.eq.s32.totalorder %s49, 1
      %p203 = por %p201, %p202
      %p205 = scmp.ne.s32.totalorder %s190, %s204
      %p206 = scmp.eq.s32.totalorder %s49, 0
      %p207 = por %p205, %p206
      %s209 = sadd.s32 %s208, 1
      %p212 = scmp.eq.s32.totalorder %s43, 1
      %p213 = scmp.ne.s32.totalorder %s208, %s210
      %p214 = scmp.eq.s32.totalorder %s43, 0
      %p215 = por %p213, %p214
      %p216 = scmp.ne.s32.totalorder %s208, %s210
      %p217 = scmp.eq.s32.totalorder %s48, 1
      %p218 = por %p216, %p217
      %p219 = scmp.ne.s32.totalorder %s210, %s211
      %p220 = scmp.eq.s32.totalorder %s48, 0
      %p221 = por %p219, %p220
      %p222 = scmp.ne.s32.totalorder %s210, %s211
      %p223 = scmp.eq.s32.totalorder %s49, 1
      %p224 = por %p222, %p223
      %p226 = scmp.ne.s32.totalorder %s211, %s225
      %p227 = scmp.eq.s32.totalorder %s49, 0
      %p228 = por %p226, %p227
      %s230 = sadd.s32 %s229, 1
      %p233 = scmp.eq.s32.totalorder %s43, 1
      %p234 = scmp.ne.s32.totalorder %s229, %s231
      %p235 = scmp.eq.s32.totalorder %s43, 0
      %p236 = por %p234, %p235
      %p237 = scmp.ne.s32.totalorder %s229, %s231
      %p238 = scmp.eq.s32.totalorder %s48, 1
      %p239 = por %p237, %p238
      %p240 = scmp.ne.s32.totalorder %s231, %s232
      %p241 = scmp.eq.s32.totalorder %s48, 0
      %p242 = por %p240, %p241
      %p243 = scmp.ne.s32.totalorder %s231, %s232
      %p244 = scmp.eq.s32.totalorder %s49, 1
      %p245 = por %p243, %p244
      %p247 = scmp.ne.s32.totalorder %s232, %s246
      %p248 = scmp.eq.s32.totalorder %s49, 0
      %p249 = por %p247, %p248
      %s251 = sadd.s32 %s250, 1
      %p254 = scmp.eq.s32.totalorder %s43, 1
      %p255 = scmp.ne.s32.totalorder %s250, %s252
      %p256 = scmp.eq.s32.totalorder %s43, 0
      %p257 = por %p255, %p256
      %p258 = scmp.ne.s32.totalorder %s250, %s252
      %p259 = scmp.eq.s32.totalorder %s48, 1
      %p260 = por %p258, %p259
      %p261 = scmp.ne.s32.totalorder %s252, %s253
      %p262 = scmp.eq.s32.totalorder %s48, 0
      %p263 = por %p261, %p262
      %p264 = scmp.ne.s32.totalorder %s252, %s253
      %p265 = scmp.eq.s32.totalorder %s49, 1
      %p266 = por %p264, %p265
      %p268 = scmp.ne.s32.totalorder %s253, %s267
      %p269 = scmp.eq.s32.totalorder %s49, 0
      %p270 = por %p268, %p269
      %s272 = sadd.s32 %s271, 1
      %p275 = scmp.eq.s32.totalorder %s43, 1
      %p276 = scmp.ne.s32.totalorder %s271, %s273
      %p277 = scmp.eq.s32.totalorder %s43, 0
      %p278 = por %p276, %p277
      %p279 = scmp.ne.s32.totalorder %s271, %s273
      %p280 = scmp.eq.s32.totalorder %s48, 1
      %p281 = por %p279, %p280
      %p282 = scmp.ne.s32.totalorder %s273, %s274
      %p283 = scmp.eq.s32.totalorder %s48, 0
      %p284 = por %p282, %p283
      %p285 = scmp.ne.s32.totalorder %s273, %s274
      %p286 = scmp.eq.s32.totalorder %s49, 1
      %p287 = por %p285, %p286
      %p289 = scmp.ne.s32.totalorder %s274, %s288
      %p290 = scmp.eq.s32.totalorder %s49, 0
      %p291 = por %p289, %p290
      %s293 = sadd.s32 %s292, 1
      %p296 = scmp.eq.s32.totalorder %s43, 1
      %p297 = scmp.ne.s32.totalorder %s292, %s294
      %p298 = scmp.eq.s32.totalorder %s43, 0
      %p299 = por %p297, %p298
      %p300 = scmp.ne.s32.totalorder %s292, %s294
      %p301 = scmp.eq.s32.totalorder %s48, 1
      %p302 = por %p300, %p301
      %p303 = scmp.ne.s32.totalorder %s294, %s295
      %p304 = scmp.eq.s32.totalorder %s48, 0
      %p305 = por %p303, %p304
      %p306 = scmp.ne.s32.totalorder %s294, %s295
      %p307 = scmp.eq.s32.totalorder %s49, 1
      %p308 = por %p306, %p307
      %p310 = scmp.ne.s32.totalorder %s295, %s309
      %p311 = scmp.eq.s32.totalorder %s49, 0
      %p312 = por %p310, %p311
      %s314 = sadd.s32 %s313, 1
      %p317 = scmp.eq.s32.totalorder %s43, 1
      %p318 = scmp.ne.s32.totalorder %s313, %s315
      %p319 = scmp.eq.s32.totalorder %s43, 0
      %p320 = por %p318, %p319
      %p321 = scmp.ne.s32.totalorder %s313, %s315
      %p322 = scmp.eq.s32.totalorder %s48, 1
      %p323 = por %p321, %p322
      %p324 = scmp.ne.s32.totalorder %s315, %s316
      %p325 = scmp.eq.s32.totalorder %s48, 0
      %p326 = por %p324, %p325
      %p327 = scmp.ne.s32.totalorder %s315, %s316
      %p328 = scmp.eq.s32.totalorder %s49, 1
      %p329 = por %p327, %p328
      %p331 = scmp.ne.s32.totalorder %s316, %s330
      %p332 = scmp.eq.s32.totalorder %s49, 0
      %p333 = por %p331, %p332
      %s335 = sadd.s32 %s334, 1
      %p338 = scmp.eq.s32.totalorder %s43, 1
      %p339 = scmp.ne.s32.totalorder %s334, %s336
      %p340 = scmp.eq.s32.totalorder %s43, 0
      %p341 = por %p339, %p340
      %p342 = scmp.ne.s32.totalorder %s334, %s336
      %p343 = scmp.eq.s32.totalorder %s48, 1
      %p344 = por %p342, %p343
      %p345 = scmp.ne.s32.totalorder %s336, %s337
      %p346 = scmp.eq.s32.totalorder %s48, 0
      %p347 = por %p345, %p346
      %p348 = scmp.ne.s32.totalorder %s336, %s337
      %p349 = scmp.eq.s32.totalorder %s49, 1
      %p350 = por %p348, %p349
      %p352 = scmp.ne.s32.totalorder %s337, %s351
      %p353 = scmp.eq.s32.totalorder %s49, 0
      %p354 = por %p352, %p353
      %s356 = sadd.s32 %s355, 1
      %p359 = scmp.eq.s32.totalorder %s43, 1
      %p360 = scmp.ne.s32.totalorder %s355, %s357
      %p361 = scmp.eq.s32.totalorder %s43, 0
      %p362 = por %p360, %p361
      %p363 = scmp.ne.s32.totalorder %s355, %s357
      %p364 = scmp.eq.s32.totalorder %s48, 1
      %p365 = por %p363, %p364
      %p366 = scmp.ne.s32.totalorder %s357, %s358
      %p367 = scmp.eq.s32.totalorder %s48, 0
      %p368 = por %p366, %p367
      %p369 = scmp.ne.s32.totalorder %s357, %s358
      %p370 = scmp.eq.s32.totalorder %s49, 1
      %p371 = por %p369, %p370
      %p373 = scmp.ne.s32.totalorder %s358, %s372
      %p374 = scmp.eq.s32.totalorder %s49, 0
      %p375 = por %p373, %p374
      %s377 = sadd.s32 %s376, 1
      %p380 = scmp.eq.s32.totalorder %s43, 1
      %p381 = scmp.ne.s32.totalorder %s376, %s378
      %p382 = scmp.eq.s32.totalorder %s43, 0
      %p383 = por %p381, %p382
      %p384 = scmp.ne.s32.totalorder %s376, %s378
      %p385 = scmp.eq.s32.totalorder %s48, 1
      %p386 = por %p384, %p385
      %p387 = scmp.ne.s32.totalorder %s378, %s379
      %p388 = scmp.eq.s32.totalorder %s48, 0
      %p389 = por %p387, %p388
      %p390 = scmp.ne.s32.totalorder %s378, %s379
      %p391 = scmp.eq.s32.totalorder %s49, 1
      %p392 = por %p390, %p391
      %p394 = scmp.ne.s32.totalorder %s379, %s393
      %p395 = scmp.eq.s32.totalorder %s49, 0
      %p396 = por %p394, %p395
      %s398 = sadd.s32 %s397, 1
      %p401 = scmp.eq.s32.totalorder %s43, 1
      %p402 = scmp.ne.s32.totalorder %s397, %s399
      %p403 = scmp.eq.s32.totalorder %s43, 0
      %p404 = por %p402, %p403
      %p405 = scmp.ne.s32.totalorder %s397, %s399
      %p406 = scmp.eq.s32.totalorder %s48, 1
      %p407 = por %p405, %p406
      %p408 = scmp.ne.s32.totalorder %s399, %s400
      %p409 = scmp.eq.s32.totalorder %s48, 0
      %p410 = por %p408, %p409
      %p411 = scmp.ne.s32.totalorder %s399, %s400
      %p412 = scmp.eq.s32.totalorder %s49, 1
      %p413 = por %p411, %p412
      %p415 = scmp.ne.s32.totalorder %s400, %s414
      %p416 = scmp.eq.s32.totalorder %s49, 0
      %p417 = por %p415, %p416
      %s419 = sadd.s32 %s418, 1
      %p422 = scmp.eq.s32.totalorder %s43, 1
      %p423 = scmp.ne.s32.totalorder %s418, %s420
      %p424 = scmp.eq.s32.totalorder %s43, 0
      %p425 = por %p423, %p424
      %p426 = scmp.ne.s32.totalorder %s418, %s420
      %p427 = scmp.eq.s32.totalorder %s48, 1
      %p428 = por %p426, %p427
      %p429 = scmp.ne.s32.totalorder %s420, %s421
      %p430 = scmp.eq.s32.totalorder %s48, 0
      %p431 = por %p429, %p430
      %p432 = scmp.ne.s32.totalorder %s420, %s421
      %p433 = scmp.eq.s32.totalorder %s49, 1
      %p434 = por %p432, %p433
      %p436 = scmp.ne.s32.totalorder %s421, %s435
      %p437 = scmp.eq.s32.totalorder %s49, 0
      %p438 = por %p436, %p437
      %s440 = sadd.s32 %s439, 1
      %p443 = scmp.eq.s32.totalorder %s43, 1
      %p444 = scmp.ne.s32.totalorder %s439, %s441
      %p445 = scmp.eq.s32.totalorder %s43, 0
      %p446 = por %p444, %p445
      %p447 = scmp.ne.s32.totalorder %s439, %s441
      %p448 = scmp.eq.s32.totalorder %s48, 1
      %p449 = por %p447, %p448
      %p450 = scmp.ne.s32.totalorder %s441, %s442
      %p451 = scmp.eq.s32.totalorder %s48, 0
      %p452 = por %p450, %p451
      %p453 = scmp.ne.s32.totalorder %s441, %s442
      %p454 = scmp.eq.s32.totalorder %s49, 1
      %p455 = por %p453, %p454
      %p457 = scmp.ne.s32.totalorder %s442, %s456
      %p458 = scmp.eq.s32.totalorder %s49, 0
      %p459 = por %p457, %p458
      %s461 = sadd.s32 %s460, 1
      %p464 = scmp.eq.s32.totalorder %s43, 1
      %p465 = scmp.ne.s32.totalorder %s460, %s462
      %p466 = scmp.eq.s32.totalorder %s43, 0
      %p467 = por %p465, %p466
      %p468 = scmp.ne.s32.totalorder %s460, %s462
      %p469 = scmp.eq.s32.totalorder %s48, 1
      %p470 = por %p468, %p469
      %p471 = scmp.ne.s32.totalorder %s462, %s463
      %p472 = scmp.eq.s32.totalorder %s48, 0
      %p473 = por %p471, %p472
      %p474 = scmp.ne.s32.totalorder %s462, %s463
      %p475 = scmp.eq.s32.totalorder %s49, 1
      %p476 = por %p474, %p475
      %p478 = scmp.ne.s32.totalorder %s463, %s477
      %p479 = scmp.eq.s32.totalorder %s49, 0
      %p480 = por %p478, %p479
      %s482 = sadd.s32 %s481, 1
      %p485 = scmp.eq.s32.totalorder %s43, 1
      %p486 = scmp.ne.s32.totalorder %s481, %s483
      %p487 = scmp.eq.s32.totalorder %s43, 0
      %p488 = por %p486, %p487
      %p489 = scmp.ne.s32.totalorder %s481, %s483
      %p490 = scmp.eq.s32.totalorder %s48, 1
      %p491 = por %p489, %p490
      %p492 = scmp.ne.s32.totalorder %s483, %s484
      %p493 = scmp.eq.s32.totalorder %s48, 0
      %p494 = por %p492, %p493
      %p495 = scmp.ne.s32.totalorder %s483, %s484
      %p496 = scmp.eq.s32.totalorder %s49, 1
      %p497 = por %p495, %p496
      %p499 = scmp.ne.s32.totalorder %s484, %s498
      %p500 = scmp.eq.s32.totalorder %s49, 0
      %p501 = por %p499, %p500
      %s503 = sadd.s32 %s502, 1
      %p506 = scmp.eq.s32.totalorder %s43, 1
      %p507 = scmp.ne.s32.totalorder %s502, %s504
      %p508 = scmp.eq.s32.totalorder %s43, 0
      %p509 = por %p507, %p508
      %p510 = scmp.ne.s32.totalorder %s502, %s504
      %p511 = scmp.eq.s32.totalorder %s48, 1
      %p512 = por %p510, %p511
      %p513 = scmp.ne.s32.totalorder %s504, %s505
      %p514 = scmp.eq.s32.totalorder %s48, 0
      %p515 = por %p513, %p514
      %p516 = scmp.ne.s32.totalorder %s504, %s505
      %p517 = scmp.eq.s32.totalorder %s49, 1
      %p518 = por %p516, %p517
      %p520 = scmp.ne.s32.totalorder %s505, %s519
      %p521 = scmp.eq.s32.totalorder %s49, 0
      %p522 = por %p520, %p521
      %s524 = sadd.s32 %s523, 1
      %p527 = scmp.eq.s32.totalorder %s43, 1
      %p528 = scmp.ne.s32.totalorder %s523, %s525
      %p529 = scmp.eq.s32.totalorder %s43, 0
      %p530 = por %p528, %p529
      %p531 = scmp.ne.s32.totalorder %s523, %s525
      %p532 = scmp.eq.s32.totalorder %s48, 1
      %p533 = por %p531, %p532
      %p534 = scmp.ne.s32.totalorder %s525, %s526
      %p535 = scmp.eq.s32.totalorder %s48, 0
      %p536 = por %p534, %p535
      %p537 = scmp.ne.s32.totalorder %s525, %s526
      %p538 = scmp.eq.s32.totalorder %s49, 1
      %p539 = por %p537, %p538
      %p541 = scmp.ne.s32.totalorder %s526, %s540
      %p542 = scmp.eq.s32.totalorder %s49, 0
      %p543 = por %p541, %p542
      %s545 = sadd.s32 %s544, 1
      %p548 = scmp.eq.s32.totalorder %s43, 1
      %p549 = scmp.ne.s32.totalorder %s544, %s546
      %p550 = scmp.eq.s32.totalorder %s43, 0
      %p551 = por %p549, %p550
      %p552 = scmp.ne.s32.totalorder %s544, %s546
      %p553 = scmp.eq.s32.totalorder %s48, 1
      %p554 = por %p552, %p553
      %p555 = scmp.ne.s32.totalorder %s546, %s547
      %p556 = scmp.eq.s32.totalorder %s48, 0
      %p557 = por %p555, %p556
      %p558 = scmp.ne.s32.totalorder %s546, %s547
      %p559 = scmp.eq.s32.totalorder %s49, 1
      %p560 = por %p558, %p559
      %p562 = scmp.ne.s32.totalorder %s547, %s561
      %p563 = scmp.eq.s32.totalorder %s49, 0
      %p564 = por %p562, %p563
      %s565 = ssub.s32 %s43, %s50
      %p566 = scmp.eq.s32.totalorder %s565, 0
      %s568 = sadd.s32 %s567, 1
      %s569 = scalar_select %p566, %s567, %s568
      %p572 = pneg %p566
      %p573 = scmp.eq.s32.totalorder %s43, 1
      %p574 = por %p572, %p573
      %p575 = scmp.ne.s32.totalorder %s567, %s570
      %p576 = scmp.eq.s32.totalorder %s43, 0
      %p577 = por %p575, %p576
      %p578 = scmp.ne.s32.totalorder %s567, %s570
      %p579 = scmp.eq.s32.totalorder %s48, 1
      %p580 = por %p578, %p579
      %p581 = scmp.ne.s32.totalorder %s570, %s571
      %p582 = scmp.eq.s32.totalorder %s48, 0
      %p583 = por %p581, %p582
      %p584 = scmp.ne.s32.totalorder %s570, %s571
      %p585 = scmp.eq.s32.totalorder %s49, 1
      %p586 = por %p584, %p585
      %p588 = scmp.ne.s32.totalorder %s571, %s587
      %p589 = scmp.eq.s32.totalorder %s49, 0
      %p590 = por %p588, %p589
      %p591 = scmp.le.s32.totalorder 1, %s43
      %p592 = scmp.lt.s32.totalorder %s43, 3
      %p593 = pnand %p591, %p592
      %p594 = pneg %p593
      // Predicated region
      $region9: #{tpu_custom_call.1} parent=5 // pred_check
        _
      $region10: #{tpu_custom_call.1} parent=5 // pred_check_branch
        %596 = sbr.rel (%p593) target = $region12
      $region11: #{tpu_custom_call.1} parent=5 // pred_region
        %s597 = ssub.s32 %s43, 1
        // Predicated region
        $region13: #{tpu_custom_call.1} parent=11 // pred_check
          %p598 = pneg %p116
        $region14: #{tpu_custom_call.1} parent=11 // pred_check_branch
          %600 = sbr.rel (%p598) target = $region16
        $region15: #{tpu_custom_call.1} parent=11 // pred_region
          %s602 = ssub.s32 80, 80
          %603 = vsyncadd [#allocation6], %s602
          %s604 = sshll.u32 [#allocation5], 4
          %s605 = int_to_ptr.vmem [resolvable:$true] %s604
          %610 = dma.hbm_to_vmem [thread:$0]  %s2, 80, %s605, [#allocation6], 16, 16, 1
        $region16: #{tpu_custom_call.1} parent=11 // pred_fallthru
          _
        // Predicated region
        $region17: #{tpu_custom_call.1} parent=11 // pred_check
          %p611 = pneg %p137
        $region18: #{tpu_custom_call.1} parent=11 // pred_check_branch
          %613 = sbr.rel (%p611) target = $region20
        $region19: #{tpu_custom_call.1} parent=11 // pred_region
          %s615 = ssub.s32 16, 16
          %616 = vsyncadd [#allocation6], %s615
          %s618 = sshll.u32 [#allocation7], 4
          %s619 = int_to_ptr.vmem [resolvable:$true] %s618
          %621 = dma.hbm_to_vmem [thread:$0]  %s3, 16, %s619, [#allocation6]
        $region20: #{tpu_custom_call.1} parent=11 // pred_fallthru
          _
        // Predicated region
        $region21: #{tpu_custom_call.1} parent=11 // pred_check
          %p622 = pneg %p158
        $region22: #{tpu_custom_call.1} parent=11 // pred_check_branch
          %624 = sbr.rel (%p622) target = $region24
        $region23: #{tpu_custom_call.1} parent=11 // pred_region
          _
        $region24: #{tpu_custom_call.1} parent=11 // pred_fallthru
          _
        // Predicated region
        $region25: #{tpu_custom_call.1} parent=11 // pred_check
          %p625 = pneg %p179
        $region26: #{tpu_custom_call.1} parent=11 // pred_check_branch
          %627 = sbr.rel (%p625) target = $region28
        $region27: #{tpu_custom_call.1} parent=11 // pred_region
          %s629 = ssub.s32 16, 16
          %630 = vsyncadd [#allocation9], %s629
          %s632 = sshll.u32 [#allocation8], 4
          %s633 = int_to_ptr.vmem [resolvable:$true] %s632
          %635 = dma.hbm_to_vmem [thread:$0]  %s5, 16, %s633, [#allocation9]
        $region28: #{tpu_custom_call.1} parent=11 // pred_fallthru
          _
        // Predicated region
        $region29: #{tpu_custom_call.1} parent=11 // pred_check
          %p636 = pneg %p200
        $region30: #{tpu_custom_call.1} parent=11 // pred_check_branch
          %638 = sbr.rel (%p636) target = $region32
        $region31: #{tpu_custom_call.1} parent=11 // pred_region
          _
        $region32: #{tpu_custom_call.1} parent=11 // pred_fallthru
          _
        // Predicated region
        $region33: #{tpu_custom_call.1} parent=11 // pred_check
          %p639 = pneg %p221
        $region34: #{tpu_custom_call.1} parent=11 // pred_check_branch
          %641 = sbr.rel (%p639) target = $region36
        $region35: #{tpu_custom_call.1} parent=11 // pred_region
          %s643 = ssub.s32 32, 32
          %644 = vsyncadd [#allocation9], %s643
          %s646 = sshll.u32 [#allocation10], 4
          %s647 = int_to_ptr.vmem [resolvable:$true] %s646
          %649 = dma.hbm_to_vmem [thread:$0]  %s7, 32, %s647, [#allocation9]
        $region36: #{tpu_custom_call.1} parent=11 // pred_fallthru
          _
        // Predicated region
        $region37: #{tpu_custom_call.1} parent=11 // pred_check
          %p650 = pneg %p242
        $region38: #{tpu_custom_call.1} parent=11 // pred_check_branch
          %652 = sbr.rel (%p650) target = $region40
        $region39: #{tpu_custom_call.1} parent=11 // pred_region
          %s654 = ssub.s32 12288, 12288
          %655 = vsyncadd [#allocation12], %s654
          %s656 = sshll.u32 [#allocation11], 4
          %s657 = int_to_ptr.vmem [resolvable:$true] %s656
          %662 = dma.hbm_to_vmem [thread:$0]  %s8, 12288, %s657, [#allocation12], 128, 128, 8
        $region40: #{tpu_custom_call.1} parent=11 // pred_fallthru
          _
        // Predicated region
        $region41: #{tpu_custom_call.1} parent=11 // pred_check
          %p663 = pneg %p263
        $region42: #{tpu_custom_call.1} parent=11 // pred_check_branch
          %665 = sbr.rel (%p663) target = $region44
        $region43: #{tpu_custom_call.1} parent=11 // pred_region
          %s667 = ssub.s32 32, 32
          %668 = vsyncadd [#allocation12], %s667
          %s670 = sshll.u32 [#allocation13], 4
          %s671 = int_to_ptr.vmem [resolvable:$true] %s670
          %673 = dma.hbm_to_vmem [thread:$0]  %s9, 32, %s671, [#allocation12]
        $region44: #{tpu_custom_call.1} parent=11 // pred_fallthru
          _
        // Predicated region
        $region45: #{tpu_custom_call.1} parent=11 // pred_check
          %p674 = pneg %p284
        $region46: #{tpu_custom_call.1} parent=11 // pred_check_branch
          %676 = sbr.rel (%p674) target = $region48
        $region47: #{tpu_custom_call.1} parent=11 // pred_region
          %s678 = ssub.s32 24576, 24576
          %679 = vsyncadd [#allocation15], %s678
          %s680 = sshll.u32 [#allocation14], 4
          %s681 = int_to_ptr.vmem [resolvable:$true] %s680
          %686 = dma.hbm_to_vmem [thread:$0]  %s10, 24576, %s681, [#allocation15], 128, 128, 8
        $region48: #{tpu_custom_call.1} parent=11 // pred_fallthru
          _
        // Predicated region
        $region49: #{tpu_custom_call.1} parent=11 // pred_check
          %p687 = pneg %p305
        $region50: #{tpu_custom_call.1} parent=11 // pred_check_branch
          %689 = sbr.rel (%p687) target = $region52
        $region51: #{tpu_custom_call.1} parent=11 // pred_region
          %s691 = ssub.s32 32, 32
          %692 = vsyncadd [#allocation15], %s691
          %s694 = sshll.u32 [#allocation16], 4
          %s695 = int_to_ptr.vmem [resolvable:$true] %s694
          %697 = dma.hbm_to_vmem [thread:$0]  %s11, 32, %s695, [#allocation15]
        $region52: #{tpu_custom_call.1} parent=11 // pred_fallthru
          _
        // Predicated region
        $region53: #{tpu_custom_call.1} parent=11 // pred_check
          %p698 = pneg %p326
        $region54: #{tpu_custom_call.1} parent=11 // pred_check_branch
          %700 = sbr.rel (%p698) target = $region56
        $region55: #{tpu_custom_call.1} parent=11 // pred_region
          _
        $region56: #{tpu_custom_call.1} parent=11 // pred_fallthru
          _
        // Predicated region
        $region57: #{tpu_custom_call.1} parent=11 // pred_check
          %p701 = pneg %p347
        $region58: #{tpu_custom_call.1} parent=11 // pred_check_branch
          %703 = sbr.rel (%p701) target = $region60
        $region59: #{tpu_custom_call.1} parent=11 // pred_region
          %s705 = ssub.s32 16, 16
          %706 = vsyncadd [#allocation18], %s705
          %s708 = sshll.u32 [#allocation17], 4
          %s709 = int_to_ptr.vmem [resolvable:$true] %s708
          %711 = dma.hbm_to_vmem [thread:$0]  %s13, 16, %s709, [#allocation18]
        $region60: #{tpu_custom_call.1} parent=11 // pred_fallthru
          _
        // Predicated region
        $region61: #{tpu_custom_call.1} parent=11 // pred_check
          %p712 = pneg %p368
        $region62: #{tpu_custom_call.1} parent=11 // pred_check_branch
          %714 = sbr.rel (%p712) target = $region64
        $region63: #{tpu_custom_call.1} parent=11 // pred_region
          _
        $region64: #{tpu_custom_call.1} parent=11 // pred_fallthru
          _
        // Predicated region
        $region65: #{tpu_custom_call.1} parent=11 // pred_check
          %p715 = pneg %p389
        $region66: #{tpu_custom_call.1} parent=11 // pred_check_branch
          %717 = sbr.rel (%p715) target = $region68
        $region67: #{tpu_custom_call.1} parent=11 // pred_region
          %s719 = ssub.s32 16, 16
          %720 = vsyncadd [#allocation18], %s719
          %s722 = sshll.u32 [#allocation19], 4
          %s723 = int_to_ptr.vmem [resolvable:$true] %s722
          %725 = dma.hbm_to_vmem [thread:$0]  %s15, 16, %s723, [#allocation18]
        $region68: #{tpu_custom_call.1} parent=11 // pred_fallthru
          _
        // Predicated region
        $region69: #{tpu_custom_call.1} parent=11 // pred_check
          %p726 = pneg %p410
        $region70: #{tpu_custom_call.1} parent=11 // pred_check_branch
          %728 = sbr.rel (%p726) target = $region72
        $region71: #{tpu_custom_call.1} parent=11 // pred_region
          _
        $region72: #{tpu_custom_call.1} parent=11 // pred_fallthru
          _
        // Predicated region
        $region73: #{tpu_custom_call.1} parent=11 // pred_check
          %p729 = pneg %p431
        $region74: #{tpu_custom_call.1} parent=11 // pred_check_branch
          %731 = sbr.rel (%p729) target = $region76
        $region75: #{tpu_custom_call.1} parent=11 // pred_region
          %s733 = ssub.s32 16, 16
          %734 = vsyncadd [#allocation21], %s733
          %s736 = sshll.u32 [#allocation20], 4
          %s737 = int_to_ptr.vmem [resolvable:$true] %s736
          %739 = dma.hbm_to_vmem [thread:$0]  %s17, 16, %s737, [#allocation21]
        $region76: #{tpu_custom_call.1} parent=11 // pred_fallthru
          _
        // Predicated region
        $region77: #{tpu_custom_call.1} parent=11 // pred_check
          %p740 = pneg %p452
        $region78: #{tpu_custom_call.1} parent=11 // pred_check_branch
          %742 = sbr.rel (%p740) target = $region80
        $region79: #{tpu_custom_call.1} parent=11 // pred_region
          _
        $region80: #{tpu_custom_call.1} parent=11 // pred_fallthru
          _
        // Predicated region
        $region81: #{tpu_custom_call.1} parent=11 // pred_check
          %p743 = pneg %p473
        $region82: #{tpu_custom_call.1} parent=11 // pred_check_branch
          %745 = sbr.rel (%p743) target = $region84
        $region83: #{tpu_custom_call.1} parent=11 // pred_region
          _
        $region84: #{tpu_custom_call.1} parent=11 // pred_fallthru
          _
        // Predicated region
        $region85: #{tpu_custom_call.1} parent=11 // pred_check
          %p746 = pneg %p494
        $region86: #{tpu_custom_call.1} parent=11 // pred_check_branch
          %748 = sbr.rel (%p746) target = $region88
        $region87: #{tpu_custom_call.1} parent=11 // pred_region
          %s750 = ssub.s32 192, 192
          %751 = vsyncadd [#allocation21], %s750
          %s752 = sshll.u32 [#allocation22], 4
          %s753 = int_to_ptr.vmem [resolvable:$true] %s752
          %758 = dma.hbm_to_vmem [thread:$0]  %s20, 192, %s753, [#allocation21], 64, 64, 4
        $region88: #{tpu_custom_call.1} parent=11 // pred_fallthru
          _
        // Predicated region
        $region89: #{tpu_custom_call.1} parent=11 // pred_check
          %p759 = pneg %p515
        $region90: #{tpu_custom_call.1} parent=11 // pred_check_branch
          %761 = sbr.rel (%p759) target = $region92
        $region91: #{tpu_custom_call.1} parent=11 // pred_region
          _
        $region92: #{tpu_custom_call.1} parent=11 // pred_fallthru
          _
        // Predicated region
        $region93: #{tpu_custom_call.1} parent=11 // pred_check
          %p762 = pneg %p536
        $region94: #{tpu_custom_call.1} parent=11 // pred_check_branch
          %764 = sbr.rel (%p762) target = $region96
        $region95: #{tpu_custom_call.1} parent=11 // pred_region
          _
        $region96: #{tpu_custom_call.1} parent=11 // pred_fallthru
          _
        // Predicated region
        $region97: #{tpu_custom_call.1} parent=11 // pred_check
          %p765 = pneg %p557
        $region98: #{tpu_custom_call.1} parent=11 // pred_check_branch
          %767 = sbr.rel (%p765) target = $region100
        $region99: #{tpu_custom_call.1} parent=11 // pred_region
          %s769 = ssub.s32 1088, 1088
          %770 = vsyncadd [#allocation24], %s769
          %s771 = sshll.u32 [#allocation23], 4
          %s772 = int_to_ptr.vmem [resolvable:$true] %s771
          %777 = dma.hbm_to_vmem [thread:$0]  %s23, 1088, %s772, [#allocation24], 64, 64, 4
        $region100: #{tpu_custom_call.1} parent=11 // pred_fallthru
          _
      $region12: #{tpu_custom_call.1} parent=5 // pred_fallthru
        _
      %p778 = scmp.lt.s32.totalorder %s43, 2
      // Predicated region
      $region101: #{tpu_custom_call.1} parent=5 // pred_check
        %p779 = pneg %p778
      $region102: #{tpu_custom_call.1} parent=5 // pred_check_branch
        %781 = sbr.rel (%p779) target = $region104
      $region103: #{tpu_custom_call.1} parent=5 // pred_region
        // Predicated region
        $region105: #{tpu_custom_call.1} parent=103 // pred_check
          %p782 = pneg %p63
        $region106: #{tpu_custom_call.1} parent=103 // pred_check_branch
          %784 = sbr.rel (%p782) target = $region108
        $region107: #{tpu_custom_call.1} parent=103 // pred_region
          %p785 = scmp.lt.s32.totalorder %s43, 1
          %s786 = scalar_select %p785, %s43, 1
          %s787 = smul.addr %s786, 17
          %s788 = smul.addr %s787, 8
          %s789 = scalar_lea.vmem %s0, %s788
        $region108: #{tpu_custom_call.1} parent=103 // pred_fallthru
          _
        // Predicated region
        $region109: #{tpu_custom_call.1} parent=103 // pred_check
          %p790 = pneg %p89
        $region110: #{tpu_custom_call.1} parent=103 // pred_check_branch
          %792 = sbr.rel (%p790) target = $region112
        $region111: #{tpu_custom_call.1} parent=103 // pred_region
          %s793 = sand.u32 %s79, 1
          %s794 = scalar_lea.sflag [#allocation3], %s793
          %s795 = sand.u32 %s79, 1
          %s796 = smul.addr %s795, 4
          %s797 = scalar_lea.vmem [#allocation2], %s796
          %s799 = ssub.s32 64, 64
          %800 = vsyncadd %s794, %s799
          %s801 = smul.addr %s43, 2
          %s802 = smul.addr %s801, 32
          %s803 = scalar_lea.hbm %s1, %s802
          %s805 = sshll.u32 %s797, 4
          %s806 = int_to_ptr.vmem [resolvable:$true] %s805
          %808 = dma.hbm_to_vmem [thread:$0]  %s803, 64, %s806, %s794
        $region112: #{tpu_custom_call.1} parent=103 // pred_fallthru
          _
      $region104: #{tpu_custom_call.1} parent=5 // pred_fallthru
        _
      %p809 = scmp.le.s32.totalorder 1, %s43
      %p810 = scmp.lt.s32.totalorder %s43, 3
      %p811 = pnand %p809, %p810
      %p812 = pneg %p811
      // Predicated region
      $region113: #{tpu_custom_call.1} parent=5 // pred_check
        _
      $region114: #{tpu_custom_call.1} parent=5 // pred_check_branch
        %814 = sbr.rel (%p811) target = $region116
      $region115: #{tpu_custom_call.1} parent=5 // pred_region
        %s815 = ssub.s32 %s43, 1
        %s816 = sand.u32 %s82, 1
        %s817 = scalar_lea.sflag [#allocation3], %s816
        %s818 = sand.u32 %s82, 1
        %s819 = smul.addr %s818, 4
        %s820 = scalar_lea.vmem [#allocation2], %s819
        // Predicated region
        $region117: #{tpu_custom_call.1} parent=115 // pred_check
          %p821 = pneg %p95
        $region118: #{tpu_custom_call.1} parent=115 // pred_check_branch
          %823 = sbr.rel (%p821) target = $region120
        $region119: #{tpu_custom_call.1} parent=115 // pred_region
          %824 = dma.done %s817, 64
        $region120: #{tpu_custom_call.1} parent=115 // pred_fallthru
          _
        // Predicated region
        $region121: #{tpu_custom_call.1} parent=115 // pred_check
          %p825 = pneg %p116
        $region122: #{tpu_custom_call.1} parent=115 // pred_check_branch
          %827 = sbr.rel (%p825) target = $region124
        $region123: #{tpu_custom_call.1} parent=115 // pred_region
          %828 = dma.done [#allocation6], 80
        $region124: #{tpu_custom_call.1} parent=115 // pred_fallthru
          _
        // Predicated region
        $region125: #{tpu_custom_call.1} parent=115 // pred_check
          %p829 = pneg %p137
        $region126: #{tpu_custom_call.1} parent=115 // pred_check_branch
          %831 = sbr.rel (%p829) target = $region128
        $region127: #{tpu_custom_call.1} parent=115 // pred_region
          %832 = dma.done [#allocation6], 16
        $region128: #{tpu_custom_call.1} parent=115 // pred_fallthru
          _
        // Predicated region
        $region129: #{tpu_custom_call.1} parent=115 // pred_check
          %p833 = pneg %p179
        $region130: #{tpu_custom_call.1} parent=115 // pred_check_branch
          %835 = sbr.rel (%p833) target = $region132
        $region131: #{tpu_custom_call.1} parent=115 // pred_region
          %836 = dma.done [#allocation9], 16
        $region132: #{tpu_custom_call.1} parent=115 // pred_fallthru
          _
        // Predicated region
        $region133: #{tpu_custom_call.1} parent=115 // pred_check
          %p837 = pneg %p221
        $region134: #{tpu_custom_call.1} parent=115 // pred_check_branch
          %839 = sbr.rel (%p837) target = $region136
        $region135: #{tpu_custom_call.1} parent=115 // pred_region
          %840 = dma.done [#allocation9], 32
        $region136: #{tpu_custom_call.1} parent=115 // pred_fallthru
          _
        // Predicated region
        $region137: #{tpu_custom_call.1} parent=115 // pred_check
          %p841 = pneg %p242
        $region138: #{tpu_custom_call.1} parent=115 // pred_check_branch
          %843 = sbr.rel (%p841) target = $region140
        $region139: #{tpu_custom_call.1} parent=115 // pred_region
          %844 = dma.done [#allocation12], 12288
        $region140: #{tpu_custom_call.1} parent=115 // pred_fallthru
          _
        // Predicated region
        $region141: #{tpu_custom_call.1} parent=115 // pred_check
          %p845 = pneg %p263
        $region142: #{tpu_custom_call.1} parent=115 // pred_check_branch
          %847 = sbr.rel (%p845) target = $region144
        $region143: #{tpu_custom_call.1} parent=115 // pred_region
          %848 = dma.done [#allocation12], 32
        $region144: #{tpu_custom_call.1} parent=115 // pred_fallthru
          _
        // Predicated region
        $region145: #{tpu_custom_call.1} parent=115 // pred_check
          %p849 = pneg %p284
        $region146: #{tpu_custom_call.1} parent=115 // pred_check_branch
          %851 = sbr.rel (%p849) target = $region148
        $region147: #{tpu_custom_call.1} parent=115 // pred_region
          %852 = dma.done [#allocation15], 24576
        $region148: #{tpu_custom_call.1} parent=115 // pred_fallthru
          _
        // Predicated region
        $region149: #{tpu_custom_call.1} parent=115 // pred_check
          %p853 = pneg %p305
        $region150: #{tpu_custom_call.1} parent=115 // pred_check_branch
          %855 = sbr.rel (%p853) target = $region152
        $region151: #{tpu_custom_call.1} parent=115 // pred_region
          %856 = dma.done [#allocation15], 32
        $region152: #{tpu_custom_call.1} parent=115 // pred_fallthru
          _
        // Predicated region
        $region153: #{tpu_custom_call.1} parent=115 // pred_check
          %p857 = pneg %p347
        $region154: #{tpu_custom_call.1} parent=115 // pred_check_branch
          %859 = sbr.rel (%p857) target = $region156
        $region155: #{tpu_custom_call.1} parent=115 // pred_region
          %860 = dma.done [#allocation18], 16
        $region156: #{tpu_custom_call.1} parent=115 // pred_fallthru
          _
        // Predicated region
        $region157: #{tpu_custom_call.1} parent=115 // pred_check
          %p861 = pneg %p389
        $region158: #{tpu_custom_call.1} parent=115 // pred_check_branch
          %863 = sbr.rel (%p861) target = $region160
        $region159: #{tpu_custom_call.1} parent=115 // pred_region
          %864 = dma.done [#allocation18], 16
        $region160: #{tpu_custom_call.1} parent=115 // pred_fallthru
          _
        // Predicated region
        $region161: #{tpu_custom_call.1} parent=115 // pred_check
          %p865 = pneg %p431
        $region162: #{tpu_custom_call.1} parent=115 // pred_check_branch
          %867 = sbr.rel (%p865) target = $region164
        $region163: #{tpu_custom_call.1} parent=115 // pred_region
          %868 = dma.done [#allocation21], 16
        $region164: #{tpu_custom_call.1} parent=115 // pred_fallthru
          _
        // Predicated region
        $region165: #{tpu_custom_call.1} parent=115 // pred_check
          %p869 = pneg %p494
        $region166: #{tpu_custom_call.1} parent=115 // pred_check_branch
          %871 = sbr.rel (%p869) target = $region168
        $region167: #{tpu_custom_call.1} parent=115 // pred_region
          %872 = dma.done [#allocation21], 192
        $region168: #{tpu_custom_call.1} parent=115 // pred_fallthru
          _
        // Predicated region
        $region169: #{tpu_custom_call.1} parent=115 // pred_check
          %p873 = pneg %p557
        $region170: #{tpu_custom_call.1} parent=115 // pred_check_branch
          %875 = sbr.rel (%p873) target = $region172
        $region171: #{tpu_custom_call.1} parent=115 // pred_region
          %876 = dma.done [#allocation24], 1088
        $region172: #{tpu_custom_call.1} parent=115 // pred_fallthru
          _
        %p877 = scmp.lt.s32.totalorder %s48, 1
        %s878 = scalar_select %p877, %s48, 1
        %s879 = smul.addr %s878, 17
        %s880 = smul.addr %s879, 8
        %s881 = scalar_lea.vmem %s0, %s880
        %p882 = pneg %p69
        %p883 = pneg %p66
        %s884 = sand.u32 %s82, 1
        %s885 = scalar_lea.sflag [#allocation3], %s884
        %s886 = sand.u32 %s82, 1
        %s887 = smul.addr %s886, 4
        %s888 = scalar_lea.vmem [#allocation2], %s887
        %p889 = pneg %p95
        %p890 = pneg %p92
        %p891 = pneg %p116
        %p892 = pneg %p113
        %p893 = pneg %p137
        %p894 = pneg %p134
        %p895 = pneg %p158
        %p896 = pneg %p155
        %p897 = pneg %p179
        %p898 = pneg %p176
        %p899 = pneg %p200
        %p900 = pneg %p197
        %p901 = pneg %p221
        %p902 = pneg %p218
        %p903 = pneg %p242
        %p904 = pneg %p239
        %p905 = pneg %p263
        %p906 = pneg %p260
        %p907 = pneg %p284
        %p908 = pneg %p281
        %p909 = pneg %p305
        %p910 = pneg %p302
        %p911 = pneg %p326
        %p912 = pneg %p323
        %p913 = pneg %p347
        %p914 = pneg %p344
        %p915 = pneg %p368
        %p916 = pneg %p365
        %p917 = pneg %p389
        %p918 = pneg %p386
        %p919 = pneg %p410
        %p920 = pneg %p407
        %p921 = pneg %p431
        %p922 = pneg %p428
        %p923 = pneg %p452
        %p924 = pneg %p449
        %p925 = pneg %p473
        %p926 = pneg %p470
        %p927 = pneg %p494
        %p928 = pneg %p491
        %p929 = pneg %p515
        %p930 = pneg %p512
        %p931 = pneg %p536
        %p932 = pneg %p533
        %p933 = pneg %p557
        %p934 = pneg %p554
        %p935 = pneg %p583
        %p936 = pneg %p580
        %s937 = sand.u32 %s570, 1
        %s938 = scalar_lea.sflag [#allocation4], %s937
        %s939 = sand.u32 %s570, 1
        %s940 = smul.addr %s939, 2
        %s941 = scalar_lea.vmem [#allocation25], %s940
        %p942 = scmp.lt.s32.totalorder %s48, 1
        %s943 = scalar_select %p942, %s48, 1
        %s944 = smul.addr %s943, 17
        %s945 = smul.addr %s944, 8
        %s946 = scalar_lea.vmem %s0, %s945
        %v948 = vld [vmem:[%s946] sm:$0xff]
        %v949 = vld [vmem:[%s946 + $0x8] sm:$0xff]
        %v950 = vld [vmem:[%s946 + $0x10] sm:$0xff]
        %v951 = vld [vmem:[%s946 + $0x18] sm:$0xff]
        %v952 = vld [vmem:[%s946 + $0x20] sm:$0xff]
        %v953 = vld [vmem:[%s946 + $0x28] sm:$0xff]
        %v954 = vld [vmem:[%s946 + $0x30] sm:$0xff]
        %v955 = vld [vmem:[%s946 + $0x38] sm:$0xff]
        %v956 = vld [vmem:[%s946 + $0x40] sm:$0xff]
        %v957 = vld [vmem:[%s946 + $0x48] sm:$0xff]
        %v958 = vld [vmem:[%s946 + $0x50] sm:$0xff]
        %v959 = vld [vmem:[%s946 + $0x58] sm:$0xff]
        %v960 = vld [vmem:[%s946 + $0x60] sm:$0xff]
        %v961 = vld [vmem:[%s946 + $0x68] sm:$0xff]
        %v962 = vld [vmem:[%s946 + $0x70] sm:$0xff]
        %v963 = vld [vmem:[%s946 + $0x78] sm:$0xff]
        %v964 = vld [vmem:[%s946 + $0x80] sm:$0xff]
        %v965 = vpack.c.bf16 %v949, %v948
        %v966 = vpack.c.bf16 %v951, %v950
        %v967 = vpack.c.bf16 %v953, %v952
        %v968 = vpack.c.bf16 %v955, %v954
        %v969 = vpack.c.bf16 %v957, %v956
        %v970 = vpack.c.bf16 %v959, %v958
        %v971 = vpack.c.bf16 %v961, %v960
        %v972 = vpack.c.bf16 %v963, %v962
        %v973 = vpack.c.bf16 %v964, %v964
        %vm983 = vcmask 1040384
        %v984 = vrot.slane %v965, 7
        %v985 = vrot.slane %v966, 7
        %v986 = vsel %vm983, %v984, %v985
        %v987 = vrot.slane %v967, 7
        %v988 = vsel %vm983, %v985, %v987
        %v989 = vrot.slane %v968, 7
        %v990 = vsel %vm983, %v987, %v989
        %v991 = vrot.slane %v969, 7
        %v992 = vsel %vm983, %v989, %v991
        %v993 = vrot.slane %v970, 7
        %v994 = vsel %vm983, %v991, %v993
        %v995 = vrot.slane %v971, 7
        %v996 = vsel %vm983, %v993, %v995
        %v997 = vrot.slane %v972, 7
        %v998 = vsel %vm983, %v995, %v997
        %v999 = vrot.slane %v973, 7
        %v1000 = vsel %vm983, %v997, %v999
        %vm1001 = vcmask 1040384
        %v1004 = vsel %vm1001, 0, %v984
        %vm1005 = vcmask 1044480
        %v1007 = vsel %vm1005, %v1000, 0
        %v1008 = vld [vmem:[#allocation5] sm:$0x1]
        %s1009 = scalar_lea.vmem [#allocation5], 1
        %v1010 = vld [vmem:[%s1009] sm:$0x1]
        %vm1011 = vsmask.f32 7424
        %v1012 = vshrl.u32 %v1004, 16
        %v1014 = vshll.u32 %v1004, 16
        %v1016 = vrot.slane %v1014, 1
        %v1017 = vor.u32 %v1012, %v1016
        %v1019 = vshll.u32 %v986, 16
        %v1021 = vrot.slane %v1019, 1
        %v1022 = vsel %vm1011, %v1017, %v1021
        %v1023 = vshrl.u32 %v986, 16
        %v1025 = vor.u32 %v1023, %v1021
        %v1027 = vshll.u32 %v988, 16
        %v1029 = vrot.slane %v1027, 1
        %v1030 = vsel %vm1011, %v1025, %v1029
        %v1031 = vshrl.u32 %v988, 16
        %v1033 = vor.u32 %v1031, %v1029
        %v1035 = vshll.u32 %v990, 16
        %v1037 = vrot.slane %v1035, 1
        %v1038 = vsel %vm1011, %v1033, %v1037
        %v1039 = vshrl.u32 %v990, 16
        %v1041 = vor.u32 %v1039, %v1037
        %v1043 = vshll.u32 %v992, 16
        %v1045 = vrot.slane %v1043, 1
        %v1046 = vsel %vm1011, %v1041, %v1045
        %v1047 = vshrl.u32 %v992, 16
        %v1049 = vor.u32 %v1047, %v1045
        %v1051 = vshll.u32 %v994, 16
        %v1053 = vrot.slane %v1051, 1
        %v1054 = vsel %vm1011, %v1049, %v1053
        %v1055 = vshrl.u32 %v994, 16
        %v1057 = vor.u32 %v1055, %v1053
        %v1059 = vshll.u32 %v996, 16
        %v1061 = vrot.slane %v1059, 1
        %v1062 = vsel %vm1011, %v1057, %v1061
        %v1063 = vshrl.u32 %v996, 16
        %v1065 = vor.u32 %v1063, %v1061
        %v1067 = vshll.u32 %v998, 16
        %v1069 = vrot.slane %v1067, 1
        %v1070 = vsel %vm1011, %v1065, %v1069
        %v1071 = vshrl.u32 %v998, 16
        %v1073 = vor.u32 %v1071, %v1069
        %v1074 = vshll.u32 %v1007, 16
        %v1076 = vrot.slane %v1074, 1
        %v1077 = vsel %vm1011, %v1073, %v1076
        %v1078 = vshrl.u32 %v1007, 16
        %v1080 = vor.u32 %v1078, %v1076
        %vm1081 = vcmask 15360
        %v1083 = vsel %vm1081, %v1022, 0
        %v1086 = vsel %vm1081, %v1030, 0
        %v1089 = vsel %vm1081, %v1038, 0
        %v1092 = vsel %vm1081, %v1046, 0
        %v1095 = vsel %vm1081, %v1054, 0
        %v1098 = vsel %vm1081, %v1062, 0
        %v1101 = vsel %vm1081, %v1070, 0
        %v1104 = vsel %vm1081, %v1077, 0
        %v1107 = vsel %vm1081, %v1080, 0
        %v1110 = vsel %vm1001, %v1010, 0
        %1112 = vmatprep.subr.bf16.mxu0 0
        %1113 = vmatpush1.bf16.msra.mxu0 %v1110
        %1114 = vmatprep.subr.bf16.mxu0 0
        %1115 = vmatpush1.bf16.msra.mxu0 0
        %1116 = vmatprep.subr.bf16.mxu0 0
        %1117 = vmatpush1.bf16.msra.mxu0 0
        %1118 = vmatprep.subr.bf16.mxu0 0
        %1119 = vmatpush1.bf16.msra.mxu0 0
        %1120 = vmatprep.subr.bf16.mxu0 0
        %1121 = vmatpush1.bf16.msra.mxu0 0
        %1122 = vmatprep.subr.bf16.mxu0 0
        %1123 = vmatpush1.bf16.msra.mxu0 0
        %1124 = vmatprep.subr.bf16.mxu0 0
        %1125 = vmatpush1.bf16.msra.mxu0 0
        %1126 = vmatprep.subr.bf16.mxu0 0
        %1127 = vmatpush1.bf16.msra.mxu0 0
        %1128 = vmatprep.subr.bf16.mxu0 0
        %1129 = vmatpush1.bf16.msra.mxu0 0
        %1130 = vmatprep.subr.bf16.mxu0 0
        %1131 = vmatpush1.bf16.msra.mxu0 0
        %1132 = vmatprep.subr.bf16.mxu0 0
        %1133 = vmatpush1.bf16.msra.mxu0 0
        %1134 = vmatprep.subr.bf16.mxu0 0
        %1135 = vmatpush1.bf16.msra.mxu0 0
        %1136 = vmatprep.subr.bf16.mxu0 0
        %1137 = vmatpush1.bf16.msra.mxu0 0
        %1138 = vmatprep.subr.bf16.mxu0 0
        %1139 = vmatpush1.bf16.msra.mxu0 0
        %1140 = vmatprep.subr.bf16.mxu0 0
        %1141 = vmatpush1.bf16.msra.mxu0 0
        %1142 = vmatprep.subr.bf16.mxu0 0
        %1143 = vmatpush1.bf16.msra.mxu0 0
        %1144 = vmatprep.mubr.bf16.mxu0 0
        %1145 = vmatmul.mubr.bf16.gmra.mrb[0].mxu0 %v1083
        %v1146 = vpop.f32.mrb[0].mxu0
        %v1147 = vadd.f32 0.0, %v1146
        %v1148 = vpop.f32.mrb[0].mxu0
        %v1149 = vpop.f32.mrb[0].mxu0
        %v1150 = vadd.f32 0.0, %v1149
        %v1151 = vpop.f32.mrb[0].mxu0
        %1152 = vmatprep.mubr.bf16.mxu0 0
        %1153 = vmatmul.mubr.bf16.gmra.mrb[0].mxu0 %v1086
        %v1154 = vpop.f32.mrb[0].mxu0
        %v1155 = vadd.f32 0.0, %v1154
        %v1156 = vpop.f32.mrb[0].mxu0
        %v1157 = vpop.f32.mrb[0].mxu0
        %v1158 = vadd.f32 0.0, %v1157
        %v1159 = vpop.f32.mrb[0].mxu0
        %1160 = vmatprep.mubr.bf16.mxu0 0
        %1161 = vmatmul.mubr.bf16.gmra.mrb[0].mxu0 %v1089
        %v1162 = vpop.f32.mrb[0].mxu0
        %v1163 = vadd.f32 0.0, %v1162
        %v1164 = vpop.f32.mrb[0].mxu0
        %v1165 = vpop.f32.mrb[0].mxu0
        %v1166 = vadd.f32 0.0, %v1165
        %v1167 = vpop.f32.mrb[0].mxu0
        %1168 = vmatprep.mubr.bf16.mxu0 0
        %1169 = vmatmul.mubr.bf16.gmra.mrb[0].mxu0 %v1092
        %v1170 = vpop.f32.mrb[0].mxu0
        %v1171 = vadd.f32 0.0, %v1170
        %v1172 = vpop.f32.mrb[0].mxu0
        %v1173 = vpop.f32.mrb[0].mxu0
        %v1174 = vadd.f32 0.0, %v1173
        %v1175 = vpop.f32.mrb[0].mxu0
        %1176 = vmatprep.mubr.bf16.mxu0 0
        %1177 = vmatmul.mubr.bf16.gmra.mrb[0].mxu0 %v1095
        %v1178 = vpop.f32.mrb[0].mxu0
        %v1179 = vadd.f32 0.0, %v1178
        %v1180 = vpop.f32.mrb[0].mxu0
        %v1181 = vpop.f32.mrb[0].mxu0
        %v1182 = vadd.f32 0.0, %v1181
        %v1183 = vpop.f32.mrb[0].mxu0
        %1184 = vmatprep.mubr.bf16.mxu0 0
        %1185 = vmatmul.mubr.bf16.gmra.mrb[0].mxu0 %v1098
        %v1186 = vpop.f32.mrb[0].mxu0
        %v1187 = vadd.f32 0.0, %v1186
        %v1188 = vpop.f32.mrb[0].mxu0
        %v1189 = vpop.f32.mrb[0].mxu0
        %v1190 = vadd.f32 0.0, %v1189
        %v1191 = vpop.f32.mrb[0].mxu0
        %1192 = vmatprep.mubr.bf16.mxu0 0
        %1193 = vmatmul.mubr.bf16.gmra.mrb[0].mxu0 %v1101
        %v1194 = vpop.f32.mrb[0].mxu0
        %v1195 = vadd.f32 0.0, %v1194
        %v1196 = vpop.f32.mrb[0].mxu0
        %v1197 = vpop.f32.mrb[0].mxu0
        %v1198 = vadd.f32 0.0, %v1197
        %v1199 = vpop.f32.mrb[0].mxu0
        %1200 = vmatprep.mubr.bf16.mxu0 0
        %1201 = vmatmul.mubr.bf16.gmra.mrb[0].mxu0 %v1104
        %v1202 = vpop.f32.mrb[0].mxu0
        %v1203 = vadd.f32 0.0, %v1202
        %v1204 = vpop.f32.mrb[0].mxu0
        %v1205 = vpop.f32.mrb[0].mxu0
        %v1206 = vadd.f32 0.0, %v1205
        %v1207 = vpop.f32.mrb[0].mxu0
        %1208 = vmatprep.mubr.bf16.mxu0 0
        %1209 = vmatmul.mubr.bf16.gmra.mrb[0].mxu0 %v1107
        %v1210 = vpop.f32.mrb[0].mxu0
        %v1211 = vadd.f32 0.0, %v1210
        %v1212 = vpop.f32.mrb[0].mxu0
        %v1213 = vpop.f32.mrb[0].mxu0
        %v1214 = vpop.f32.mrb[0].mxu0
        %1215 = vdwg.mxu0
        %v1216 = vsel %vm1081, %v1004, 0
        %v1218 = vsel %vm1081, %v986, 0
        %v1220 = vsel %vm1081, %v988, 0
        %v1222 = vsel %vm1081, %v990, 0
        %v1224 = vsel %vm1081, %v992, 0
        %v1226 = vsel %vm1081, %v994, 0
        %v1228 = vsel %vm1081, %v996, 0
        %v1230 = vsel %vm1081, %v998, 0
        %v1232 = vsel %vm1081, %v1007, 0
        %v1235 = vsel %vm1001, %v1008, 0
        %1237 = vmatprep.subr.bf16.mxu0 0
        %1238 = vmatpush1.bf16.msra.mxu0 %v1235
        %1239 = vmatprep.subr.bf16.mxu0 0
        %1240 = vmatpush1.bf16.msra.mxu0 0
        %1241 = vmatprep.subr.bf16.mxu0 0
        %1242 = vmatpush1.bf16.msra.mxu0 0
        %1243 = vmatprep.subr.bf16.mxu0 0
        %1244 = vmatpush1.bf16.msra.mxu0 0
        %1245 = vmatprep.subr.bf16.mxu0 0
        %1246 = vmatpush1.bf16.msra.mxu0 0
        %1247 = vmatprep.subr.bf16.mxu0 0
        %1248 = vmatpush1.bf16.msra.mxu0 0
        %1249 = vmatprep.subr.bf16.mxu0 0
        %1250 = vmatpush1.bf16.msra.mxu0 0
        %1251 = vmatprep.subr.bf16.mxu0 0
        %1252 = vmatpush1.bf16.msra.mxu0 0
        %1253 = vmatprep.subr.bf16.mxu0 0
        %1254 = vmatpush1.bf16.msra.mxu0 0
        %1255 = vmatprep.subr.bf16.mxu0 0
        %1256 = vmatpush1.bf16.msra.mxu0 0
        %1257 = vmatprep.subr.bf16.mxu0 0
        %1258 = vmatpush1.bf16.msra.mxu0 0
        %1259 = vmatprep.subr.bf16.mxu0 0
        %1260 = vmatpush1.bf16.msra.mxu0 0
        %1261 = vmatprep.subr.bf16.mxu0 0
        %1262 = vmatpush1.bf16.msra.mxu0 0
        %1263 = vmatprep.subr.bf16.mxu0 0
        %1264 = vmatpush1.bf16.msra.mxu0 0
        %1265 = vmatprep.subr.bf16.mxu0 0
        %1266 = vmatpush1.bf16.msra.mxu0 0
        %1267 = vmatprep.subr.bf16.mxu0 0
        %1268 = vmatpush1.bf16.msra.mxu0 0
        %1269 = vmatprep.mubr.bf16.mxu0 0
        %1270 = vmatmul.mubr.bf16.gmra.mrb[0].mxu0 %v1216
        %v1271 = vpop.f32.mrb[0].mxu0
        %v1272 = vadd.f32 %v1147, %v1271
        %v1273 = vpop.f32.mrb[0].mxu0
        %v1274 = vpop.f32.mrb[0].mxu0
        %v1275 = vadd.f32 %v1150, %v1274
        %v1276 = vpop.f32.mrb[0].mxu0
        %1277 = vmatprep.mubr.bf16.mxu0 0
        %1278 = vmatmul.mubr.bf16.gmra.mrb[0].mxu0 %v1218
        %v1279 = vpop.f32.mrb[0].mxu0
        %v1280 = vadd.f32 %v1155, %v1279
        %v1281 = vpop.f32.mrb[0].mxu0
        %v1282 = vpop.f32.mrb[0].mxu0
        %v1283 = vadd.f32 %v1158, %v1282
        %v1284 = vpop.f32.mrb[0].mxu0
        %1285 = vmatprep.mubr.bf16.mxu0 0
        %1286 = vmatmul.mubr.bf16.gmra.mrb[0].mxu0 %v1220
        %v1287 = vpop.f32.mrb[0].mxu0
        %v1288 = vadd.f32 %v1163, %v1287
        %v1289 = vpop.f32.mrb[0].mxu0
        %v1290 = vpop.f32.mrb[0].mxu0
        %v1291 = vadd.f32 %v1166, %v1290
        %v1292 = vpop.f32.mrb[0].mxu0
        %1293 = vmatprep.mubr.bf16.mxu0 0
        %1294 = vmatmul.mubr.bf16.gmra.mrb[0].mxu0 %v1222
        %v1295 = vpop.f32.mrb[0].mxu0
        %v1296 = vadd.f32 %v1171, %v1295
        %v1297 = vpop.f32.mrb[0].mxu0
        %v1298 = vpop.f32.mrb[0].mxu0
        %v1299 = vadd.f32 %v1174, %v1298
        %v1300 = vpop.f32.mrb[0].mxu0
        %1301 = vmatprep.mubr.bf16.mxu0 0
        %1302 = vmatmul.mubr.bf16.gmra.mrb[0].mxu0 %v1224
        %v1303 = vpop.f32.mrb[0].mxu0
        %v1304 = vadd.f32 %v1179, %v1303
        %v1305 = vpop.f32.mrb[0].mxu0
        %v1306 = vpop.f32.mrb[0].mxu0
        %v1307 = vadd.f32 %v1182, %v1306
        %v1308 = vpop.f32.mrb[0].mxu0
        %1309 = vmatprep.mubr.bf16.mxu0 0
        %1310 = vmatmul.mubr.bf16.gmra.mrb[0].mxu0 %v1226
        %v1311 = vpop.f32.mrb[0].mxu0
        %v1312 = vadd.f32 %v1187, %v1311
        %v1313 = vpop.f32.mrb[0].mxu0
        %v1314 = vpop.f32.mrb[0].mxu0
        %v1315 = vadd.f32 %v1190, %v1314
        %v1316 = vpop.f32.mrb[0].mxu0
        %1317 = vmatprep.mubr.bf16.mxu0 0
        %1318 = vmatmul.mubr.bf16.gmra.mrb[0].mxu0 %v1228
        %v1319 = vpop.f32.mrb[0].mxu0
        %v1320 = vadd.f32 %v1195, %v1319
        %v1321 = vpop.f32.mrb[0].mxu0
        %v1322 = vpop.f32.mrb[0].mxu0
        %v1323 = vadd.f32 %v1198, %v1322
        %v1324 = vpop.f32.mrb[0].mxu0
        %1325 = vmatprep.mubr.bf16.mxu0 0
        %1326 = vmatmul.mubr.bf16.gmra.mrb[0].mxu0 %v1230
        %v1327 = vpop.f32.mrb[0].mxu0
        %v1328 = vadd.f32 %v1203, %v1327
        %v1329 = vpop.f32.mrb[0].mxu0
        %v1330 = vpop.f32.mrb[0].mxu0
        %v1331 = vadd.f32 %v1206, %v1330
        %v1332 = vpop.f32.mrb[0].mxu0
        %1333 = vmatprep.mubr.bf16.mxu0 0
        %1334 = vmatmul.mubr.bf16.gmra.mrb[0].mxu0 %v1232
        %v1335 = vpop.f32.mrb[0].mxu0
        %v1336 = vadd.f32 %v1211, %v1335
        %v1337 = vpop.f32.mrb[0].mxu0
        %v1338 = vpop.f32.mrb[0].mxu0
        %v1339 = vpop.f32.mrb[0].mxu0
        %1340 = vdwg.mxu0
        %s1341 = scalar_lea.vmem [#allocation5], 2
        %v1342 = vld [vmem:[%s1341] sm:$0x1]
        %v1344 = vsel %vm1081, %v965, 0
        %v1347 = vsel %vm1081, %v966, 0
        %v1350 = vsel %vm1081, %v967, 0
        %v1353 = vsel %vm1081, %v968, 0
        %v1356 = vsel %vm1081, %v969, 0
        %v1359 = vsel %vm1081, %v970, 0
        %v1362 = vsel %vm1081, %v971, 0
        %v1365 = vsel %vm1081, %v972, 0
        %v1368 = vsel %vm1081, %v973, 0
        %v1371 = vsel %vm1001, %v1342, 0
        %1373 = vmatprep.subr.bf16.mxu0 0
        %1374 = vmatpush1.bf16.msra.mxu0 %v1371
        %1375 = vmatprep.subr.bf16.mxu0 0
        %1376 = vmatpush1.bf16.msra.mxu0 0
        %1377 = vmatprep.subr.bf16.mxu0 0
        %1378 = vmatpush1.bf16.msra.mxu0 0
        %1379 = vmatprep.subr.bf16.mxu0 0
        %1380 = vmatpush1.bf16.msra.mxu0 0
        %1381 = vmatprep.subr.bf16.mxu0 0
        %1382 = vmatpush1.bf16.msra.mxu0 0
        %1383 = vmatprep.subr.bf16.mxu0 0
        %1384 = vmatpush1.bf16.msra.mxu0 0
        %1385 = vmatprep.subr.bf16.mxu0 0
        %1386 = vmatpush1.bf16.msra.mxu0 0
        %1387 = vmatprep.subr.bf16.mxu0 0
        %1388 = vmatpush1.bf16.msra.mxu0 0
        %1389 = vmatprep.subr.bf16.mxu0 0
        %1390 = vmatpush1.bf16.msra.mxu0 0
        %1391 = vmatprep.subr.bf16.mxu0 0
        %1392 = vmatpush1.bf16.msra.mxu0 0
        %1393 = vmatprep.subr.bf16.mxu0 0
        %1394 = vmatpush1.bf16.msra.mxu0 0
        %1395 = vmatprep.subr.bf16.mxu0 0
        %1396 = vmatpush1.bf16.msra.mxu0 0
        %1397 = vmatprep.subr.bf16.mxu0 0
        %1398 = vmatpush1.bf16.msra.mxu0 0
        %1399 = vmatprep.subr.bf16.mxu0 0
        %1400 = vmatpush1.bf16.msra.mxu0 0
        %1401 = vmatprep.subr.bf16.mxu0 0
        %1402 = vmatpush1.bf16.msra.mxu0 0
        %1403 = vmatprep.subr.bf16.mxu0 0
        %1404 = vmatpush1.bf16.msra.mxu0 0
        %1405 = vmatprep.mubr.bf16.mxu0 0
        %1406 = vmatmul.mubr.bf16.gmra.mrb[0].mxu0 %v1344
        %v1407 = vpop.f32.mrb[0].mxu0
        %v1408 = vadd.f32 0.0, %v1407
        %v1409 = vpop.f32.mrb[0].mxu0
        %v1410 = vpop.f32.mrb[0].mxu0
        %v1411 = vadd.f32 0.0, %v1410
        %v1412 = vpop.f32.mrb[0].mxu0
        %1413 = vmatprep.mubr.bf16.mxu0 0
        %1414 = vmatmul.mubr.bf16.gmra.mrb[0].mxu0 %v1347
        %v1415 = vpop.f32.mrb[0].mxu0
        %v1416 = vadd.f32 0.0, %v1415
        %v1417 = vpop.f32.mrb[0].mxu0
        %v1418 = vpop.f32.mrb[0].mxu0
        %v1419 = vadd.f32 0.0, %v1418
        %v1420 = vpop.f32.mrb[0].mxu0
        %1421 = vmatprep.mubr.bf16.mxu0 0
        %1422 = vmatmul.mubr.bf16.gmra.mrb[0].mxu0 %v1350
        %v1423 = vpop.f32.mrb[0].mxu0
        %v1424 = vadd.f32 0.0, %v1423
        %v1425 = vpop.f32.mrb[0].mxu0
        %v1426 = vpop.f32.mrb[0].mxu0
        %v1427 = vadd.f32 0.0, %v1426
        %v1428 = vpop.f32.mrb[0].mxu0
        %1429 = vmatprep.mubr.bf16.mxu0 0
        %1430 = vmatmul.mubr.bf16.gmra.mrb[0].mxu0 %v1353
        %v1431 = vpop.f32.mrb[0].mxu0
        %v1432 = vadd.f32 0.0, %v1431
        %v1433 = vpop.f32.mrb[0].mxu0
        %v1434 = vpop.f32.mrb[0].mxu0
        %v1435 = vadd.f32 0.0, %v1434
        %v1436 = vpop.f32.mrb[0].mxu0
        %1437 = vmatprep.mubr.bf16.mxu0 0
        %1438 = vmatmul.mubr.bf16.gmra.mrb[0].mxu0 %v1356
        %v1439 = vpop.f32.mrb[0].mxu0
        %v1440 = vadd.f32 0.0, %v1439
        %v1441 = vpop.f32.mrb[0].mxu0
        %v1442 = vpop.f32.mrb[0].mxu0
        %v1443 = vadd.f32 0.0, %v1442
        %v1444 = vpop.f32.mrb[0].mxu0
        %1445 = vmatprep.mubr.bf16.mxu0 0
        %1446 = vmatmul.mubr.bf16.gmra.mrb[0].mxu0 %v1359
        %v1447 = vpop.f32.mrb[0].mxu0
        %v1448 = vadd.f32 0.0, %v1447
        %v1449 = vpop.f32.mrb[0].mxu0
        %v1450 = vpop.f32.mrb[0].mxu0
        %v1451 = vadd.f32 0.0, %v1450
        %v1452 = vpop.f32.mrb[0].mxu0
        %1453 = vmatprep.mubr.bf16.mxu0 0
        %1454 = vmatmul.mubr.bf16.gmra.mrb[0].mxu0 %v1362
        %v1455 = vpop.f32.mrb[0].mxu0
        %v1456 = vadd.f32 0.0, %v1455
        %v1457 = vpop.f32.mrb[0].mxu0
        %v1458 = vpop.f32.mrb[0].mxu0
        %v1459 = vadd.f32 0.0, %v1458
        %v1460 = vpop.f32.mrb[0].mxu0
        %1461 = vmatprep.mubr.bf16.mxu0 0
        %1462 = vmatmul.mubr.bf16.gmra.mrb[0].mxu0 %v1365
        %v1463 = vpop.f32.mrb[0].mxu0
        %v1464 = vadd.f32 0.0, %v1463
        %v1465 = vpop.f32.mrb[0].mxu0
        %v1466 = vpop.f32.mrb[0].mxu0
        %v1467 = vadd.f32 0.0, %v1466
        %v1468 = vpop.f32.mrb[0].mxu0
        %1469 = vmatprep.mubr.bf16.mxu0 0
        %1470 = vmatmul.mubr.bf16.gmra.mrb[0].mxu0 %v1368
        %v1471 = vpop.f32.mrb[0].mxu0
        %v1472 = vadd.f32 0.0, %v1471
        %v1473 = vpop.f32.mrb[0].mxu0
        %v1474 = vpop.f32.mrb[0].mxu0
        %v1475 = vpop.f32.mrb[0].mxu0
        %1476 = vdwg.mxu0
        %v1477 = vadd.f32 %v1272, %v1408
        %v1478 = vadd.f32 %v1275, %v1411
        %v1479 = vadd.f32 %v1280, %v1416
        %v1480 = vadd.f32 %v1283, %v1419
        %v1481 = vadd.f32 %v1288, %v1424
        %v1482 = vadd.f32 %v1291, %v1427
        %v1483 = vadd.f32 %v1296, %v1432
        %v1484 = vadd.f32 %v1299, %v1435
        %v1485 = vadd.f32 %v1304, %v1440
        %v1486 = vadd.f32 %v1307, %v1443
        %v1487 = vadd.f32 %v1312, %v1448
        %v1488 = vadd.f32 %v1315, %v1451
        %v1489 = vadd.f32 %v1320, %v1456
        %v1490 = vadd.f32 %v1323, %v1459
        %v1491 = vadd.f32 %v1328, %v1464
        %v1492 = vadd.f32 %v1331, %v1467
        %v1493 = vadd.f32 %v1336, %v1472
        %s1494 = scalar_lea.vmem [#allocation5], 3
        %v1495 = vld [vmem:[%s1494] sm:$0x1]
        %vm1496 = vsmask.f32 6400
        %v1497 = vrot.slane %v1012, 1
        %v1498 = vrot.slane %v1014, 2
        %v1499 = vor.u32 %v1497, %v1498
        %v1500 = vrot.slane %v1023, 1
        %v1501 = vrot.slane %v1019, 2
        %v1502 = vor.u32 %v1500, %v1501
        %v1503 = vsel %vm1496, %v1499, %v1502
        %v1504 = vrot.slane %v1031, 1
        %v1505 = vrot.slane %v1027, 2
        %v1506 = vor.u32 %v1504, %v1505
        %v1507 = vsel %vm1496, %v1502, %v1506
        %v1508 = vrot.slane %v1039, 1
        %v1509 = vrot.slane %v1035, 2
        %v1510 = vor.u32 %v1508, %v1509
        %v1511 = vsel %vm1496, %v1506, %v1510
        %v1512 = vrot.slane %v1047, 1
        %v1513 = vrot.slane %v1043, 2
        %v1514 = vor.u32 %v1512, %v1513
        %v1515 = vsel %vm1496, %v1510, %v1514
        %v1516 = vrot.slane %v1055, 1
        %v1517 = vrot.slane %v1051, 2
        %v1518 = vor.u32 %v1516, %v1517
        %v1519 = vsel %vm1496, %v1514, %v1518
        %v1520 = vrot.slane %v1063, 1
        %v1521 = vrot.slane %v1059, 2
        %v1522 = vor.u32 %v1520, %v1521
        %v1523 = vsel %vm1496, %v1518, %v1522
        %v1524 = vrot.slane %v1071, 1
        %v1525 = vrot.slane %v1067, 2
        %v1526 = vor.u32 %v1524, %v1525
        %v1527 = vsel %vm1496, %v1522, %v1526
        %v1528 = vrot.slane %v1078, 1
        %v1529 = vrot.slane %v1074, 2
        %v1530 = vor.u32 %v1528, %v1529
        %v1531 = vsel %vm1496, %v1526, %v1530
        %v1533 = vsel %vm1081, %v1503, 0
        %v1536 = vsel %vm1081, %v1507, 0
        %v1539 = vsel %vm1081, %v1511, 0
        %v1542 = vsel %vm1081, %v1515, 0
        %v1545 = vsel %vm1081, %v1519, 0
        %v1548 = vsel %vm1081, %v1523, 0
        %v1551 = vsel %vm1081, %v1527, 0
        %v1554 = vsel %vm1081, %v1531, 0
        %v1557 = vsel %vm1081, %v1530, 0
        %v1560 = vsel %vm1001, %v1495, 0
        %1562 = vmatprep.subr.bf16.mxu0 0
        %1563 = vmatpush1.bf16.msra.mxu0 %v1560
        %1564 = vmatprep.subr.bf16.mxu0 0
        %1565 = vmatpush1.bf16.msra.mxu0 0
        %1566 = vmatprep.subr.bf16.mxu0 0
        %1567 = vmatpush1.bf16.msra.mxu0 0
        %1568 = vmatprep.subr.bf16.mxu0 0
        %1569 = vmatpush1.bf16.msra.mxu0 0
        %1570 = vmatprep.subr.bf16.mxu0 0
        %1571 = vmatpush1.bf16.msra.mxu0 0
        %1572 = vmatprep.subr.bf16.mxu0 0
        %1573 = vmatpush1.bf16.msra.mxu0 0
        %1574 = vmatprep.subr.bf16.mxu0 0
        %1575 = vmatpush1.bf16.msra.mxu0 0
        %1576 = vmatprep.subr.bf16.mxu0 0
        %1577 = vmatpush1.bf16.msra.mxu0 0
        %1578 = vmatprep.subr.bf16.mxu0 0
        %1579 = vmatpush1.bf16.msra.mxu0 0
        %1580 = vmatprep.subr.bf16.mxu0 0
        %1581 = vmatpush1.bf16.msra.mxu0 0
        %1582 = vmatprep.subr.bf16.mxu0 0
        %1583 = vmatpush1.bf16.msra.mxu0 0
        %1584 = vmatprep.subr.bf16.mxu0 0
        %1585 = vmatpush1.bf16.msra.mxu0 0
        %1586 = vmatprep.subr.bf16.mxu0 0
        %1587 = vmatpush1.bf16.msra.mxu0 0
        %1588 = vmatprep.subr.bf16.mxu0 0
        %1589 = vmatpush1.bf16.msra.mxu0 0
        %1590 = vmatprep.subr.bf16.mxu0 0
        %1591 = vmatpush1.bf16.msra.mxu0 0
        %1592 = vmatprep.subr.bf16.mxu0 0
        %1593 = vmatpush1.bf16.msra.mxu0 0
        %1594 = vmatprep.mubr.bf16.mxu0 0
        %1595 = vmatmul.mubr.bf16.gmra.mrb[0].mxu0 %v1533
        %v1596 = vpop.f32.mrb[0].mxu0
        %v1597 = vadd.f32 0.0, %v1596
        %v1598 = vpop.f32.mrb[0].mxu0
        %v1599 = vpop.f32.mrb[0].mxu0
        %v1600 = vadd.f32 0.0, %v1599
        %v1601 = vpop.f32.mrb[0].mxu0
        %1602 = vmatprep.mubr.bf16.mxu0 0
        %1603 = vmatmul.mubr.bf16.gmra.mrb[0].mxu0 %v1536
        %v1604 = vpop.f32.mrb[0].mxu0
        %v1605 = vadd.f32 0.0, %v1604
        %v1606 = vpop.f32.mrb[0].mxu0
        %v1607 = vpop.f32.mrb[0].mxu0
        %v1608 = vadd.f32 0.0, %v1607
        %v1609 = vpop.f32.mrb[0].mxu0
        %1610 = vmatprep.mubr.bf16.mxu0 0
        %1611 = vmatmul.mubr.bf16.gmra.mrb[0].mxu0 %v1539
        %v1612 = vpop.f32.mrb[0].mxu0
        %v1613 = vadd.f32 0.0, %v1612
        %v1614 = vpop.f32.mrb[0].mxu0
        %v1615 = vpop.f32.mrb[0].mxu0
        %v1616 = vadd.f32 0.0, %v1615
        %v1617 = vpop.f32.mrb[0].mxu0
        %1618 = vmatprep.mubr.bf16.mxu0 0
        %1619 = vmatmul.mubr.bf16.gmra.mrb[0].mxu0 %v1542
        %v1620 = vpop.f32.mrb[0].mxu0
        %v1621 = vadd.f32 0.0, %v1620
        %v1622 = vpop.f32.mrb[0].mxu0
        %v1623 = vpop.f32.mrb[0].mxu0
        %v1624 = vadd.f32 0.0, %v1623
        %v1625 = vpop.f32.mrb[0].mxu0
        %1626 = vmatprep.mubr.bf16.mxu0 0
        %1627 = vmatmul.mubr.bf16.gmra.mrb[0].mxu0 %v1545
        %v1628 = vpop.f32.mrb[0].mxu0
        %v1629 = vadd.f32 0.0, %v1628
        %v1630 = vpop.f32.mrb[0].mxu0
        %v1631 = vpop.f32.mrb[0].mxu0
        %v1632 = vadd.f32 0.0, %v1631
        %v1633 = vpop.f32.mrb[0].mxu0
        %1634 = vmatprep.mubr.bf16.mxu0 0
        %1635 = vmatmul.mubr.bf16.gmra.mrb[0].mxu0 %v1548
        %v1636 = vpop.f32.mrb[0].mxu0
        %v1637 = vadd.f32 0.0, %v1636
        %v1638 = vpop.f32.mrb[0].mxu0
        %v1639 = vpop.f32.mrb[0].mxu0
        %v1640 = vadd.f32 0.0, %v1639
        %v1641 = vpop.f32.mrb[0].mxu0
        %1642 = vmatprep.mubr.bf16.mxu0 0
        %1643 = vmatmul.mubr.bf16.gmra.mrb[0].mxu0 %v1551
        %v1644 = vpop.f32.mrb[0].mxu0
        %v1645 = vadd.f32 0.0, %v1644
        %v1646 = vpop.f32.mrb[0].mxu0
        %v1647 = vpop.f32.mrb[0].mxu0
        %v1648 = vadd.f32 0.0, %v1647
        %v1649 = vpop.f32.mrb[0].mxu0
        %1650 = vmatprep.mubr.bf16.mxu0 0
        %1651 = vmatmul.mubr.bf16.gmra.mrb[0].mxu0 %v1554
        %v1652 = vpop.f32.mrb[0].mxu0
        %v1653 = vadd.f32 0.0, %v1652
        %v1654 = vpop.f32.mrb[0].mxu0
        %v1655 = vpop.f32.mrb[0].mxu0
        %v1656 = vadd.f32 0.0, %v1655
        %v1657 = vpop.f32.mrb[0].mxu0
        %1658 = vmatprep.mubr.bf16.mxu0 0
        %1659 = vmatmul.mubr.bf16.gmra.mrb[0].mxu0 %v1557
        %v1660 = vpop.f32.mrb[0].mxu0
        %v1661 = vadd.f32 0.0, %v1660
        %v1662 = vpop.f32.mrb[0].mxu0
        %v1663 = vpop.f32.mrb[0].mxu0
        %v1664 = vpop.f32.mrb[0].mxu0
        %1665 = vdwg.mxu0
        %v1666 = vadd.f32 %v1477, %v1597
        %v1667 = vadd.f32 %v1478, %v1600
        %v1668 = vadd.f32 %v1479, %v1605
        %v1669 = vadd.f32 %v1480, %v1608
        %v1670 = vadd.f32 %v1481, %v1613
        %v1671 = vadd.f32 %v1482, %v1616
        %v1672 = vadd.f32 %v1483, %v1621
        %v1673 = vadd.f32 %v1484, %v1624
        %v1674 = vadd.f32 %v1485, %v1629
        %v1675 = vadd.f32 %v1486, %v1632
        %v1676 = vadd.f32 %v1487, %v1637
        %v1677 = vadd.f32 %v1488, %v1640
        %v1678 = vadd.f32 %v1489, %v1645
        %v1679 = vadd.f32 %v1490, %v1648
        %v1680 = vadd.f32 %v1491, %v1653
        %v1681 = vadd.f32 %v1492, %v1656
        %v1682 = vadd.f32 %v1493, %v1661
        %s1683 = scalar_lea.vmem [#allocation5], 4
        %v1684 = vld [vmem:[%s1683] sm:$0x1]
        %vm1687 = vcmask 1045504
        %v1688 = vrot.slane %v1004, 2
        %v1689 = vrot.slane %v986, 2
        %v1690 = vsel %vm1687, %v1688, %v1689
        %v1691 = vrot.slane %v988, 2
        %v1692 = vsel %vm1687, %v1689, %v1691
        %v1693 = vrot.slane %v990, 2
        %v1694 = vsel %vm1687, %v1691, %v1693
        %v1695 = vrot.slane %v992, 2
        %v1696 = vsel %vm1687, %v1693, %v1695
        %v1697 = vrot.slane %v994, 2
        %v1698 = vsel %vm1687, %v1695, %v1697
        %v1699 = vrot.slane %v996, 2
        %v1700 = vsel %vm1687, %v1697, %v1699
        %v1701 = vrot.slane %v998, 2
        %v1702 = vsel %vm1687, %v1699, %v1701
        %v1703 = vrot.slane %v1007, 2
        %v1704 = vsel %vm1687, %v1701, %v1703
        %v1706 = vsel %vm1081, %v1690, 0
        %v1709 = vsel %vm1081, %v1692, 0
        %v1712 = vsel %vm1081, %v1694, 0
        %v1715 = vsel %vm1081, %v1696, 0
        %v1718 = vsel %vm1081, %v1698, 0
        %v1721 = vsel %vm1081, %v1700, 0
        %v1724 = vsel %vm1081, %v1702, 0
        %v1727 = vsel %vm1081, %v1704, 0
        %v1730 = vsel %vm1081, %v1703, 0
        %v1733 = vsel %vm1001, %v1684, 0
        %1735 = vmatprep.subr.bf16.mxu0 0
        %1736 = vmatpush1.bf16.msra.mxu0 %v1733
        %1737 = vmatprep.subr.bf16.mxu0 0
        %1738 = vmatpush1.bf16.msra.mxu0 0
        %1739 = vmatprep.subr.bf16.mxu0 0
        %1740 = vmatpush1.bf16.msra.mxu0 0
        %1741 = vmatprep.subr.bf16.mxu0 0
        %1742 = vmatpush1.bf16.msra.mxu0 0
        %1743 = vmatprep.subr.bf16.mxu0 0
        %1744 = vmatpush1.bf16.msra.mxu0 0
        %1745 = vmatprep.subr.bf16.mxu0 0
        %1746 = vmatpush1.bf16.msra.mxu0 0
        %1747 = vmatprep.subr.bf16.mxu0 0
        %1748 = vmatpush1.bf16.msra.mxu0 0
        %1749 = vmatprep.subr.bf16.mxu0 0
        %1750 = vmatpush1.bf16.msra.mxu0 0
        %1751 = vmatprep.subr.bf16.mxu0 0
        %1752 = vmatpush1.bf16.msra.mxu0 0
        %1753 = vmatprep.subr.bf16.mxu0 0
        %1754 = vmatpush1.bf16.msra.mxu0 0
        %1755 = vmatprep.subr.bf16.mxu0 0
        %1756 = vmatpush1.bf16.msra.mxu0 0
        %1757 = vmatprep.subr.bf16.mxu0 0
        %1758 = vmatpush1.bf16.msra.mxu0 0
        %1759 = vmatprep.subr.bf16.mxu0 0
        %1760 = vmatpush1.bf16.msra.mxu0 0
        %1761 = vmatprep.subr.bf16.mxu0 0
        %1762 = vmatpush1.bf16.msra.mxu0 0
        %1763 = vmatprep.subr.bf16.mxu0 0
        %1764 = vmatpush1.bf16.msra.mxu0 0
        %1765 = vmatprep.subr.bf16.mxu0 0
        %1766 = vmatpush1.bf16.msra.mxu0 0
        %1767 = vmatprep.mubr.bf16.mxu0 0
        %1768 = vmatmul.mubr.bf16.gmra.mrb[0].mxu0 %v1706
        %v1769 = vpop.f32.mrb[0].mxu0
        %v1770 = vadd.f32 0.0, %v1769
        %v1771 = vpop.f32.mrb[0].mxu0
        %v1772 = vpop.f32.mrb[0].mxu0
        %v1773 = vadd.f32 0.0, %v1772
        %v1774 = vpop.f32.mrb[0].mxu0
        %1775 = vmatprep.mubr.bf16.mxu0 0
        %1776 = vmatmul.mubr.bf16.gmra.mrb[0].mxu0 %v1709
        %v1777 = vpop.f32.mrb[0].mxu0
        %v1778 = vadd.f32 0.0, %v1777
        %v1779 = vpop.f32.mrb[0].mxu0
        %v1780 = vpop.f32.mrb[0].mxu0
        %v1781 = vadd.f32 0.0, %v1780
        %v1782 = vpop.f32.mrb[0].mxu0
        %1783 = vmatprep.mubr.bf16.mxu0 0
        %1784 = vmatmul.mubr.bf16.gmra.mrb[0].mxu0 %v1712
        %v1785 = vpop.f32.mrb[0].mxu0
        %v1786 = vadd.f32 0.0, %v1785
        %v1787 = vpop.f32.mrb[0].mxu0
        %v1788 = vpop.f32.mrb[0].mxu0
        %v1789 = vadd.f32 0.0, %v1788
        %v1790 = vpop.f32.mrb[0].mxu0
        %1791 = vmatprep.mubr.bf16.mxu0 0
        %1792 = vmatmul.mubr.bf16.gmra.mrb[0].mxu0 %v1715
        %v1793 = vpop.f32.mrb[0].mxu0
        %v1794 = vadd.f32 0.0, %v1793
        %v1795 = vpop.f32.mrb[0].mxu0
        %v1796 = vpop.f32.mrb[0].mxu0
        %v1797 = vadd.f32 0.0, %v1796
        %v1798 = vpop.f32.mrb[0].mxu0
        %1799 = vmatprep.mubr.bf16.mxu0 0
        %1800 = vmatmul.mubr.bf16.gmra.mrb[0].mxu0 %v1718
        %v1801 = vpop.f32.mrb[0].mxu0
        %v1802 = vadd.f32 0.0, %v1801
        %v1803 = vpop.f32.mrb[0].mxu0
        %v1804 = vpop.f32.mrb[0].mxu0
        %v1805 = vadd.f32 0.0, %v1804
        %v1806 = vpop.f32.mrb[0].mxu0
        %1807 = vmatprep.mubr.bf16.mxu0 0
        %1808 = vmatmul.mubr.bf16.gmra.mrb[0].mxu0 %v1721
        %v1809 = vpop.f32.mrb[0].mxu0
        %v1810 = vadd.f32 0.0, %v1809
        %v1811 = vpop.f32.mrb[0].mxu0
        %v1812 = vpop.f32.mrb[0].mxu0
        %v1813 = vadd.f32 0.0, %v1812
        %v1814 = vpop.f32.mrb[0].mxu0
        %1815 = vmatprep.mubr.bf16.mxu0 0
        %1816 = vmatmul.mubr.bf16.gmra.mrb[0].mxu0 %v1724
        %v1817 = vpop.f32.mrb[0].mxu0
        %v1818 = vadd.f32 0.0, %v1817
        %v1819 = vpop.f32.mrb[0].mxu0
        %v1820 = vpop.f32.mrb[0].mxu0
        %v1821 = vadd.f32 0.0, %v1820
        %v1822 = vpop.f32.mrb[0].mxu0
        %1823 = vmatprep.mubr.bf16.mxu0 0
        %1824 = vmatmul.mubr.bf16.gmra.mrb[0].mxu0 %v1727
        %v1825 = vpop.f32.mrb[0].mxu0
        %v1826 = vadd.f32 0.0, %v1825
        %v1827 = vpop.f32.mrb[0].mxu0
        %v1828 = vpop.f32.mrb[0].mxu0
        %v1829 = vadd.f32 0.0, %v1828
        %v1830 = vpop.f32.mrb[0].mxu0
        %1831 = vmatprep.mubr.bf16.mxu0 0
        %1832 = vmatmul.mubr.bf16.gmra.mrb[0].mxu0 %v1730
        %v1833 = vpop.f32.mrb[0].mxu0
        %v1834 = vadd.f32 0.0, %v1833
        %v1835 = vpop.f32.mrb[0].mxu0
        %v1836 = vpop.f32.mrb[0].mxu0
        %v1837 = vpop.f32.mrb[0].mxu0
        %1838 = vdwg.mxu0
        %v1839 = vadd.f32 %v1666, %v1770
        %v1840 = vadd.f32 %v1667, %v1773
        %v1841 = vadd.f32 %v1668, %v1778
        %v1842 = vadd.f32 %v1669, %v1781
        %v1843 = vadd.f32 %v1670, %v1786
        %v1844 = vadd.f32 %v1671, %v1789
        %v1845 = vadd.f32 %v1672, %v1794
        %v1846 = vadd.f32 %v1673, %v1797
        %v1847 = vadd.f32 %v1674, %v1802
        %v1848 = vadd.f32 %v1675, %v1805
        %v1849 = vadd.f32 %v1676, %v1810
        %v1850 = vadd.f32 %v1677, %v1813
        %v1851 = vadd.f32 %v1678, %v1818
        %v1852 = vadd.f32 %v1679, %v1821
        %v1853 = vadd.f32 %v1680, %v1826
        %v1854 = vadd.f32 %v1681, %v1829
        %v1855 = vadd.f32 %v1682, %v1834
        %v1856 = vld [vmem:[#allocation7] sm:$0x1]
        %v1858 = vlaneseq
        %v1859 = vshrl.u32 %v1858, 7
        %v1860 = vsub.s32 0, %v1859
        %v1861 = vrot.slane %v1856, %v1860
        %v1863 = vadd.f32 %v1839, %v1861
        %v1864 = vadd.f32 %v1840, %v1861
        %v1865 = vadd.f32 %v1841, %v1861
        %v1866 = vadd.f32 %v1842, %v1861
        %v1867 = vadd.f32 %v1843, %v1861
        %v1868 = vadd.f32 %v1844, %v1861
        %v1869 = vadd.f32 %v1845, %v1861
        %v1870 = vadd.f32 %v1846, %v1861
        %v1871 = vadd.f32 %v1847, %v1861
        %v1872 = vadd.f32 %v1848, %v1861
        %v1873 = vadd.f32 %v1849, %v1861
        %v1874 = vadd.f32 %v1850, %v1861
        %v1875 = vadd.f32 %v1851, %v1861
        %v1876 = vadd.f32 %v1852, %v1861
        %v1877 = vadd.f32 %v1853, %v1861
        %v1878 = vadd.f32 %v1854, %v1861
        %v1879 = vadd.f32 %v1855, %v1861
        %v1880 = vmax.f32 %v1863, 0.0
        %v1881 = vmax.f32 %v1864, 0.0
        %v1882 = vmax.f32 %v1865, 0.0
        %v1883 = vmax.f32 %v1866, 0.0
        %v1884 = vmax.f32 %v1867, 0.0
        %v1885 = vmax.f32 %v1868, 0.0
        %v1886 = vmax.f32 %v1869, 0.0
        %v1887 = vmax.f32 %v1870, 0.0
        %v1888 = vmax.f32 %v1871, 0.0
        %v1889 = vmax.f32 %v1872, 0.0
        %v1890 = vmax.f32 %v1873, 0.0
        %v1891 = vmax.f32 %v1874, 0.0
        %v1892 = vmax.f32 %v1875, 0.0
        %v1893 = vmax.f32 %v1876, 0.0
        %v1894 = vmax.f32 %v1877, 0.0
        %v1895 = vmax.f32 %v1878, 0.0
        %v1896 = vmax.f32 %v1879, 0.0
        %vm1914 = vcmask 1046528
        %v1915 = vrot.slane %v1880, 1
        %v1916 = vrot.slane %v1881, 1
        %v1917 = vsel %vm1914, %v1915, %v1916
        %v1918 = vrot.slane %v1882, 1
        %v1919 = vsel %vm1914, %v1916, %v1918
        %v1920 = vrot.slane %v1883, 1
        %v1921 = vsel %vm1914, %v1918, %v1920
        %v1922 = vrot.slane %v1884, 1
        %v1923 = vsel %vm1914, %v1920, %v1922
        %v1924 = vrot.slane %v1885, 1
        %v1925 = vsel %vm1914, %v1922, %v1924
        %v1926 = vrot.slane %v1886, 1
        %v1927 = vsel %vm1914, %v1924, %v1926
        %v1928 = vrot.slane %v1887, 1
        %v1929 = vsel %vm1914, %v1926, %v1928
        %v1930 = vrot.slane %v1888, 1
        %v1931 = vsel %vm1914, %v1928, %v1930
        %v1932 = vrot.slane %v1889, 1
        %v1933 = vsel %vm1914, %v1930, %v1932
        %v1934 = vrot.slane %v1890, 1
        %v1935 = vsel %vm1914, %v1932, %v1934
        %v1936 = vrot.slane %v1891, 1
        %v1937 = vsel %vm1914, %v1934, %v1936
        %v1938 = vrot.slane %v1892, 1
        %v1939 = vsel %vm1914, %v1936, %v1938
        %v1940 = vrot.slane %v1893, 1
        %v1941 = vsel %vm1914, %v1938, %v1940
        %v1942 = vrot.slane %v1894, 1
        %v1943 = vsel %vm1914, %v1940, %v1942
        %v1944 = vrot.slane %v1895, 1
        %v1945 = vsel %vm1914, %v1942, %v1944
        %v1946 = vrot.slane %v1896, 1
        %v1947 = vsel %vm1914, %v1944, %v1946
        %v1965 = vsel %vm1914, %v1946, %v1896
        %v1966 = vmax.f32 %v1880, %v1917
        %v1967 = vmax.f32 %v1881, %v1919
        %v1968 = vmax.f32 %v1882, %v1921
        %v1969 = vmax.f32 %v1883, %v1923
        %v1970 = vmax.f32 %v1884, %v1925
        %v1971 = vmax.f32 %v1885, %v1927
        %v1972 = vmax.f32 %v1886, %v1929
        %v1973 = vmax.f32 %v1887, %v1931
        %v1974 = vmax.f32 %v1888, %v1933
        %v1975 = vmax.f32 %v1889, %v1935
        %v1976 = vmax.f32 %v1890, %v1937
        %v1977 = vmax.f32 %v1891, %v1939
        %v1978 = vmax.f32 %v1892, %v1941
        %v1979 = vmax.f32 %v1893, %v1943
        %v1980 = vmax.f32 %v1894, %v1945
        %v1981 = vmax.f32 %v1895, %v1947
        %v1982 = vmax.f32 %v1896, %v1965
        %v1983 = vld [vmem:[%s18] sm:$0xff]
        %v1984 = vld [vmem:[%s18 + $0x8] sm:$0xff]
        %v1985 = vld [vmem:[%s18 + $0x10] sm:$0xff]
        %v1986 = vld [vmem:[%s18 + $0x18] sm:$0xff]
        %v1987 = vld [vmem:[%s18 + $0x20] sm:$0xff]
        %v1988 = vld [vmem:[%s18 + $0x28] sm:$0xff]
        %v1989 = vld [vmem:[%s18 + $0x30] sm:$0xff]
        %v1990 = vld [vmem:[%s18 + $0x38] sm:$0xff]
        %v1991 = vld [vmem:[%s18 + $0x40] sm:$0x33]
        %v1992 = vpack.c.bf16 %v1967, %v1966
        %v1993 = vpack.c.bf16 %v1969, %v1968
        %v1994 = vpack.c.bf16 %v1971, %v1970
        %v1995 = vpack.c.bf16 %v1973, %v1972
        %v1996 = vpack.c.bf16 %v1975, %v1974
        %v1997 = vpack.c.bf16 %v1977, %v1976
        %v1998 = vpack.c.bf16 %v1979, %v1978
        %v1999 = vpack.c.bf16 %v1981, %v1980
        %v2000 = vpack.c.bf16 %v1982, %v1982
        %v2010 = vunpack.c.l.b16 %v1983
        %v2011 = vunpack.c.h.b16 %v1983
        %v2012 = vunpack.c.l.b16 %v1984
        %v2013 = vunpack.c.h.b16 %v1984
        %v2014 = vunpack.c.l.b16 %v1985
        %v2015 = vunpack.c.h.b16 %v1985
        %v2016 = vunpack.c.l.b16 %v1986
        %v2017 = vunpack.c.h.b16 %v1986
        %v2018 = vunpack.c.l.b16 %v1987
        %v2019 = vunpack.c.h.b16 %v1987
        %v2020 = vunpack.c.l.b16 %v1988
        %v2021 = vunpack.c.h.b16 %v1988
        %v2022 = vunpack.c.l.b16 %v1989
        %v2023 = vunpack.c.h.b16 %v1989
        %v2024 = vunpack.c.l.b16 %v1990
        %v2025 = vunpack.c.h.b16 %v1990
        %v2026 = vunpack.c.l.b16 %v1991
        %v2027 = vunpack.c.h.b16 %v1991
        %v2028 = vpack.c.b16 %v2012, %v2010
        %v2029 = vpack.c.b16 %v2013, %v2011
        %v2030 = vpack.c.b16 %v2016, %v2014
        %v2031 = vpack.c.b16 %v2017, %v2015
        %v2032 = vpack.c.b16 %v2020, %v2018
        %v2033 = vpack.c.b16 %v2021, %v2019
        %v2034 = vpack.c.b16 %v2024, %v2022
        %v2035 = vpack.c.b16 %v2025, %v2023
        %v2036 = vpack.c.b16 %v2026, %v2026
        %v2037 = vpack.c.b16 %v2027, %v2027
        %vm2043 = vcmask 64512
        %v2045 = vsel %vm2043, %v2029, 0
        %v2048 = vsel %vm2043, %v2031, 0
        %v2051 = vsel %vm2043, %v2033, 0
        %v2054 = vsel %vm2043, %v2035, 0
        %v2057 = vsel %vm2043, %v2037, 0
        %vm2059 = vcmask 1043456
        %v2061 = vsel %vm2059, %v2000, 0
        %2063 = vmatprep.subr.bf16.mxu0 0
        %2064 = vmatpush1.bf16.msra.mxu0 %v1992
        %2065 = vmatprep.subr.bf16.mxu0 0
        %2066 = vmatpush1.bf16.msra.mxu0 %v1993
        %2067 = vmatprep.subr.bf16.mxu0 0
        %2068 = vmatpush1.bf16.msra.mxu0 %v1994
        %2069 = vmatprep.subr.bf16.mxu0 0
        %2070 = vmatpush1.bf16.msra.mxu0 %v1995
        %2071 = vmatprep.subr.bf16.mxu0 0
        %2072 = vmatpush1.bf16.msra.mxu0 %v1996
        %2073 = vmatprep.subr.bf16.mxu0 0
        %2074 = vmatpush1.bf16.msra.mxu0 %v1997
        %2075 = vmatprep.subr.bf16.mxu0 0
        %2076 = vmatpush1.bf16.msra.mxu0 %v1998
        %2077 = vmatprep.subr.bf16.mxu0 0
        %2078 = vmatpush1.bf16.msra.mxu0 %v1999
        %2079 = vmatprep.subr.bf16.mxu0 0
        %2080 = vmatpush1.bf16.msra.mxu0 %v2061
        %2081 = vmatprep.subr.bf16.mxu0 0
        %2082 = vmatpush1.bf16.msra.mxu0 0
        %2083 = vmatprep.subr.bf16.mxu0 0
        %2084 = vmatpush1.bf16.msra.mxu0 0
        %2085 = vmatprep.subr.bf16.mxu0 0
        %2086 = vmatpush1.bf16.msra.mxu0 0
        %2087 = vmatprep.subr.bf16.mxu0 0
        %2088 = vmatpush1.bf16.msra.mxu0 0
        %2089 = vmatprep.subr.bf16.mxu0 0
        %2090 = vmatpush1.bf16.msra.mxu0 0
        %2091 = vmatprep.subr.bf16.mxu0 0
        %2092 = vmatpush1.bf16.msra.mxu0 0
        %2093 = vmatprep.subr.bf16.mxu0 0
        %2094 = vmatpush1.bf16.msra.mxu0 0
        %2095 = vmatprep.mubr.bf16.mxu0 %v2045
        %2096 = vmatmul.mubr.bf16.gmra.mrb[0].mxu0 %v2028
        %v2097 = vpop.f32.mrb[0].mxu0
        %v2098 = vadd.f32 0.0, %v2097
        %v2099 = vpop.f32.mrb[0].mxu0
        %v2100 = vpop.f32.mrb[0].mxu0
        %v2101 = vadd.f32 0.0, %v2100
        %v2102 = vpop.f32.mrb[0].mxu0
        %2103 = vmatprep.mubr.bf16.mxu0 %v2048
        %2104 = vmatmul.mubr.bf16.gmra.mrb[0].mxu0 %v2030
        %v2105 = vpop.f32.mrb[0].mxu0
        %v2106 = vadd.f32 0.0, %v2105
        %v2107 = vpop.f32.mrb[0].mxu0
        %v2108 = vpop.f32.mrb[0].mxu0
        %v2109 = vadd.f32 0.0, %v2108
        %v2110 = vpop.f32.mrb[0].mxu0
        %2111 = vmatprep.mubr.bf16.mxu0 %v2051
        %2112 = vmatmul.mubr.bf16.gmra.mrb[0].mxu0 %v2032
        %v2113 = vpop.f32.mrb[0].mxu0
        %v2114 = vadd.f32 0.0, %v2113
        %v2115 = vpop.f32.mrb[0].mxu0
        %v2116 = vpop.f32.mrb[0].mxu0
        %v2117 = vadd.f32 0.0, %v2116
        %v2118 = vpop.f32.mrb[0].mxu0
        %2119 = vmatprep.mubr.bf16.mxu0 %v2054
        %2120 = vmatmul.mubr.bf16.gmra.mrb[0].mxu0 %v2034
        %v2121 = vpop.f32.mrb[0].mxu0
        %v2122 = vadd.f32 0.0, %v2121
        %v2123 = vpop.f32.mrb[0].mxu0
        %v2124 = vpop.f32.mrb[0].mxu0
        %v2125 = vadd.f32 0.0, %v2124
        %v2126 = vpop.f32.mrb[0].mxu0
        %2127 = vmatprep.mubr.bf16.mxu0 %v2057
        %2128 = vmatmul.mubr.bf16.gmra.mrb[0].mxu0 %v2036
        %v2129 = vpop.f32.mrb[0].mxu0
        %v2130 = vadd.f32 0.0, %v2129
        %v2131 = vpop.f32.mrb[0].mxu0
        %v2132 = vpop.f32.mrb[0].mxu0
        %v2133 = vpop.f32.mrb[0].mxu0
        %2134 = vdwg.mxu0
        %v2135 = vpack.c.bf16 %v2101, %v2098
        %v2136 = vpack.c.bf16 %v2109, %v2106
        %v2137 = vpack.c.bf16 %v2117, %v2114
        %v2138 = vpack.c.bf16 %v2125, %v2122
        %v2139 = vpack.c.bf16 %v2130, %v2130
        %v2145 = vrot.slane %v2135, 7
        %v2146 = vrot.slane %v2136, 7
        %v2147 = vsel %vm983, %v2145, %v2146
        %v2148 = vrot.slane %v2137, 7
        %v2149 = vsel %vm983, %v2146, %v2148
        %v2150 = vrot.slane %v2138, 7
        %v2151 = vsel %vm983, %v2148, %v2150
        %v2152 = vrot.slane %v2139, 7
        %v2153 = vsel %vm983, %v2150, %v2152
        %v2155 = vsel %vm1001, 0, %v2145
        %vm2156 = vcmask 1042432
        %v2158 = vsel %vm2156, %v2153, 0
        %v2159 = vld [vmem:[%s4] sm:$0xf]
        %v2160 = vld [vmem:[%s4 + $0x4] sm:$0xf]
        %v2161 = vld [vmem:[%s4 + $0x8] sm:$0xf]
        %v2162 = vld [vmem:[%s4 + $0xc] sm:$0xf]
        %v2163 = vld [vmem:[%s4 + $0x10] sm:$0xf]
        %v2164 = vld [vmem:[%s4 + $0x14] sm:$0xf]
        %v2165 = vld [vmem:[%s4 + $0x18] sm:$0xf]
        %v2166 = vld [vmem:[%s4 + $0x1c] sm:$0xf]
        %s2167 = scalar_lea.vmem %s4, 32
        %v2168 = vld [vmem:[%s2167] sm:$0xf]
        %v2169 = vld [vmem:[%s2167 + $0x4] sm:$0xf]
        %v2170 = vld [vmem:[%s2167 + $0x8] sm:$0xf]
        %v2171 = vld [vmem:[%s2167 + $0xc] sm:$0xf]
        %v2172 = vld [vmem:[%s2167 + $0x10] sm:$0xf]
        %v2173 = vld [vmem:[%s2167 + $0x14] sm:$0xf]
        %v2174 = vld [vmem:[%s2167 + $0x18] sm:$0xf]
        %v2175 = vld [vmem:[%s2167 + $0x1c] sm:$0xf]
        %v2176 = vshrl.u32 %v2155, 16
        %v2178 = vshll.u32 %v2155, 16
        %v2180 = vrot.slane %v2178, 1
        %v2181 = vor.u32 %v2176, %v2180
        %v2183 = vshll.u32 %v2147, 16
        %v2185 = vrot.slane %v2183, 1
        %v2186 = vsel %vm1011, %v2181, %v2185
        %v2187 = vshrl.u32 %v2147, 16
        %v2189 = vor.u32 %v2187, %v2185
        %v2191 = vshll.u32 %v2149, 16
        %v2193 = vrot.slane %v2191, 1
        %v2194 = vsel %vm1011, %v2189, %v2193
        %v2195 = vshrl.u32 %v2149, 16
        %v2197 = vor.u32 %v2195, %v2193
        %v2199 = vshll.u32 %v2151, 16
        %v2201 = vrot.slane %v2199, 1
        %v2202 = vsel %vm1011, %v2197, %v2201
        %v2203 = vshrl.u32 %v2151, 16
        %v2205 = vor.u32 %v2203, %v2201
        %v2206 = vshll.u32 %v2158, 16
        %v2208 = vrot.slane %v2206, 1
        %v2209 = vsel %vm1011, %v2205, %v2208
        %v2210 = vshrl.u32 %v2158, 16
        %v2212 = vor.u32 %v2210, %v2208
        %v2221 = vunpack.c.l.b16 %v2168
        %v2222 = vunpack.c.l.b16 %v2169
        %v2223 = vunpack.c.l.b16 %v2170
        %v2224 = vunpack.c.l.b16 %v2171
        %v2225 = vunpack.c.l.b16 %v2172
        %v2226 = vunpack.c.l.b16 %v2173
        %v2227 = vunpack.c.l.b16 %v2174
        %v2228 = vunpack.c.l.b16 %v2175
        %v2229 = vpack.c.b16 %v2222, %v2221
        %v2230 = vpack.c.b16 %v2224, %v2223
        %v2231 = vpack.c.b16 %v2226, %v2225
        %v2232 = vpack.c.b16 %v2228, %v2227
        %vm2237 = vcmask 523264
        %v2239 = vsel %vm2237, %v2186, 0
        %v2242 = vsel %vm2237, %v2194, 0
        %v2245 = vsel %vm2237, %v2202, 0
        %v2248 = vsel %vm2237, %v2209, 0
        %v2251 = vsel %vm2237, %v2212, 0
        %2253 = vmatprep.subr.bf16.mxu0 0
        %2254 = vmatpush1.bf16.msra.mxu0 %v2229
        %2255 = vmatprep.subr.bf16.mxu0 0
        %2256 = vmatpush1.bf16.msra.mxu0 %v2230
        %2257 = vmatprep.subr.bf16.mxu0 0
        %2258 = vmatpush1.bf16.msra.mxu0 %v2231
        %2259 = vmatprep.subr.bf16.mxu0 0
        %2260 = vmatpush1.bf16.msra.mxu0 %v2232
        %2261 = vmatprep.subr.bf16.mxu0 0
        %2262 = vmatpush1.bf16.msra.mxu0 0
        %2263 = vmatprep.subr.bf16.mxu0 0
        %2264 = vmatpush1.bf16.msra.mxu0 0
        %2265 = vmatprep.subr.bf16.mxu0 0
        %2266 = vmatpush1.bf16.msra.mxu0 0
        %2267 = vmatprep.subr.bf16.mxu0 0
        %2268 = vmatpush1.bf16.msra.mxu0 0
        %2269 = vmatprep.subr.bf16.mxu0 0
        %2270 = vmatpush1.bf16.msra.mxu0 0
        %2271 = vmatprep.subr.bf16.mxu0 0
        %2272 = vmatpush1.bf16.msra.mxu0 0
        %2273 = vmatprep.subr.bf16.mxu0 0
        %2274 = vmatpush1.bf16.msra.mxu0 0
        %2275 = vmatprep.subr.bf16.mxu0 0
        %2276 = vmatpush1.bf16.msra.mxu0 0
        %2277 = vmatprep.subr.bf16.mxu0 0
        %2278 = vmatpush1.bf16.msra.mxu0 0
        %2279 = vmatprep.subr.bf16.mxu0 0
        %2280 = vmatpush1.bf16.msra.mxu0 0
        %2281 = vmatprep.subr.bf16.mxu0 0
        %2282 = vmatpush1.bf16.msra.mxu0 0
        %2283 = vmatprep.subr.bf16.mxu0 0
        %2284 = vmatpush1.bf16.msra.mxu0 0
        %2285 = vmatprep.mubr.bf16.mxu0 0
        %2286 = vmatmul.mubr.bf16.gmra.mrb[0].mxu0 %v2239
        %v2287 = vpop.f32.mrb[0].mxu0
        %v2288 = vadd.f32 0.0, %v2287
        %v2289 = vpop.f32.mrb[0].mxu0
        %v2290 = vpop.f32.mrb[0].mxu0
        %v2291 = vadd.f32 0.0, %v2290
        %v2292 = vpop.f32.mrb[0].mxu0
        %2293 = vmatprep.mubr.bf16.mxu0 0
        %2294 = vmatmul.mubr.bf16.gmra.mrb[0].mxu0 %v2242
        %v2295 = vpop.f32.mrb[0].mxu0
        %v2296 = vadd.f32 0.0, %v2295
        %v2297 = vpop.f32.mrb[0].mxu0
        %v2298 = vpop.f32.mrb[0].mxu0
        %v2299 = vadd.f32 0.0, %v2298
        %v2300 = vpop.f32.mrb[0].mxu0
        %2301 = vmatprep.mubr.bf16.mxu0 0
        %2302 = vmatmul.mubr.bf16.gmra.mrb[0].mxu0 %v2245
        %v2303 = vpop.f32.mrb[0].mxu0
        %v2304 = vadd.f32 0.0, %v2303
        %v2305 = vpop.f32.mrb[0].mxu0
        %v2306 = vpop.f32.mrb[0].mxu0
        %v2307 = vadd.f32 0.0, %v2306
        %v2308 = vpop.f32.mrb[0].mxu0
        %2309 = vmatprep.mubr.bf16.mxu0 0
        %2310 = vmatmul.mubr.bf16.gmra.mrb[0].mxu0 %v2248
        %v2311 = vpop.f32.mrb[0].mxu0
        %v2312 = vadd.f32 0.0, %v2311
        %v2313 = vpop.f32.mrb[0].mxu0
        %v2314 = vpop.f32.mrb[0].mxu0
        %v2315 = vadd.f32 0.0, %v2314
        %v2316 = vpop.f32.mrb[0].mxu0
        %2317 = vmatprep.mubr.bf16.mxu0 0
        %2318 = vmatmul.mubr.bf16.gmra.mrb[0].mxu0 %v2251
        %v2319 = vpop.f32.mrb[0].mxu0
        %v2320 = vadd.f32 0.0, %v2319
        %v2321 = vpop.f32.mrb[0].mxu0
        %v2322 = vpop.f32.mrb[0].mxu0
        %v2323 = vpop.f32.mrb[0].mxu0
        %2324 = vdwg.mxu0
        %v2333 = vunpack.c.l.b16 %v2159
        %v2334 = vunpack.c.l.b16 %v2160
        %v2335 = vunpack.c.l.b16 %v2161
        %v2336 = vunpack.c.l.b16 %v2162
        %v2337 = vunpack.c.l.b16 %v2163
        %v2338 = vunpack.c.l.b16 %v2164
        %v2339 = vunpack.c.l.b16 %v2165
        %v2340 = vunpack.c.l.b16 %v2166
        %v2341 = vpack.c.b16 %v2334, %v2333
        %v2342 = vpack.c.b16 %v2336, %v2335
        %v2343 = vpack.c.b16 %v2338, %v2337
        %v2344 = vpack.c.b16 %v2340, %v2339
        %v2349 = vsel %vm2237, %v2155, 0
        %v2351 = vsel %vm2237, %v2147, 0
        %v2353 = vsel %vm2237, %v2149, 0
        %v2355 = vsel %vm2237, %v2151, 0
        %v2357 = vsel %vm2237, %v2158, 0
        %2359 = vmatprep.subr.bf16.mxu0 0
        %2360 = vmatpush1.bf16.msra.mxu0 %v2341
        %2361 = vmatprep.subr.bf16.mxu0 0
        %2362 = vmatpush1.bf16.msra.mxu0 %v2342
        %2363 = vmatprep.subr.bf16.mxu0 0
        %2364 = vmatpush1.bf16.msra.mxu0 %v2343
        %2365 = vmatprep.subr.bf16.mxu0 0
        %2366 = vmatpush1.bf16.msra.mxu0 %v2344
        %2367 = vmatprep.subr.bf16.mxu0 0
        %2368 = vmatpush1.bf16.msra.mxu0 0
        %2369 = vmatprep.subr.bf16.mxu0 0
        %2370 = vmatpush1.bf16.msra.mxu0 0
        %2371 = vmatprep.subr.bf16.mxu0 0
        %2372 = vmatpush1.bf16.msra.mxu0 0
        %2373 = vmatprep.subr.bf16.mxu0 0
        %2374 = vmatpush1.bf16.msra.mxu0 0
        %2375 = vmatprep.subr.bf16.mxu0 0
        %2376 = vmatpush1.bf16.msra.mxu0 0
        %2377 = vmatprep.subr.bf16.mxu0 0
        %2378 = vmatpush1.bf16.msra.mxu0 0
        %2379 = vmatprep.subr.bf16.mxu0 0
        %2380 = vmatpush1.bf16.msra.mxu0 0
        %2381 = vmatprep.subr.bf16.mxu0 0
        %2382 = vmatpush1.bf16.msra.mxu0 0
        %2383 = vmatprep.subr.bf16.mxu0 0
        %2384 = vmatpush1.bf16.msra.mxu0 0
        %2385 = vmatprep.subr.bf16.mxu0 0
        %2386 = vmatpush1.bf16.msra.mxu0 0
        %2387 = vmatprep.subr.bf16.mxu0 0
        %2388 = vmatpush1.bf16.msra.mxu0 0
        %2389 = vmatprep.subr.bf16.mxu0 0
        %2390 = vmatpush1.bf16.msra.mxu0 0
        %2391 = vmatprep.mubr.bf16.mxu0 0
        %2392 = vmatmul.mubr.bf16.gmra.mrb[0].mxu0 %v2349
        %v2393 = vpop.f32.mrb[0].mxu0
        %v2394 = vadd.f32 %v2288, %v2393
        %v2395 = vpop.f32.mrb[0].mxu0
        %v2396 = vpop.f32.mrb[0].mxu0
        %v2397 = vadd.f32 %v2291, %v2396
        %v2398 = vpop.f32.mrb[0].mxu0
        %2399 = vmatprep.mubr.bf16.mxu0 0
        %2400 = vmatmul.mubr.bf16.gmra.mrb[0].mxu0 %v2351
        %v2401 = vpop.f32.mrb[0].mxu0
        %v2402 = vadd.f32 %v2296, %v2401
        %v2403 = vpop.f32.mrb[0].mxu0
        %v2404 = vpop.f32.mrb[0].mxu0
        %v2405 = vadd.f32 %v2299, %v2404
        %v2406 = vpop.f32.mrb[0].mxu0
        %2407 = vmatprep.mubr.bf16.mxu0 0
        %2408 = vmatmul.mubr.bf16.gmra.mrb[0].mxu0 %v2353
        %v2409 = vpop.f32.mrb[0].mxu0
        %v2410 = vadd.f32 %v2304, %v2409
        %v2411 = vpop.f32.mrb[0].mxu0
        %v2412 = vpop.f32.mrb[0].mxu0
        %v2413 = vadd.f32 %v2307, %v2412
        %v2414 = vpop.f32.mrb[0].mxu0
        %2415 = vmatprep.mubr.bf16.mxu0 0
        %2416 = vmatmul.mubr.bf16.gmra.mrb[0].mxu0 %v2355
        %v2417 = vpop.f32.mrb[0].mxu0
        %v2418 = vadd.f32 %v2312, %v2417
        %v2419 = vpop.f32.mrb[0].mxu0
        %v2420 = vpop.f32.mrb[0].mxu0
        %v2421 = vadd.f32 %v2315, %v2420
        %v2422 = vpop.f32.mrb[0].mxu0
        %2423 = vmatprep.mubr.bf16.mxu0 0
        %2424 = vmatmul.mubr.bf16.gmra.mrb[0].mxu0 %v2357
        %v2425 = vpop.f32.mrb[0].mxu0
        %v2426 = vadd.f32 %v2320, %v2425
        %v2427 = vpop.f32.mrb[0].mxu0
        %v2428 = vpop.f32.mrb[0].mxu0
        %v2429 = vpop.f32.mrb[0].mxu0
        %2430 = vdwg.mxu0
        %s2431 = scalar_lea.vmem %s4, 64
        %v2432 = vld [vmem:[%s2431] sm:$0xf]
        %v2433 = vld [vmem:[%s2431 + $0x4] sm:$0xf]
        %v2434 = vld [vmem:[%s2431 + $0x8] sm:$0xf]
        %v2435 = vld [vmem:[%s2431 + $0xc] sm:$0xf]
        %v2436 = vld [vmem:[%s2431 + $0x10] sm:$0xf]
        %v2437 = vld [vmem:[%s2431 + $0x14] sm:$0xf]
        %v2438 = vld [vmem:[%s2431 + $0x18] sm:$0xf]
        %v2439 = vld [vmem:[%s2431 + $0x1c] sm:$0xf]
        %v2448 = vunpack.c.l.b16 %v2432
        %v2449 = vunpack.c.l.b16 %v2433
        %v2450 = vunpack.c.l.b16 %v2434
        %v2451 = vunpack.c.l.b16 %v2435
        %v2452 = vunpack.c.l.b16 %v2436
        %v2453 = vunpack.c.l.b16 %v2437
        %v2454 = vunpack.c.l.b16 %v2438
        %v2455 = vunpack.c.l.b16 %v2439
        %v2456 = vpack.c.b16 %v2449, %v2448
        %v2457 = vpack.c.b16 %v2451, %v2450
        %v2458 = vpack.c.b16 %v2453, %v2452
        %v2459 = vpack.c.b16 %v2455, %v2454
        %v2465 = vsel %vm2237, %v2135, 0
        %v2468 = vsel %vm2237, %v2136, 0
        %v2471 = vsel %vm2237, %v2137, 0
        %v2474 = vsel %vm2237, %v2138, 0
        %v2477 = vsel %vm2237, %v2139, 0
        %2479 = vmatprep.subr.bf16.mxu0 0
        %2480 = vmatpush1.bf16.msra.mxu0 %v2456
        %2481 = vmatprep.subr.bf16.mxu0 0
        %2482 = vmatpush1.bf16.msra.mxu0 %v2457
        %2483 = vmatprep.subr.bf16.mxu0 0
        %2484 = vmatpush1.bf16.msra.mxu0 %v2458
        %2485 = vmatprep.subr.bf16.mxu0 0
        %2486 = vmatpush1.bf16.msra.mxu0 %v2459
        %2487 = vmatprep.subr.bf16.mxu0 0
        %2488 = vmatpush1.bf16.msra.mxu0 0
        %2489 = vmatprep.subr.bf16.mxu0 0
        %2490 = vmatpush1.bf16.msra.mxu0 0
        %2491 = vmatprep.subr.bf16.mxu0 0
        %2492 = vmatpush1.bf16.msra.mxu0 0
        %2493 = vmatprep.subr.bf16.mxu0 0
        %2494 = vmatpush1.bf16.msra.mxu0 0
        %2495 = vmatprep.subr.bf16.mxu0 0
        %2496 = vmatpush1.bf16.msra.mxu0 0
        %2497 = vmatprep.subr.bf16.mxu0 0
        %2498 = vmatpush1.bf16.msra.mxu0 0
        %2499 = vmatprep.subr.bf16.mxu0 0
        %2500 = vmatpush1.bf16.msra.mxu0 0
        %2501 = vmatprep.subr.bf16.mxu0 0
        %2502 = vmatpush1.bf16.msra.mxu0 0
        %2503 = vmatprep.subr.bf16.mxu0 0
        %2504 = vmatpush1.bf16.msra.mxu0 0
        %2505 = vmatprep.subr.bf16.mxu0 0
        %2506 = vmatpush1.bf16.msra.mxu0 0
        %2507 = vmatprep.subr.bf16.mxu0 0
        %2508 = vmatpush1.bf16.msra.mxu0 0
        %2509 = vmatprep.subr.bf16.mxu0 0
        %2510 = vmatpush1.bf16.msra.mxu0 0
        %2511 = vmatprep.mubr.bf16.mxu0 0
        %2512 = vmatmul.mubr.bf16.gmra.mrb[0].mxu0 %v2465
        %v2513 = vpop.f32.mrb[0].mxu0
        %v2514 = vadd.f32 0.0, %v2513
        %v2515 = vpop.f32.mrb[0].mxu0
        %v2516 = vpop.f32.mrb[0].mxu0
        %v2517 = vadd.f32 0.0, %v2516
        %v2518 = vpop.f32.mrb[0].mxu0
        %2519 = vmatprep.mubr.bf16.mxu0 0
        %2520 = vmatmul.mubr.bf16.gmra.mrb[0].mxu0 %v2468
        %v2521 = vpop.f32.mrb[0].mxu0
        %v2522 = vadd.f32 0.0, %v2521
        %v2523 = vpop.f32.mrb[0].mxu0
        %v2524 = vpop.f32.mrb[0].mxu0
        %v2525 = vadd.f32 0.0, %v2524
        %v2526 = vpop.f32.mrb[0].mxu0
        %2527 = vmatprep.mubr.bf16.mxu0 0
        %2528 = vmatmul.mubr.bf16.gmra.mrb[0].mxu0 %v2471
        %v2529 = vpop.f32.mrb[0].mxu0
        %v2530 = vadd.f32 0.0, %v2529
        %v2531 = vpop.f32.mrb[0].mxu0
        %v2532 = vpop.f32.mrb[0].mxu0
        %v2533 = vadd.f32 0.0, %v2532
        %v2534 = vpop.f32.mrb[0].mxu0
        %2535 = vmatprep.mubr.bf16.mxu0 0
        %2536 = vmatmul.mubr.bf16.gmra.mrb[0].mxu0 %v2474
        %v2537 = vpop.f32.mrb[0].mxu0
        %v2538 = vadd.f32 0.0, %v2537
        %v2539 = vpop.f32.mrb[0].mxu0
        %v2540 = vpop.f32.mrb[0].mxu0
        %v2541 = vadd.f32 0.0, %v2540
        %v2542 = vpop.f32.mrb[0].mxu0
        %2543 = vmatprep.mubr.bf16.mxu0 0
        %2544 = vmatmul.mubr.bf16.gmra.mrb[0].mxu0 %v2477
        %v2545 = vpop.f32.mrb[0].mxu0
        %v2546 = vadd.f32 0.0, %v2545
        %v2547 = vpop.f32.mrb[0].mxu0
        %v2548 = vpop.f32.mrb[0].mxu0
        %v2549 = vpop.f32.mrb[0].mxu0
        %2550 = vdwg.mxu0
        %v2551 = vadd.f32 %v2394, %v2514
        %v2552 = vadd.f32 %v2397, %v2517
        %v2553 = vadd.f32 %v2402, %v2522
        %v2554 = vadd.f32 %v2405, %v2525
        %v2555 = vadd.f32 %v2410, %v2530
        %v2556 = vadd.f32 %v2413, %v2533
        %v2557 = vadd.f32 %v2418, %v2538
        %v2558 = vadd.f32 %v2421, %v2541
        %v2559 = vadd.f32 %v2426, %v2546
        %s2560 = scalar_lea.vmem %s4, 96
        %v2561 = vld [vmem:[%s2560] sm:$0xf]
        %v2562 = vld [vmem:[%s2560 + $0x4] sm:$0xf]
        %v2563 = vld [vmem:[%s2560 + $0x8] sm:$0xf]
        %v2564 = vld [vmem:[%s2560 + $0xc] sm:$0xf]
        %v2565 = vld [vmem:[%s2560 + $0x10] sm:$0xf]
        %v2566 = vld [vmem:[%s2560 + $0x14] sm:$0xf]
        %v2567 = vld [vmem:[%s2560 + $0x18] sm:$0xf]
        %v2568 = vld [vmem:[%s2560 + $0x1c] sm:$0xf]
        %v2569 = vrot.slane %v2176, 1
        %v2570 = vrot.slane %v2178, 2
        %v2571 = vor.u32 %v2569, %v2570
        %v2572 = vrot.slane %v2187, 1
        %v2573 = vrot.slane %v2183, 2
        %v2574 = vor.u32 %v2572, %v2573
        %v2575 = vsel %vm1496, %v2571, %v2574
        %v2576 = vrot.slane %v2195, 1
        %v2577 = vrot.slane %v2191, 2
        %v2578 = vor.u32 %v2576, %v2577
        %v2579 = vsel %vm1496, %v2574, %v2578
        %v2580 = vrot.slane %v2203, 1
        %v2581 = vrot.slane %v2199, 2
        %v2582 = vor.u32 %v2580, %v2581
        %v2583 = vsel %vm1496, %v2578, %v2582
        %v2584 = vrot.slane %v2210, 1
        %v2585 = vrot.slane %v2206, 2
        %v2586 = vor.u32 %v2584, %v2585
        %v2587 = vsel %vm1496, %v2582, %v2586
        %v2596 = vunpack.c.l.b16 %v2561
        %v2597 = vunpack.c.l.b16 %v2562
        %v2598 = vunpack.c.l.b16 %v2563
        %v2599 = vunpack.c.l.b16 %v2564
        %v2600 = vunpack.c.l.b16 %v2565
        %v2601 = vunpack.c.l.b16 %v2566
        %v2602 = vunpack.c.l.b16 %v2567
        %v2603 = vunpack.c.l.b16 %v2568
        %v2604 = vpack.c.b16 %v2597, %v2596
        %v2605 = vpack.c.b16 %v2599, %v2598
        %v2606 = vpack.c.b16 %v2601, %v2600
        %v2607 = vpack.c.b16 %v2603, %v2602
        %v2613 = vsel %vm2237, %v2575, 0
        %v2616 = vsel %vm2237, %v2579, 0
        %v2619 = vsel %vm2237, %v2583, 0
        %v2622 = vsel %vm2237, %v2587, 0
        %v2625 = vsel %vm2237, %v2586, 0
        %2627 = vmatprep.subr.bf16.mxu0 0
        %2628 = vmatpush1.bf16.msra.mxu0 %v2604
        %2629 = vmatprep.subr.bf16.mxu0 0
        %2630 = vmatpush1.bf16.msra.mxu0 %v2605
        %2631 = vmatprep.subr.bf16.mxu0 0
        %2632 = vmatpush1.bf16.msra.mxu0 %v2606
        %2633 = vmatprep.subr.bf16.mxu0 0
        %2634 = vmatpush1.bf16.msra.mxu0 %v2607
        %2635 = vmatprep.subr.bf16.mxu0 0
        %2636 = vmatpush1.bf16.msra.mxu0 0
        %2637 = vmatprep.subr.bf16.mxu0 0
        %2638 = vmatpush1.bf16.msra.mxu0 0
        %2639 = vmatprep.subr.bf16.mxu0 0
        %2640 = vmatpush1.bf16.msra.mxu0 0
        %2641 = vmatprep.subr.bf16.mxu0 0
        %2642 = vmatpush1.bf16.msra.mxu0 0
        %2643 = vmatprep.subr.bf16.mxu0 0
        %2644 = vmatpush1.bf16.msra.mxu0 0
        %2645 = vmatprep.subr.bf16.mxu0 0
        %2646 = vmatpush1.bf16.msra.mxu0 0
        %2647 = vmatprep.subr.bf16.mxu0 0
        %2648 = vmatpush1.bf16.msra.mxu0 0
        %2649 = vmatprep.subr.bf16.mxu0 0
        %2650 = vmatpush1.bf16.msra.mxu0 0
        %2651 = vmatprep.subr.bf16.mxu0 0
        %2652 = vmatpush1.bf16.msra.mxu0 0
        %2653 = vmatprep.subr.bf16.mxu0 0
        %2654 = vmatpush1.bf16.msra.mxu0 0
        %2655 = vmatprep.subr.bf16.mxu0 0
        %2656 = vmatpush1.bf16.msra.mxu0 0
        %2657 = vmatprep.subr.bf16.mxu0 0
        %2658 = vmatpush1.bf16.msra.mxu0 0
        %2659 = vmatprep.mubr.bf16.mxu0 0
        %2660 = vmatmul.mubr.bf16.gmra.mrb[0].mxu0 %v2613
        %v2661 = vpop.f32.mrb[0].mxu0
        %v2662 = vadd.f32 0.0, %v2661
        %v2663 = vpop.f32.mrb[0].mxu0
        %v2664 = vpop.f32.mrb[0].mxu0
        %v2665 = vadd.f32 0.0, %v2664
        %v2666 = vpop.f32.mrb[0].mxu0
        %2667 = vmatprep.mubr.bf16.mxu0 0
        %2668 = vmatmul.mubr.bf16.gmra.mrb[0].mxu0 %v2616
        %v2669 = vpop.f32.mrb[0].mxu0
        %v2670 = vadd.f32 0.0, %v2669
        %v2671 = vpop.f32.mrb[0].mxu0
        %v2672 = vpop.f32.mrb[0].mxu0
        %v2673 = vadd.f32 0.0, %v2672
        %v2674 = vpop.f32.mrb[0].mxu0
        %2675 = vmatprep.mubr.bf16.mxu0 0
        %2676 = vmatmul.mubr.bf16.gmra.mrb[0].mxu0 %v2619
        %v2677 = vpop.f32.mrb[0].mxu0
        %v2678 = vadd.f32 0.0, %v2677
        %v2679 = vpop.f32.mrb[0].mxu0
        %v2680 = vpop.f32.mrb[0].mxu0
        %v2681 = vadd.f32 0.0, %v2680
        %v2682 = vpop.f32.mrb[0].mxu0
        %2683 = vmatprep.mubr.bf16.mxu0 0
        %2684 = vmatmul.mubr.bf16.gmra.mrb[0].mxu0 %v2622
        %v2685 = vpop.f32.mrb[0].mxu0
        %v2686 = vadd.f32 0.0, %v2685
        %v2687 = vpop.f32.mrb[0].mxu0
        %v2688 = vpop.f32.mrb[0].mxu0
        %v2689 = vadd.f32 0.0, %v2688
        %v2690 = vpop.f32.mrb[0].mxu0
        %2691 = vmatprep.mubr.bf16.mxu0 0
        %2692 = vmatmul.mubr.bf16.gmra.mrb[0].mxu0 %v2625
        %v2693 = vpop.f32.mrb[0].mxu0
        %v2694 = vadd.f32 0.0, %v2693
        %v2695 = vpop.f32.mrb[0].mxu0
        %v2696 = vpop.f32.mrb[0].mxu0
        %v2697 = vpop.f32.mrb[0].mxu0
        %2698 = vdwg.mxu0
        %v2699 = vadd.f32 %v2551, %v2662
        %v2700 = vadd.f32 %v2552, %v2665
        %v2701 = vadd.f32 %v2553, %v2670
        %v2702 = vadd.f32 %v2554, %v2673
        %v2703 = vadd.f32 %v2555, %v2678
        %v2704 = vadd.f32 %v2556, %v2681
        %v2705 = vadd.f32 %v2557, %v2686
        %v2706 = vadd.f32 %v2558, %v2689
        %v2707 = vadd.f32 %v2559, %v2694
        %s2708 = scalar_lea.vmem %s4, 128
        %v2709 = vld [vmem:[%s2708] sm:$0xf]
        %v2710 = vld [vmem:[%s2708 + $0x4] sm:$0xf]
        %v2711 = vld [vmem:[%s2708 + $0x8] sm:$0xf]
        %v2712 = vld [vmem:[%s2708 + $0xc] sm:$0xf]
        %v2713 = vld [vmem:[%s2708 + $0x10] sm:$0xf]
        %v2714 = vld [vmem:[%s2708 + $0x14] sm:$0xf]
        %v2715 = vld [vmem:[%s2708 + $0x18] sm:$0xf]
        %v2716 = vld [vmem:[%s2708 + $0x1c] sm:$0xf]
        %v2719 = vrot.slane %v2155, 2
        %v2720 = vrot.slane %v2147, 2
        %v2721 = vsel %vm1687, %v2719, %v2720
        %v2722 = vrot.slane %v2149, 2
        %v2723 = vsel %vm1687, %v2720, %v2722
        %v2724 = vrot.slane %v2151, 2
        %v2725 = vsel %vm1687, %v2722, %v2724
        %v2726 = vrot.slane %v2158, 2
        %v2727 = vsel %vm1687, %v2724, %v2726
        %v2736 = vunpack.c.l.b16 %v2709
        %v2737 = vunpack.c.l.b16 %v2710
        %v2738 = vunpack.c.l.b16 %v2711
        %v2739 = vunpack.c.l.b16 %v2712
        %v2740 = vunpack.c.l.b16 %v2713
        %v2741 = vunpack.c.l.b16 %v2714
        %v2742 = vunpack.c.l.b16 %v2715
        %v2743 = vunpack.c.l.b16 %v2716
        %v2744 = vpack.c.b16 %v2737, %v2736
        %v2745 = vpack.c.b16 %v2739, %v2738
        %v2746 = vpack.c.b16 %v2741, %v2740
        %v2747 = vpack.c.b16 %v2743, %v2742
        %v2753 = vsel %vm2237, %v2721, 0
        %v2756 = vsel %vm2237, %v2723, 0
        %v2759 = vsel %vm2237, %v2725, 0
        %v2762 = vsel %vm2237, %v2727, 0
        %v2765 = vsel %vm2237, %v2726, 0
        %2767 = vmatprep.subr.bf16.mxu0 0
        %2768 = vmatpush1.bf16.msra.mxu0 %v2744
        %2769 = vmatprep.subr.bf16.mxu0 0
        %2770 = vmatpush1.bf16.msra.mxu0 %v2745
        %2771 = vmatprep.subr.bf16.mxu0 0
        %2772 = vmatpush1.bf16.msra.mxu0 %v2746
        %2773 = vmatprep.subr.bf16.mxu0 0
        %2774 = vmatpush1.bf16.msra.mxu0 %v2747
        %2775 = vmatprep.subr.bf16.mxu0 0
        %2776 = vmatpush1.bf16.msra.mxu0 0
        %2777 = vmatprep.subr.bf16.mxu0 0
        %2778 = vmatpush1.bf16.msra.mxu0 0
        %2779 = vmatprep.subr.bf16.mxu0 0
        %2780 = vmatpush1.bf16.msra.mxu0 0
        %2781 = vmatprep.subr.bf16.mxu0 0
        %2782 = vmatpush1.bf16.msra.mxu0 0
        %2783 = vmatprep.subr.bf16.mxu0 0
        %2784 = vmatpush1.bf16.msra.mxu0 0
        %2785 = vmatprep.subr.bf16.mxu0 0
        %2786 = vmatpush1.bf16.msra.mxu0 0
        %2787 = vmatprep.subr.bf16.mxu0 0
        %2788 = vmatpush1.bf16.msra.mxu0 0
        %2789 = vmatprep.subr.bf16.mxu0 0
        %2790 = vmatpush1.bf16.msra.mxu0 0
        %2791 = vmatprep.subr.bf16.mxu0 0
        %2792 = vmatpush1.bf16.msra.mxu0 0
        %2793 = vmatprep.subr.bf16.mxu0 0
        %2794 = vmatpush1.bf16.msra.mxu0 0
        %2795 = vmatprep.subr.bf16.mxu0 0
        %2796 = vmatpush1.bf16.msra.mxu0 0
        %2797 = vmatprep.subr.bf16.mxu0 0
        %2798 = vmatpush1.bf16.msra.mxu0 0
        %2799 = vmatprep.mubr.bf16.mxu0 0
        %2800 = vmatmul.mubr.bf16.gmra.mrb[0].mxu0 %v2753
        %v2801 = vpop.f32.mrb[0].mxu0
        %v2802 = vadd.f32 0.0, %v2801
        %v2803 = vpop.f32.mrb[0].mxu0
        %v2804 = vpop.f32.mrb[0].mxu0
        %v2805 = vadd.f32 0.0, %v2804
        %v2806 = vpop.f32.mrb[0].mxu0
        %2807 = vmatprep.mubr.bf16.mxu0 0
        %2808 = vmatmul.mubr.bf16.gmra.mrb[0].mxu0 %v2756
        %v2809 = vpop.f32.mrb[0].mxu0
        %v2810 = vadd.f32 0.0, %v2809
        %v2811 = vpop.f32.mrb[0].mxu0
        %v2812 = vpop.f32.mrb[0].mxu0
        %v2813 = vadd.f32 0.0, %v2812
        %v2814 = vpop.f32.mrb[0].mxu0
        %2815 = vmatprep.mubr.bf16.mxu0 0
        %2816 = vmatmul.mubr.bf16.gmra.mrb[0].mxu0 %v2759
        %v2817 = vpop.f32.mrb[0].mxu0
        %v2818 = vadd.f32 0.0, %v2817
        %v2819 = vpop.f32.mrb[0].mxu0
        %v2820 = vpop.f32.mrb[0].mxu0
        %v2821 = vadd.f32 0.0, %v2820
        %v2822 = vpop.f32.mrb[0].mxu0
        %2823 = vmatprep.mubr.bf16.mxu0 0
        %2824 = vmatmul.mubr.bf16.gmra.mrb[0].mxu0 %v2762
        %v2825 = vpop.f32.mrb[0].mxu0
        %v2826 = vadd.f32 0.0, %v2825
        %v2827 = vpop.f32.mrb[0].mxu0
        %v2828 = vpop.f32.mrb[0].mxu0
        %v2829 = vadd.f32 0.0, %v2828
        %v2830 = vpop.f32.mrb[0].mxu0
        %2831 = vmatprep.mubr.bf16.mxu0 0
        %2832 = vmatmul.mubr.bf16.gmra.mrb[0].mxu0 %v2765
        %v2833 = vpop.f32.mrb[0].mxu0
        %v2834 = vadd.f32 0.0, %v2833
        %v2835 = vpop.f32.mrb[0].mxu0
        %v2836 = vpop.f32.mrb[0].mxu0
        %v2837 = vpop.f32.mrb[0].mxu0
        %2838 = vdwg.mxu0
        %v2839 = vadd.f32 %v2699, %v2802
        %v2840 = vadd.f32 %v2700, %v2805
        %v2841 = vadd.f32 %v2701, %v2810
        %v2842 = vadd.f32 %v2702, %v2813
        %v2843 = vadd.f32 %v2703, %v2818
        %v2844 = vadd.f32 %v2704, %v2821
        %v2845 = vadd.f32 %v2705, %v2826
        %v2846 = vadd.f32 %v2706, %v2829
        %v2847 = vadd.f32 %v2707, %v2834
        %v2848 = vld [vmem:[#allocation8] sm:$0x1]
        %v2850 = vlaneseq
        %v2851 = vshrl.u32 %v2850, 7
        %v2852 = vsub.s32 0, %v2851
        %v2853 = vrot.slane %v2848, %v2852
        %v2855 = vadd.f32 %v2839, %v2853
        %v2856 = vadd.f32 %v2840, %v2853
        %v2857 = vadd.f32 %v2841, %v2853
        %v2858 = vadd.f32 %v2842, %v2853
        %v2859 = vadd.f32 %v2843, %v2853
        %v2860 = vadd.f32 %v2844, %v2853
        %v2861 = vadd.f32 %v2845, %v2853
        %v2862 = vadd.f32 %v2846, %v2853
        %v2863 = vadd.f32 %v2847, %v2853
        %v2864 = vmax.f32 %v2855, 0.0
        %v2865 = vmax.f32 %v2856, 0.0
        %v2866 = vmax.f32 %v2857, 0.0
        %v2867 = vmax.f32 %v2858, 0.0
        %v2868 = vmax.f32 %v2859, 0.0
        %v2869 = vmax.f32 %v2860, 0.0
        %v2870 = vmax.f32 %v2861, 0.0
        %v2871 = vmax.f32 %v2862, 0.0
        %v2872 = vmax.f32 %v2863, 0.0
        %v2882 = vrot.slane %v2864, 1
        %v2883 = vrot.slane %v2865, 1
        %v2884 = vsel %vm1914, %v2882, %v2883
        %v2885 = vrot.slane %v2866, 1
        %v2886 = vsel %vm1914, %v2883, %v2885
        %v2887 = vrot.slane %v2867, 1
        %v2888 = vsel %vm1914, %v2885, %v2887
        %v2889 = vrot.slane %v2868, 1
        %v2890 = vsel %vm1914, %v2887, %v2889
        %v2891 = vrot.slane %v2869, 1
        %v2892 = vsel %vm1914, %v2889, %v2891
        %v2893 = vrot.slane %v2870, 1
        %v2894 = vsel %vm1914, %v2891, %v2893
        %v2895 = vrot.slane %v2871, 1
        %v2896 = vsel %vm1914, %v2893, %v2895
        %v2897 = vrot.slane %v2872, 1
        %v2898 = vsel %vm1914, %v2895, %v2897
        %v2908 = vsel %vm2156, %v2897, %v2872
        %v2909 = vmax.f32 %v2864, %v2884
        %v2910 = vmax.f32 %v2865, %v2886
        %v2911 = vmax.f32 %v2866, %v2888
        %v2912 = vmax.f32 %v2867, %v2890
        %v2913 = vmax.f32 %v2868, %v2892
        %v2914 = vmax.f32 %v2869, %v2894
        %v2915 = vmax.f32 %v2870, %v2896
        %v2916 = vmax.f32 %v2871, %v2898
        %v2917 = vmax.f32 %v2872, %v2908
        %v2918 = vld [vmem:[%s19] sm:$0xf]
        %v2919 = vld [vmem:[%s19 + $0x4] sm:$0xf]
        %v2920 = vld [vmem:[%s19 + $0x8] sm:$0xf]
        %v2921 = vld [vmem:[%s19 + $0xc] sm:$0xf]
        %v2922 = vld [vmem:[%s19 + $0x10] sm:$0x1]
        %v2923 = vpack.c.bf16 %v2910, %v2909
        %v2924 = vpack.c.bf16 %v2912, %v2911
        %v2925 = vpack.c.bf16 %v2914, %v2913
        %v2926 = vpack.c.bf16 %v2916, %v2915
        %v2927 = vpack.c.bf16 %v2917, %v2917
        %v2933 = vunpack.c.l.b16 %v2918
        %v2934 = vunpack.c.l.b16 %v2919
        %v2935 = vunpack.c.l.b16 %v2920
        %v2936 = vunpack.c.l.b16 %v2921
        %v2937 = vunpack.c.l.b16 %v2922
        %v2938 = vpack.c.b16 %v2934, %v2933
        %v2939 = vpack.c.b16 %v2936, %v2935
        %v2940 = vpack.c.b16 %v2937, %v2937
        %vm2941 = vcmask 556032
        %v2943 = vsel %vm2941, %v2938, 0
        %v2946 = vsel %vm2941, %v2939, 0
        %v2949 = vsel %vm2941, %v2940, 0
        %vm2951 = vcmask 1041408
        %v2953 = vsel %vm2951, %v2927, 0
        %2955 = vmatprep.subr.bf16.mxu0 0
        %2956 = vmatpush1.bf16.msra.mxu0 %v2923
        %2957 = vmatprep.subr.bf16.mxu0 0
        %2958 = vmatpush1.bf16.msra.mxu0 %v2924
        %2959 = vmatprep.subr.bf16.mxu0 0
        %2960 = vmatpush1.bf16.msra.mxu0 %v2925
        %2961 = vmatprep.subr.bf16.mxu0 0
        %2962 = vmatpush1.bf16.msra.mxu0 %v2926
        %2963 = vmatprep.subr.bf16.mxu0 0
        %2964 = vmatpush1.bf16.msra.mxu0 %v2953
        %2965 = vmatprep.subr.bf16.mxu0 0
        %2966 = vmatpush1.bf16.msra.mxu0 0
        %2967 = vmatprep.subr.bf16.mxu0 0
        %2968 = vmatpush1.bf16.msra.mxu0 0
        %2969 = vmatprep.subr.bf16.mxu0 0
        %2970 = vmatpush1.bf16.msra.mxu0 0
        %2971 = vmatprep.subr.bf16.mxu0 0
        %2972 = vmatpush1.bf16.msra.mxu0 0
        %2973 = vmatprep.subr.bf16.mxu0 0
        %2974 = vmatpush1.bf16.msra.mxu0 0
        %2975 = vmatprep.subr.bf16.mxu0 0
        %2976 = vmatpush1.bf16.msra.mxu0 0
        %2977 = vmatprep.subr.bf16.mxu0 0
        %2978 = vmatpush1.bf16.msra.mxu0 0
        %2979 = vmatprep.subr.bf16.mxu0 0
        %2980 = vmatpush1.bf16.msra.mxu0 0
        %2981 = vmatprep.subr.bf16.mxu0 0
        %2982 = vmatpush1.bf16.msra.mxu0 0
        %2983 = vmatprep.subr.bf16.mxu0 0
        %2984 = vmatpush1.bf16.msra.mxu0 0
        %2985 = vmatprep.subr.bf16.mxu0 0
        %2986 = vmatpush1.bf16.msra.mxu0 0
        %2987 = vmatprep.mubr.bf16.mxu0 0
        %2988 = vmatmul.mubr.bf16.gmra.mrb[0].mxu0 %v2943
        %v2989 = vpop.f32.mrb[0].mxu0
        %v2990 = vadd.f32 0.0, %v2989
        %v2991 = vpop.f32.mrb[0].mxu0
        %v2992 = vpop.f32.mrb[0].mxu0
        %v2993 = vadd.f32 0.0, %v2992
        %v2994 = vpop.f32.mrb[0].mxu0
        %2995 = vmatprep.mubr.bf16.mxu0 0
        %2996 = vmatmul.mubr.bf16.gmra.mrb[0].mxu0 %v2946
        %v2997 = vpop.f32.mrb[0].mxu0
        %v2998 = vadd.f32 0.0, %v2997
        %v2999 = vpop.f32.mrb[0].mxu0
        %v3000 = vpop.f32.mrb[0].mxu0
        %v3001 = vadd.f32 0.0, %v3000
        %v3002 = vpop.f32.mrb[0].mxu0
        %3003 = vmatprep.mubr.bf16.mxu0 0
        %3004 = vmatmul.mubr.bf16.gmra.mrb[0].mxu0 %v2949
        %v3005 = vpop.f32.mrb[0].mxu0
        %v3006 = vadd.f32 0.0, %v3005
        %v3007 = vpop.f32.mrb[0].mxu0
        %v3008 = vpop.f32.mrb[0].mxu0
        %v3009 = vpop.f32.mrb[0].mxu0
        %3010 = vdwg.mxu0
        %v3011 = vpack.c.bf16 %v2993, %v2990
        %v3012 = vpack.c.bf16 %v3001, %v2998
        %v3013 = vpack.c.bf16 %v3006, %v3006
        %vm3014 = vsmask.f32 256
        %v3016 = vshrl.u32 %v3011, 16
        %v3018 = vrot.slane %v3016, 7
        %v3019 = vshll.u32 %v3011, 16
        %v3021 = vor.u32 %v3018, %v3019
        %v3023 = vshrl.u32 %v3012, 16
        %v3025 = vrot.slane %v3023, 7
        %v3026 = vshll.u32 %v3012, 16
        %v3028 = vor.u32 %v3025, %v3026
        %v3029 = vsel %vm3014, %v3018, %v3028
        %v3031 = vshrl.u32 %v3013, 16
        %v3033 = vrot.slane %v3031, 7
        %v3034 = vshll.u32 %v3013, 16
        %v3036 = vor.u32 %v3033, %v3034
        %v3037 = vsel %vm3014, %v3025, %v3036
        %vm3041 = vmand %vm983, %vm3014
        %v3042 = vsel %vm3041, 0, %v3021
        %vm3043 = vcmask 1041408
        %vm3044 = vsmask.f32 1280
        %vm3045 = vmand %vm3043, %vm3044
        %v3046 = vsel %vm3045, %v3037, 0
        %v3047 = vld [vmem:[%s6] sm:$0xff]
        %v3048 = vld [vmem:[%s6 + $0x8] sm:$0xff]
        %v3049 = vld [vmem:[%s6 + $0x10] sm:$0xff]
        %v3050 = vld [vmem:[%s6 + $0x18] sm:$0xff]
        %v3051 = vld [vmem:[%s6 + $0x20] sm:$0xff]
        %v3052 = vld [vmem:[%s6 + $0x28] sm:$0xff]
        %v3053 = vld [vmem:[%s6 + $0x30] sm:$0xff]
        %v3054 = vld [vmem:[%s6 + $0x38] sm:$0xff]
        %v3055 = vld [vmem:[%s6 + $0x40] sm:$0xff]
        %v3056 = vld [vmem:[%s6 + $0x48] sm:$0xff]
        %v3057 = vld [vmem:[%s6 + $0x50] sm:$0xff]
        %v3058 = vld [vmem:[%s6 + $0x58] sm:$0xff]
        %v3059 = vld [vmem:[%s6 + $0x60] sm:$0xff]
        %v3060 = vld [vmem:[%s6 + $0x68] sm:$0xff]
        %v3061 = vld [vmem:[%s6 + $0x70] sm:$0xff]
        %v3062 = vld [vmem:[%s6 + $0x78] sm:$0xff]
        %s3063 = scalar_lea.vmem %s6, 128
        %v3064 = vld [vmem:[%s3063] sm:$0xff]
        %v3065 = vld [vmem:[%s3063 + $0x8] sm:$0xff]
        %v3066 = vld [vmem:[%s3063 + $0x10] sm:$0xff]
        %v3067 = vld [vmem:[%s3063 + $0x18] sm:$0xff]
        %v3068 = vld [vmem:[%s3063 + $0x20] sm:$0xff]
        %v3069 = vld [vmem:[%s3063 + $0x28] sm:$0xff]
        %v3070 = vld [vmem:[%s3063 + $0x30] sm:$0xff]
        %v3071 = vld [vmem:[%s3063 + $0x38] sm:$0xff]
        %v3072 = vld [vmem:[%s3063 + $0x40] sm:$0xff]
        %v3073 = vld [vmem:[%s3063 + $0x48] sm:$0xff]
        %v3074 = vld [vmem:[%s3063 + $0x50] sm:$0xff]
        %v3075 = vld [vmem:[%s3063 + $0x58] sm:$0xff]
        %v3076 = vld [vmem:[%s3063 + $0x60] sm:$0xff]
        %v3077 = vld [vmem:[%s3063 + $0x68] sm:$0xff]
        %v3078 = vld [vmem:[%s3063 + $0x70] sm:$0xff]
        %v3079 = vld [vmem:[%s3063 + $0x78] sm:$0xff]
        %v3096 = vunpack.c.l.b16 %v3064
        %v3097 = vunpack.c.h.b16 %v3064
        %v3098 = vunpack.c.l.b16 %v3065
        %v3099 = vunpack.c.h.b16 %v3065
        %v3100 = vunpack.c.l.b16 %v3066
        %v3101 = vunpack.c.h.b16 %v3066
        %v3102 = vunpack.c.l.b16 %v3067
        %v3103 = vunpack.c.h.b16 %v3067
        %v3104 = vunpack.c.l.b16 %v3068
        %v3105 = vunpack.c.h.b16 %v3068
        %v3106 = vunpack.c.l.b16 %v3069
        %v3107 = vunpack.c.h.b16 %v3069
        %v3108 = vunpack.c.l.b16 %v3070
        %v3109 = vunpack.c.h.b16 %v3070
        %v3110 = vunpack.c.l.b16 %v3071
        %v3111 = vunpack.c.h.b16 %v3071
        %v3112 = vunpack.c.l.b16 %v3072
        %v3113 = vunpack.c.h.b16 %v3072
        %v3114 = vunpack.c.l.b16 %v3073
        %v3115 = vunpack.c.h.b16 %v3073
        %v3116 = vunpack.c.l.b16 %v3074
        %v3117 = vunpack.c.h.b16 %v3074
        %v3118 = vunpack.c.l.b16 %v3075
        %v3119 = vunpack.c.h.b16 %v3075
        %v3120 = vunpack.c.l.b16 %v3076
        %v3121 = vunpack.c.h.b16 %v3076
        %v3122 = vunpack.c.l.b16 %v3077
        %v3123 = vunpack.c.h.b16 %v3077
        %v3124 = vunpack.c.l.b16 %v3078
        %v3125 = vunpack.c.h.b16 %v3078
        %v3126 = vunpack.c.l.b16 %v3079
        %v3127 = vunpack.c.h.b16 %v3079
        %v3128 = vpack.c.b16 %v3098, %v3096
        %v3129 = vpack.c.b16 %v3099, %v3097
        %v3130 = vpack.c.b16 %v3102, %v3100
        %v3131 = vpack.c.b16 %v3103, %v3101
        %v3132 = vpack.c.b16 %v3106, %v3104
        %v3133 = vpack.c.b16 %v3107, %v3105
        %v3134 = vpack.c.b16 %v3110, %v3108
        %v3135 = vpack.c.b16 %v3111, %v3109
        %v3136 = vpack.c.b16 %v3114, %v3112
        %v3137 = vpack.c.b16 %v3115, %v3113
        %v3138 = vpack.c.b16 %v3118, %v3116
        %v3139 = vpack.c.b16 %v3119, %v3117
        %v3140 = vpack.c.b16 %v3122, %v3120
        %v3141 = vpack.c.b16 %v3123, %v3121
        %v3142 = vpack.c.b16 %v3126, %v3124
        %v3143 = vpack.c.b16 %v3127, %v3125
        %3160 = vmatprep.subr.bf16.mxu0 %v3129
        %3161 = vmatpush1.bf16.msra.mxu0 %v3128
        %3162 = vmatprep.subr.bf16.mxu0 %v3131
        %3163 = vmatpush1.bf16.msra.mxu0 %v3130
        %3164 = vmatprep.subr.bf16.mxu0 %v3133
        %3165 = vmatpush1.bf16.msra.mxu0 %v3132
        %3166 = vmatprep.subr.bf16.mxu0 %v3135
        %3167 = vmatpush1.bf16.msra.mxu0 %v3134
        %3168 = vmatprep.subr.bf16.mxu0 %v3137
        %3169 = vmatpush1.bf16.msra.mxu0 %v3136
        %3170 = vmatprep.subr.bf16.mxu0 %v3139
        %3171 = vmatpush1.bf16.msra.mxu0 %v3138
        %3172 = vmatprep.subr.bf16.mxu0 %v3141
        %3173 = vmatpush1.bf16.msra.mxu0 %v3140
        %3174 = vmatprep.subr.bf16.mxu0 %v3143
        %3175 = vmatpush1.bf16.msra.mxu0 %v3142
        %3176 = vmatprep.subr.bf16.mxu0 0
        %3177 = vmatpush1.bf16.msra.mxu0 0
        %3178 = vmatprep.subr.bf16.mxu0 0
        %3179 = vmatpush1.bf16.msra.mxu0 0
        %3180 = vmatprep.subr.bf16.mxu0 0
        %3181 = vmatpush1.bf16.msra.mxu0 0
        %3182 = vmatprep.subr.bf16.mxu0 0
        %3183 = vmatpush1.bf16.msra.mxu0 0
        %3184 = vmatprep.subr.bf16.mxu0 0
        %3185 = vmatpush1.bf16.msra.mxu0 0
        %3186 = vmatprep.subr.bf16.mxu0 0
        %3187 = vmatpush1.bf16.msra.mxu0 0
        %3188 = vmatprep.subr.bf16.mxu0 0
        %3189 = vmatpush1.bf16.msra.mxu0 0
        %3190 = vmatprep.subr.bf16.mxu0 0
        %3191 = vmatpush1.bf16.msra.mxu0 0
        %3192 = vmatprep.mubr.bf16.mxu0 0
        %3193 = vmatmul.mubr.bf16.gmra.mrb[0].mxu0 %v3011
        %v3194 = vpop.f32.mrb[0].mxu0
        %v3195 = vadd.f32 0.0, %v3194
        %v3196 = vpop.f32.mrb[0].mxu0
        %v3197 = vadd.f32 0.0, %v3196
        %v3198 = vpop.f32.mrb[0].mxu0
        %v3199 = vadd.f32 0.0, %v3198
        %v3200 = vpop.f32.mrb[0].mxu0
        %v3201 = vadd.f32 0.0, %v3200
        %3202 = vmatprep.mubr.bf16.mxu0 0
        %3203 = vmatmul.mubr.bf16.gmra.mrb[0].mxu0 %v3012
        %v3204 = vpop.f32.mrb[0].mxu0
        %v3205 = vadd.f32 0.0, %v3204
        %v3206 = vpop.f32.mrb[0].mxu0
        %v3207 = vadd.f32 0.0, %v3206
        %v3208 = vpop.f32.mrb[0].mxu0
        %v3209 = vadd.f32 0.0, %v3208
        %v3210 = vpop.f32.mrb[0].mxu0
        %v3211 = vadd.f32 0.0, %v3210
        %3212 = vmatprep.mubr.bf16.mxu0 0
        %3213 = vmatmul.mubr.bf16.gmra.mrb[0].mxu0 %v3013
        %v3214 = vpop.f32.mrb[0].mxu0
        %v3215 = vadd.f32 0.0, %v3214
        %v3216 = vpop.f32.mrb[0].mxu0
        %v3217 = vadd.f32 0.0, %v3216
        %v3218 = vpop.f32.mrb[0].mxu0
        %v3219 = vpop.f32.mrb[0].mxu0
        %3220 = vdwg.mxu0
        %v3237 = vunpack.c.l.b16 %v3047
        %v3238 = vunpack.c.h.b16 %v3047
        %v3239 = vunpack.c.l.b16 %v3048
        %v3240 = vunpack.c.h.b16 %v3048
        %v3241 = vunpack.c.l.b16 %v3049
        %v3242 = vunpack.c.h.b16 %v3049
        %v3243 = vunpack.c.l.b16 %v3050
        %v3244 = vunpack.c.h.b16 %v3050
        %v3245 = vunpack.c.l.b16 %v3051
        %v3246 = vunpack.c.h.b16 %v3051
        %v3247 = vunpack.c.l.b16 %v3052
        %v3248 = vunpack.c.h.b16 %v3052
        %v3249 = vunpack.c.l.b16 %v3053
        %v3250 = vunpack.c.h.b16 %v3053
        %v3251 = vunpack.c.l.b16 %v3054
        %v3252 = vunpack.c.h.b16 %v3054
        %v3253 = vunpack.c.l.b16 %v3055
        %v3254 = vunpack.c.h.b16 %v3055
        %v3255 = vunpack.c.l.b16 %v3056
        %v3256 = vunpack.c.h.b16 %v3056
        %v3257 = vunpack.c.l.b16 %v3057
        %v3258 = vunpack.c.h.b16 %v3057
        %v3259 = vunpack.c.l.b16 %v3058
        %v3260 = vunpack.c.h.b16 %v3058
        %v3261 = vunpack.c.l.b16 %v3059
        %v3262 = vunpack.c.h.b16 %v3059
        %v3263 = vunpack.c.l.b16 %v3060
        %v3264 = vunpack.c.h.b16 %v3060
        %v3265 = vunpack.c.l.b16 %v3061
        %v3266 = vunpack.c.h.b16 %v3061
        %v3267 = vunpack.c.l.b16 %v3062
        %v3268 = vunpack.c.h.b16 %v3062
        %v3269 = vpack.c.b16 %v3239, %v3237
        %v3270 = vpack.c.b16 %v3240, %v3238
        %v3271 = vpack.c.b16 %v3243, %v3241
        %v3272 = vpack.c.b16 %v3244, %v3242
        %v3273 = vpack.c.b16 %v3247, %v3245
        %v3274 = vpack.c.b16 %v3248, %v3246
        %v3275 = vpack.c.b16 %v3251, %v3249
        %v3276 = vpack.c.b16 %v3252, %v3250
        %v3277 = vpack.c.b16 %v3255, %v3253
        %v3278 = vpack.c.b16 %v3256, %v3254
        %v3279 = vpack.c.b16 %v3259, %v3257
        %v3280 = vpack.c.b16 %v3260, %v3258
        %v3281 = vpack.c.b16 %v3263, %v3261
        %v3282 = vpack.c.b16 %v3264, %v3262
        %v3283 = vpack.c.b16 %v3267, %v3265
        %v3284 = vpack.c.b16 %v3268, %v3266
        %3301 = vmatprep.subr.bf16.mxu0 %v3270
        %3302 = vmatpush1.bf16.msra.mxu0 %v3269
        %3303 = vmatprep.subr.bf16.mxu0 %v3272
        %3304 = vmatpush1.bf16.msra.mxu0 %v3271
        %3305 = vmatprep.subr.bf16.mxu0 %v3274
        %3306 = vmatpush1.bf16.msra.mxu0 %v3273
        %3307 = vmatprep.subr.bf16.mxu0 %v3276
        %3308 = vmatpush1.bf16.msra.mxu0 %v3275
        %3309 = vmatprep.subr.bf16.mxu0 %v3278
        %3310 = vmatpush1.bf16.msra.mxu0 %v3277
        %3311 = vmatprep.subr.bf16.mxu0 %v3280
        %3312 = vmatpush1.bf16.msra.mxu0 %v3279
        %3313 = vmatprep.subr.bf16.mxu0 %v3282
        %3314 = vmatpush1.bf16.msra.mxu0 %v3281
        %3315 = vmatprep.subr.bf16.mxu0 %v3284
        %3316 = vmatpush1.bf16.msra.mxu0 %v3283
        %3317 = vmatprep.subr.bf16.mxu0 0
        %3318 = vmatpush1.bf16.msra.mxu0 0
        %3319 = vmatprep.subr.bf16.mxu0 0
        %3320 = vmatpush1.bf16.msra.mxu0 0
        %3321 = vmatprep.subr.bf16.mxu0 0
        %3322 = vmatpush1.bf16.msra.mxu0 0
        %3323 = vmatprep.subr.bf16.mxu0 0
        %3324 = vmatpush1.bf16.msra.mxu0 0
        %3325 = vmatprep.subr.bf16.mxu0 0
        %3326 = vmatpush1.bf16.msra.mxu0 0
        %3327 = vmatprep.subr.bf16.mxu0 0
        %3328 = vmatpush1.bf16.msra.mxu0 0
        %3329 = vmatprep.subr.bf16.mxu0 0
        %3330 = vmatpush1.bf16.msra.mxu0 0
        %3331 = vmatprep.subr.bf16.mxu0 0
        %3332 = vmatpush1.bf16.msra.mxu0 0
        %3333 = vmatprep.mubr.bf16.mxu0 0
        %3334 = vmatmul.mubr.bf16.gmra.mrb[0].mxu0 %v3042
        %v3335 = vpop.f32.mrb[0].mxu0
        %v3336 = vadd.f32 %v3195, %v3335
        %v3337 = vpop.f32.mrb[0].mxu0
        %v3338 = vadd.f32 %v3197, %v3337
        %v3339 = vpop.f32.mrb[0].mxu0
        %v3340 = vadd.f32 %v3199, %v3339
        %v3341 = vpop.f32.mrb[0].mxu0
        %v3342 = vadd.f32 %v3201, %v3341
        %3343 = vmatprep.mubr.bf16.mxu0 0
        %3344 = vmatmul.mubr.bf16.gmra.mrb[0].mxu0 %v3029
        %v3345 = vpop.f32.mrb[0].mxu0
        %v3346 = vadd.f32 %v3205, %v3345
        %v3347 = vpop.f32.mrb[0].mxu0
        %v3348 = vadd.f32 %v3207, %v3347
        %v3349 = vpop.f32.mrb[0].mxu0
        %v3350 = vadd.f32 %v3209, %v3349
        %v3351 = vpop.f32.mrb[0].mxu0
        %v3352 = vadd.f32 %v3211, %v3351
        %3353 = vmatprep.mubr.bf16.mxu0 0
        %3354 = vmatmul.mubr.bf16.gmra.mrb[0].mxu0 %v3046
        %v3355 = vpop.f32.mrb[0].mxu0
        %v3356 = vadd.f32 %v3215, %v3355
        %v3357 = vpop.f32.mrb[0].mxu0
        %v3358 = vadd.f32 %v3217, %v3357
        %v3359 = vpop.f32.mrb[0].mxu0
        %v3360 = vpop.f32.mrb[0].mxu0
        %3361 = vdwg.mxu0
        %s3362 = scalar_lea.vmem %s6, 256
        %v3363 = vld [vmem:[%s3362] sm:$0xff]
        %v3364 = vld [vmem:[%s3362 + $0x8] sm:$0xff]
        %v3365 = vld [vmem:[%s3362 + $0x10] sm:$0xff]
        %v3366 = vld [vmem:[%s3362 + $0x18] sm:$0xff]
        %v3367 = vld [vmem:[%s3362 + $0x20] sm:$0xff]
        %v3368 = vld [vmem:[%s3362 + $0x28] sm:$0xff]
        %v3369 = vld [vmem:[%s3362 + $0x30] sm:$0xff]
        %v3370 = vld [vmem:[%s3362 + $0x38] sm:$0xff]
        %v3371 = vld [vmem:[%s3362 + $0x40] sm:$0xff]
        %v3372 = vld [vmem:[%s3362 + $0x48] sm:$0xff]
        %v3373 = vld [vmem:[%s3362 + $0x50] sm:$0xff]
        %v3374 = vld [vmem:[%s3362 + $0x58] sm:$0xff]
        %v3375 = vld [vmem:[%s3362 + $0x60] sm:$0xff]
        %v3376 = vld [vmem:[%s3362 + $0x68] sm:$0xff]
        %v3377 = vld [vmem:[%s3362 + $0x70] sm:$0xff]
        %v3378 = vld [vmem:[%s3362 + $0x78] sm:$0xff]
        %vm3381 = vcmask 1046528
        %v3382 = vrot.slane %v3042, 1
        %v3383 = vrot.slane %v3029, 1
        %v3384 = vsel %vm3381, %v3382, %v3383
        %v3385 = vrot.slane %v3046, 1
        %v3386 = vsel %vm3381, %v3383, %v3385
        %v3406 = vunpack.c.l.b16 %v3363
        %v3407 = vunpack.c.h.b16 %v3363
        %v3408 = vunpack.c.l.b16 %v3364
        %v3409 = vunpack.c.h.b16 %v3364
        %v3410 = vunpack.c.l.b16 %v3365
        %v3411 = vunpack.c.h.b16 %v3365
        %v3412 = vunpack.c.l.b16 %v3366
        %v3413 = vunpack.c.h.b16 %v3366
        %v3414 = vunpack.c.l.b16 %v3367
        %v3415 = vunpack.c.h.b16 %v3367
        %v3416 = vunpack.c.l.b16 %v3368
        %v3417 = vunpack.c.h.b16 %v3368
        %v3418 = vunpack.c.l.b16 %v3369
        %v3419 = vunpack.c.h.b16 %v3369
        %v3420 = vunpack.c.l.b16 %v3370
        %v3421 = vunpack.c.h.b16 %v3370
        %v3422 = vunpack.c.l.b16 %v3371
        %v3423 = vunpack.c.h.b16 %v3371
        %v3424 = vunpack.c.l.b16 %v3372
        %v3425 = vunpack.c.h.b16 %v3372
        %v3426 = vunpack.c.l.b16 %v3373
        %v3427 = vunpack.c.h.b16 %v3373
        %v3428 = vunpack.c.l.b16 %v3374
        %v3429 = vunpack.c.h.b16 %v3374
        %v3430 = vunpack.c.l.b16 %v3375
        %v3431 = vunpack.c.h.b16 %v3375
        %v3432 = vunpack.c.l.b16 %v3376
        %v3433 = vunpack.c.h.b16 %v3376
        %v3434 = vunpack.c.l.b16 %v3377
        %v3435 = vunpack.c.h.b16 %v3377
        %v3436 = vunpack.c.l.b16 %v3378
        %v3437 = vunpack.c.h.b16 %v3378
        %v3438 = vpack.c.b16 %v3408, %v3406
        %v3439 = vpack.c.b16 %v3409, %v3407
        %v3440 = vpack.c.b16 %v3412, %v3410
        %v3441 = vpack.c.b16 %v3413, %v3411
        %v3442 = vpack.c.b16 %v3416, %v3414
        %v3443 = vpack.c.b16 %v3417, %v3415
        %v3444 = vpack.c.b16 %v3420, %v3418
        %v3445 = vpack.c.b16 %v3421, %v3419
        %v3446 = vpack.c.b16 %v3424, %v3422
        %v3447 = vpack.c.b16 %v3425, %v3423
        %v3448 = vpack.c.b16 %v3428, %v3426
        %v3449 = vpack.c.b16 %v3429, %v3427
        %v3450 = vpack.c.b16 %v3432, %v3430
        %v3451 = vpack.c.b16 %v3433, %v3431
        %v3452 = vpack.c.b16 %v3436, %v3434
        %v3453 = vpack.c.b16 %v3437, %v3435
        %3470 = vmatprep.subr.bf16.mxu0 %v3439
        %3471 = vmatpush1.bf16.msra.mxu0 %v3438
        %3472 = vmatprep.subr.bf16.mxu0 %v3441
        %3473 = vmatpush1.bf16.msra.mxu0 %v3440
        %3474 = vmatprep.subr.bf16.mxu0 %v3443
        %3475 = vmatpush1.bf16.msra.mxu0 %v3442
        %3476 = vmatprep.subr.bf16.mxu0 %v3445
        %3477 = vmatpush1.bf16.msra.mxu0 %v3444
        %3478 = vmatprep.subr.bf16.mxu0 %v3447
        %3479 = vmatpush1.bf16.msra.mxu0 %v3446
        %3480 = vmatprep.subr.bf16.mxu0 %v3449
        %3481 = vmatpush1.bf16.msra.mxu0 %v3448
        %3482 = vmatprep.subr.bf16.mxu0 %v3451
        %3483 = vmatpush1.bf16.msra.mxu0 %v3450
        %3484 = vmatprep.subr.bf16.mxu0 %v3453
        %3485 = vmatpush1.bf16.msra.mxu0 %v3452
        %3486 = vmatprep.subr.bf16.mxu0 0
        %3487 = vmatpush1.bf16.msra.mxu0 0
        %3488 = vmatprep.subr.bf16.mxu0 0
        %3489 = vmatpush1.bf16.msra.mxu0 0
        %3490 = vmatprep.subr.bf16.mxu0 0
        %3491 = vmatpush1.bf16.msra.mxu0 0
        %3492 = vmatprep.subr.bf16.mxu0 0
        %3493 = vmatpush1.bf16.msra.mxu0 0
        %3494 = vmatprep.subr.bf16.mxu0 0
        %3495 = vmatpush1.bf16.msra.mxu0 0
        %3496 = vmatprep.subr.bf16.mxu0 0
        %3497 = vmatpush1.bf16.msra.mxu0 0
        %3498 = vmatprep.subr.bf16.mxu0 0
        %3499 = vmatpush1.bf16.msra.mxu0 0
        %3500 = vmatprep.subr.bf16.mxu0 0
        %3501 = vmatpush1.bf16.msra.mxu0 0
        %3502 = vmatprep.mubr.bf16.mxu0 0
        %3503 = vmatmul.mubr.bf16.gmra.mrb[0].mxu0 %v3384
        %v3504 = vpop.f32.mrb[0].mxu0
        %v3505 = vadd.f32 0.0, %v3504
        %v3506 = vpop.f32.mrb[0].mxu0
        %v3507 = vadd.f32 0.0, %v3506
        %v3508 = vpop.f32.mrb[0].mxu0
        %v3509 = vadd.f32 0.0, %v3508
        %v3510 = vpop.f32.mrb[0].mxu0
        %v3511 = vadd.f32 0.0, %v3510
        %3512 = vmatprep.mubr.bf16.mxu0 0
        %3513 = vmatmul.mubr.bf16.gmra.mrb[0].mxu0 %v3386
        %v3514 = vpop.f32.mrb[0].mxu0
        %v3515 = vadd.f32 0.0, %v3514
        %v3516 = vpop.f32.mrb[0].mxu0
        %v3517 = vadd.f32 0.0, %v3516
        %v3518 = vpop.f32.mrb[0].mxu0
        %v3519 = vadd.f32 0.0, %v3518
        %v3520 = vpop.f32.mrb[0].mxu0
        %v3521 = vadd.f32 0.0, %v3520
        %3522 = vmatprep.mubr.bf16.mxu0 0
        %3523 = vmatmul.mubr.bf16.gmra.mrb[0].mxu0 %v3385
        %v3524 = vpop.f32.mrb[0].mxu0
        %v3525 = vadd.f32 0.0, %v3524
        %v3526 = vpop.f32.mrb[0].mxu0
        %v3527 = vadd.f32 0.0, %v3526
        %v3528 = vpop.f32.mrb[0].mxu0
        %v3529 = vpop.f32.mrb[0].mxu0
        %3530 = vdwg.mxu0
        %v3531 = vadd.f32 %v3336, %v3505
        %v3532 = vadd.f32 %v3338, %v3507
        %v3533 = vadd.f32 %v3340, %v3509
        %v3534 = vadd.f32 %v3342, %v3511
        %v3535 = vadd.f32 %v3346, %v3515
        %v3536 = vadd.f32 %v3348, %v3517
        %v3537 = vadd.f32 %v3350, %v3519
        %v3538 = vadd.f32 %v3352, %v3521
        %v3539 = vadd.f32 %v3356, %v3525
        %v3540 = vadd.f32 %v3358, %v3527
        %v3541 = vld [vmem:[#allocation10] sm:$0x3]
        %v3543 = vlaneseq
        %v3544 = vshrl.u32 %v3543, 7
        %v3545 = vsub.s32 0, %v3544
        %v3546 = vrot.slane %v3541, %v3545
        %v3547 = vlaneseq
        %v3548 = vshrl.u32 %v3547, 7
        %v3549 = vsub.s32 1, %v3548
        %v3550 = vrot.slane %v3541, %v3549
        %v3553 = vadd.f32 %v3531, %v3546
        %v3554 = vadd.f32 %v3532, %v3550
        %v3555 = vadd.f32 %v3533, %v3546
        %v3556 = vadd.f32 %v3534, %v3550
        %v3557 = vadd.f32 %v3535, %v3546
        %v3558 = vadd.f32 %v3536, %v3550
        %v3559 = vadd.f32 %v3537, %v3546
        %v3560 = vadd.f32 %v3538, %v3550
        %v3561 = vadd.f32 %v3539, %v3546
        %v3562 = vadd.f32 %v3540, %v3550
        %v3563 = vmax.f32 %v3553, 0.0
        %v3564 = vmax.f32 %v3554, 0.0
        %v3565 = vmax.f32 %v3555, 0.0
        %v3566 = vmax.f32 %v3556, 0.0
        %v3567 = vmax.f32 %v3557, 0.0
        %v3568 = vmax.f32 %v3558, 0.0
        %v3569 = vmax.f32 %v3559, 0.0
        %v3570 = vmax.f32 %v3560, 0.0
        %v3571 = vmax.f32 %v3561, 0.0
        %v3572 = vmax.f32 %v3562, 0.0
        %v3583 = vrot.slane %v3563, 1
        %v3584 = vrot.slane %v3565, 1
        %v3585 = vsel %vm1914, %v3583, %v3584
        %v3586 = vrot.slane %v3564, 1
        %v3587 = vrot.slane %v3566, 1
        %v3588 = vsel %vm1914, %v3586, %v3587
        %v3589 = vrot.slane %v3567, 1
        %v3590 = vsel %vm1914, %v3584, %v3589
        %v3591 = vrot.slane %v3568, 1
        %v3592 = vsel %vm1914, %v3587, %v3591
        %v3593 = vrot.slane %v3569, 1
        %v3594 = vsel %vm1914, %v3589, %v3593
        %v3595 = vrot.slane %v3570, 1
        %v3596 = vsel %vm1914, %v3591, %v3595
        %v3597 = vrot.slane %v3571, 1
        %v3598 = vsel %vm1914, %v3593, %v3597
        %v3599 = vrot.slane %v3572, 1
        %v3600 = vsel %vm1914, %v3595, %v3599
        %v3611 = vsel %vm1001, %v3597, %v3571
        %v3612 = vsel %vm1001, %v3599, %v3572
        %v3613 = vmax.f32 %v3563, %v3585
        %v3614 = vmax.f32 %v3564, %v3588
        %v3615 = vmax.f32 %v3565, %v3590
        %v3616 = vmax.f32 %v3566, %v3592
        %v3617 = vmax.f32 %v3567, %v3594
        %v3618 = vmax.f32 %v3568, %v3596
        %v3619 = vmax.f32 %v3569, %v3598
        %v3620 = vmax.f32 %v3570, %v3600
        %v3621 = vmax.f32 %v3571, %v3611
        %v3622 = vmax.f32 %v3572, %v3612
        %v3623 = vld [vmem:[#allocation22] sm:$0xf]
        %v3624 = vld [vmem:[#allocation22 + $0x4] sm:$0xf]
        %v3625 = vld [vmem:[#allocation22 + $0x8] sm:$0x1]
        %v3626 = vpack.c.bf16 %v3615, %v3613
        %v3627 = vpack.c.bf16 %v3616, %v3614
        %v3628 = vpack.c.bf16 %v3619, %v3617
        %v3629 = vpack.c.bf16 %v3620, %v3618
        %v3630 = vpack.c.bf16 %v3621, %v3621
        %v3631 = vpack.c.bf16 %v3622, %v3622
        %v3635 = vunpack.c.l.b16 %v3623
        %v3636 = vunpack.c.l.b16 %v3624
        %v3637 = vunpack.c.l.b16 %v3625
        %v3638 = vpack.c.b16 %v3636, %v3635
        %v3639 = vpack.c.b16 %v3637, %v3637
        %vm3640 = vcmask 277504
        %v3642 = vsel %vm3640, %v3638, 0
        %v3645 = vsel %vm3640, %v3639, 0
        %v3648 = vsel %vm1001, %v3630, 0
        %v3651 = vsel %vm1001, %v3631, 0
        %3653 = vmatprep.subr.bf16.mxu0 %v3627
        %3654 = vmatpush1.bf16.msra.mxu0 %v3626
        %3655 = vmatprep.subr.bf16.mxu0 %v3629
        %3656 = vmatpush1.bf16.msra.mxu0 %v3628
        %3657 = vmatprep.subr.bf16.mxu0 %v3651
        %3658 = vmatpush1.bf16.msra.mxu0 %v3648
        %3659 = vmatprep.subr.bf16.mxu0 0
        %3660 = vmatpush1.bf16.msra.mxu0 0
        %3661 = vmatprep.subr.bf16.mxu0 0
        %3662 = vmatpush1.bf16.msra.mxu0 0
        %3663 = vmatprep.subr.bf16.mxu0 0
        %3664 = vmatpush1.bf16.msra.mxu0 0
        %3665 = vmatprep.subr.bf16.mxu0 0
        %3666 = vmatpush1.bf16.msra.mxu0 0
        %3667 = vmatprep.subr.bf16.mxu0 0
        %3668 = vmatpush1.bf16.msra.mxu0 0
        %3669 = vmatprep.subr.bf16.mxu0 0
        %3670 = vmatpush1.bf16.msra.mxu0 0
        %3671 = vmatprep.subr.bf16.mxu0 0
        %3672 = vmatpush1.bf16.msra.mxu0 0
        %3673 = vmatprep.subr.bf16.mxu0 0
        %3674 = vmatpush1.bf16.msra.mxu0 0
        %3675 = vmatprep.subr.bf16.mxu0 0
        %3676 = vmatpush1.bf16.msra.mxu0 0
        %3677 = vmatprep.subr.bf16.mxu0 0
        %3678 = vmatpush1.bf16.msra.mxu0 0
        %3679 = vmatprep.subr.bf16.mxu0 0
        %3680 = vmatpush1.bf16.msra.mxu0 0
        %3681 = vmatprep.subr.bf16.mxu0 0
        %3682 = vmatpush1.bf16.msra.mxu0 0
        %3683 = vmatprep.subr.bf16.mxu0 0
        %3684 = vmatpush1.bf16.msra.mxu0 0
        %3685 = vmatprep.mubr.bf16.mxu0 0
        %3686 = vmatmul.mubr.bf16.gmra.mrb[0].mxu0 %v3642
        %v3687 = vpop.f32.mrb[0].mxu0
        %v3688 = vadd.f32 0.0, %v3687
        %v3689 = vpop.f32.mrb[0].mxu0
        %v3690 = vadd.f32 0.0, %v3689
        %v3691 = vpop.f32.mrb[0].mxu0
        %v3692 = vadd.f32 0.0, %v3691
        %v3693 = vpop.f32.mrb[0].mxu0
        %v3694 = vadd.f32 0.0, %v3693
        %3695 = vmatprep.mubr.bf16.mxu0 0
        %3696 = vmatmul.mubr.bf16.gmra.mrb[0].mxu0 %v3645
        %v3697 = vpop.f32.mrb[0].mxu0
        %v3698 = vadd.f32 0.0, %v3697
        %v3699 = vpop.f32.mrb[0].mxu0
        %v3700 = vadd.f32 0.0, %v3699
        %v3701 = vpop.f32.mrb[0].mxu0
        %v3702 = vpop.f32.mrb[0].mxu0
        %3703 = vdwg.mxu0
        %v3704 = vpack.c.bf16 %v3692, %v3688
        %v3705 = vpack.c.bf16 %v3694, %v3690
        %v3706 = vpack.c.bf16 %v3698, %v3698
        %v3707 = vpack.c.bf16 %v3700, %v3700
        %v3709 = vshrl.u32 %v3704, 16
        %v3711 = vrot.slane %v3709, 7
        %v3712 = vshll.u32 %v3704, 16
        %v3714 = vor.u32 %v3711, %v3712
        %v3716 = vshrl.u32 %v3705, 16
        %v3718 = vrot.slane %v3716, 7
        %v3719 = vshll.u32 %v3705, 16
        %v3721 = vor.u32 %v3718, %v3719
        %v3723 = vshll.u32 %v3706, 16
        %v3725 = vsel %vm3014, %v3711, %v3723
        %v3727 = vshll.u32 %v3707, 16
        %v3729 = vsel %vm3014, %v3718, %v3727
        %v3732 = vsel %vm3041, 0, %v3714
        %v3733 = vsel %vm3041, 0, %v3721
        %v3735 = vsel %vm1001, %v3725, 0
        %v3738 = vsel %vm1001, %v3729, 0
        %v3740 = vld [vmem:[#allocation11] sm:$0xff]
        %v3741 = vld [vmem:[#allocation11 + $0x8] sm:$0xff]
        %v3742 = vld [vmem:[#allocation11 + $0x10] sm:$0xff]
        %v3743 = vld [vmem:[#allocation11 + $0x18] sm:$0xff]
        %v3744 = vld [vmem:[#allocation11 + $0x20] sm:$0xff]
        %v3745 = vld [vmem:[#allocation11 + $0x28] sm:$0xff]
        %v3746 = vld [vmem:[#allocation11 + $0x30] sm:$0xff]
        %v3747 = vld [vmem:[#allocation11 + $0x38] sm:$0xff]
        %v3748 = vld [vmem:[#allocation11 + $0x40] sm:$0xff]
        %v3749 = vld [vmem:[#allocation11 + $0x48] sm:$0xff]
        %v3750 = vld [vmem:[#allocation11 + $0x50] sm:$0xff]
        %v3751 = vld [vmem:[#allocation11 + $0x58] sm:$0xff]
        %v3752 = vld [vmem:[#allocation11 + $0x60] sm:$0xff]
        %v3753 = vld [vmem:[#allocation11 + $0x68] sm:$0xff]
        %v3754 = vld [vmem:[#allocation11 + $0x70] sm:$0xff]
        %v3755 = vld [vmem:[#allocation11 + $0x78] sm:$0xff]
        %v3756 = vld [vmem:[#allocation11 + $0x80] sm:$0xff]
        %v3757 = vld [vmem:[#allocation11 + $0x88] sm:$0xff]
        %v3758 = vld [vmem:[#allocation11 + $0x90] sm:$0xff]
        %v3759 = vld [vmem:[#allocation11 + $0x98] sm:$0xff]
        %v3760 = vld [vmem:[#allocation11 + $0xa0] sm:$0xff]
        %v3761 = vld [vmem:[#allocation11 + $0xa8] sm:$0xff]
        %v3762 = vld [vmem:[#allocation11 + $0xb0] sm:$0xff]
        %v3763 = vld [vmem:[#allocation11 + $0xb8] sm:$0xff]
        %v3764 = vld [vmem:[#allocation11 + $0xc0] sm:$0xff]
        %v3765 = vld [vmem:[#allocation11 + $0xc8] sm:$0xff]
        %v3766 = vld [vmem:[#allocation11 + $0xd0] sm:$0xff]
        %v3767 = vld [vmem:[#allocation11 + $0xd8] sm:$0xff]
        %v3768 = vld [vmem:[#allocation11 + $0xe0] sm:$0xff]
        %v3769 = vld [vmem:[#allocation11 + $0xe8] sm:$0xff]
        %v3770 = vld [vmem:[#allocation11 + $0xf0] sm:$0xff]
        %v3771 = vld [vmem:[#allocation11 + $0xf8] sm:$0xff]
        %s3772 = scalar_lea.vmem [#allocation11], 256
        %v3773 = vld [vmem:[%s3772] sm:$0xff]
        %v3774 = vld [vmem:[%s3772 + $0x8] sm:$0xff]
        %v3775 = vld [vmem:[%s3772 + $0x10] sm:$0xff]
        %v3776 = vld [vmem:[%s3772 + $0x18] sm:$0xff]
        %v3777 = vld [vmem:[%s3772 + $0x20] sm:$0xff]
        %v3778 = vld [vmem:[%s3772 + $0x28] sm:$0xff]
        %v3779 = vld [vmem:[%s3772 + $0x30] sm:$0xff]
        %v3780 = vld [vmem:[%s3772 + $0x38] sm:$0xff]
        %v3781 = vld [vmem:[%s3772 + $0x40] sm:$0xff]
        %v3782 = vld [vmem:[%s3772 + $0x48] sm:$0xff]
        %v3783 = vld [vmem:[%s3772 + $0x50] sm:$0xff]
        %v3784 = vld [vmem:[%s3772 + $0x58] sm:$0xff]
        %v3785 = vld [vmem:[%s3772 + $0x60] sm:$0xff]
        %v3786 = vld [vmem:[%s3772 + $0x68] sm:$0xff]
        %v3787 = vld [vmem:[%s3772 + $0x70] sm:$0xff]
        %v3788 = vld [vmem:[%s3772 + $0x78] sm:$0xff]
        %v3789 = vld [vmem:[%s3772 + $0x80] sm:$0xff]
        %v3790 = vld [vmem:[%s3772 + $0x88] sm:$0xff]
        %v3791 = vld [vmem:[%s3772 + $0x90] sm:$0xff]
        %v3792 = vld [vmem:[%s3772 + $0x98] sm:$0xff]
        %v3793 = vld [vmem:[%s3772 + $0xa0] sm:$0xff]
        %v3794 = vld [vmem:[%s3772 + $0xa8] sm:$0xff]
        %v3795 = vld [vmem:[%s3772 + $0xb0] sm:$0xff]
        %v3796 = vld [vmem:[%s3772 + $0xb8] sm:$0xff]
        %v3797 = vld [vmem:[%s3772 + $0xc0] sm:$0xff]
        %v3798 = vld [vmem:[%s3772 + $0xc8] sm:$0xff]
        %v3799 = vld [vmem:[%s3772 + $0xd0] sm:$0xff]
        %v3800 = vld [vmem:[%s3772 + $0xd8] sm:$0xff]
        %v3801 = vld [vmem:[%s3772 + $0xe0] sm:$0xff]
        %v3802 = vld [vmem:[%s3772 + $0xe8] sm:$0xff]
        %v3803 = vld [vmem:[%s3772 + $0xf0] sm:$0xff]
        %v3804 = vld [vmem:[%s3772 + $0xf8] sm:$0xff]
        %v3837 = vunpack.c.l.b16 %v3773
        %v3838 = vunpack.c.h.b16 %v3773
        %v3839 = vunpack.c.l.b16 %v3774
        %v3840 = vunpack.c.h.b16 %v3774
        %v3841 = vunpack.c.l.b16 %v3775
        %v3842 = vunpack.c.h.b16 %v3775
        %v3843 = vunpack.c.l.b16 %v3776
        %v3844 = vunpack.c.h.b16 %v3776
        %v3845 = vunpack.c.l.b16 %v3777
        %v3846 = vunpack.c.h.b16 %v3777
        %v3847 = vunpack.c.l.b16 %v3778
        %v3848 = vunpack.c.h.b16 %v3778
        %v3849 = vunpack.c.l.b16 %v3779
        %v3850 = vunpack.c.h.b16 %v3779
        %v3851 = vunpack.c.l.b16 %v3780
        %v3852 = vunpack.c.h.b16 %v3780
        %v3853 = vunpack.c.l.b16 %v3781
        %v3854 = vunpack.c.h.b16 %v3781
        %v3855 = vunpack.c.l.b16 %v3782
        %v3856 = vunpack.c.h.b16 %v3782
        %v3857 = vunpack.c.l.b16 %v3783
        %v3858 = vunpack.c.h.b16 %v3783
        %v3859 = vunpack.c.l.b16 %v3784
        %v3860 = vunpack.c.h.b16 %v3784
        %v3861 = vunpack.c.l.b16 %v3785
        %v3862 = vunpack.c.h.b16 %v3785
        %v3863 = vunpack.c.l.b16 %v3786
        %v3864 = vunpack.c.h.b16 %v3786
        %v3865 = vunpack.c.l.b16 %v3787
        %v3866 = vunpack.c.h.b16 %v3787
        %v3867 = vunpack.c.l.b16 %v3788
        %v3868 = vunpack.c.h.b16 %v3788
        %v3869 = vunpack.c.l.b16 %v3789
        %v3870 = vunpack.c.h.b16 %v3789
        %v3871 = vunpack.c.l.b16 %v3790
        %v3872 = vunpack.c.h.b16 %v3790
        %v3873 = vunpack.c.l.b16 %v3791
        %v3874 = vunpack.c.h.b16 %v3791
        %v3875 = vunpack.c.l.b16 %v3792
        %v3876 = vunpack.c.h.b16 %v3792
        %v3877 = vunpack.c.l.b16 %v3793
        %v3878 = vunpack.c.h.b16 %v3793
        %v3879 = vunpack.c.l.b16 %v3794
        %v3880 = vunpack.c.h.b16 %v3794
        %v3881 = vunpack.c.l.b16 %v3795
        %v3882 = vunpack.c.h.b16 %v3795
        %v3883 = vunpack.c.l.b16 %v3796
        %v3884 = vunpack.c.h.b16 %v3796
        %v3885 = vunpack.c.l.b16 %v3797
        %v3886 = vunpack.c.h.b16 %v3797
        %v3887 = vunpack.c.l.b16 %v3798
        %v3888 = vunpack.c.h.b16 %v3798
        %v3889 = vunpack.c.l.b16 %v3799
        %v3890 = vunpack.c.h.b16 %v3799
        %v3891 = vunpack.c.l.b16 %v3800
        %v3892 = vunpack.c.h.b16 %v3800
        %v3893 = vunpack.c.l.b16 %v3801
        %v3894 = vunpack.c.h.b16 %v3801
        %v3895 = vunpack.c.l.b16 %v3802
        %v3896 = vunpack.c.h.b16 %v3802
        %v3897 = vunpack.c.l.b16 %v3803
        %v3898 = vunpack.c.h.b16 %v3803
        %v3899 = vunpack.c.l.b16 %v3804
        %v3900 = vunpack.c.h.b16 %v3804
        %v3901 = vpack.c.b16 %v3839, %v3837
        %v3902 = vpack.c.b16 %v3840, %v3838
        %v3903 = vpack.c.b16 %v3843, %v3841
        %v3904 = vpack.c.b16 %v3844, %v3842
        %v3905 = vpack.c.b16 %v3847, %v3845
        %v3906 = vpack.c.b16 %v3848, %v3846
        %v3907 = vpack.c.b16 %v3851, %v3849
        %v3908 = vpack.c.b16 %v3852, %v3850
        %v3909 = vpack.c.b16 %v3855, %v3853
        %v3910 = vpack.c.b16 %v3856, %v3854
        %v3911 = vpack.c.b16 %v3859, %v3857
        %v3912 = vpack.c.b16 %v3860, %v3858
        %v3913 = vpack.c.b16 %v3863, %v3861
        %v3914 = vpack.c.b16 %v3864, %v3862
        %v3915 = vpack.c.b16 %v3867, %v3865
        %v3916 = vpack.c.b16 %v3868, %v3866
        %v3917 = vpack.c.b16 %v3871, %v3869
        %v3918 = vpack.c.b16 %v3872, %v3870
        %v3919 = vpack.c.b16 %v3875, %v3873
        %v3920 = vpack.c.b16 %v3876, %v3874
        %v3921 = vpack.c.b16 %v3879, %v3877
        %v3922 = vpack.c.b16 %v3880, %v3878
        %v3923 = vpack.c.b16 %v3883, %v3881
        %v3924 = vpack.c.b16 %v3884, %v3882
        %v3925 = vpack.c.b16 %v3887, %v3885
        %v3926 = vpack.c.b16 %v3888, %v3886
        %v3927 = vpack.c.b16 %v3891, %v3889
        %v3928 = vpack.c.b16 %v3892, %v3890
        %v3929 = vpack.c.b16 %v3895, %v3893
        %v3930 = vpack.c.b16 %v3896, %v3894
        %v3931 = vpack.c.b16 %v3899, %v3897
        %v3932 = vpack.c.b16 %v3900, %v3898
        %3965 = vmatprep.subr.bf16.mxu0 %v3902
        %3966 = vmatpush1.bf16.msra.mxu0 %v3901
        %3967 = vmatprep.subr.bf16.mxu0 %v3904
        %3968 = vmatpush1.bf16.msra.mxu0 %v3903
        %3969 = vmatprep.subr.bf16.mxu0 %v3906
        %3970 = vmatpush1.bf16.msra.mxu0 %v3905
        %3971 = vmatprep.subr.bf16.mxu0 %v3908
        %3972 = vmatpush1.bf16.msra.mxu0 %v3907
        %3973 = vmatprep.subr.bf16.mxu0 %v3910
        %3974 = vmatpush1.bf16.msra.mxu0 %v3909
        %3975 = vmatprep.subr.bf16.mxu0 %v3912
        %3976 = vmatpush1.bf16.msra.mxu0 %v3911
        %3977 = vmatprep.subr.bf16.mxu0 %v3914
        %3978 = vmatpush1.bf16.msra.mxu0 %v3913
        %3979 = vmatprep.subr.bf16.mxu0 %v3916
        %3980 = vmatpush1.bf16.msra.mxu0 %v3915
        %3981 = vmatprep.subr.bf16.mxu0 %v3918
        %3982 = vmatpush1.bf16.msra.mxu0 %v3917
        %3983 = vmatprep.subr.bf16.mxu0 %v3920
        %3984 = vmatpush1.bf16.msra.mxu0 %v3919
        %3985 = vmatprep.subr.bf16.mxu0 %v3922
        %3986 = vmatpush1.bf16.msra.mxu0 %v3921
        %3987 = vmatprep.subr.bf16.mxu0 %v3924
        %3988 = vmatpush1.bf16.msra.mxu0 %v3923
        %3989 = vmatprep.subr.bf16.mxu0 %v3926
        %3990 = vmatpush1.bf16.msra.mxu0 %v3925
        %3991 = vmatprep.subr.bf16.mxu0 %v3928
        %3992 = vmatpush1.bf16.msra.mxu0 %v3927
        %3993 = vmatprep.subr.bf16.mxu0 %v3930
        %3994 = vmatpush1.bf16.msra.mxu0 %v3929
        %3995 = vmatprep.subr.bf16.mxu0 %v3932
        %3996 = vmatpush1.bf16.msra.mxu0 %v3931
        %3997 = vmatprep.mubr.bf16.mxu0 %v3705
        %3998 = vmatmul.mubr.bf16.gmra.mrb[0].mxu0 %v3704
        %v3999 = vpop.f32.mrb[0].mxu0
        %v4000 = vadd.f32 0.0, %v3999
        %v4001 = vpop.f32.mrb[0].mxu0
        %v4002 = vadd.f32 0.0, %v4001
        %v4003 = vpop.f32.mrb[0].mxu0
        %v4004 = vadd.f32 0.0, %v4003
        %v4005 = vpop.f32.mrb[0].mxu0
        %v4006 = vadd.f32 0.0, %v4005
        %4007 = vmatprep.mubr.bf16.mxu0 %v3707
        %4008 = vmatmul.mubr.bf16.gmra.mrb[0].mxu0 %v3706
        %v4009 = vpop.f32.mrb[0].mxu0
        %v4010 = vadd.f32 0.0, %v4009
        %v4011 = vpop.f32.mrb[0].mxu0
        %v4012 = vadd.f32 0.0, %v4011
        %v4013 = vpop.f32.mrb[0].mxu0
        %v4014 = vpop.f32.mrb[0].mxu0
        %4015 = vdwg.mxu0
        %v4048 = vunpack.c.l.b16 %v3740
        %v4049 = vunpack.c.h.b16 %v3740
        %v4050 = vunpack.c.l.b16 %v3741
        %v4051 = vunpack.c.h.b16 %v3741
        %v4052 = vunpack.c.l.b16 %v3742
        %v4053 = vunpack.c.h.b16 %v3742
        %v4054 = vunpack.c.l.b16 %v3743
        %v4055 = vunpack.c.h.b16 %v3743
        %v4056 = vunpack.c.l.b16 %v3744
        %v4057 = vunpack.c.h.b16 %v3744
        %v4058 = vunpack.c.l.b16 %v3745
        %v4059 = vunpack.c.h.b16 %v3745
        %v4060 = vunpack.c.l.b16 %v3746
        %v4061 = vunpack.c.h.b16 %v3746
        %v4062 = vunpack.c.l.b16 %v3747
        %v4063 = vunpack.c.h.b16 %v3747
        %v4064 = vunpack.c.l.b16 %v3748
        %v4065 = vunpack.c.h.b16 %v3748
        %v4066 = vunpack.c.l.b16 %v3749
        %v4067 = vunpack.c.h.b16 %v3749
        %v4068 = vunpack.c.l.b16 %v3750
        %v4069 = vunpack.c.h.b16 %v3750
        %v4070 = vunpack.c.l.b16 %v3751
        %v4071 = vunpack.c.h.b16 %v3751
        %v4072 = vunpack.c.l.b16 %v3752
        %v4073 = vunpack.c.h.b16 %v3752
        %v4074 = vunpack.c.l.b16 %v3753
        %v4075 = vunpack.c.h.b16 %v3753
        %v4076 = vunpack.c.l.b16 %v3754
        %v4077 = vunpack.c.h.b16 %v3754
        %v4078 = vunpack.c.l.b16 %v3755
        %v4079 = vunpack.c.h.b16 %v3755
        %v4080 = vunpack.c.l.b16 %v3756
        %v4081 = vunpack.c.h.b16 %v3756
        %v4082 = vunpack.c.l.b16 %v3757
        %v4083 = vunpack.c.h.b16 %v3757
        %v4084 = vunpack.c.l.b16 %v3758
        %v4085 = vunpack.c.h.b16 %v3758
        %v4086 = vunpack.c.l.b16 %v3759
        %v4087 = vunpack.c.h.b16 %v3759
        %v4088 = vunpack.c.l.b16 %v3760
        %v4089 = vunpack.c.h.b16 %v3760
        %v4090 = vunpack.c.l.b16 %v3761
        %v4091 = vunpack.c.h.b16 %v3761
        %v4092 = vunpack.c.l.b16 %v3762
        %v4093 = vunpack.c.h.b16 %v3762
        %v4094 = vunpack.c.l.b16 %v3763
        %v4095 = vunpack.c.h.b16 %v3763
        %v4096 = vunpack.c.l.b16 %v3764
        %v4097 = vunpack.c.h.b16 %v3764
        %v4098 = vunpack.c.l.b16 %v3765
        %v4099 = vunpack.c.h.b16 %v3765
        %v4100 = vunpack.c.l.b16 %v3766
        %v4101 = vunpack.c.h.b16 %v3766
        %v4102 = vunpack.c.l.b16 %v3767
        %v4103 = vunpack.c.h.b16 %v3767
        %v4104 = vunpack.c.l.b16 %v3768
        %v4105 = vunpack.c.h.b16 %v3768
        %v4106 = vunpack.c.l.b16 %v3769
        %v4107 = vunpack.c.h.b16 %v3769
        %v4108 = vunpack.c.l.b16 %v3770
        %v4109 = vunpack.c.h.b16 %v3770
        %v4110 = vunpack.c.l.b16 %v3771
        %v4111 = vunpack.c.h.b16 %v3771
        %v4112 = vpack.c.b16 %v4050, %v4048
        %v4113 = vpack.c.b16 %v4051, %v4049
        %v4114 = vpack.c.b16 %v4054, %v4052
        %v4115 = vpack.c.b16 %v4055, %v4053
        %v4116 = vpack.c.b16 %v4058, %v4056
        %v4117 = vpack.c.b16 %v4059, %v4057
        %v4118 = vpack.c.b16 %v4062, %v4060
        %v4119 = vpack.c.b16 %v4063, %v4061
        %v4120 = vpack.c.b16 %v4066, %v4064
        %v4121 = vpack.c.b16 %v4067, %v4065
        %v4122 = vpack.c.b16 %v4070, %v4068
        %v4123 = vpack.c.b16 %v4071, %v4069
        %v4124 = vpack.c.b16 %v4074, %v4072
        %v4125 = vpack.c.b16 %v4075, %v4073
        %v4126 = vpack.c.b16 %v4078, %v4076
        %v4127 = vpack.c.b16 %v4079, %v4077
        %v4128 = vpack.c.b16 %v4082, %v4080
        %v4129 = vpack.c.b16 %v4083, %v4081
        %v4130 = vpack.c.b16 %v4086, %v4084
        %v4131 = vpack.c.b16 %v4087, %v4085
        %v4132 = vpack.c.b16 %v4090, %v4088
        %v4133 = vpack.c.b16 %v4091, %v4089
        %v4134 = vpack.c.b16 %v4094, %v4092
        %v4135 = vpack.c.b16 %v4095, %v4093
        %v4136 = vpack.c.b16 %v4098, %v4096
        %v4137 = vpack.c.b16 %v4099, %v4097
        %v4138 = vpack.c.b16 %v4102, %v4100
        %v4139 = vpack.c.b16 %v4103, %v4101
        %v4140 = vpack.c.b16 %v4106, %v4104
        %v4141 = vpack.c.b16 %v4107, %v4105
        %v4142 = vpack.c.b16 %v4110, %v4108
        %v4143 = vpack.c.b16 %v4111, %v4109
        %4176 = vmatprep.subr.bf16.mxu0 %v4113
        %4177 = vmatpush1.bf16.msra.mxu0 %v4112
        %4178 = vmatprep.subr.bf16.mxu0 %v4115
        %4179 = vmatpush1.bf16.msra.mxu0 %v4114
        %4180 = vmatprep.subr.bf16.mxu0 %v4117
        %4181 = vmatpush1.bf16.msra.mxu0 %v4116
        %4182 = vmatprep.subr.bf16.mxu0 %v4119
        %4183 = vmatpush1.bf16.msra.mxu0 %v4118
        %4184 = vmatprep.subr.bf16.mxu0 %v4121
        %4185 = vmatpush1.bf16.msra.mxu0 %v4120
        %4186 = vmatprep.subr.bf16.mxu0 %v4123
        %4187 = vmatpush1.bf16.msra.mxu0 %v4122
        %4188 = vmatprep.subr.bf16.mxu0 %v4125
        %4189 = vmatpush1.bf16.msra.mxu0 %v4124
        %4190 = vmatprep.subr.bf16.mxu0 %v4127
        %4191 = vmatpush1.bf16.msra.mxu0 %v4126
        %4192 = vmatprep.subr.bf16.mxu0 %v4129
        %4193 = vmatpush1.bf16.msra.mxu0 %v4128
        %4194 = vmatprep.subr.bf16.mxu0 %v4131
        %4195 = vmatpush1.bf16.msra.mxu0 %v4130
        %4196 = vmatprep.subr.bf16.mxu0 %v4133
        %4197 = vmatpush1.bf16.msra.mxu0 %v4132
        %4198 = vmatprep.subr.bf16.mxu0 %v4135
        %4199 = vmatpush1.bf16.msra.mxu0 %v4134
        %4200 = vmatprep.subr.bf16.mxu0 %v4137
        %4201 = vmatpush1.bf16.msra.mxu0 %v4136
        %4202 = vmatprep.subr.bf16.mxu0 %v4139
        %4203 = vmatpush1.bf16.msra.mxu0 %v4138
        %4204 = vmatprep.subr.bf16.mxu0 %v4141
        %4205 = vmatpush1.bf16.msra.mxu0 %v4140
        %4206 = vmatprep.subr.bf16.mxu0 %v4143
        %4207 = vmatpush1.bf16.msra.mxu0 %v4142
        %4208 = vmatprep.mubr.bf16.mxu0 %v3733
        %4209 = vmatmul.mubr.bf16.gmra.mrb[0].mxu0 %v3732
        %v4210 = vpop.f32.mrb[0].mxu0
        %v4211 = vadd.f32 %v4000, %v4210
        %v4212 = vpop.f32.mrb[0].mxu0
        %v4213 = vadd.f32 %v4002, %v4212
        %v4214 = vpop.f32.mrb[0].mxu0
        %v4215 = vadd.f32 %v4004, %v4214
        %v4216 = vpop.f32.mrb[0].mxu0
        %v4217 = vadd.f32 %v4006, %v4216
        %4218 = vmatprep.mubr.bf16.mxu0 %v3738
        %4219 = vmatmul.mubr.bf16.gmra.mrb[0].mxu0 %v3735
        %v4220 = vpop.f32.mrb[0].mxu0
        %v4221 = vadd.f32 %v4010, %v4220
        %v4222 = vpop.f32.mrb[0].mxu0
        %v4223 = vadd.f32 %v4012, %v4222
        %v4224 = vpop.f32.mrb[0].mxu0
        %v4225 = vpop.f32.mrb[0].mxu0
        %4226 = vdwg.mxu0
        %s4227 = scalar_lea.vmem [#allocation11], 512
        %v4228 = vld [vmem:[%s4227] sm:$0xff]
        %v4229 = vld [vmem:[%s4227 + $0x8] sm:$0xff]
        %v4230 = vld [vmem:[%s4227 + $0x10] sm:$0xff]
        %v4231 = vld [vmem:[%s4227 + $0x18] sm:$0xff]
        %v4232 = vld [vmem:[%s4227 + $0x20] sm:$0xff]
        %v4233 = vld [vmem:[%s4227 + $0x28] sm:$0xff]
        %v4234 = vld [vmem:[%s4227 + $0x30] sm:$0xff]
        %v4235 = vld [vmem:[%s4227 + $0x38] sm:$0xff]
        %v4236 = vld [vmem:[%s4227 + $0x40] sm:$0xff]
        %v4237 = vld [vmem:[%s4227 + $0x48] sm:$0xff]
        %v4238 = vld [vmem:[%s4227 + $0x50] sm:$0xff]
        %v4239 = vld [vmem:[%s4227 + $0x58] sm:$0xff]
        %v4240 = vld [vmem:[%s4227 + $0x60] sm:$0xff]
        %v4241 = vld [vmem:[%s4227 + $0x68] sm:$0xff]
        %v4242 = vld [vmem:[%s4227 + $0x70] sm:$0xff]
        %v4243 = vld [vmem:[%s4227 + $0x78] sm:$0xff]
        %v4244 = vld [vmem:[%s4227 + $0x80] sm:$0xff]
        %v4245 = vld [vmem:[%s4227 + $0x88] sm:$0xff]
        %v4246 = vld [vmem:[%s4227 + $0x90] sm:$0xff]
        %v4247 = vld [vmem:[%s4227 + $0x98] sm:$0xff]
        %v4248 = vld [vmem:[%s4227 + $0xa0] sm:$0xff]
        %v4249 = vld [vmem:[%s4227 + $0xa8] sm:$0xff]
        %v4250 = vld [vmem:[%s4227 + $0xb0] sm:$0xff]
        %v4251 = vld [vmem:[%s4227 + $0xb8] sm:$0xff]
        %v4252 = vld [vmem:[%s4227 + $0xc0] sm:$0xff]
        %v4253 = vld [vmem:[%s4227 + $0xc8] sm:$0xff]
        %v4254 = vld [vmem:[%s4227 + $0xd0] sm:$0xff]
        %v4255 = vld [vmem:[%s4227 + $0xd8] sm:$0xff]
        %v4256 = vld [vmem:[%s4227 + $0xe0] sm:$0xff]
        %v4257 = vld [vmem:[%s4227 + $0xe8] sm:$0xff]
        %v4258 = vld [vmem:[%s4227 + $0xf0] sm:$0xff]
        %v4259 = vld [vmem:[%s4227 + $0xf8] sm:$0xff]
        %v4264 = vrot.slane %v3732, 1
        %v4265 = vrot.slane %v3735, 1
        %v4266 = vsel %vm3381, %v4264, %v4265
        %v4267 = vrot.slane %v3733, 1
        %v4268 = vrot.slane %v3738, 1
        %v4269 = vsel %vm3381, %v4267, %v4268
        %v4306 = vunpack.c.l.b16 %v4228
        %v4307 = vunpack.c.h.b16 %v4228
        %v4308 = vunpack.c.l.b16 %v4229
        %v4309 = vunpack.c.h.b16 %v4229
        %v4310 = vunpack.c.l.b16 %v4230
        %v4311 = vunpack.c.h.b16 %v4230
        %v4312 = vunpack.c.l.b16 %v4231
        %v4313 = vunpack.c.h.b16 %v4231
        %v4314 = vunpack.c.l.b16 %v4232
        %v4315 = vunpack.c.h.b16 %v4232
        %v4316 = vunpack.c.l.b16 %v4233
        %v4317 = vunpack.c.h.b16 %v4233
        %v4318 = vunpack.c.l.b16 %v4234
        %v4319 = vunpack.c.h.b16 %v4234
        %v4320 = vunpack.c.l.b16 %v4235
        %v4321 = vunpack.c.h.b16 %v4235
        %v4322 = vunpack.c.l.b16 %v4236
        %v4323 = vunpack.c.h.b16 %v4236
        %v4324 = vunpack.c.l.b16 %v4237
        %v4325 = vunpack.c.h.b16 %v4237
        %v4326 = vunpack.c.l.b16 %v4238
        %v4327 = vunpack.c.h.b16 %v4238
        %v4328 = vunpack.c.l.b16 %v4239
        %v4329 = vunpack.c.h.b16 %v4239
        %v4330 = vunpack.c.l.b16 %v4240
        %v4331 = vunpack.c.h.b16 %v4240
        %v4332 = vunpack.c.l.b16 %v4241
        %v4333 = vunpack.c.h.b16 %v4241
        %v4334 = vunpack.c.l.b16 %v4242
        %v4335 = vunpack.c.h.b16 %v4242
        %v4336 = vunpack.c.l.b16 %v4243
        %v4337 = vunpack.c.h.b16 %v4243
        %v4338 = vunpack.c.l.b16 %v4244
        %v4339 = vunpack.c.h.b16 %v4244
        %v4340 = vunpack.c.l.b16 %v4245
        %v4341 = vunpack.c.h.b16 %v4245
        %v4342 = vunpack.c.l.b16 %v4246
        %v4343 = vunpack.c.h.b16 %v4246
        %v4344 = vunpack.c.l.b16 %v4247
        %v4345 = vunpack.c.h.b16 %v4247
        %v4346 = vunpack.c.l.b16 %v4248
        %v4347 = vunpack.c.h.b16 %v4248
        %v4348 = vunpack.c.l.b16 %v4249
        %v4349 = vunpack.c.h.b16 %v4249
        %v4350 = vunpack.c.l.b16 %v4250
        %v4351 = vunpack.c.h.b16 %v4250
        %v4352 = vunpack.c.l.b16 %v4251
        %v4353 = vunpack.c.h.b16 %v4251
        %v4354 = vunpack.c.l.b16 %v4252
        %v4355 = vunpack.c.h.b16 %v4252
        %v4356 = vunpack.c.l.b16 %v4253
        %v4357 = vunpack.c.h.b16 %v4253
        %v4358 = vunpack.c.l.b16 %v4254
        %v4359 = vunpack.c.h.b16 %v4254
        %v4360 = vunpack.c.l.b16 %v4255
        %v4361 = vunpack.c.h.b16 %v4255
        %v4362 = vunpack.c.l.b16 %v4256
        %v4363 = vunpack.c.h.b16 %v4256
        %v4364 = vunpack.c.l.b16 %v4257
        %v4365 = vunpack.c.h.b16 %v4257
        %v4366 = vunpack.c.l.b16 %v4258
        %v4367 = vunpack.c.h.b16 %v4258
        %v4368 = vunpack.c.l.b16 %v4259
        %v4369 = vunpack.c.h.b16 %v4259
        %v4370 = vpack.c.b16 %v4308, %v4306
        %v4371 = vpack.c.b16 %v4309, %v4307
        %v4372 = vpack.c.b16 %v4312, %v4310
        %v4373 = vpack.c.b16 %v4313, %v4311
        %v4374 = vpack.c.b16 %v4316, %v4314
        %v4375 = vpack.c.b16 %v4317, %v4315
        %v4376 = vpack.c.b16 %v4320, %v4318
        %v4377 = vpack.c.b16 %v4321, %v4319
        %v4378 = vpack.c.b16 %v4324, %v4322
        %v4379 = vpack.c.b16 %v4325, %v4323
        %v4380 = vpack.c.b16 %v4328, %v4326
        %v4381 = vpack.c.b16 %v4329, %v4327
        %v4382 = vpack.c.b16 %v4332, %v4330
        %v4383 = vpack.c.b16 %v4333, %v4331
        %v4384 = vpack.c.b16 %v4336, %v4334
        %v4385 = vpack.c.b16 %v4337, %v4335
        %v4386 = vpack.c.b16 %v4340, %v4338
        %v4387 = vpack.c.b16 %v4341, %v4339
        %v4388 = vpack.c.b16 %v4344, %v4342
        %v4389 = vpack.c.b16 %v4345, %v4343
        %v4390 = vpack.c.b16 %v4348, %v4346
        %v4391 = vpack.c.b16 %v4349, %v4347
        %v4392 = vpack.c.b16 %v4352, %v4350
        %v4393 = vpack.c.b16 %v4353, %v4351
        %v4394 = vpack.c.b16 %v4356, %v4354
        %v4395 = vpack.c.b16 %v4357, %v4355
        %v4396 = vpack.c.b16 %v4360, %v4358
        %v4397 = vpack.c.b16 %v4361, %v4359
        %v4398 = vpack.c.b16 %v4364, %v4362
        %v4399 = vpack.c.b16 %v4365, %v4363
        %v4400 = vpack.c.b16 %v4368, %v4366
        %v4401 = vpack.c.b16 %v4369, %v4367
        %4434 = vmatprep.subr.bf16.mxu0 %v4371
        %4435 = vmatpush1.bf16.msra.mxu0 %v4370
        %4436 = vmatprep.subr.bf16.mxu0 %v4373
        %4437 = vmatpush1.bf16.msra.mxu0 %v4372
        %4438 = vmatprep.subr.bf16.mxu0 %v4375
        %4439 = vmatpush1.bf16.msra.mxu0 %v4374
        %4440 = vmatprep.subr.bf16.mxu0 %v4377
        %4441 = vmatpush1.bf16.msra.mxu0 %v4376
        %4442 = vmatprep.subr.bf16.mxu0 %v4379
        %4443 = vmatpush1.bf16.msra.mxu0 %v4378
        %4444 = vmatprep.subr.bf16.mxu0 %v4381
        %4445 = vmatpush1.bf16.msra.mxu0 %v4380
        %4446 = vmatprep.subr.bf16.mxu0 %v4383
        %4447 = vmatpush1.bf16.msra.mxu0 %v4382
        %4448 = vmatprep.subr.bf16.mxu0 %v4385
        %4449 = vmatpush1.bf16.msra.mxu0 %v4384
        %4450 = vmatprep.subr.bf16.mxu0 %v4387
        %4451 = vmatpush1.bf16.msra.mxu0 %v4386
        %4452 = vmatprep.subr.bf16.mxu0 %v4389
        %4453 = vmatpush1.bf16.msra.mxu0 %v4388
        %4454 = vmatprep.subr.bf16.mxu0 %v4391
        %4455 = vmatpush1.bf16.msra.mxu0 %v4390
        %4456 = vmatprep.subr.bf16.mxu0 %v4393
        %4457 = vmatpush1.bf16.msra.mxu0 %v4392
        %4458 = vmatprep.subr.bf16.mxu0 %v4395
        %4459 = vmatpush1.bf16.msra.mxu0 %v4394
        %4460 = vmatprep.subr.bf16.mxu0 %v4397
        %4461 = vmatpush1.bf16.msra.mxu0 %v4396
        %4462 = vmatprep.subr.bf16.mxu0 %v4399
        %4463 = vmatpush1.bf16.msra.mxu0 %v4398
        %4464 = vmatprep.subr.bf16.mxu0 %v4401
        %4465 = vmatpush1.bf16.msra.mxu0 %v4400
        %4466 = vmatprep.mubr.bf16.mxu0 %v4269
        %4467 = vmatmul.mubr.bf16.gmra.mrb[0].mxu0 %v4266
        %v4468 = vpop.f32.mrb[0].mxu0
        %v4469 = vadd.f32 0.0, %v4468
        %v4470 = vpop.f32.mrb[0].mxu0
        %v4471 = vadd.f32 0.0, %v4470
        %v4472 = vpop.f32.mrb[0].mxu0
        %v4473 = vadd.f32 0.0, %v4472
        %v4474 = vpop.f32.mrb[0].mxu0
        %v4475 = vadd.f32 0.0, %v4474
        %4476 = vmatprep.mubr.bf16.mxu0 %v4268
        %4477 = vmatmul.mubr.bf16.gmra.mrb[0].mxu0 %v4265
        %v4478 = vpop.f32.mrb[0].mxu0
        %v4479 = vadd.f32 0.0, %v4478
        %v4480 = vpop.f32.mrb[0].mxu0
        %v4481 = vadd.f32 0.0, %v4480
        %v4482 = vpop.f32.mrb[0].mxu0
        %v4483 = vpop.f32.mrb[0].mxu0
        %4484 = vdwg.mxu0
        %v4485 = vadd.f32 %v4211, %v4469
        %v4486 = vadd.f32 %v4213, %v4471
        %v4487 = vadd.f32 %v4215, %v4473
        %v4488 = vadd.f32 %v4217, %v4475
        %v4489 = vadd.f32 %v4221, %v4479
        %v4490 = vadd.f32 %v4223, %v4481
        %v4491 = vld [vmem:[#allocation13] sm:$0x3]
        %v4493 = vlaneseq
        %v4494 = vshrl.u32 %v4493, 7
        %v4495 = vsub.s32 0, %v4494
        %v4496 = vrot.slane %v4491, %v4495
        %v4497 = vlaneseq
        %v4498 = vshrl.u32 %v4497, 7
        %v4499 = vsub.s32 1, %v4498
        %v4500 = vrot.slane %v4491, %v4499
        %v4503 = vadd.f32 %v4485, %v4496
        %v4504 = vadd.f32 %v4486, %v4500
        %v4505 = vadd.f32 %v4487, %v4496
        %v4506 = vadd.f32 %v4488, %v4500
        %v4507 = vadd.f32 %v4489, %v4496
        %v4508 = vadd.f32 %v4490, %v4500
        %v4509 = vmax.f32 %v4503, 0.0
        %v4510 = vmax.f32 %v4504, 0.0
        %v4511 = vmax.f32 %v4505, 0.0
        %v4512 = vmax.f32 %v4506, 0.0
        %v4513 = vmax.f32 %v4507, 0.0
        %v4514 = vmax.f32 %v4508, 0.0
        %v4515 = vld [vmem:[%s21] sm:$0xf]
        %v4516 = vld [vmem:[%s21 + $0x4] sm:$0xf]
        %v4517 = vld [vmem:[%s21 + $0x8] sm:$0xf]
        %v4518 = vld [vmem:[%s21 + $0xc] sm:$0xf]
        %v4519 = vld [vmem:[%s21 + $0x10] sm:$0x1]
        %v4520 = vpack.c.bf16 %v4511, %v4509
        %v4521 = vpack.c.bf16 %v4512, %v4510
        %v4522 = vpack.c.bf16 %v4513, %v4513
        %v4523 = vpack.c.bf16 %v4514, %v4514
        %v4529 = vunpack.c.l.b16 %v4515
        %v4530 = vunpack.c.l.b16 %v4516
        %v4531 = vunpack.c.l.b16 %v4517
        %v4532 = vunpack.c.l.b16 %v4518
        %v4533 = vunpack.c.l.b16 %v4519
        %v4534 = vpack.c.b16 %v4530, %v4529
        %v4535 = vpack.c.b16 %v4532, %v4531
        %v4536 = vpack.c.b16 %v4533, %v4533
        %vm4537 = vcmask 138240
        %v4539 = vsel %vm4537, %v4534, 0
        %v4542 = vsel %vm4537, %v4535, 0
        %v4545 = vsel %vm4537, %v4536, 0
        %v4547 = vsel 0, 4294967295, 65535
        %v4548 = vsel %vm1001, %v4547, 0
        %v4550 = vand.u32 %v4522, %v4548
        %v4553 = vand.u32 %v4523, %v4548
        %4555 = vmatprep.subr.bf16.mxu0 %v4521
        %4556 = vmatpush1.bf16.msra.mxu0 %v4520
        %4557 = vmatprep.subr.bf16.mxu0 %v4553
        %4558 = vmatpush1.bf16.msra.mxu0 %v4550
        %4559 = vmatprep.subr.bf16.mxu0 0
        %4560 = vmatpush1.bf16.msra.mxu0 0
        %4561 = vmatprep.subr.bf16.mxu0 0
        %4562 = vmatpush1.bf16.msra.mxu0 0
        %4563 = vmatprep.subr.bf16.mxu0 0
        %4564 = vmatpush1.bf16.msra.mxu0 0
        %4565 = vmatprep.subr.bf16.mxu0 0
        %4566 = vmatpush1.bf16.msra.mxu0 0
        %4567 = vmatprep.subr.bf16.mxu0 0
        %4568 = vmatpush1.bf16.msra.mxu0 0
        %4569 = vmatprep.subr.bf16.mxu0 0
        %4570 = vmatpush1.bf16.msra.mxu0 0
        %4571 = vmatprep.subr.bf16.mxu0 0
        %4572 = vmatpush1.bf16.msra.mxu0 0
        %4573 = vmatprep.subr.bf16.mxu0 0
        %4574 = vmatpush1.bf16.msra.mxu0 0
        %4575 = vmatprep.subr.bf16.mxu0 0
        %4576 = vmatpush1.bf16.msra.mxu0 0
        %4577 = vmatprep.subr.bf16.mxu0 0
        %4578 = vmatpush1.bf16.msra.mxu0 0
        %4579 = vmatprep.subr.bf16.mxu0 0
        %4580 = vmatpush1.bf16.msra.mxu0 0
        %4581 = vmatprep.subr.bf16.mxu0 0
        %4582 = vmatpush1.bf16.msra.mxu0 0
        %4583 = vmatprep.subr.bf16.mxu0 0
        %4584 = vmatpush1.bf16.msra.mxu0 0
        %4585 = vmatprep.subr.bf16.mxu0 0
        %4586 = vmatpush1.bf16.msra.mxu0 0
        %4587 = vmatprep.mubr.bf16.mxu0 0
        %4588 = vmatmul.mubr.bf16.gmra.mrb[0].mxu0 %v4539
        %v4589 = vpop.f32.mrb[0].mxu0
        %v4590 = vadd.f32 0.0, %v4589
        %v4591 = vpop.f32.mrb[0].mxu0
        %v4592 = vadd.f32 0.0, %v4591
        %v4593 = vpop.f32.mrb[0].mxu0
        %v4594 = vadd.f32 0.0, %v4593
        %v4595 = vpop.f32.mrb[0].mxu0
        %v4596 = vadd.f32 0.0, %v4595
        %4597 = vmatprep.mubr.bf16.mxu0 0
        %4598 = vmatmul.mubr.bf16.gmra.mrb[0].mxu0 %v4542
        %v4599 = vpop.f32.mrb[0].mxu0
        %v4600 = vadd.f32 0.0, %v4599
        %v4601 = vpop.f32.mrb[0].mxu0
        %v4602 = vadd.f32 0.0, %v4601
        %v4603 = vpop.f32.mrb[0].mxu0
        %v4604 = vadd.f32 0.0, %v4603
        %v4605 = vpop.f32.mrb[0].mxu0
        %v4606 = vadd.f32 0.0, %v4605
        %4607 = vmatprep.mubr.bf16.mxu0 0
        %4608 = vmatmul.mubr.bf16.gmra.mrb[0].mxu0 %v4545
        %v4609 = vpop.f32.mrb[0].mxu0
        %v4610 = vadd.f32 0.0, %v4609
        %v4611 = vpop.f32.mrb[0].mxu0
        %v4612 = vadd.f32 0.0, %v4611
        %v4613 = vpop.f32.mrb[0].mxu0
        %v4614 = vpop.f32.mrb[0].mxu0
        %4615 = vdwg.mxu0
        %v4616 = vpack.c.bf16 %v4594, %v4590
        %v4617 = vpack.c.bf16 %v4596, %v4592
        %v4618 = vpack.c.bf16 %v3565, %v3563
        %v4619 = vpack.c.bf16 %v3566, %v3564
        %v4620 = vpack.c.bf16 %v4604, %v4600
        %v4621 = vpack.c.bf16 %v4606, %v4602
        %v4622 = vpack.c.bf16 %v3569, %v3567
        %v4623 = vpack.c.bf16 %v3570, %v3568
        %v4624 = vpack.c.bf16 %v4610, %v4610
        %v4625 = vpack.c.bf16 %v4612, %v4612
        %v4626 = vpack.c.bf16 %v3571, %v3571
        %v4627 = vpack.c.bf16 %v3572, %v3572
        %v4629 = vshrl.u32 %v4616, 16
        %v4631 = vrot.slane %v4629, 7
        %v4632 = vshll.u32 %v4616, 16
        %v4634 = vor.u32 %v4631, %v4632
        %v4636 = vshrl.u32 %v4617, 16
        %v4638 = vrot.slane %v4636, 7
        %v4639 = vshll.u32 %v4617, 16
        %v4641 = vor.u32 %v4638, %v4639
        %v4643 = vshrl.u32 %v4618, 16
        %v4645 = vrot.slane %v4643, 7
        %v4646 = vshll.u32 %v4618, 16
        %v4648 = vor.u32 %v4645, %v4646
        %v4650 = vshrl.u32 %v4619, 16
        %v4652 = vrot.slane %v4650, 7
        %v4653 = vshll.u32 %v4619, 16
        %v4655 = vor.u32 %v4652, %v4653
        %v4657 = vshrl.u32 %v4620, 16
        %v4659 = vrot.slane %v4657, 7
        %v4660 = vshll.u32 %v4620, 16
        %v4662 = vor.u32 %v4659, %v4660
        %v4663 = vsel %vm3014, %v4631, %v4662
        %v4665 = vshrl.u32 %v4621, 16
        %v4667 = vrot.slane %v4665, 7
        %v4668 = vshll.u32 %v4621, 16
        %v4670 = vor.u32 %v4667, %v4668
        %v4671 = vsel %vm3014, %v4638, %v4670
        %v4673 = vshrl.u32 %v4622, 16
        %v4675 = vrot.slane %v4673, 7
        %v4676 = vshll.u32 %v4622, 16
        %v4678 = vor.u32 %v4675, %v4676
        %v4679 = vsel %vm3014, %v4645, %v4678
        %v4681 = vshrl.u32 %v4623, 16
        %v4683 = vrot.slane %v4681, 7
        %v4684 = vshll.u32 %v4623, 16
        %v4686 = vor.u32 %v4683, %v4684
        %v4687 = vsel %vm3014, %v4652, %v4686
        %v4689 = vshrl.u32 %v4624, 16
        %v4691 = vrot.slane %v4689, 7
        %v4692 = vshll.u32 %v4624, 16
        %v4694 = vor.u32 %v4691, %v4692
        %v4695 = vsel %vm3014, %v4659, %v4694
        %v4697 = vshrl.u32 %v4625, 16
        %v4699 = vrot.slane %v4697, 7
        %v4700 = vshll.u32 %v4625, 16
        %v4702 = vor.u32 %v4699, %v4700
        %v4703 = vsel %vm3014, %v4667, %v4702
        %v4705 = vshrl.u32 %v4626, 16
        %v4707 = vrot.slane %v4705, 7
        %v4708 = vshll.u32 %v4626, 16
        %v4710 = vor.u32 %v4707, %v4708
        %v4711 = vsel %vm3014, %v4675, %v4710
        %v4713 = vshrl.u32 %v4627, 16
        %v4715 = vrot.slane %v4713, 7
        %v4716 = vshll.u32 %v4627, 16
        %v4718 = vor.u32 %v4715, %v4716
        %v4719 = vsel %vm3014, %v4683, %v4718
        %v4732 = vsel %vm3041, 0, %v4634
        %v4733 = vsel %vm3041, 0, %v4641
        %v4734 = vsel %vm3041, 0, %v4648
        %v4735 = vsel %vm3041, 0, %v4655
        %v4736 = vsel %vm3045, %v4695, 0
        %v4737 = vsel %vm3045, %v4703, 0
        %v4738 = vsel %vm3045, %v4711, 0
        %v4739 = vsel %vm3045, %v4719, 0
        %v4740 = vld [vmem:[#allocation14] sm:$0xff]
        %v4741 = vld [vmem:[#allocation14 + $0x8] sm:$0xff]
        %v4742 = vld [vmem:[#allocation14 + $0x10] sm:$0xff]
        %v4743 = vld [vmem:[#allocation14 + $0x18] sm:$0xff]
        %v4744 = vld [vmem:[#allocation14 + $0x20] sm:$0xff]
        %v4745 = vld [vmem:[#allocation14 + $0x28] sm:$0xff]
        %v4746 = vld [vmem:[#allocation14 + $0x30] sm:$0xff]
        %v4747 = vld [vmem:[#allocation14 + $0x38] sm:$0xff]
        %v4748 = vld [vmem:[#allocation14 + $0x40] sm:$0xff]
        %v4749 = vld [vmem:[#allocation14 + $0x48] sm:$0xff]
        %v4750 = vld [vmem:[#allocation14 + $0x50] sm:$0xff]
        %v4751 = vld [vmem:[#allocation14 + $0x58] sm:$0xff]
        %v4752 = vld [vmem:[#allocation14 + $0x60] sm:$0xff]
        %v4753 = vld [vmem:[#allocation14 + $0x68] sm:$0xff]
        %v4754 = vld [vmem:[#allocation14 + $0x70] sm:$0xff]
        %v4755 = vld [vmem:[#allocation14 + $0x78] sm:$0xff]
        %v4756 = vld [vmem:[#allocation14 + $0x80] sm:$0xff]
        %v4757 = vld [vmem:[#allocation14 + $0x88] sm:$0xff]
        %v4758 = vld [vmem:[#allocation14 + $0x90] sm:$0xff]
        %v4759 = vld [vmem:[#allocation14 + $0x98] sm:$0xff]
        %v4760 = vld [vmem:[#allocation14 + $0xa0] sm:$0xff]
        %v4761 = vld [vmem:[#allocation14 + $0xa8] sm:$0xff]
        %v4762 = vld [vmem:[#allocation14 + $0xb0] sm:$0xff]
        %v4763 = vld [vmem:[#allocation14 + $0xb8] sm:$0xff]
        %v4764 = vld [vmem:[#allocation14 + $0xc0] sm:$0xff]
        %v4765 = vld [vmem:[#allocation14 + $0xc8] sm:$0xff]
        %v4766 = vld [vmem:[#allocation14 + $0xd0] sm:$0xff]
        %v4767 = vld [vmem:[#allocation14 + $0xd8] sm:$0xff]
        %v4768 = vld [vmem:[#allocation14 + $0xe0] sm:$0xff]
        %v4769 = vld [vmem:[#allocation14 + $0xe8] sm:$0xff]
        %v4770 = vld [vmem:[#allocation14 + $0xf0] sm:$0xff]
        %v4771 = vld [vmem:[#allocation14 + $0xf8] sm:$0xff]
        %v4772 = vld [vmem:[#allocation14 + $0x100] sm:$0xff]
        %v4773 = vld [vmem:[#allocation14 + $0x108] sm:$0xff]
        %v4774 = vld [vmem:[#allocation14 + $0x110] sm:$0xff]
        %v4775 = vld [vmem:[#allocation14 + $0x118] sm:$0xff]
        %v4776 = vld [vmem:[#allocation14 + $0x120] sm:$0xff]
        %v4777 = vld [vmem:[#allocation14 + $0x128] sm:$0xff]
        %v4778 = vld [vmem:[#allocation14 + $0x130] sm:$0xff]
        %v4779 = vld [vmem:[#allocation14 + $0x138] sm:$0xff]
        %v4780 = vld [vmem:[#allocation14 + $0x140] sm:$0xff]
        %v4781 = vld [vmem:[#allocation14 + $0x148] sm:$0xff]
        %v4782 = vld [vmem:[#allocation14 + $0x150] sm:$0xff]
        %v4783 = vld [vmem:[#allocation14 + $0x158] sm:$0xff]
        %v4784 = vld [vmem:[#allocation14 + $0x160] sm:$0xff]
        %v4785 = vld [vmem:[#allocation14 + $0x168] sm:$0xff]
        %v4786 = vld [vmem:[#allocation14 + $0x170] sm:$0xff]
        %v4787 = vld [vmem:[#allocation14 + $0x178] sm:$0xff]
        %v4788 = vld [vmem:[#allocation14 + $0x180] sm:$0xff]
        %v4789 = vld [vmem:[#allocation14 + $0x188] sm:$0xff]
        %v4790 = vld [vmem:[#allocation14 + $0x190] sm:$0xff]
        %v4791 = vld [vmem:[#allocation14 + $0x198] sm:$0xff]
        %v4792 = vld [vmem:[#allocation14 + $0x1a0] sm:$0xff]
        %v4793 = vld [vmem:[#allocation14 + $0x1a8] sm:$0xff]
        %v4794 = vld [vmem:[#allocation14 + $0x1b0] sm:$0xff]
        %v4795 = vld [vmem:[#allocation14 + $0x1b8] sm:$0xff]
        %v4796 = vld [vmem:[#allocation14 + $0x1c0] sm:$0xff]
        %v4797 = vld [vmem:[#allocation14 + $0x1c8] sm:$0xff]
        %v4798 = vld [vmem:[#allocation14 + $0x1d0] sm:$0xff]
        %v4799 = vld [vmem:[#allocation14 + $0x1d8] sm:$0xff]
        %v4800 = vld [vmem:[#allocation14 + $0x1e0] sm:$0xff]
        %v4801 = vld [vmem:[#allocation14 + $0x1e8] sm:$0xff]
        %v4802 = vld [vmem:[#allocation14 + $0x1f0] sm:$0xff]
        %v4803 = vld [vmem:[#allocation14 + $0x1f8] sm:$0xff]
        %s4804 = scalar_lea.vmem [#allocation14], 512
        %v4805 = vld [vmem:[%s4804] sm:$0xff]
        %v4806 = vld [vmem:[%s4804 + $0x8] sm:$0xff]
        %v4807 = vld [vmem:[%s4804 + $0x10] sm:$0xff]
        %v4808 = vld [vmem:[%s4804 + $0x18] sm:$0xff]
        %v4809 = vld [vmem:[%s4804 + $0x20] sm:$0xff]
        %v4810 = vld [vmem:[%s4804 + $0x28] sm:$0xff]
        %v4811 = vld [vmem:[%s4804 + $0x30] sm:$0xff]
        %v4812 = vld [vmem:[%s4804 + $0x38] sm:$0xff]
        %v4813 = vld [vmem:[%s4804 + $0x40] sm:$0xff]
        %v4814 = vld [vmem:[%s4804 + $0x48] sm:$0xff]
        %v4815 = vld [vmem:[%s4804 + $0x50] sm:$0xff]
        %v4816 = vld [vmem:[%s4804 + $0x58] sm:$0xff]
        %v4817 = vld [vmem:[%s4804 + $0x60] sm:$0xff]
        %v4818 = vld [vmem:[%s4804 + $0x68] sm:$0xff]
        %v4819 = vld [vmem:[%s4804 + $0x70] sm:$0xff]
        %v4820 = vld [vmem:[%s4804 + $0x78] sm:$0xff]
        %v4821 = vld [vmem:[%s4804 + $0x80] sm:$0xff]
        %v4822 = vld [vmem:[%s4804 + $0x88] sm:$0xff]
        %v4823 = vld [vmem:[%s4804 + $0x90] sm:$0xff]
        %v4824 = vld [vmem:[%s4804 + $0x98] sm:$0xff]
        %v4825 = vld [vmem:[%s4804 + $0xa0] sm:$0xff]
        %v4826 = vld [vmem:[%s4804 + $0xa8] sm:$0xff]
        %v4827 = vld [vmem:[%s4804 + $0xb0] sm:$0xff]
        %v4828 = vld [vmem:[%s4804 + $0xb8] sm:$0xff]
        %v4829 = vld [vmem:[%s4804 + $0xc0] sm:$0xff]
        %v4830 = vld [vmem:[%s4804 + $0xc8] sm:$0xff]
        %v4831 = vld [vmem:[%s4804 + $0xd0] sm:$0xff]
        %v4832 = vld [vmem:[%s4804 + $0xd8] sm:$0xff]
        %v4833 = vld [vmem:[%s4804 + $0xe0] sm:$0xff]
        %v4834 = vld [vmem:[%s4804 + $0xe8] sm:$0xff]
        %v4835 = vld [vmem:[%s4804 + $0xf0] sm:$0xff]
        %v4836 = vld [vmem:[%s4804 + $0xf8] sm:$0xff]
        %v4837 = vld [vmem:[%s4804 + $0x100] sm:$0xff]
        %v4838 = vld [vmem:[%s4804 + $0x108] sm:$0xff]
        %v4839 = vld [vmem:[%s4804 + $0x110] sm:$0xff]
        %v4840 = vld [vmem:[%s4804 + $0x118] sm:$0xff]
        %v4841 = vld [vmem:[%s4804 + $0x120] sm:$0xff]
        %v4842 = vld [vmem:[%s4804 + $0x128] sm:$0xff]
        %v4843 = vld [vmem:[%s4804 + $0x130] sm:$0xff]
        %v4844 = vld [vmem:[%s4804 + $0x138] sm:$0xff]
        %v4845 = vld [vmem:[%s4804 + $0x140] sm:$0xff]
        %v4846 = vld [vmem:[%s4804 + $0x148] sm:$0xff]
        %v4847 = vld [vmem:[%s4804 + $0x150] sm:$0xff]
        %v4848 = vld [vmem:[%s4804 + $0x158] sm:$0xff]
        %v4849 = vld [vmem:[%s4804 + $0x160] sm:$0xff]
        %v4850 = vld [vmem:[%s4804 + $0x168] sm:$0xff]
        %v4851 = vld [vmem:[%s4804 + $0x170] sm:$0xff]
        %v4852 = vld [vmem:[%s4804 + $0x178] sm:$0xff]
        %v4853 = vld [vmem:[%s4804 + $0x180] sm:$0xff]
        %v4854 = vld [vmem:[%s4804 + $0x188] sm:$0xff]
        %v4855 = vld [vmem:[%s4804 + $0x190] sm:$0xff]
        %v4856 = vld [vmem:[%s4804 + $0x198] sm:$0xff]
        %v4857 = vld [vmem:[%s4804 + $0x1a0] sm:$0xff]
        %v4858 = vld [vmem:[%s4804 + $0x1a8] sm:$0xff]
        %v4859 = vld [vmem:[%s4804 + $0x1b0] sm:$0xff]
        %v4860 = vld [vmem:[%s4804 + $0x1b8] sm:$0xff]
        %v4861 = vld [vmem:[%s4804 + $0x1c0] sm:$0xff]
        %v4862 = vld [vmem:[%s4804 + $0x1c8] sm:$0xff]
        %v4863 = vld [vmem:[%s4804 + $0x1d0] sm:$0xff]
        %v4864 = vld [vmem:[%s4804 + $0x1d8] sm:$0xff]
        %v4865 = vld [vmem:[%s4804 + $0x1e0] sm:$0xff]
        %v4866 = vld [vmem:[%s4804 + $0x1e8] sm:$0xff]
        %v4867 = vld [vmem:[%s4804 + $0x1f0] sm:$0xff]
        %v4868 = vld [vmem:[%s4804 + $0x1f8] sm:$0xff]
        %v4933 = vunpack.c.l.b16 %v4805
        %v4934 = vunpack.c.h.b16 %v4805
        %v4935 = vunpack.c.l.b16 %v4806
        %v4936 = vunpack.c.h.b16 %v4806
        %v4937 = vunpack.c.l.b16 %v4807
        %v4938 = vunpack.c.h.b16 %v4807
        %v4939 = vunpack.c.l.b16 %v4808
        %v4940 = vunpack.c.h.b16 %v4808
        %v4941 = vunpack.c.l.b16 %v4809
        %v4942 = vunpack.c.h.b16 %v4809
        %v4943 = vunpack.c.l.b16 %v4810
        %v4944 = vunpack.c.h.b16 %v4810
        %v4945 = vunpack.c.l.b16 %v4811
        %v4946 = vunpack.c.h.b16 %v4811
        %v4947 = vunpack.c.l.b16 %v4812
        %v4948 = vunpack.c.h.b16 %v4812
        %v4949 = vunpack.c.l.b16 %v4813
        %v4950 = vunpack.c.h.b16 %v4813
        %v4951 = vunpack.c.l.b16 %v4814
        %v4952 = vunpack.c.h.b16 %v4814
        %v4953 = vunpack.c.l.b16 %v4815
        %v4954 = vunpack.c.h.b16 %v4815
        %v4955 = vunpack.c.l.b16 %v4816
        %v4956 = vunpack.c.h.b16 %v4816
        %v4957 = vunpack.c.l.b16 %v4817
        %v4958 = vunpack.c.h.b16 %v4817
        %v4959 = vunpack.c.l.b16 %v4818
        %v4960 = vunpack.c.h.b16 %v4818
        %v4961 = vunpack.c.l.b16 %v4819
        %v4962 = vunpack.c.h.b16 %v4819
        %v4963 = vunpack.c.l.b16 %v4820
        %v4964 = vunpack.c.h.b16 %v4820
        %v4965 = vunpack.c.l.b16 %v4821
        %v4966 = vunpack.c.h.b16 %v4821
        %v4967 = vunpack.c.l.b16 %v4822
        %v4968 = vunpack.c.h.b16 %v4822
        %v4969 = vunpack.c.l.b16 %v4823
        %v4970 = vunpack.c.h.b16 %v4823
        %v4971 = vunpack.c.l.b16 %v4824
        %v4972 = vunpack.c.h.b16 %v4824
        %v4973 = vunpack.c.l.b16 %v4825
        %v4974 = vunpack.c.h.b16 %v4825
        %v4975 = vunpack.c.l.b16 %v4826
        %v4976 = vunpack.c.h.b16 %v4826
        %v4977 = vunpack.c.l.b16 %v4827
        %v4978 = vunpack.c.h.b16 %v4827
        %v4979 = vunpack.c.l.b16 %v4828
        %v4980 = vunpack.c.h.b16 %v4828
        %v4981 = vunpack.c.l.b16 %v4829
        %v4982 = vunpack.c.h.b16 %v4829
        %v4983 = vunpack.c.l.b16 %v4830
        %v4984 = vunpack.c.h.b16 %v4830
        %v4985 = vunpack.c.l.b16 %v4831
        %v4986 = vunpack.c.h.b16 %v4831
        %v4987 = vunpack.c.l.b16 %v4832
        %v4988 = vunpack.c.h.b16 %v4832
        %v4989 = vunpack.c.l.b16 %v4833
        %v4990 = vunpack.c.h.b16 %v4833
        %v4991 = vunpack.c.l.b16 %v4834
        %v4992 = vunpack.c.h.b16 %v4834
        %v4993 = vunpack.c.l.b16 %v4835
        %v4994 = vunpack.c.h.b16 %v4835
        %v4995 = vunpack.c.l.b16 %v4836
        %v4996 = vunpack.c.h.b16 %v4836
        %v4997 = vunpack.c.l.b16 %v4837
        %v4998 = vunpack.c.h.b16 %v4837
        %v4999 = vunpack.c.l.b16 %v4838
        %v5000 = vunpack.c.h.b16 %v4838
        %v5001 = vunpack.c.l.b16 %v4839
        %v5002 = vunpack.c.h.b16 %v4839
        %v5003 = vunpack.c.l.b16 %v4840
        %v5004 = vunpack.c.h.b16 %v4840
        %v5005 = vunpack.c.l.b16 %v4841
        %v5006 = vunpack.c.h.b16 %v4841
        %v5007 = vunpack.c.l.b16 %v4842
        %v5008 = vunpack.c.h.b16 %v4842
        %v5009 = vunpack.c.l.b16 %v4843
        %v5010 = vunpack.c.h.b16 %v4843
        %v5011 = vunpack.c.l.b16 %v4844
        %v5012 = vunpack.c.h.b16 %v4844
        %v5013 = vunpack.c.l.b16 %v4845
        %v5014 = vunpack.c.h.b16 %v4845
        %v5015 = vunpack.c.l.b16 %v4846
        %v5016 = vunpack.c.h.b16 %v4846
        %v5017 = vunpack.c.l.b16 %v4847
        %v5018 = vunpack.c.h.b16 %v4847
        %v5019 = vunpack.c.l.b16 %v4848
        %v5020 = vunpack.c.h.b16 %v4848
        %v5021 = vunpack.c.l.b16 %v4849
        %v5022 = vunpack.c.h.b16 %v4849
        %v5023 = vunpack.c.l.b16 %v4850
        %v5024 = vunpack.c.h.b16 %v4850
        %v5025 = vunpack.c.l.b16 %v4851
        %v5026 = vunpack.c.h.b16 %v4851
        %v5027 = vunpack.c.l.b16 %v4852
        %v5028 = vunpack.c.h.b16 %v4852
        %v5029 = vunpack.c.l.b16 %v4853
        %v5030 = vunpack.c.h.b16 %v4853
        %v5031 = vunpack.c.l.b16 %v4854
        %v5032 = vunpack.c.h.b16 %v4854
        %v5033 = vunpack.c.l.b16 %v4855
        %v5034 = vunpack.c.h.b16 %v4855
        %v5035 = vunpack.c.l.b16 %v4856
        %v5036 = vunpack.c.h.b16 %v4856
        %v5037 = vunpack.c.l.b16 %v4857
        %v5038 = vunpack.c.h.b16 %v4857
        %v5039 = vunpack.c.l.b16 %v4858
        %v5040 = vunpack.c.h.b16 %v4858
        %v5041 = vunpack.c.l.b16 %v4859
        %v5042 = vunpack.c.h.b16 %v4859
        %v5043 = vunpack.c.l.b16 %v4860
        %v5044 = vunpack.c.h.b16 %v4860
        %v5045 = vunpack.c.l.b16 %v4861
        %v5046 = vunpack.c.h.b16 %v4861
        %v5047 = vunpack.c.l.b16 %v4862
        %v5048 = vunpack.c.h.b16 %v4862
        %v5049 = vunpack.c.l.b16 %v4863
        %v5050 = vunpack.c.h.b16 %v4863
        %v5051 = vunpack.c.l.b16 %v4864
        %v5052 = vunpack.c.h.b16 %v4864
        %v5053 = vunpack.c.l.b16 %v4865
        %v5054 = vunpack.c.h.b16 %v4865
        %v5055 = vunpack.c.l.b16 %v4866
        %v5056 = vunpack.c.h.b16 %v4866
        %v5057 = vunpack.c.l.b16 %v4867
        %v5058 = vunpack.c.h.b16 %v4867
        %v5059 = vunpack.c.l.b16 %v4868
        %v5060 = vunpack.c.h.b16 %v4868
        %v5061 = vpack.c.b16 %v4935, %v4933
        %v5062 = vpack.c.b16 %v4936, %v4934
        %v5063 = vpack.c.b16 %v4939, %v4937
        %v5064 = vpack.c.b16 %v4940, %v4938
        %v5065 = vpack.c.b16 %v4943, %v4941
        %v5066 = vpack.c.b16 %v4944, %v4942
        %v5067 = vpack.c.b16 %v4947, %v4945
        %v5068 = vpack.c.b16 %v4948, %v4946
        %v5069 = vpack.c.b16 %v4951, %v4949
        %v5070 = vpack.c.b16 %v4952, %v4950
        %v5071 = vpack.c.b16 %v4955, %v4953
        %v5072 = vpack.c.b16 %v4956, %v4954
        %v5073 = vpack.c.b16 %v4959, %v4957
        %v5074 = vpack.c.b16 %v4960, %v4958
        %v5075 = vpack.c.b16 %v4963, %v4961
        %v5076 = vpack.c.b16 %v4964, %v4962
        %v5077 = vpack.c.b16 %v4967, %v4965
        %v5078 = vpack.c.b16 %v4968, %v4966
        %v5079 = vpack.c.b16 %v4971, %v4969
        %v5080 = vpack.c.b16 %v4972, %v4970
        %v5081 = vpack.c.b16 %v4975, %v4973
        %v5082 = vpack.c.b16 %v4976, %v4974
        %v5083 = vpack.c.b16 %v4979, %v4977
        %v5084 = vpack.c.b16 %v4980, %v4978
        %v5085 = vpack.c.b16 %v4983, %v4981
        %v5086 = vpack.c.b16 %v4984, %v4982
        %v5087 = vpack.c.b16 %v4987, %v4985
        %v5088 = vpack.c.b16 %v4988, %v4986
        %v5089 = vpack.c.b16 %v4991, %v4989
        %v5090 = vpack.c.b16 %v4992, %v4990
        %v5091 = vpack.c.b16 %v4995, %v4993
        %v5092 = vpack.c.b16 %v4996, %v4994
        %v5093 = vpack.c.b16 %v4999, %v4997
        %v5094 = vpack.c.b16 %v5000, %v4998
        %v5095 = vpack.c.b16 %v5003, %v5001
        %v5096 = vpack.c.b16 %v5004, %v5002
        %v5097 = vpack.c.b16 %v5007, %v5005
        %v5098 = vpack.c.b16 %v5008, %v5006
        %v5099 = vpack.c.b16 %v5011, %v5009
        %v5100 = vpack.c.b16 %v5012, %v5010
        %v5101 = vpack.c.b16 %v5015, %v5013
        %v5102 = vpack.c.b16 %v5016, %v5014
        %v5103 = vpack.c.b16 %v5019, %v5017
        %v5104 = vpack.c.b16 %v5020, %v5018
        %v5105 = vpack.c.b16 %v5023, %v5021
        %v5106 = vpack.c.b16 %v5024, %v5022
        %v5107 = vpack.c.b16 %v5027, %v5025
        %v5108 = vpack.c.b16 %v5028, %v5026
        %v5109 = vpack.c.b16 %v5031, %v5029
        %v5110 = vpack.c.b16 %v5032, %v5030
        %v5111 = vpack.c.b16 %v5035, %v5033
        %v5112 = vpack.c.b16 %v5036, %v5034
        %v5113 = vpack.c.b16 %v5039, %v5037
        %v5114 = vpack.c.b16 %v5040, %v5038
        %v5115 = vpack.c.b16 %v5043, %v5041
        %v5116 = vpack.c.b16 %v5044, %v5042
        %v5117 = vpack.c.b16 %v5047, %v5045
        %v5118 = vpack.c.b16 %v5048, %v5046
        %v5119 = vpack.c.b16 %v5051, %v5049
        %v5120 = vpack.c.b16 %v5052, %v5050
        %v5121 = vpack.c.b16 %v5055, %v5053
        %v5122 = vpack.c.b16 %v5056, %v5054
        %v5123 = vpack.c.b16 %v5059, %v5057
        %v5124 = vpack.c.b16 %v5060, %v5058
        %5189 = vmatprep.subr.bf16.mxu0 %v5062
        %5190 = vmatpush1.bf16.msra.mxu0 %v5061
        %5191 = vmatprep.subr.bf16.mxu0 %v5064
        %5192 = vmatpush1.bf16.msra.mxu0 %v5063
        %5193 = vmatprep.subr.bf16.mxu0 %v5066
        %5194 = vmatpush1.bf16.msra.mxu0 %v5065
        %5195 = vmatprep.subr.bf16.mxu0 %v5068
        %5196 = vmatpush1.bf16.msra.mxu0 %v5067
        %5197 = vmatprep.subr.bf16.mxu0 %v5070
        %5198 = vmatpush1.bf16.msra.mxu0 %v5069
        %5199 = vmatprep.subr.bf16.mxu0 %v5072
        %5200 = vmatpush1.bf16.msra.mxu0 %v5071
        %5201 = vmatprep.subr.bf16.mxu0 %v5074
        %5202 = vmatpush1.bf16.msra.mxu0 %v5073
        %5203 = vmatprep.subr.bf16.mxu0 %v5076
        %5204 = vmatpush1.bf16.msra.mxu0 %v5075
        %5205 = vmatprep.subr.bf16.mxu0 %v5078
        %5206 = vmatpush1.bf16.msra.mxu0 %v5077
        %5207 = vmatprep.subr.bf16.mxu0 %v5080
        %5208 = vmatpush1.bf16.msra.mxu0 %v5079
        %5209 = vmatprep.subr.bf16.mxu0 %v5082
        %5210 = vmatpush1.bf16.msra.mxu0 %v5081
        %5211 = vmatprep.subr.bf16.mxu0 %v5084
        %5212 = vmatpush1.bf16.msra.mxu0 %v5083
        %5213 = vmatprep.subr.bf16.mxu0 %v5086
        %5214 = vmatpush1.bf16.msra.mxu0 %v5085
        %5215 = vmatprep.subr.bf16.mxu0 %v5088
        %5216 = vmatpush1.bf16.msra.mxu0 %v5087
        %5217 = vmatprep.subr.bf16.mxu0 %v5090
        %5218 = vmatpush1.bf16.msra.mxu0 %v5089
        %5219 = vmatprep.subr.bf16.mxu0 %v5092
        %5220 = vmatpush1.bf16.msra.mxu0 %v5091
        %5221 = vmatprep.mubr.bf16.mxu0 %v4617
        %5222 = vmatmul.mubr.bf16.gmra.mrb[0].mxu0 %v4616
        %v5223 = vpop.f32.mrb[0].mxu0
        %v5224 = vadd.f32 0.0, %v5223
        %v5225 = vpop.f32.mrb[0].mxu0
        %v5226 = vadd.f32 0.0, %v5225
        %v5227 = vpop.f32.mrb[0].mxu0
        %v5228 = vadd.f32 0.0, %v5227
        %v5229 = vpop.f32.mrb[0].mxu0
        %v5230 = vadd.f32 0.0, %v5229
        %5231 = vmatprep.mubr.bf16.mxu0 %v4621
        %5232 = vmatmul.mubr.bf16.gmra.mrb[0].mxu0 %v4620
        %v5233 = vpop.f32.mrb[0].mxu0
        %v5234 = vadd.f32 0.0, %v5233
        %v5235 = vpop.f32.mrb[0].mxu0
        %v5236 = vadd.f32 0.0, %v5235
        %v5237 = vpop.f32.mrb[0].mxu0
        %v5238 = vadd.f32 0.0, %v5237
        %v5239 = vpop.f32.mrb[0].mxu0
        %v5240 = vadd.f32 0.0, %v5239
        %5241 = vmatprep.mubr.bf16.mxu0 %v4625
        %5242 = vmatmul.mubr.bf16.gmra.mrb[0].mxu0 %v4624
        %v5243 = vpop.f32.mrb[0].mxu0
        %v5244 = vadd.f32 0.0, %v5243
        %v5245 = vpop.f32.mrb[0].mxu0
        %v5246 = vadd.f32 0.0, %v5245
        %v5247 = vpop.f32.mrb[0].mxu0
        %v5248 = vpop.f32.mrb[0].mxu0
        %5249 = vdwg.mxu0
        %5250 = vmatprep.subr.bf16.mxu0 %v5094
        %5251 = vmatpush1.bf16.msra.mxu0 %v5093
        %5252 = vmatprep.subr.bf16.mxu0 %v5096
        %5253 = vmatpush1.bf16.msra.mxu0 %v5095
        %5254 = vmatprep.subr.bf16.mxu0 %v5098
        %5255 = vmatpush1.bf16.msra.mxu0 %v5097
        %5256 = vmatprep.subr.bf16.mxu0 %v5100
        %5257 = vmatpush1.bf16.msra.mxu0 %v5099
        %5258 = vmatprep.subr.bf16.mxu0 %v5102
        %5259 = vmatpush1.bf16.msra.mxu0 %v5101
        %5260 = vmatprep.subr.bf16.mxu0 %v5104
        %5261 = vmatpush1.bf16.msra.mxu0 %v5103
        %5262 = vmatprep.subr.bf16.mxu0 %v5106
        %5263 = vmatpush1.bf16.msra.mxu0 %v5105
        %5264 = vmatprep.subr.bf16.mxu0 %v5108
        %5265 = vmatpush1.bf16.msra.mxu0 %v5107
        %5266 = vmatprep.subr.bf16.mxu0 %v5110
        %5267 = vmatpush1.bf16.msra.mxu0 %v5109
        %5268 = vmatprep.subr.bf16.mxu0 %v5112
        %5269 = vmatpush1.bf16.msra.mxu0 %v5111
        %5270 = vmatprep.subr.bf16.mxu0 %v5114
        %5271 = vmatpush1.bf16.msra.mxu0 %v5113
        %5272 = vmatprep.subr.bf16.mxu0 %v5116
        %5273 = vmatpush1.bf16.msra.mxu0 %v5115
        %5274 = vmatprep.subr.bf16.mxu0 %v5118
        %5275 = vmatpush1.bf16.msra.mxu0 %v5117
        %5276 = vmatprep.subr.bf16.mxu0 %v5120
        %5277 = vmatpush1.bf16.msra.mxu0 %v5119
        %5278 = vmatprep.subr.bf16.mxu0 %v5122
        %5279 = vmatpush1.bf16.msra.mxu0 %v5121
        %5280 = vmatprep.subr.bf16.mxu0 %v5124
        %5281 = vmatpush1.bf16.msra.mxu0 %v5123
        %5282 = vmatprep.mubr.bf16.mxu0 %v4619
        %5283 = vmatmul.mubr.bf16.gmra.mrb[0].mxu0 %v4618
        %v5284 = vpop.f32.mrb[0].mxu0
        %v5285 = vadd.f32 %v5224, %v5284
        %v5286 = vpop.f32.mrb[0].mxu0
        %v5287 = vadd.f32 %v5226, %v5286
        %v5288 = vpop.f32.mrb[0].mxu0
        %v5289 = vadd.f32 %v5228, %v5288
        %v5290 = vpop.f32.mrb[0].mxu0
        %v5291 = vadd.f32 %v5230, %v5290
        %5292 = vmatprep.mubr.bf16.mxu0 %v4623
        %5293 = vmatmul.mubr.bf16.gmra.mrb[0].mxu0 %v4622
        %v5294 = vpop.f32.mrb[0].mxu0
        %v5295 = vadd.f32 %v5234, %v5294
        %v5296 = vpop.f32.mrb[0].mxu0
        %v5297 = vadd.f32 %v5236, %v5296
        %v5298 = vpop.f32.mrb[0].mxu0
        %v5299 = vadd.f32 %v5238, %v5298
        %v5300 = vpop.f32.mrb[0].mxu0
        %v5301 = vadd.f32 %v5240, %v5300
        %5302 = vmatprep.mubr.bf16.mxu0 %v4627
        %5303 = vmatmul.mubr.bf16.gmra.mrb[0].mxu0 %v4626
        %v5304 = vpop.f32.mrb[0].mxu0
        %v5305 = vadd.f32 %v5244, %v5304
        %v5306 = vpop.f32.mrb[0].mxu0
        %v5307 = vadd.f32 %v5246, %v5306
        %v5308 = vpop.f32.mrb[0].mxu0
        %v5309 = vpop.f32.mrb[0].mxu0
        %5310 = vdwg.mxu0
        %v5375 = vunpack.c.l.b16 %v4740
        %v5376 = vunpack.c.h.b16 %v4740
        %v5377 = vunpack.c.l.b16 %v4741
        %v5378 = vunpack.c.h.b16 %v4741
        %v5379 = vunpack.c.l.b16 %v4742
        %v5380 = vunpack.c.h.b16 %v4742
        %v5381 = vunpack.c.l.b16 %v4743
        %v5382 = vunpack.c.h.b16 %v4743
        %v5383 = vunpack.c.l.b16 %v4744
        %v5384 = vunpack.c.h.b16 %v4744
        %v5385 = vunpack.c.l.b16 %v4745
        %v5386 = vunpack.c.h.b16 %v4745
        %v5387 = vunpack.c.l.b16 %v4746
        %v5388 = vunpack.c.h.b16 %v4746
        %v5389 = vunpack.c.l.b16 %v4747
        %v5390 = vunpack.c.h.b16 %v4747
        %v5391 = vunpack.c.l.b16 %v4748
        %v5392 = vunpack.c.h.b16 %v4748
        %v5393 = vunpack.c.l.b16 %v4749
        %v5394 = vunpack.c.h.b16 %v4749
        %v5395 = vunpack.c.l.b16 %v4750
        %v5396 = vunpack.c.h.b16 %v4750
        %v5397 = vunpack.c.l.b16 %v4751
        %v5398 = vunpack.c.h.b16 %v4751
        %v5399 = vunpack.c.l.b16 %v4752
        %v5400 = vunpack.c.h.b16 %v4752
        %v5401 = vunpack.c.l.b16 %v4753
        %v5402 = vunpack.c.h.b16 %v4753
        %v5403 = vunpack.c.l.b16 %v4754
        %v5404 = vunpack.c.h.b16 %v4754
        %v5405 = vunpack.c.l.b16 %v4755
        %v5406 = vunpack.c.h.b16 %v4755
        %v5407 = vunpack.c.l.b16 %v4756
        %v5408 = vunpack.c.h.b16 %v4756
        %v5409 = vunpack.c.l.b16 %v4757
        %v5410 = vunpack.c.h.b16 %v4757
        %v5411 = vunpack.c.l.b16 %v4758
        %v5412 = vunpack.c.h.b16 %v4758
        %v5413 = vunpack.c.l.b16 %v4759
        %v5414 = vunpack.c.h.b16 %v4759
        %v5415 = vunpack.c.l.b16 %v4760
        %v5416 = vunpack.c.h.b16 %v4760
        %v5417 = vunpack.c.l.b16 %v4761
        %v5418 = vunpack.c.h.b16 %v4761
        %v5419 = vunpack.c.l.b16 %v4762
        %v5420 = vunpack.c.h.b16 %v4762
        %v5421 = vunpack.c.l.b16 %v4763
        %v5422 = vunpack.c.h.b16 %v4763
        %v5423 = vunpack.c.l.b16 %v4764
        %v5424 = vunpack.c.h.b16 %v4764
        %v5425 = vunpack.c.l.b16 %v4765
        %v5426 = vunpack.c.h.b16 %v4765
        %v5427 = vunpack.c.l.b16 %v4766
        %v5428 = vunpack.c.h.b16 %v4766
        %v5429 = vunpack.c.l.b16 %v4767
        %v5430 = vunpack.c.h.b16 %v4767
        %v5431 = vunpack.c.l.b16 %v4768
        %v5432 = vunpack.c.h.b16 %v4768
        %v5433 = vunpack.c.l.b16 %v4769
        %v5434 = vunpack.c.h.b16 %v4769
        %v5435 = vunpack.c.l.b16 %v4770
        %v5436 = vunpack.c.h.b16 %v4770
        %v5437 = vunpack.c.l.b16 %v4771
        %v5438 = vunpack.c.h.b16 %v4771
        %v5439 = vunpack.c.l.b16 %v4772
        %v5440 = vunpack.c.h.b16 %v4772
        %v5441 = vunpack.c.l.b16 %v4773
        %v5442 = vunpack.c.h.b16 %v4773
        %v5443 = vunpack.c.l.b16 %v4774
        %v5444 = vunpack.c.h.b16 %v4774
        %v5445 = vunpack.c.l.b16 %v4775
        %v5446 = vunpack.c.h.b16 %v4775
        %v5447 = vunpack.c.l.b16 %v4776
        %v5448 = vunpack.c.h.b16 %v4776
        %v5449 = vunpack.c.l.b16 %v4777
        %v5450 = vunpack.c.h.b16 %v4777
        %v5451 = vunpack.c.l.b16 %v4778
        %v5452 = vunpack.c.h.b16 %v4778
        %v5453 = vunpack.c.l.b16 %v4779
        %v5454 = vunpack.c.h.b16 %v4779
        %v5455 = vunpack.c.l.b16 %v4780
        %v5456 = vunpack.c.h.b16 %v4780
        %v5457 = vunpack.c.l.b16 %v4781
        %v5458 = vunpack.c.h.b16 %v4781
        %v5459 = vunpack.c.l.b16 %v4782
        %v5460 = vunpack.c.h.b16 %v4782
        %v5461 = vunpack.c.l.b16 %v4783
        %v5462 = vunpack.c.h.b16 %v4783
        %v5463 = vunpack.c.l.b16 %v4784
        %v5464 = vunpack.c.h.b16 %v4784
        %v5465 = vunpack.c.l.b16 %v4785
        %v5466 = vunpack.c.h.b16 %v4785
        %v5467 = vunpack.c.l.b16 %v4786
        %v5468 = vunpack.c.h.b16 %v4786
        %v5469 = vunpack.c.l.b16 %v4787
        %v5470 = vunpack.c.h.b16 %v4787
        %v5471 = vunpack.c.l.b16 %v4788
        %v5472 = vunpack.c.h.b16 %v4788
        %v5473 = vunpack.c.l.b16 %v4789
        %v5474 = vunpack.c.h.b16 %v4789
        %v5475 = vunpack.c.l.b16 %v4790
        %v5476 = vunpack.c.h.b16 %v4790
        %v5477 = vunpack.c.l.b16 %v4791
        %v5478 = vunpack.c.h.b16 %v4791
        %v5479 = vunpack.c.l.b16 %v4792
        %v5480 = vunpack.c.h.b16 %v4792
        %v5481 = vunpack.c.l.b16 %v4793
        %v5482 = vunpack.c.h.b16 %v4793
        %v5483 = vunpack.c.l.b16 %v4794
        %v5484 = vunpack.c.h.b16 %v4794
        %v5485 = vunpack.c.l.b16 %v4795
        %v5486 = vunpack.c.h.b16 %v4795
        %v5487 = vunpack.c.l.b16 %v4796
        %v5488 = vunpack.c.h.b16 %v4796
        %v5489 = vunpack.c.l.b16 %v4797
        %v5490 = vunpack.c.h.b16 %v4797
        %v5491 = vunpack.c.l.b16 %v4798
        %v5492 = vunpack.c.h.b16 %v4798
        %v5493 = vunpack.c.l.b16 %v4799
        %v5494 = vunpack.c.h.b16 %v4799
        %v5495 = vunpack.c.l.b16 %v4800
        %v5496 = vunpack.c.h.b16 %v4800
        %v5497 = vunpack.c.l.b16 %v4801
        %v5498 = vunpack.c.h.b16 %v4801
        %v5499 = vunpack.c.l.b16 %v4802
        %v5500 = vunpack.c.h.b16 %v4802
        %v5501 = vunpack.c.l.b16 %v4803
        %v5502 = vunpack.c.h.b16 %v4803
        %v5503 = vpack.c.b16 %v5377, %v5375
        %v5504 = vpack.c.b16 %v5378, %v5376
        %v5505 = vpack.c.b16 %v5381, %v5379
        %v5506 = vpack.c.b16 %v5382, %v5380
        %v5507 = vpack.c.b16 %v5385, %v5383
        %v5508 = vpack.c.b16 %v5386, %v5384
        %v5509 = vpack.c.b16 %v5389, %v5387
        %v5510 = vpack.c.b16 %v5390, %v5388
        %v5511 = vpack.c.b16 %v5393, %v5391
        %v5512 = vpack.c.b16 %v5394, %v5392
        %v5513 = vpack.c.b16 %v5397, %v5395
        %v5514 = vpack.c.b16 %v5398, %v5396
        %v5515 = vpack.c.b16 %v5401, %v5399
        %v5516 = vpack.c.b16 %v5402, %v5400
        %v5517 = vpack.c.b16 %v5405, %v5403
        %v5518 = vpack.c.b16 %v5406, %v5404
        %v5519 = vpack.c.b16 %v5409, %v5407
        %v5520 = vpack.c.b16 %v5410, %v5408
        %v5521 = vpack.c.b16 %v5413, %v5411
        %v5522 = vpack.c.b16 %v5414, %v5412
        %v5523 = vpack.c.b16 %v5417, %v5415
        %v5524 = vpack.c.b16 %v5418, %v5416
        %v5525 = vpack.c.b16 %v5421, %v5419
        %v5526 = vpack.c.b16 %v5422, %v5420
        %v5527 = vpack.c.b16 %v5425, %v5423
        %v5528 = vpack.c.b16 %v5426, %v5424
        %v5529 = vpack.c.b16 %v5429, %v5427
        %v5530 = vpack.c.b16 %v5430, %v5428
        %v5531 = vpack.c.b16 %v5433, %v5431
        %v5532 = vpack.c.b16 %v5434, %v5432
        %v5533 = vpack.c.b16 %v5437, %v5435
        %v5534 = vpack.c.b16 %v5438, %v5436
        %v5535 = vpack.c.b16 %v5441, %v5439
        %v5536 = vpack.c.b16 %v5442, %v5440
        %v5537 = vpack.c.b16 %v5445, %v5443
        %v5538 = vpack.c.b16 %v5446, %v5444
        %v5539 = vpack.c.b16 %v5449, %v5447
        %v5540 = vpack.c.b16 %v5450, %v5448
        %v5541 = vpack.c.b16 %v5453, %v5451
        %v5542 = vpack.c.b16 %v5454, %v5452
        %v5543 = vpack.c.b16 %v5457, %v5455
        %v5544 = vpack.c.b16 %v5458, %v5456
        %v5545 = vpack.c.b16 %v5461, %v5459
        %v5546 = vpack.c.b16 %v5462, %v5460
        %v5547 = vpack.c.b16 %v5465, %v5463
        %v5548 = vpack.c.b16 %v5466, %v5464
        %v5549 = vpack.c.b16 %v5469, %v5467
        %v5550 = vpack.c.b16 %v5470, %v5468
        %v5551 = vpack.c.b16 %v5473, %v5471
        %v5552 = vpack.c.b16 %v5474, %v5472
        %v5553 = vpack.c.b16 %v5477, %v5475
        %v5554 = vpack.c.b16 %v5478, %v5476
        %v5555 = vpack.c.b16 %v5481, %v5479
        %v5556 = vpack.c.b16 %v5482, %v5480
        %v5557 = vpack.c.b16 %v5485, %v5483
        %v5558 = vpack.c.b16 %v5486, %v5484
        %v5559 = vpack.c.b16 %v5489, %v5487
        %v5560 = vpack.c.b16 %v5490, %v5488
        %v5561 = vpack.c.b16 %v5493, %v5491
        %v5562 = vpack.c.b16 %v5494, %v5492
        %v5563 = vpack.c.b16 %v5497, %v5495
        %v5564 = vpack.c.b16 %v5498, %v5496
        %v5565 = vpack.c.b16 %v5501, %v5499
        %v5566 = vpack.c.b16 %v5502, %v5500
        %5631 = vmatprep.subr.bf16.mxu0 %v5504
        %5632 = vmatpush1.bf16.msra.mxu0 %v5503
        %5633 = vmatprep.subr.bf16.mxu0 %v5506
        %5634 = vmatpush1.bf16.msra.mxu0 %v5505
        %5635 = vmatprep.subr.bf16.mxu0 %v5508
        %5636 = vmatpush1.bf16.msra.mxu0 %v5507
        %5637 = vmatprep.subr.bf16.mxu0 %v5510
        %5638 = vmatpush1.bf16.msra.mxu0 %v5509
        %5639 = vmatprep.subr.bf16.mxu0 %v5512
        %5640 = vmatpush1.bf16.msra.mxu0 %v5511
        %5641 = vmatprep.subr.bf16.mxu0 %v5514
        %5642 = vmatpush1.bf16.msra.mxu0 %v5513
        %5643 = vmatprep.subr.bf16.mxu0 %v5516
        %5644 = vmatpush1.bf16.msra.mxu0 %v5515
        %5645 = vmatprep.subr.bf16.mxu0 %v5518
        %5646 = vmatpush1.bf16.msra.mxu0 %v5517
        %5647 = vmatprep.subr.bf16.mxu0 %v5520
        %5648 = vmatpush1.bf16.msra.mxu0 %v5519
        %5649 = vmatprep.subr.bf16.mxu0 %v5522
        %5650 = vmatpush1.bf16.msra.mxu0 %v5521
        %5651 = vmatprep.subr.bf16.mxu0 %v5524
        %5652 = vmatpush1.bf16.msra.mxu0 %v5523
        %5653 = vmatprep.subr.bf16.mxu0 %v5526
        %5654 = vmatpush1.bf16.msra.mxu0 %v5525
        %5655 = vmatprep.subr.bf16.mxu0 %v5528
        %5656 = vmatpush1.bf16.msra.mxu0 %v5527
        %5657 = vmatprep.subr.bf16.mxu0 %v5530
        %5658 = vmatpush1.bf16.msra.mxu0 %v5529
        %5659 = vmatprep.subr.bf16.mxu0 %v5532
        %5660 = vmatpush1.bf16.msra.mxu0 %v5531
        %5661 = vmatprep.subr.bf16.mxu0 %v5534
        %5662 = vmatpush1.bf16.msra.mxu0 %v5533
        %5663 = vmatprep.mubr.bf16.mxu0 %v4733
        %5664 = vmatmul.mubr.bf16.gmra.mrb[0].mxu0 %v4732
        %v5665 = vpop.f32.mrb[0].mxu0
        %v5666 = vadd.f32 %v5285, %v5665
        %v5667 = vpop.f32.mrb[0].mxu0
        %v5668 = vadd.f32 %v5287, %v5667
        %v5669 = vpop.f32.mrb[0].mxu0
        %v5670 = vadd.f32 %v5289, %v5669
        %v5671 = vpop.f32.mrb[0].mxu0
        %v5672 = vadd.f32 %v5291, %v5671
        %5673 = vmatprep.mubr.bf16.mxu0 %v4671
        %5674 = vmatmul.mubr.bf16.gmra.mrb[0].mxu0 %v4663
        %v5675 = vpop.f32.mrb[0].mxu0
        %v5676 = vadd.f32 %v5295, %v5675
        %v5677 = vpop.f32.mrb[0].mxu0
        %v5678 = vadd.f32 %v5297, %v5677
        %v5679 = vpop.f32.mrb[0].mxu0
        %v5680 = vadd.f32 %v5299, %v5679
        %v5681 = vpop.f32.mrb[0].mxu0
        %v5682 = vadd.f32 %v5301, %v5681
        %5683 = vmatprep.mubr.bf16.mxu0 %v4737
        %5684 = vmatmul.mubr.bf16.gmra.mrb[0].mxu0 %v4736
        %v5685 = vpop.f32.mrb[0].mxu0
        %v5686 = vadd.f32 %v5305, %v5685
        %v5687 = vpop.f32.mrb[0].mxu0
        %v5688 = vadd.f32 %v5307, %v5687
        %v5689 = vpop.f32.mrb[0].mxu0
        %v5690 = vpop.f32.mrb[0].mxu0
        %5691 = vdwg.mxu0
        %5692 = vmatprep.subr.bf16.mxu0 %v5536
        %5693 = vmatpush1.bf16.msra.mxu0 %v5535
        %5694 = vmatprep.subr.bf16.mxu0 %v5538
        %5695 = vmatpush1.bf16.msra.mxu0 %v5537
        %5696 = vmatprep.subr.bf16.mxu0 %v5540
        %5697 = vmatpush1.bf16.msra.mxu0 %v5539
        %5698 = vmatprep.subr.bf16.mxu0 %v5542
        %5699 = vmatpush1.bf16.msra.mxu0 %v5541
        %5700 = vmatprep.subr.bf16.mxu0 %v5544
        %5701 = vmatpush1.bf16.msra.mxu0 %v5543
        %5702 = vmatprep.subr.bf16.mxu0 %v5546
        %5703 = vmatpush1.bf16.msra.mxu0 %v5545
        %5704 = vmatprep.subr.bf16.mxu0 %v5548
        %5705 = vmatpush1.bf16.msra.mxu0 %v5547
        %5706 = vmatprep.subr.bf16.mxu0 %v5550
        %5707 = vmatpush1.bf16.msra.mxu0 %v5549
        %5708 = vmatprep.subr.bf16.mxu0 %v5552
        %5709 = vmatpush1.bf16.msra.mxu0 %v5551
        %5710 = vmatprep.subr.bf16.mxu0 %v5554
        %5711 = vmatpush1.bf16.msra.mxu0 %v5553
        %5712 = vmatprep.subr.bf16.mxu0 %v5556
        %5713 = vmatpush1.bf16.msra.mxu0 %v5555
        %5714 = vmatprep.subr.bf16.mxu0 %v5558
        %5715 = vmatpush1.bf16.msra.mxu0 %v5557
        %5716 = vmatprep.subr.bf16.mxu0 %v5560
        %5717 = vmatpush1.bf16.msra.mxu0 %v5559
        %5718 = vmatprep.subr.bf16.mxu0 %v5562
        %5719 = vmatpush1.bf16.msra.mxu0 %v5561
        %5720 = vmatprep.subr.bf16.mxu0 %v5564
        %5721 = vmatpush1.bf16.msra.mxu0 %v5563
        %5722 = vmatprep.subr.bf16.mxu0 %v5566
        %5723 = vmatpush1.bf16.msra.mxu0 %v5565
        %5724 = vmatprep.mubr.bf16.mxu0 %v4735
        %5725 = vmatmul.mubr.bf16.gmra.mrb[0].mxu0 %v4734
        %v5726 = vpop.f32.mrb[0].mxu0
        %v5727 = vadd.f32 %v5666, %v5726
        %v5728 = vpop.f32.mrb[0].mxu0
        %v5729 = vadd.f32 %v5668, %v5728
        %v5730 = vpop.f32.mrb[0].mxu0
        %v5731 = vadd.f32 %v5670, %v5730
        %v5732 = vpop.f32.mrb[0].mxu0
        %v5733 = vadd.f32 %v5672, %v5732
        %5734 = vmatprep.mubr.bf16.mxu0 %v4687
        %5735 = vmatmul.mubr.bf16.gmra.mrb[0].mxu0 %v4679
        %v5736 = vpop.f32.mrb[0].mxu0
        %v5737 = vadd.f32 %v5676, %v5736
        %v5738 = vpop.f32.mrb[0].mxu0
        %v5739 = vadd.f32 %v5678, %v5738
        %v5740 = vpop.f32.mrb[0].mxu0
        %v5741 = vadd.f32 %v5680, %v5740
        %v5742 = vpop.f32.mrb[0].mxu0
        %v5743 = vadd.f32 %v5682, %v5742
        %5744 = vmatprep.mubr.bf16.mxu0 %v4739
        %5745 = vmatmul.mubr.bf16.gmra.mrb[0].mxu0 %v4738
        %v5746 = vpop.f32.mrb[0].mxu0
        %v5747 = vadd.f32 %v5686, %v5746
        %v5748 = vpop.f32.mrb[0].mxu0
        %v5749 = vadd.f32 %v5688, %v5748
        %v5750 = vpop.f32.mrb[0].mxu0
        %v5751 = vpop.f32.mrb[0].mxu0
        %5752 = vdwg.mxu0
        %s5753 = scalar_lea.vmem [#allocation14], 1024
        %v5754 = vld [vmem:[%s5753] sm:$0xff]
        %v5755 = vld [vmem:[%s5753 + $0x8] sm:$0xff]
        %v5756 = vld [vmem:[%s5753 + $0x10] sm:$0xff]
        %v5757 = vld [vmem:[%s5753 + $0x18] sm:$0xff]
        %v5758 = vld [vmem:[%s5753 + $0x20] sm:$0xff]
        %v5759 = vld [vmem:[%s5753 + $0x28] sm:$0xff]
        %v5760 = vld [vmem:[%s5753 + $0x30] sm:$0xff]
        %v5761 = vld [vmem:[%s5753 + $0x38] sm:$0xff]
        %v5762 = vld [vmem:[%s5753 + $0x40] sm:$0xff]
        %v5763 = vld [vmem:[%s5753 + $0x48] sm:$0xff]
        %v5764 = vld [vmem:[%s5753 + $0x50] sm:$0xff]
        %v5765 = vld [vmem:[%s5753 + $0x58] sm:$0xff]
        %v5766 = vld [vmem:[%s5753 + $0x60] sm:$0xff]
        %v5767 = vld [vmem:[%s5753 + $0x68] sm:$0xff]
        %v5768 = vld [vmem:[%s5753 + $0x70] sm:$0xff]
        %v5769 = vld [vmem:[%s5753 + $0x78] sm:$0xff]
        %v5770 = vld [vmem:[%s5753 + $0x80] sm:$0xff]
        %v5771 = vld [vmem:[%s5753 + $0x88] sm:$0xff]
        %v5772 = vld [vmem:[%s5753 + $0x90] sm:$0xff]
        %v5773 = vld [vmem:[%s5753 + $0x98] sm:$0xff]
        %v5774 = vld [vmem:[%s5753 + $0xa0] sm:$0xff]
        %v5775 = vld [vmem:[%s5753 + $0xa8] sm:$0xff]
        %v5776 = vld [vmem:[%s5753 + $0xb0] sm:$0xff]
        %v5777 = vld [vmem:[%s5753 + $0xb8] sm:$0xff]
        %v5778 = vld [vmem:[%s5753 + $0xc0] sm:$0xff]
        %v5779 = vld [vmem:[%s5753 + $0xc8] sm:$0xff]
        %v5780 = vld [vmem:[%s5753 + $0xd0] sm:$0xff]
        %v5781 = vld [vmem:[%s5753 + $0xd8] sm:$0xff]
        %v5782 = vld [vmem:[%s5753 + $0xe0] sm:$0xff]
        %v5783 = vld [vmem:[%s5753 + $0xe8] sm:$0xff]
        %v5784 = vld [vmem:[%s5753 + $0xf0] sm:$0xff]
        %v5785 = vld [vmem:[%s5753 + $0xf8] sm:$0xff]
        %v5786 = vld [vmem:[%s5753 + $0x100] sm:$0xff]
        %v5787 = vld [vmem:[%s5753 + $0x108] sm:$0xff]
        %v5788 = vld [vmem:[%s5753 + $0x110] sm:$0xff]
        %v5789 = vld [vmem:[%s5753 + $0x118] sm:$0xff]
        %v5790 = vld [vmem:[%s5753 + $0x120] sm:$0xff]
        %v5791 = vld [vmem:[%s5753 + $0x128] sm:$0xff]
        %v5792 = vld [vmem:[%s5753 + $0x130] sm:$0xff]
        %v5793 = vld [vmem:[%s5753 + $0x138] sm:$0xff]
        %v5794 = vld [vmem:[%s5753 + $0x140] sm:$0xff]
        %v5795 = vld [vmem:[%s5753 + $0x148] sm:$0xff]
        %v5796 = vld [vmem:[%s5753 + $0x150] sm:$0xff]
        %v5797 = vld [vmem:[%s5753 + $0x158] sm:$0xff]
        %v5798 = vld [vmem:[%s5753 + $0x160] sm:$0xff]
        %v5799 = vld [vmem:[%s5753 + $0x168] sm:$0xff]
        %v5800 = vld [vmem:[%s5753 + $0x170] sm:$0xff]
        %v5801 = vld [vmem:[%s5753 + $0x178] sm:$0xff]
        %v5802 = vld [vmem:[%s5753 + $0x180] sm:$0xff]
        %v5803 = vld [vmem:[%s5753 + $0x188] sm:$0xff]
        %v5804 = vld [vmem:[%s5753 + $0x190] sm:$0xff]
        %v5805 = vld [vmem:[%s5753 + $0x198] sm:$0xff]
        %v5806 = vld [vmem:[%s5753 + $0x1a0] sm:$0xff]
        %v5807 = vld [vmem:[%s5753 + $0x1a8] sm:$0xff]
        %v5808 = vld [vmem:[%s5753 + $0x1b0] sm:$0xff]
        %v5809 = vld [vmem:[%s5753 + $0x1b8] sm:$0xff]
        %v5810 = vld [vmem:[%s5753 + $0x1c0] sm:$0xff]
        %v5811 = vld [vmem:[%s5753 + $0x1c8] sm:$0xff]
        %v5812 = vld [vmem:[%s5753 + $0x1d0] sm:$0xff]
        %v5813 = vld [vmem:[%s5753 + $0x1d8] sm:$0xff]
        %v5814 = vld [vmem:[%s5753 + $0x1e0] sm:$0xff]
        %v5815 = vld [vmem:[%s5753 + $0x1e8] sm:$0xff]
        %v5816 = vld [vmem:[%s5753 + $0x1f0] sm:$0xff]
        %v5817 = vld [vmem:[%s5753 + $0x1f8] sm:$0xff]
        %v5826 = vrot.slane %v4732, 1
        %v5827 = vrot.slane %v4663, 1
        %v5828 = vsel %vm3381, %v5826, %v5827
        %v5829 = vrot.slane %v4733, 1
        %v5830 = vrot.slane %v4671, 1
        %v5831 = vsel %vm3381, %v5829, %v5830
        %v5832 = vrot.slane %v4734, 1
        %v5833 = vrot.slane %v4679, 1
        %v5834 = vsel %vm3381, %v5832, %v5833
        %v5835 = vrot.slane %v4735, 1
        %v5836 = vrot.slane %v4687, 1
        %v5837 = vsel %vm3381, %v5835, %v5836
        %v5838 = vrot.slane %v4736, 1
        %v5839 = vsel %vm3381, %v5827, %v5838
        %v5840 = vrot.slane %v4737, 1
        %v5841 = vsel %vm3381, %v5830, %v5840
        %v5842 = vrot.slane %v4738, 1
        %v5843 = vsel %vm3381, %v5833, %v5842
        %v5844 = vrot.slane %v4739, 1
        %v5845 = vsel %vm3381, %v5836, %v5844
        %v5922 = vunpack.c.l.b16 %v5754
        %v5923 = vunpack.c.h.b16 %v5754
        %v5924 = vunpack.c.l.b16 %v5755
        %v5925 = vunpack.c.h.b16 %v5755
        %v5926 = vunpack.c.l.b16 %v5756
        %v5927 = vunpack.c.h.b16 %v5756
        %v5928 = vunpack.c.l.b16 %v5757
        %v5929 = vunpack.c.h.b16 %v5757
        %v5930 = vunpack.c.l.b16 %v5758
        %v5931 = vunpack.c.h.b16 %v5758
        %v5932 = vunpack.c.l.b16 %v5759
        %v5933 = vunpack.c.h.b16 %v5759
        %v5934 = vunpack.c.l.b16 %v5760
        %v5935 = vunpack.c.h.b16 %v5760
        %v5936 = vunpack.c.l.b16 %v5761
        %v5937 = vunpack.c.h.b16 %v5761
        %v5938 = vunpack.c.l.b16 %v5762
        %v5939 = vunpack.c.h.b16 %v5762
        %v5940 = vunpack.c.l.b16 %v5763
        %v5941 = vunpack.c.h.b16 %v5763
        %v5942 = vunpack.c.l.b16 %v5764
        %v5943 = vunpack.c.h.b16 %v5764
        %v5944 = vunpack.c.l.b16 %v5765
        %v5945 = vunpack.c.h.b16 %v5765
        %v5946 = vunpack.c.l.b16 %v5766
        %v5947 = vunpack.c.h.b16 %v5766
        %v5948 = vunpack.c.l.b16 %v5767
        %v5949 = vunpack.c.h.b16 %v5767
        %v5950 = vunpack.c.l.b16 %v5768
        %v5951 = vunpack.c.h.b16 %v5768
        %v5952 = vunpack.c.l.b16 %v5769
        %v5953 = vunpack.c.h.b16 %v5769
        %v5954 = vunpack.c.l.b16 %v5770
        %v5955 = vunpack.c.h.b16 %v5770
        %v5956 = vunpack.c.l.b16 %v5771
        %v5957 = vunpack.c.h.b16 %v5771
        %v5958 = vunpack.c.l.b16 %v5772
        %v5959 = vunpack.c.h.b16 %v5772
        %v5960 = vunpack.c.l.b16 %v5773
        %v5961 = vunpack.c.h.b16 %v5773
        %v5962 = vunpack.c.l.b16 %v5774
        %v5963 = vunpack.c.h.b16 %v5774
        %v5964 = vunpack.c.l.b16 %v5775
        %v5965 = vunpack.c.h.b16 %v5775
        %v5966 = vunpack.c.l.b16 %v5776
        %v5967 = vunpack.c.h.b16 %v5776
        %v5968 = vunpack.c.l.b16 %v5777
        %v5969 = vunpack.c.h.b16 %v5777
        %v5970 = vunpack.c.l.b16 %v5778
        %v5971 = vunpack.c.h.b16 %v5778
        %v5972 = vunpack.c.l.b16 %v5779
        %v5973 = vunpack.c.h.b16 %v5779
        %v5974 = vunpack.c.l.b16 %v5780
        %v5975 = vunpack.c.h.b16 %v5780
        %v5976 = vunpack.c.l.b16 %v5781
        %v5977 = vunpack.c.h.b16 %v5781
        %v5978 = vunpack.c.l.b16 %v5782
        %v5979 = vunpack.c.h.b16 %v5782
        %v5980 = vunpack.c.l.b16 %v5783
        %v5981 = vunpack.c.h.b16 %v5783
        %v5982 = vunpack.c.l.b16 %v5784
        %v5983 = vunpack.c.h.b16 %v5784
        %v5984 = vunpack.c.l.b16 %v5785
        %v5985 = vunpack.c.h.b16 %v5785
        %v5986 = vunpack.c.l.b16 %v5786
        %v5987 = vunpack.c.h.b16 %v5786
        %v5988 = vunpack.c.l.b16 %v5787
        %v5989 = vunpack.c.h.b16 %v5787
        %v5990 = vunpack.c.l.b16 %v5788
        %v5991 = vunpack.c.h.b16 %v5788
        %v5992 = vunpack.c.l.b16 %v5789
        %v5993 = vunpack.c.h.b16 %v5789
        %v5994 = vunpack.c.l.b16 %v5790
        %v5995 = vunpack.c.h.b16 %v5790
        %v5996 = vunpack.c.l.b16 %v5791
        %v5997 = vunpack.c.h.b16 %v5791
        %v5998 = vunpack.c.l.b16 %v5792
        %v5999 = vunpack.c.h.b16 %v5792
        %v6000 = vunpack.c.l.b16 %v5793
        %v6001 = vunpack.c.h.b16 %v5793
        %v6002 = vunpack.c.l.b16 %v5794
        %v6003 = vunpack.c.h.b16 %v5794
        %v6004 = vunpack.c.l.b16 %v5795
        %v6005 = vunpack.c.h.b16 %v5795
        %v6006 = vunpack.c.l.b16 %v5796
        %v6007 = vunpack.c.h.b16 %v5796
        %v6008 = vunpack.c.l.b16 %v5797
        %v6009 = vunpack.c.h.b16 %v5797
        %v6010 = vunpack.c.l.b16 %v5798
        %v6011 = vunpack.c.h.b16 %v5798
        %v6012 = vunpack.c.l.b16 %v5799
        %v6013 = vunpack.c.h.b16 %v5799
        %v6014 = vunpack.c.l.b16 %v5800
        %v6015 = vunpack.c.h.b16 %v5800
        %v6016 = vunpack.c.l.b16 %v5801
        %v6017 = vunpack.c.h.b16 %v5801
        %v6018 = vunpack.c.l.b16 %v5802
        %v6019 = vunpack.c.h.b16 %v5802
        %v6020 = vunpack.c.l.b16 %v5803
        %v6021 = vunpack.c.h.b16 %v5803
        %v6022 = vunpack.c.l.b16 %v5804
        %v6023 = vunpack.c.h.b16 %v5804
        %v6024 = vunpack.c.l.b16 %v5805
        %v6025 = vunpack.c.h.b16 %v5805
        %v6026 = vunpack.c.l.b16 %v5806
        %v6027 = vunpack.c.h.b16 %v5806
        %v6028 = vunpack.c.l.b16 %v5807
        %v6029 = vunpack.c.h.b16 %v5807
        %v6030 = vunpack.c.l.b16 %v5808
        %v6031 = vunpack.c.h.b16 %v5808
        %v6032 = vunpack.c.l.b16 %v5809
        %v6033 = vunpack.c.h.b16 %v5809
        %v6034 = vunpack.c.l.b16 %v5810
        %v6035 = vunpack.c.h.b16 %v5810
        %v6036 = vunpack.c.l.b16 %v5811
        %v6037 = vunpack.c.h.b16 %v5811
        %v6038 = vunpack.c.l.b16 %v5812
        %v6039 = vunpack.c.h.b16 %v5812
        %v6040 = vunpack.c.l.b16 %v5813
        %v6041 = vunpack.c.h.b16 %v5813
        %v6042 = vunpack.c.l.b16 %v5814
        %v6043 = vunpack.c.h.b16 %v5814
        %v6044 = vunpack.c.l.b16 %v5815
        %v6045 = vunpack.c.h.b16 %v5815
        %v6046 = vunpack.c.l.b16 %v5816
        %v6047 = vunpack.c.h.b16 %v5816
        %v6048 = vunpack.c.l.b16 %v5817
        %v6049 = vunpack.c.h.b16 %v5817
        %v6050 = vpack.c.b16 %v5924, %v5922
        %v6051 = vpack.c.b16 %v5925, %v5923
        %v6052 = vpack.c.b16 %v5928, %v5926
        %v6053 = vpack.c.b16 %v5929, %v5927
        %v6054 = vpack.c.b16 %v5932, %v5930
        %v6055 = vpack.c.b16 %v5933, %v5931
        %v6056 = vpack.c.b16 %v5936, %v5934
        %v6057 = vpack.c.b16 %v5937, %v5935
        %v6058 = vpack.c.b16 %v5940, %v5938
        %v6059 = vpack.c.b16 %v5941, %v5939
        %v6060 = vpack.c.b16 %v5944, %v5942
        %v6061 = vpack.c.b16 %v5945, %v5943
        %v6062 = vpack.c.b16 %v5948, %v5946
        %v6063 = vpack.c.b16 %v5949, %v5947
        %v6064 = vpack.c.b16 %v5952, %v5950
        %v6065 = vpack.c.b16 %v5953, %v5951
        %v6066 = vpack.c.b16 %v5956, %v5954
        %v6067 = vpack.c.b16 %v5957, %v5955
        %v6068 = vpack.c.b16 %v5960, %v5958
        %v6069 = vpack.c.b16 %v5961, %v5959
        %v6070 = vpack.c.b16 %v5964, %v5962
        %v6071 = vpack.c.b16 %v5965, %v5963
        %v6072 = vpack.c.b16 %v5968, %v5966
        %v6073 = vpack.c.b16 %v5969, %v5967
        %v6074 = vpack.c.b16 %v5972, %v5970
        %v6075 = vpack.c.b16 %v5973, %v5971
        %v6076 = vpack.c.b16 %v5976, %v5974
        %v6077 = vpack.c.b16 %v5977, %v5975
        %v6078 = vpack.c.b16 %v5980, %v5978
        %v6079 = vpack.c.b16 %v5981, %v5979
        %v6080 = vpack.c.b16 %v5984, %v5982
        %v6081 = vpack.c.b16 %v5985, %v5983
        %v6082 = vpack.c.b16 %v5988, %v5986
        %v6083 = vpack.c.b16 %v5989, %v5987
        %v6084 = vpack.c.b16 %v5992, %v5990
        %v6085 = vpack.c.b16 %v5993, %v5991
        %v6086 = vpack.c.b16 %v5996, %v5994
        %v6087 = vpack.c.b16 %v5997, %v5995
        %v6088 = vpack.c.b16 %v6000, %v5998
        %v6089 = vpack.c.b16 %v6001, %v5999
        %v6090 = vpack.c.b16 %v6004, %v6002
        %v6091 = vpack.c.b16 %v6005, %v6003
        %v6092 = vpack.c.b16 %v6008, %v6006
        %v6093 = vpack.c.b16 %v6009, %v6007
        %v6094 = vpack.c.b16 %v6012, %v6010
        %v6095 = vpack.c.b16 %v6013, %v6011
        %v6096 = vpack.c.b16 %v6016, %v6014
        %v6097 = vpack.c.b16 %v6017, %v6015
        %v6098 = vpack.c.b16 %v6020, %v6018
        %v6099 = vpack.c.b16 %v6021, %v6019
        %v6100 = vpack.c.b16 %v6024, %v6022
        %v6101 = vpack.c.b16 %v6025, %v6023
        %v6102 = vpack.c.b16 %v6028, %v6026
        %v6103 = vpack.c.b16 %v6029, %v6027
        %v6104 = vpack.c.b16 %v6032, %v6030
        %v6105 = vpack.c.b16 %v6033, %v6031
        %v6106 = vpack.c.b16 %v6036, %v6034
        %v6107 = vpack.c.b16 %v6037, %v6035
        %v6108 = vpack.c.b16 %v6040, %v6038
        %v6109 = vpack.c.b16 %v6041, %v6039
        %v6110 = vpack.c.b16 %v6044, %v6042
        %v6111 = vpack.c.b16 %v6045, %v6043
        %v6112 = vpack.c.b16 %v6048, %v6046
        %v6113 = vpack.c.b16 %v6049, %v6047
        %6178 = vmatprep.subr.bf16.mxu0 %v6051
        %6179 = vmatpush1.bf16.msra.mxu0 %v6050
        %6180 = vmatprep.subr.bf16.mxu0 %v6053
        %6181 = vmatpush1.bf16.msra.mxu0 %v6052
        %6182 = vmatprep.subr.bf16.mxu0 %v6055
        %6183 = vmatpush1.bf16.msra.mxu0 %v6054
        %6184 = vmatprep.subr.bf16.mxu0 %v6057
        %6185 = vmatpush1.bf16.msra.mxu0 %v6056
        %6186 = vmatprep.subr.bf16.mxu0 %v6059
        %6187 = vmatpush1.bf16.msra.mxu0 %v6058
        %6188 = vmatprep.subr.bf16.mxu0 %v6061
        %6189 = vmatpush1.bf16.msra.mxu0 %v6060
        %6190 = vmatprep.subr.bf16.mxu0 %v6063
        %6191 = vmatpush1.bf16.msra.mxu0 %v6062
        %6192 = vmatprep.subr.bf16.mxu0 %v6065
        %6193 = vmatpush1.bf16.msra.mxu0 %v6064
        %6194 = vmatprep.subr.bf16.mxu0 %v6067
        %6195 = vmatpush1.bf16.msra.mxu0 %v6066
        %6196 = vmatprep.subr.bf16.mxu0 %v6069
        %6197 = vmatpush1.bf16.msra.mxu0 %v6068
        %6198 = vmatprep.subr.bf16.mxu0 %v6071
        %6199 = vmatpush1.bf16.msra.mxu0 %v6070
        %6200 = vmatprep.subr.bf16.mxu0 %v6073
        %6201 = vmatpush1.bf16.msra.mxu0 %v6072
        %6202 = vmatprep.subr.bf16.mxu0 %v6075
        %6203 = vmatpush1.bf16.msra.mxu0 %v6074
        %6204 = vmatprep.subr.bf16.mxu0 %v6077
        %6205 = vmatpush1.bf16.msra.mxu0 %v6076
        %6206 = vmatprep.subr.bf16.mxu0 %v6079
        %6207 = vmatpush1.bf16.msra.mxu0 %v6078
        %6208 = vmatprep.subr.bf16.mxu0 %v6081
        %6209 = vmatpush1.bf16.msra.mxu0 %v6080
        %6210 = vmatprep.mubr.bf16.mxu0 %v5831
        %6211 = vmatmul.mubr.bf16.gmra.mrb[0].mxu0 %v5828
        %v6212 = vpop.f32.mrb[0].mxu0
        %v6213 = vadd.f32 0.0, %v6212
        %v6214 = vpop.f32.mrb[0].mxu0
        %v6215 = vadd.f32 0.0, %v6214
        %v6216 = vpop.f32.mrb[0].mxu0
        %v6217 = vadd.f32 0.0, %v6216
        %v6218 = vpop.f32.mrb[0].mxu0
        %v6219 = vadd.f32 0.0, %v6218
        %6220 = vmatprep.mubr.bf16.mxu0 %v5841
        %6221 = vmatmul.mubr.bf16.gmra.mrb[0].mxu0 %v5839
        %v6222 = vpop.f32.mrb[0].mxu0
        %v6223 = vadd.f32 0.0, %v6222
        %v6224 = vpop.f32.mrb[0].mxu0
        %v6225 = vadd.f32 0.0, %v6224
        %v6226 = vpop.f32.mrb[0].mxu0
        %v6227 = vadd.f32 0.0, %v6226
        %v6228 = vpop.f32.mrb[0].mxu0
        %v6229 = vadd.f32 0.0, %v6228
        %6230 = vmatprep.mubr.bf16.mxu0 %v5840
        %6231 = vmatmul.mubr.bf16.gmra.mrb[0].mxu0 %v5838
        %v6232 = vpop.f32.mrb[0].mxu0
        %v6233 = vadd.f32 0.0, %v6232
        %v6234 = vpop.f32.mrb[0].mxu0
        %v6235 = vadd.f32 0.0, %v6234
        %v6236 = vpop.f32.mrb[0].mxu0
        %v6237 = vpop.f32.mrb[0].mxu0
        %6238 = vdwg.mxu0
        %6239 = vmatprep.subr.bf16.mxu0 %v6083
        %6240 = vmatpush1.bf16.msra.mxu0 %v6082
        %6241 = vmatprep.subr.bf16.mxu0 %v6085
        %6242 = vmatpush1.bf16.msra.mxu0 %v6084
        %6243 = vmatprep.subr.bf16.mxu0 %v6087
        %6244 = vmatpush1.bf16.msra.mxu0 %v6086
        %6245 = vmatprep.subr.bf16.mxu0 %v6089
        %6246 = vmatpush1.bf16.msra.mxu0 %v6088
        %6247 = vmatprep.subr.bf16.mxu0 %v6091
        %6248 = vmatpush1.bf16.msra.mxu0 %v6090
        %6249 = vmatprep.subr.bf16.mxu0 %v6093
        %6250 = vmatpush1.bf16.msra.mxu0 %v6092
        %6251 = vmatprep.subr.bf16.mxu0 %v6095
        %6252 = vmatpush1.bf16.msra.mxu0 %v6094
        %6253 = vmatprep.subr.bf16.mxu0 %v6097
        %6254 = vmatpush1.bf16.msra.mxu0 %v6096
        %6255 = vmatprep.subr.bf16.mxu0 %v6099
        %6256 = vmatpush1.bf16.msra.mxu0 %v6098
        %6257 = vmatprep.subr.bf16.mxu0 %v6101
        %6258 = vmatpush1.bf16.msra.mxu0 %v6100
        %6259 = vmatprep.subr.bf16.mxu0 %v6103
        %6260 = vmatpush1.bf16.msra.mxu0 %v6102
        %6261 = vmatprep.subr.bf16.mxu0 %v6105
        %6262 = vmatpush1.bf16.msra.mxu0 %v6104
        %6263 = vmatprep.subr.bf16.mxu0 %v6107
        %6264 = vmatpush1.bf16.msra.mxu0 %v6106
        %6265 = vmatprep.subr.bf16.mxu0 %v6109
        %6266 = vmatpush1.bf16.msra.mxu0 %v6108
        %6267 = vmatprep.subr.bf16.mxu0 %v6111
        %6268 = vmatpush1.bf16.msra.mxu0 %v6110
        %6269 = vmatprep.subr.bf16.mxu0 %v6113
        %6270 = vmatpush1.bf16.msra.mxu0 %v6112
        %6271 = vmatprep.mubr.bf16.mxu0 %v5837
        %6272 = vmatmul.mubr.bf16.gmra.mrb[0].mxu0 %v5834
        %v6273 = vpop.f32.mrb[0].mxu0
        %v6274 = vadd.f32 %v6213, %v6273
        %v6275 = vpop.f32.mrb[0].mxu0
        %v6276 = vadd.f32 %v6215, %v6275
        %v6277 = vpop.f32.mrb[0].mxu0
        %v6278 = vadd.f32 %v6217, %v6277
        %v6279 = vpop.f32.mrb[0].mxu0
        %v6280 = vadd.f32 %v6219, %v6279
        %6281 = vmatprep.mubr.bf16.mxu0 %v5845
        %6282 = vmatmul.mubr.bf16.gmra.mrb[0].mxu0 %v5843
        %v6283 = vpop.f32.mrb[0].mxu0
        %v6284 = vadd.f32 %v6223, %v6283
        %v6285 = vpop.f32.mrb[0].mxu0
        %v6286 = vadd.f32 %v6225, %v6285
        %v6287 = vpop.f32.mrb[0].mxu0
        %v6288 = vadd.f32 %v6227, %v6287
        %v6289 = vpop.f32.mrb[0].mxu0
        %v6290 = vadd.f32 %v6229, %v6289
        %6291 = vmatprep.mubr.bf16.mxu0 %v5844
        %6292 = vmatmul.mubr.bf16.gmra.mrb[0].mxu0 %v5842
        %v6293 = vpop.f32.mrb[0].mxu0
        %v6294 = vadd.f32 %v6233, %v6293
        %v6295 = vpop.f32.mrb[0].mxu0
        %v6296 = vadd.f32 %v6235, %v6295
        %v6297 = vpop.f32.mrb[0].mxu0
        %v6298 = vpop.f32.mrb[0].mxu0
        %6299 = vdwg.mxu0
        %v6300 = vadd.f32 %v5727, %v6274
        %v6301 = vadd.f32 %v5729, %v6276
        %v6302 = vadd.f32 %v5731, %v6278
        %v6303 = vadd.f32 %v5733, %v6280
        %v6304 = vadd.f32 %v5737, %v6284
        %v6305 = vadd.f32 %v5739, %v6286
        %v6306 = vadd.f32 %v5741, %v6288
        %v6307 = vadd.f32 %v5743, %v6290
        %v6308 = vadd.f32 %v5747, %v6294
        %v6309 = vadd.f32 %v5749, %v6296
        %v6310 = vld [vmem:[#allocation16] sm:$0x3]
        %v6312 = vlaneseq
        %v6313 = vshrl.u32 %v6312, 7
        %v6314 = vsub.s32 0, %v6313
        %v6315 = vrot.slane %v6310, %v6314
        %v6316 = vlaneseq
        %v6317 = vshrl.u32 %v6316, 7
        %v6318 = vsub.s32 1, %v6317
        %v6319 = vrot.slane %v6310, %v6318
        %v6322 = vadd.f32 %v6300, %v6315
        %v6323 = vadd.f32 %v6301, %v6319
        %v6324 = vadd.f32 %v6302, %v6315
        %v6325 = vadd.f32 %v6303, %v6319
        %v6326 = vadd.f32 %v6304, %v6315
        %v6327 = vadd.f32 %v6305, %v6319
        %v6328 = vadd.f32 %v6306, %v6315
        %v6329 = vadd.f32 %v6307, %v6319
        %v6330 = vadd.f32 %v6308, %v6315
        %v6331 = vadd.f32 %v6309, %v6319
        %v6332 = vmax.f32 %v6322, 0.0
        %v6333 = vmax.f32 %v6323, 0.0
        %v6334 = vmax.f32 %v6324, 0.0
        %v6335 = vmax.f32 %v6325, 0.0
        %v6336 = vmax.f32 %v6326, 0.0
        %v6337 = vmax.f32 %v6327, 0.0
        %v6338 = vmax.f32 %v6328, 0.0
        %v6339 = vmax.f32 %v6329, 0.0
        %v6340 = vmax.f32 %v6330, 0.0
        %v6341 = vmax.f32 %v6331, 0.0
        %v6342 = vld [vmem:[%s22] sm:$0xf]
        %v6343 = vld [vmem:[%s22 + $0x4] sm:$0xf]
        %v6344 = vld [vmem:[%s22 + $0x8] sm:$0xf]
        %v6345 = vld [vmem:[%s22 + $0xc] sm:$0xf]
        %v6346 = vld [vmem:[%s22 + $0x10] sm:$0xf]
        %v6347 = vld [vmem:[%s22 + $0x14] sm:$0xf]
        %v6348 = vld [vmem:[%s22 + $0x18] sm:$0xf]
        %v6349 = vld [vmem:[%s22 + $0x1c] sm:$0xf]
        %v6350 = vld [vmem:[%s22 + $0x20] sm:$0x3]
        %v6351 = vpack.c.bf16 %v6334, %v6332
        %v6352 = vpack.c.bf16 %v6335, %v6333
        %v6353 = vpack.c.bf16 %v6338, %v6336
        %v6354 = vpack.c.bf16 %v6339, %v6337
        %v6355 = vpack.c.bf16 %v6340, %v6340
        %v6356 = vpack.c.bf16 %v6341, %v6341
        %v6366 = vunpack.c.l.b16 %v6342
        %v6367 = vunpack.c.l.b16 %v6343
        %v6368 = vunpack.c.l.b16 %v6344
        %v6369 = vunpack.c.l.b16 %v6345
        %v6370 = vunpack.c.l.b16 %v6346
        %v6371 = vunpack.c.l.b16 %v6347
        %v6372 = vunpack.c.l.b16 %v6348
        %v6373 = vunpack.c.l.b16 %v6349
        %v6374 = vunpack.c.l.b16 %v6350
        %v6375 = vpack.c.b16 %v6367, %v6366
        %v6376 = vpack.c.b16 %v6369, %v6368
        %v6377 = vpack.c.b16 %v6371, %v6370
        %v6378 = vpack.c.b16 %v6373, %v6372
        %v6379 = vpack.c.b16 %v6374, %v6374
        %v6381 = vsel %vm3640, %v6375, 0
        %v6384 = vsel %vm3640, %v6376, 0
        %v6387 = vsel %vm3640, %v6377, 0
        %v6390 = vsel %vm3640, %v6378, 0
        %v6393 = vsel %vm3640, %v6379, 0
        %v6396 = vsel %vm1001, %v6355, 0
        %v6399 = vsel %vm1001, %v6356, 0
        %6401 = vmatprep.subr.bf16.mxu0 %v6352
        %6402 = vmatpush1.bf16.msra.mxu0 %v6351
        %6403 = vmatprep.subr.bf16.mxu0 %v6354
        %6404 = vmatpush1.bf16.msra.mxu0 %v6353
        %6405 = vmatprep.subr.bf16.mxu0 %v6399
        %6406 = vmatpush1.bf16.msra.mxu0 %v6396
        %6407 = vmatprep.subr.bf16.mxu0 0
        %6408 = vmatpush1.bf16.msra.mxu0 0
        %6409 = vmatprep.subr.bf16.mxu0 0
        %6410 = vmatpush1.bf16.msra.mxu0 0
        %6411 = vmatprep.subr.bf16.mxu0 0
        %6412 = vmatpush1.bf16.msra.mxu0 0
        %6413 = vmatprep.subr.bf16.mxu0 0
        %6414 = vmatpush1.bf16.msra.mxu0 0
        %6415 = vmatprep.subr.bf16.mxu0 0
        %6416 = vmatpush1.bf16.msra.mxu0 0
        %6417 = vmatprep.subr.bf16.mxu0 0
        %6418 = vmatpush1.bf16.msra.mxu0 0
        %6419 = vmatprep.subr.bf16.mxu0 0
        %6420 = vmatpush1.bf16.msra.mxu0 0
        %6421 = vmatprep.subr.bf16.mxu0 0
        %6422 = vmatpush1.bf16.msra.mxu0 0
        %6423 = vmatprep.subr.bf16.mxu0 0
        %6424 = vmatpush1.bf16.msra.mxu0 0
        %6425 = vmatprep.subr.bf16.mxu0 0
        %6426 = vmatpush1.bf16.msra.mxu0 0
        %6427 = vmatprep.subr.bf16.mxu0 0
        %6428 = vmatpush1.bf16.msra.mxu0 0
        %6429 = vmatprep.subr.bf16.mxu0 0
        %6430 = vmatpush1.bf16.msra.mxu0 0
        %6431 = vmatprep.subr.bf16.mxu0 0
        %6432 = vmatpush1.bf16.msra.mxu0 0
        %6433 = vmatprep.mubr.bf16.mxu0 0
        %6434 = vmatmul.mubr.bf16.gmra.mrb[0].mxu0 %v6381
        %v6435 = vpop.f32.mrb[0].mxu0
        %v6436 = vadd.f32 0.0, %v6435
        %v6437 = vpop.f32.mrb[0].mxu0
        %v6438 = vadd.f32 0.0, %v6437
        %v6439 = vpop.f32.mrb[0].mxu0
        %v6440 = vadd.f32 0.0, %v6439
        %v6441 = vpop.f32.mrb[0].mxu0
        %v6442 = vadd.f32 0.0, %v6441
        %6443 = vmatprep.mubr.bf16.mxu0 0
        %6444 = vmatmul.mubr.bf16.gmra.mrb[0].mxu0 %v6384
        %v6445 = vpop.f32.mrb[0].mxu0
        %v6446 = vadd.f32 0.0, %v6445
        %v6447 = vpop.f32.mrb[0].mxu0
        %v6448 = vadd.f32 0.0, %v6447
        %v6449 = vpop.f32.mrb[0].mxu0
        %v6450 = vadd.f32 0.0, %v6449
        %v6451 = vpop.f32.mrb[0].mxu0
        %v6452 = vadd.f32 0.0, %v6451
        %6453 = vmatprep.mubr.bf16.mxu0 0
        %6454 = vmatmul.mubr.bf16.gmra.mrb[0].mxu0 %v6387
        %v6455 = vpop.f32.mrb[0].mxu0
        %v6456 = vadd.f32 0.0, %v6455
        %v6457 = vpop.f32.mrb[0].mxu0
        %v6458 = vadd.f32 0.0, %v6457
        %v6459 = vpop.f32.mrb[0].mxu0
        %v6460 = vadd.f32 0.0, %v6459
        %v6461 = vpop.f32.mrb[0].mxu0
        %v6462 = vadd.f32 0.0, %v6461
        %6463 = vmatprep.mubr.bf16.mxu0 0
        %6464 = vmatmul.mubr.bf16.gmra.mrb[0].mxu0 %v6390
        %v6465 = vpop.f32.mrb[0].mxu0
        %v6466 = vadd.f32 0.0, %v6465
        %v6467 = vpop.f32.mrb[0].mxu0
        %v6468 = vadd.f32 0.0, %v6467
        %v6469 = vpop.f32.mrb[0].mxu0
        %v6470 = vadd.f32 0.0, %v6469
        %v6471 = vpop.f32.mrb[0].mxu0
        %v6472 = vadd.f32 0.0, %v6471
        %6473 = vmatprep.mubr.bf16.mxu0 0
        %6474 = vmatmul.mubr.bf16.gmra.mrb[0].mxu0 %v6393
        %v6475 = vpop.f32.mrb[0].mxu0
        %v6476 = vadd.f32 0.0, %v6475
        %v6477 = vpop.f32.mrb[0].mxu0
        %v6478 = vadd.f32 0.0, %v6477
        %v6479 = vpop.f32.mrb[0].mxu0
        %v6480 = vpop.f32.mrb[0].mxu0
        %6481 = vdwg.mxu0
        %v6482 = vpack.c.bf16 %v6440, %v6436
        %v6483 = vpack.c.bf16 %v6442, %v6438
        %v6484 = vpack.c.bf16 %v2865, %v2864
        %v6485 = vpack.c.bf16 %v6450, %v6446
        %v6486 = vpack.c.bf16 %v6452, %v6448
        %v6487 = vpack.c.bf16 %v2867, %v2866
        %v6488 = vpack.c.bf16 %v6460, %v6456
        %v6489 = vpack.c.bf16 %v6462, %v6458
        %v6490 = vpack.c.bf16 %v2869, %v2868
        %v6491 = vpack.c.bf16 %v6470, %v6466
        %v6492 = vpack.c.bf16 %v6472, %v6468
        %v6493 = vpack.c.bf16 %v2871, %v2870
        %v6494 = vpack.c.bf16 %v6476, %v6476
        %v6495 = vpack.c.bf16 %v6478, %v6478
        %v6496 = vpack.c.bf16 %v2872, %v2872
        %v6512 = vrot.slane %v6482, 7
        %v6513 = vrot.slane %v6483, 7
        %v6514 = vrot.slane %v6484, 7
        %v6515 = vrot.slane %v6485, 7
        %v6516 = vsel %vm983, %v6512, %v6515
        %v6517 = vrot.slane %v6486, 7
        %v6518 = vsel %vm983, %v6513, %v6517
        %v6519 = vrot.slane %v6487, 7
        %v6520 = vsel %vm983, %v6514, %v6519
        %v6521 = vrot.slane %v6488, 7
        %v6522 = vsel %vm983, %v6515, %v6521
        %v6523 = vrot.slane %v6489, 7
        %v6524 = vsel %vm983, %v6517, %v6523
        %v6525 = vrot.slane %v6490, 7
        %v6526 = vsel %vm983, %v6519, %v6525
        %v6527 = vrot.slane %v6491, 7
        %v6528 = vsel %vm983, %v6521, %v6527
        %v6529 = vrot.slane %v6492, 7
        %v6530 = vsel %vm983, %v6523, %v6529
        %v6531 = vrot.slane %v6493, 7
        %v6532 = vsel %vm983, %v6525, %v6531
        %v6533 = vrot.slane %v6494, 7
        %v6534 = vsel %vm983, %v6527, %v6533
        %v6535 = vrot.slane %v6495, 7
        %v6536 = vsel %vm983, %v6529, %v6535
        %v6537 = vrot.slane %v6496, 7
        %v6538 = vsel %vm983, %v6531, %v6537
        %v6549 = vsel %vm1001, 0, %v6512
        %v6552 = vsel %vm1001, 0, %v6513
        %v6555 = vsel %vm1001, 0, %v6514
        %v6558 = vsel %vm2156, %v6534, 0
        %v6561 = vsel %vm2156, %v6536, 0
        %v6564 = vsel %vm2156, %v6538, 0
        %v6566 = vld [vmem:[%s12] sm:$0xf]
        %v6567 = vld [vmem:[%s12 + $0x4] sm:$0xf]
        %v6568 = vld [vmem:[%s12 + $0x8] sm:$0xf]
        %v6569 = vld [vmem:[%s12 + $0xc] sm:$0xf]
        %v6570 = vld [vmem:[%s12 + $0x10] sm:$0xf]
        %v6571 = vld [vmem:[%s12 + $0x14] sm:$0xf]
        %v6572 = vld [vmem:[%s12 + $0x18] sm:$0xf]
        %v6573 = vld [vmem:[%s12 + $0x1c] sm:$0xf]
        %v6574 = vld [vmem:[%s12 + $0x20] sm:$0xf]
        %v6575 = vld [vmem:[%s12 + $0x24] sm:$0xf]
        %v6576 = vld [vmem:[%s12 + $0x28] sm:$0xf]
        %v6577 = vld [vmem:[%s12 + $0x2c] sm:$0xf]
        %v6578 = vld [vmem:[%s12 + $0x30] sm:$0xf]
        %v6579 = vld [vmem:[%s12 + $0x34] sm:$0xf]
        %v6580 = vld [vmem:[%s12 + $0x38] sm:$0xf]
        %v6581 = vld [vmem:[%s12 + $0x3c] sm:$0xf]
        %v6582 = vld [vmem:[%s12 + $0x40] sm:$0xf]
        %v6583 = vld [vmem:[%s12 + $0x44] sm:$0xf]
        %v6584 = vld [vmem:[%s12 + $0x48] sm:$0xf]
        %v6585 = vld [vmem:[%s12 + $0x4c] sm:$0xf]
        %v6586 = vld [vmem:[%s12 + $0x50] sm:$0xf]
        %v6587 = vld [vmem:[%s12 + $0x54] sm:$0xf]
        %v6588 = vld [vmem:[%s12 + $0x58] sm:$0xf]
        %v6589 = vld [vmem:[%s12 + $0x5c] sm:$0xf]
        %v6590 = vld [vmem:[%s12 + $0x60] sm:$0xf]
        %v6591 = vld [vmem:[%s12 + $0x64] sm:$0xf]
        %v6592 = vld [vmem:[%s12 + $0x68] sm:$0xf]
        %v6593 = vld [vmem:[%s12 + $0x6c] sm:$0xf]
        %v6594 = vld [vmem:[%s12 + $0x70] sm:$0xf]
        %v6595 = vld [vmem:[%s12 + $0x74] sm:$0xf]
        %v6596 = vld [vmem:[%s12 + $0x78] sm:$0xf]
        %v6597 = vld [vmem:[%s12 + $0x7c] sm:$0xf]
        %v6598 = vld [vmem:[%s12 + $0x80] sm:$0xf]
        %v6599 = vld [vmem:[%s12 + $0x84] sm:$0xf]
        %v6600 = vld [vmem:[%s12 + $0x88] sm:$0xf]
        %v6601 = vld [vmem:[%s12 + $0x8c] sm:$0xf]
        %v6602 = vld [vmem:[%s12 + $0x90] sm:$0xf]
        %v6603 = vld [vmem:[%s12 + $0x94] sm:$0xf]
        %v6604 = vld [vmem:[%s12 + $0x98] sm:$0xf]
        %v6605 = vld [vmem:[%s12 + $0x9c] sm:$0xf]
        %v6606 = vld [vmem:[%s12 + $0xa0] sm:$0xf]
        %v6607 = vld [vmem:[%s12 + $0xa4] sm:$0xf]
        %v6608 = vld [vmem:[%s12 + $0xa8] sm:$0xf]
        %v6609 = vld [vmem:[%s12 + $0xac] sm:$0xf]
        %v6610 = vld [vmem:[%s12 + $0xb0] sm:$0xf]
        %v6611 = vld [vmem:[%s12 + $0xb4] sm:$0xf]
        %v6612 = vld [vmem:[%s12 + $0xb8] sm:$0xf]
        %v6613 = vld [vmem:[%s12 + $0xbc] sm:$0xf]
        %s6614 = scalar_lea.vmem %s12, 192
        %v6615 = vld [vmem:[%s6614] sm:$0xf]
        %v6616 = vld [vmem:[%s6614 + $0x4] sm:$0xf]
        %v6617 = vld [vmem:[%s6614 + $0x8] sm:$0xf]
        %v6618 = vld [vmem:[%s6614 + $0xc] sm:$0xf]
        %v6619 = vld [vmem:[%s6614 + $0x10] sm:$0xf]
        %v6620 = vld [vmem:[%s6614 + $0x14] sm:$0xf]
        %v6621 = vld [vmem:[%s6614 + $0x18] sm:$0xf]
        %v6622 = vld [vmem:[%s6614 + $0x1c] sm:$0xf]
        %v6623 = vld [vmem:[%s6614 + $0x20] sm:$0xf]
        %v6624 = vld [vmem:[%s6614 + $0x24] sm:$0xf]
        %v6625 = vld [vmem:[%s6614 + $0x28] sm:$0xf]
        %v6626 = vld [vmem:[%s6614 + $0x2c] sm:$0xf]
        %v6627 = vld [vmem:[%s6614 + $0x30] sm:$0xf]
        %v6628 = vld [vmem:[%s6614 + $0x34] sm:$0xf]
        %v6629 = vld [vmem:[%s6614 + $0x38] sm:$0xf]
        %v6630 = vld [vmem:[%s6614 + $0x3c] sm:$0xf]
        %v6631 = vld [vmem:[%s6614 + $0x40] sm:$0xf]
        %v6632 = vld [vmem:[%s6614 + $0x44] sm:$0xf]
        %v6633 = vld [vmem:[%s6614 + $0x48] sm:$0xf]
        %v6634 = vld [vmem:[%s6614 + $0x4c] sm:$0xf]
        %v6635 = vld [vmem:[%s6614 + $0x50] sm:$0xf]
        %v6636 = vld [vmem:[%s6614 + $0x54] sm:$0xf]
        %v6637 = vld [vmem:[%s6614 + $0x58] sm:$0xf]
        %v6638 = vld [vmem:[%s6614 + $0x5c] sm:$0xf]
        %v6639 = vld [vmem:[%s6614 + $0x60] sm:$0xf]
        %v6640 = vld [vmem:[%s6614 + $0x64] sm:$0xf]
        %v6641 = vld [vmem:[%s6614 + $0x68] sm:$0xf]
        %v6642 = vld [vmem:[%s6614 + $0x6c] sm:$0xf]
        %v6643 = vld [vmem:[%s6614 + $0x70] sm:$0xf]
        %v6644 = vld [vmem:[%s6614 + $0x74] sm:$0xf]
        %v6645 = vld [vmem:[%s6614 + $0x78] sm:$0xf]
        %v6646 = vld [vmem:[%s6614 + $0x7c] sm:$0xf]
        %v6647 = vld [vmem:[%s6614 + $0x80] sm:$0xf]
        %v6648 = vld [vmem:[%s6614 + $0x84] sm:$0xf]
        %v6649 = vld [vmem:[%s6614 + $0x88] sm:$0xf]
        %v6650 = vld [vmem:[%s6614 + $0x8c] sm:$0xf]
        %v6651 = vld [vmem:[%s6614 + $0x90] sm:$0xf]
        %v6652 = vld [vmem:[%s6614 + $0x94] sm:$0xf]
        %v6653 = vld [vmem:[%s6614 + $0x98] sm:$0xf]
        %v6654 = vld [vmem:[%s6614 + $0x9c] sm:$0xf]
        %v6655 = vld [vmem:[%s6614 + $0xa0] sm:$0xf]
        %v6656 = vld [vmem:[%s6614 + $0xa4] sm:$0xf]
        %v6657 = vld [vmem:[%s6614 + $0xa8] sm:$0xf]
        %v6658 = vld [vmem:[%s6614 + $0xac] sm:$0xf]
        %v6659 = vld [vmem:[%s6614 + $0xb0] sm:$0xf]
        %v6660 = vld [vmem:[%s6614 + $0xb4] sm:$0xf]
        %v6661 = vld [vmem:[%s6614 + $0xb8] sm:$0xf]
        %v6662 = vld [vmem:[%s6614 + $0xbc] sm:$0xf]
        %v6663 = vshrl.u32 %v6549, 16
        %v6665 = vshll.u32 %v6549, 16
        %v6667 = vrot.slane %v6665, 1
        %v6668 = vor.u32 %v6663, %v6667
        %v6670 = vshll.u32 %v6516, 16
        %v6672 = vrot.slane %v6670, 1
        %v6673 = vsel %vm1011, %v6668, %v6672
        %v6674 = vshrl.u32 %v6552, 16
        %v6676 = vshll.u32 %v6552, 16
        %v6678 = vrot.slane %v6676, 1
        %v6679 = vor.u32 %v6674, %v6678
        %v6681 = vshll.u32 %v6518, 16
        %v6683 = vrot.slane %v6681, 1
        %v6684 = vsel %vm1011, %v6679, %v6683
        %v6685 = vshrl.u32 %v6555, 16
        %v6687 = vshll.u32 %v6555, 16
        %v6689 = vrot.slane %v6687, 1
        %v6690 = vor.u32 %v6685, %v6689
        %v6692 = vshll.u32 %v6520, 16
        %v6694 = vrot.slane %v6692, 1
        %v6695 = vsel %vm1011, %v6690, %v6694
        %v6696 = vshrl.u32 %v6516, 16
        %v6698 = vor.u32 %v6696, %v6672
        %v6700 = vshll.u32 %v6522, 16
        %v6702 = vrot.slane %v6700, 1
        %v6703 = vsel %vm1011, %v6698, %v6702
        %v6704 = vshrl.u32 %v6518, 16
        %v6706 = vor.u32 %v6704, %v6683
        %v6708 = vshll.u32 %v6524, 16
        %v6710 = vrot.slane %v6708, 1
        %v6711 = vsel %vm1011, %v6706, %v6710
        %v6712 = vshrl.u32 %v6520, 16
        %v6714 = vor.u32 %v6712, %v6694
        %v6716 = vshll.u32 %v6526, 16
        %v6718 = vrot.slane %v6716, 1
        %v6719 = vsel %vm1011, %v6714, %v6718
        %v6720 = vshrl.u32 %v6522, 16
        %v6722 = vor.u32 %v6720, %v6702
        %v6724 = vshll.u32 %v6528, 16
        %v6726 = vrot.slane %v6724, 1
        %v6727 = vsel %vm1011, %v6722, %v6726
        %v6728 = vshrl.u32 %v6524, 16
        %v6730 = vor.u32 %v6728, %v6710
        %v6732 = vshll.u32 %v6530, 16
        %v6734 = vrot.slane %v6732, 1
        %v6735 = vsel %vm1011, %v6730, %v6734
        %v6736 = vshrl.u32 %v6526, 16
        %v6738 = vor.u32 %v6736, %v6718
        %v6740 = vshll.u32 %v6532, 16
        %v6742 = vrot.slane %v6740, 1
        %v6743 = vsel %vm1011, %v6738, %v6742
        %v6744 = vshrl.u32 %v6528, 16
        %v6746 = vor.u32 %v6744, %v6726
        %v6747 = vshll.u32 %v6558, 16
        %v6749 = vrot.slane %v6747, 1
        %v6750 = vsel %vm1011, %v6746, %v6749
        %v6751 = vshrl.u32 %v6530, 16
        %v6753 = vor.u32 %v6751, %v6734
        %v6754 = vshll.u32 %v6561, 16
        %v6756 = vrot.slane %v6754, 1
        %v6757 = vsel %vm1011, %v6753, %v6756
        %v6758 = vshrl.u32 %v6532, 16
        %v6760 = vor.u32 %v6758, %v6742
        %v6761 = vshll.u32 %v6564, 16
        %v6763 = vrot.slane %v6761, 1
        %v6764 = vsel %vm1011, %v6760, %v6763
        %v6765 = vshrl.u32 %v6558, 16
        %v6767 = vor.u32 %v6765, %v6749
        %v6768 = vshrl.u32 %v6561, 16
        %v6770 = vor.u32 %v6768, %v6756
        %v6771 = vshrl.u32 %v6564, 16
        %v6773 = vor.u32 %v6771, %v6763
        %v6837 = vunpack.c.l.b16 %v6615
        %v6838 = vunpack.c.l.b16 %v6616
        %v6839 = vunpack.c.l.b16 %v6617
        %v6840 = vunpack.c.l.b16 %v6618
        %v6841 = vunpack.c.l.b16 %v6619
        %v6842 = vunpack.c.l.b16 %v6620
        %v6843 = vunpack.c.l.b16 %v6621
        %v6844 = vunpack.c.l.b16 %v6622
        %v6845 = vunpack.c.l.b16 %v6623
        %v6846 = vunpack.c.l.b16 %v6624
        %v6847 = vunpack.c.l.b16 %v6625
        %v6848 = vunpack.c.l.b16 %v6626
        %v6849 = vunpack.c.l.b16 %v6627
        %v6850 = vunpack.c.l.b16 %v6628
        %v6851 = vunpack.c.l.b16 %v6629
        %v6852 = vunpack.c.l.b16 %v6630
        %v6853 = vunpack.c.l.b16 %v6631
        %v6854 = vunpack.c.l.b16 %v6632
        %v6855 = vunpack.c.l.b16 %v6633
        %v6856 = vunpack.c.l.b16 %v6634
        %v6857 = vunpack.c.l.b16 %v6635
        %v6858 = vunpack.c.l.b16 %v6636
        %v6859 = vunpack.c.l.b16 %v6637
        %v6860 = vunpack.c.l.b16 %v6638
        %v6861 = vunpack.c.l.b16 %v6639
        %v6862 = vunpack.c.l.b16 %v6640
        %v6863 = vunpack.c.l.b16 %v6641
        %v6864 = vunpack.c.l.b16 %v6642
        %v6865 = vunpack.c.l.b16 %v6643
        %v6866 = vunpack.c.l.b16 %v6644
        %v6867 = vunpack.c.l.b16 %v6645
        %v6868 = vunpack.c.l.b16 %v6646
        %v6869 = vunpack.c.l.b16 %v6647
        %v6870 = vunpack.c.l.b16 %v6648
        %v6871 = vunpack.c.l.b16 %v6649
        %v6872 = vunpack.c.l.b16 %v6650
        %v6873 = vunpack.c.l.b16 %v6651
        %v6874 = vunpack.c.l.b16 %v6652
        %v6875 = vunpack.c.l.b16 %v6653
        %v6876 = vunpack.c.l.b16 %v6654
        %v6877 = vunpack.c.l.b16 %v6655
        %v6878 = vunpack.c.l.b16 %v6656
        %v6879 = vunpack.c.l.b16 %v6657
        %v6880 = vunpack.c.l.b16 %v6658
        %v6881 = vunpack.c.l.b16 %v6659
        %v6882 = vunpack.c.l.b16 %v6660
        %v6883 = vunpack.c.l.b16 %v6661
        %v6884 = vunpack.c.l.b16 %v6662
        %v6885 = vpack.c.b16 %v6838, %v6837
        %v6886 = vpack.c.b16 %v6840, %v6839
        %v6887 = vpack.c.b16 %v6842, %v6841
        %v6888 = vpack.c.b16 %v6844, %v6843
        %v6889 = vpack.c.b16 %v6846, %v6845
        %v6890 = vpack.c.b16 %v6848, %v6847
        %v6891 = vpack.c.b16 %v6850, %v6849
        %v6892 = vpack.c.b16 %v6852, %v6851
        %v6893 = vpack.c.b16 %v6854, %v6853
        %v6894 = vpack.c.b16 %v6856, %v6855
        %v6895 = vpack.c.b16 %v6858, %v6857
        %v6896 = vpack.c.b16 %v6860, %v6859
        %v6897 = vpack.c.b16 %v6862, %v6861
        %v6898 = vpack.c.b16 %v6864, %v6863
        %v6899 = vpack.c.b16 %v6866, %v6865
        %v6900 = vpack.c.b16 %v6868, %v6867
        %v6901 = vpack.c.b16 %v6870, %v6869
        %v6902 = vpack.c.b16 %v6872, %v6871
        %v6903 = vpack.c.b16 %v6874, %v6873
        %v6904 = vpack.c.b16 %v6876, %v6875
        %v6905 = vpack.c.b16 %v6878, %v6877
        %v6906 = vpack.c.b16 %v6880, %v6879
        %v6907 = vpack.c.b16 %v6882, %v6881
        %v6908 = vpack.c.b16 %v6884, %v6883
        %6933 = vmatprep.subr.bf16.mxu0 0
        %6934 = vmatpush1.bf16.msra.mxu0 %v6885
        %6935 = vmatprep.subr.bf16.mxu0 0
        %6936 = vmatpush1.bf16.msra.mxu0 %v6886
        %6937 = vmatprep.subr.bf16.mxu0 0
        %6938 = vmatpush1.bf16.msra.mxu0 %v6887
        %6939 = vmatprep.subr.bf16.mxu0 0
        %6940 = vmatpush1.bf16.msra.mxu0 %v6888
        %6941 = vmatprep.subr.bf16.mxu0 0
        %6942 = vmatpush1.bf16.msra.mxu0 %v6889
        %6943 = vmatprep.subr.bf16.mxu0 0
        %6944 = vmatpush1.bf16.msra.mxu0 %v6890
        %6945 = vmatprep.subr.bf16.mxu0 0
        %6946 = vmatpush1.bf16.msra.mxu0 %v6891
        %6947 = vmatprep.subr.bf16.mxu0 0
        %6948 = vmatpush1.bf16.msra.mxu0 %v6892
        %6949 = vmatprep.subr.bf16.mxu0 0
        %6950 = vmatpush1.bf16.msra.mxu0 %v6893
        %6951 = vmatprep.subr.bf16.mxu0 0
        %6952 = vmatpush1.bf16.msra.mxu0 %v6894
        %6953 = vmatprep.subr.bf16.mxu0 0
        %6954 = vmatpush1.bf16.msra.mxu0 %v6895
        %6955 = vmatprep.subr.bf16.mxu0 0
        %6956 = vmatpush1.bf16.msra.mxu0 %v6896
        %6957 = vmatprep.subr.bf16.mxu0 0
        %6958 = vmatpush1.bf16.msra.mxu0 %v6897
        %6959 = vmatprep.subr.bf16.mxu0 0
        %6960 = vmatpush1.bf16.msra.mxu0 %v6898
        %6961 = vmatprep.subr.bf16.mxu0 0
        %6962 = vmatpush1.bf16.msra.mxu0 %v6899
        %6963 = vmatprep.subr.bf16.mxu0 0
        %6964 = vmatpush1.bf16.msra.mxu0 %v6900
        %6965 = vmatprep.mubr.bf16.mxu0 %v6684
        %6966 = vmatmul.mubr.bf16.gmra.mrb[0].mxu0 %v6673
        %v6967 = vpop.f32.mrb[0].mxu0
        %v6968 = vadd.f32 0.0, %v6967
        %v6969 = vpop.f32.mrb[0].mxu0
        %v6970 = vpop.f32.mrb[0].mxu0
        %v6971 = vadd.f32 0.0, %v6970
        %v6972 = vpop.f32.mrb[0].mxu0
        %6973 = vmatprep.mubr.bf16.mxu0 %v6711
        %6974 = vmatmul.mubr.bf16.gmra.mrb[0].mxu0 %v6703
        %v6975 = vpop.f32.mrb[0].mxu0
        %v6976 = vadd.f32 0.0, %v6975
        %v6977 = vpop.f32.mrb[0].mxu0
        %v6978 = vpop.f32.mrb[0].mxu0
        %v6979 = vadd.f32 0.0, %v6978
        %v6980 = vpop.f32.mrb[0].mxu0
        %6981 = vmatprep.mubr.bf16.mxu0 %v6735
        %6982 = vmatmul.mubr.bf16.gmra.mrb[0].mxu0 %v6727
        %v6983 = vpop.f32.mrb[0].mxu0
        %v6984 = vadd.f32 0.0, %v6983
        %v6985 = vpop.f32.mrb[0].mxu0
        %v6986 = vpop.f32.mrb[0].mxu0
        %v6987 = vadd.f32 0.0, %v6986
        %v6988 = vpop.f32.mrb[0].mxu0
        %6989 = vmatprep.mubr.bf16.mxu0 %v6757
        %6990 = vmatmul.mubr.bf16.gmra.mrb[0].mxu0 %v6750
        %v6991 = vpop.f32.mrb[0].mxu0
        %v6992 = vadd.f32 0.0, %v6991
        %v6993 = vpop.f32.mrb[0].mxu0
        %v6994 = vpop.f32.mrb[0].mxu0
        %v6995 = vadd.f32 0.0, %v6994
        %v6996 = vpop.f32.mrb[0].mxu0
        %6997 = vmatprep.mubr.bf16.mxu0 %v6770
        %6998 = vmatmul.mubr.bf16.gmra.mrb[0].mxu0 %v6767
        %v6999 = vpop.f32.mrb[0].mxu0
        %v7000 = vadd.f32 0.0, %v6999
        %v7001 = vpop.f32.mrb[0].mxu0
        %v7002 = vpop.f32.mrb[0].mxu0
        %v7003 = vpop.f32.mrb[0].mxu0
        %7004 = vdwg.mxu0
        %7005 = vmatprep.subr.bf16.mxu0 0
        %7006 = vmatpush1.bf16.msra.mxu0 %v6901
        %7007 = vmatprep.subr.bf16.mxu0 0
        %7008 = vmatpush1.bf16.msra.mxu0 %v6902
        %7009 = vmatprep.subr.bf16.mxu0 0
        %7010 = vmatpush1.bf16.msra.mxu0 %v6903
        %7011 = vmatprep.subr.bf16.mxu0 0
        %7012 = vmatpush1.bf16.msra.mxu0 %v6904
        %7013 = vmatprep.subr.bf16.mxu0 0
        %7014 = vmatpush1.bf16.msra.mxu0 %v6905
        %7015 = vmatprep.subr.bf16.mxu0 0
        %7016 = vmatpush1.bf16.msra.mxu0 %v6906
        %7017 = vmatprep.subr.bf16.mxu0 0
        %7018 = vmatpush1.bf16.msra.mxu0 %v6907
        %7019 = vmatprep.subr.bf16.mxu0 0
        %7020 = vmatpush1.bf16.msra.mxu0 %v6908
        %7021 = vmatprep.subr.bf16.mxu0 0
        %7022 = vmatpush1.bf16.msra.mxu0 0
        %7023 = vmatprep.subr.bf16.mxu0 0
        %7024 = vmatpush1.bf16.msra.mxu0 0
        %7025 = vmatprep.subr.bf16.mxu0 0
        %7026 = vmatpush1.bf16.msra.mxu0 0
        %7027 = vmatprep.subr.bf16.mxu0 0
        %7028 = vmatpush1.bf16.msra.mxu0 0
        %7029 = vmatprep.subr.bf16.mxu0 0
        %7030 = vmatpush1.bf16.msra.mxu0 0
        %7031 = vmatprep.subr.bf16.mxu0 0
        %7032 = vmatpush1.bf16.msra.mxu0 0
        %7033 = vmatprep.subr.bf16.mxu0 0
        %7034 = vmatpush1.bf16.msra.mxu0 0
        %7035 = vmatprep.subr.bf16.mxu0 0
        %7036 = vmatpush1.bf16.msra.mxu0 0
        %7037 = vmatprep.mubr.bf16.mxu0 0
        %7038 = vmatmul.mubr.bf16.gmra.mrb[0].mxu0 %v6695
        %v7039 = vpop.f32.mrb[0].mxu0
        %v7040 = vadd.f32 %v6968, %v7039
        %v7041 = vpop.f32.mrb[0].mxu0
        %v7042 = vpop.f32.mrb[0].mxu0
        %v7043 = vadd.f32 %v6971, %v7042
        %v7044 = vpop.f32.mrb[0].mxu0
        %7045 = vmatprep.mubr.bf16.mxu0 0
        %7046 = vmatmul.mubr.bf16.gmra.mrb[0].mxu0 %v6719
        %v7047 = vpop.f32.mrb[0].mxu0
        %v7048 = vadd.f32 %v6976, %v7047
        %v7049 = vpop.f32.mrb[0].mxu0
        %v7050 = vpop.f32.mrb[0].mxu0
        %v7051 = vadd.f32 %v6979, %v7050
        %v7052 = vpop.f32.mrb[0].mxu0
        %7053 = vmatprep.mubr.bf16.mxu0 0
        %7054 = vmatmul.mubr.bf16.gmra.mrb[0].mxu0 %v6743
        %v7055 = vpop.f32.mrb[0].mxu0
        %v7056 = vadd.f32 %v6984, %v7055
        %v7057 = vpop.f32.mrb[0].mxu0
        %v7058 = vpop.f32.mrb[0].mxu0
        %v7059 = vadd.f32 %v6987, %v7058
        %v7060 = vpop.f32.mrb[0].mxu0
        %7061 = vmatprep.mubr.bf16.mxu0 0
        %7062 = vmatmul.mubr.bf16.gmra.mrb[0].mxu0 %v6764
        %v7063 = vpop.f32.mrb[0].mxu0
        %v7064 = vadd.f32 %v6992, %v7063
        %v7065 = vpop.f32.mrb[0].mxu0
        %v7066 = vpop.f32.mrb[0].mxu0
        %v7067 = vadd.f32 %v6995, %v7066
        %v7068 = vpop.f32.mrb[0].mxu0
        %7069 = vmatprep.mubr.bf16.mxu0 0
        %7070 = vmatmul.mubr.bf16.gmra.mrb[0].mxu0 %v6773
        %v7071 = vpop.f32.mrb[0].mxu0
        %v7072 = vadd.f32 %v7000, %v7071
        %v7073 = vpop.f32.mrb[0].mxu0
        %v7074 = vpop.f32.mrb[0].mxu0
        %v7075 = vpop.f32.mrb[0].mxu0
        %7076 = vdwg.mxu0
        %v7125 = vunpack.c.l.b16 %v6566
        %v7126 = vunpack.c.l.b16 %v6567
        %v7127 = vunpack.c.l.b16 %v6568
        %v7128 = vunpack.c.l.b16 %v6569
        %v7129 = vunpack.c.l.b16 %v6570
        %v7130 = vunpack.c.l.b16 %v6571
        %v7131 = vunpack.c.l.b16 %v6572
        %v7132 = vunpack.c.l.b16 %v6573
        %v7133 = vunpack.c.l.b16 %v6574
        %v7134 = vunpack.c.l.b16 %v6575
        %v7135 = vunpack.c.l.b16 %v6576
        %v7136 = vunpack.c.l.b16 %v6577
        %v7137 = vunpack.c.l.b16 %v6578
        %v7138 = vunpack.c.l.b16 %v6579
        %v7139 = vunpack.c.l.b16 %v6580
        %v7140 = vunpack.c.l.b16 %v6581
        %v7141 = vunpack.c.l.b16 %v6582
        %v7142 = vunpack.c.l.b16 %v6583
        %v7143 = vunpack.c.l.b16 %v6584
        %v7144 = vunpack.c.l.b16 %v6585
        %v7145 = vunpack.c.l.b16 %v6586
        %v7146 = vunpack.c.l.b16 %v6587
        %v7147 = vunpack.c.l.b16 %v6588
        %v7148 = vunpack.c.l.b16 %v6589
        %v7149 = vunpack.c.l.b16 %v6590
        %v7150 = vunpack.c.l.b16 %v6591
        %v7151 = vunpack.c.l.b16 %v6592
        %v7152 = vunpack.c.l.b16 %v6593
        %v7153 = vunpack.c.l.b16 %v6594
        %v7154 = vunpack.c.l.b16 %v6595
        %v7155 = vunpack.c.l.b16 %v6596
        %v7156 = vunpack.c.l.b16 %v6597
        %v7157 = vunpack.c.l.b16 %v6598
        %v7158 = vunpack.c.l.b16 %v6599
        %v7159 = vunpack.c.l.b16 %v6600
        %v7160 = vunpack.c.l.b16 %v6601
        %v7161 = vunpack.c.l.b16 %v6602
        %v7162 = vunpack.c.l.b16 %v6603
        %v7163 = vunpack.c.l.b16 %v6604
        %v7164 = vunpack.c.l.b16 %v6605
        %v7165 = vunpack.c.l.b16 %v6606
        %v7166 = vunpack.c.l.b16 %v6607
        %v7167 = vunpack.c.l.b16 %v6608
        %v7168 = vunpack.c.l.b16 %v6609
        %v7169 = vunpack.c.l.b16 %v6610
        %v7170 = vunpack.c.l.b16 %v6611
        %v7171 = vunpack.c.l.b16 %v6612
        %v7172 = vunpack.c.l.b16 %v6613
        %v7173 = vpack.c.b16 %v7126, %v7125
        %v7174 = vpack.c.b16 %v7128, %v7127
        %v7175 = vpack.c.b16 %v7130, %v7129
        %v7176 = vpack.c.b16 %v7132, %v7131
        %v7177 = vpack.c.b16 %v7134, %v7133
        %v7178 = vpack.c.b16 %v7136, %v7135
        %v7179 = vpack.c.b16 %v7138, %v7137
        %v7180 = vpack.c.b16 %v7140, %v7139
        %v7181 = vpack.c.b16 %v7142, %v7141
        %v7182 = vpack.c.b16 %v7144, %v7143
        %v7183 = vpack.c.b16 %v7146, %v7145
        %v7184 = vpack.c.b16 %v7148, %v7147
        %v7185 = vpack.c.b16 %v7150, %v7149
        %v7186 = vpack.c.b16 %v7152, %v7151
        %v7187 = vpack.c.b16 %v7154, %v7153
        %v7188 = vpack.c.b16 %v7156, %v7155
        %v7189 = vpack.c.b16 %v7158, %v7157
        %v7190 = vpack.c.b16 %v7160, %v7159
        %v7191 = vpack.c.b16 %v7162, %v7161
        %v7192 = vpack.c.b16 %v7164, %v7163
        %v7193 = vpack.c.b16 %v7166, %v7165
        %v7194 = vpack.c.b16 %v7168, %v7167
        %v7195 = vpack.c.b16 %v7170, %v7169
        %v7196 = vpack.c.b16 %v7172, %v7171
        %7221 = vmatprep.subr.bf16.mxu0 0
        %7222 = vmatpush1.bf16.msra.mxu0 %v7173
        %7223 = vmatprep.subr.bf16.mxu0 0
        %7224 = vmatpush1.bf16.msra.mxu0 %v7174
        %7225 = vmatprep.subr.bf16.mxu0 0
        %7226 = vmatpush1.bf16.msra.mxu0 %v7175
        %7227 = vmatprep.subr.bf16.mxu0 0
        %7228 = vmatpush1.bf16.msra.mxu0 %v7176
        %7229 = vmatprep.subr.bf16.mxu0 0
        %7230 = vmatpush1.bf16.msra.mxu0 %v7177
        %7231 = vmatprep.subr.bf16.mxu0 0
        %7232 = vmatpush1.bf16.msra.mxu0 %v7178
        %7233 = vmatprep.subr.bf16.mxu0 0
        %7234 = vmatpush1.bf16.msra.mxu0 %v7179
        %7235 = vmatprep.subr.bf16.mxu0 0
        %7236 = vmatpush1.bf16.msra.mxu0 %v7180
        %7237 = vmatprep.subr.bf16.mxu0 0
        %7238 = vmatpush1.bf16.msra.mxu0 %v7181
        %7239 = vmatprep.subr.bf16.mxu0 0
        %7240 = vmatpush1.bf16.msra.mxu0 %v7182
        %7241 = vmatprep.subr.bf16.mxu0 0
        %7242 = vmatpush1.bf16.msra.mxu0 %v7183
        %7243 = vmatprep.subr.bf16.mxu0 0
        %7244 = vmatpush1.bf16.msra.mxu0 %v7184
        %7245 = vmatprep.subr.bf16.mxu0 0
        %7246 = vmatpush1.bf16.msra.mxu0 %v7185
        %7247 = vmatprep.subr.bf16.mxu0 0
        %7248 = vmatpush1.bf16.msra.mxu0 %v7186
        %7249 = vmatprep.subr.bf16.mxu0 0
        %7250 = vmatpush1.bf16.msra.mxu0 %v7187
        %7251 = vmatprep.subr.bf16.mxu0 0
        %7252 = vmatpush1.bf16.msra.mxu0 %v7188
        %7253 = vmatprep.mubr.bf16.mxu0 %v6552
        %7254 = vmatmul.mubr.bf16.gmra.mrb[0].mxu0 %v6549
        %v7255 = vpop.f32.mrb[0].mxu0
        %v7256 = vadd.f32 %v7040, %v7255
        %v7257 = vpop.f32.mrb[0].mxu0
        %v7258 = vpop.f32.mrb[0].mxu0
        %v7259 = vadd.f32 %v7043, %v7258
        %v7260 = vpop.f32.mrb[0].mxu0
        %7261 = vmatprep.mubr.bf16.mxu0 %v6518
        %7262 = vmatmul.mubr.bf16.gmra.mrb[0].mxu0 %v6516
        %v7263 = vpop.f32.mrb[0].mxu0
        %v7264 = vadd.f32 %v7048, %v7263
        %v7265 = vpop.f32.mrb[0].mxu0
        %v7266 = vpop.f32.mrb[0].mxu0
        %v7267 = vadd.f32 %v7051, %v7266
        %v7268 = vpop.f32.mrb[0].mxu0
        %7269 = vmatprep.mubr.bf16.mxu0 %v6524
        %7270 = vmatmul.mubr.bf16.gmra.mrb[0].mxu0 %v6522
        %v7271 = vpop.f32.mrb[0].mxu0
        %v7272 = vadd.f32 %v7056, %v7271
        %v7273 = vpop.f32.mrb[0].mxu0
        %v7274 = vpop.f32.mrb[0].mxu0
        %v7275 = vadd.f32 %v7059, %v7274
        %v7276 = vpop.f32.mrb[0].mxu0
        %7277 = vmatprep.mubr.bf16.mxu0 %v6530
        %7278 = vmatmul.mubr.bf16.gmra.mrb[0].mxu0 %v6528
        %v7279 = vpop.f32.mrb[0].mxu0
        %v7280 = vadd.f32 %v7064, %v7279
        %v7281 = vpop.f32.mrb[0].mxu0
        %v7282 = vpop.f32.mrb[0].mxu0
        %v7283 = vadd.f32 %v7067, %v7282
        %v7284 = vpop.f32.mrb[0].mxu0
        %7285 = vmatprep.mubr.bf16.mxu0 %v6561
        %7286 = vmatmul.mubr.bf16.gmra.mrb[0].mxu0 %v6558
        %v7287 = vpop.f32.mrb[0].mxu0
        %v7288 = vadd.f32 %v7072, %v7287
        %v7289 = vpop.f32.mrb[0].mxu0
        %v7290 = vpop.f32.mrb[0].mxu0
        %v7291 = vpop.f32.mrb[0].mxu0
        %7292 = vdwg.mxu0
        %7293 = vmatprep.subr.bf16.mxu0 0
        %7294 = vmatpush1.bf16.msra.mxu0 %v7189
        %7295 = vmatprep.subr.bf16.mxu0 0
        %7296 = vmatpush1.bf16.msra.mxu0 %v7190
        %7297 = vmatprep.subr.bf16.mxu0 0
        %7298 = vmatpush1.bf16.msra.mxu0 %v7191
        %7299 = vmatprep.subr.bf16.mxu0 0
        %7300 = vmatpush1.bf16.msra.mxu0 %v7192
        %7301 = vmatprep.subr.bf16.mxu0 0
        %7302 = vmatpush1.bf16.msra.mxu0 %v7193
        %7303 = vmatprep.subr.bf16.mxu0 0
        %7304 = vmatpush1.bf16.msra.mxu0 %v7194
        %7305 = vmatprep.subr.bf16.mxu0 0
        %7306 = vmatpush1.bf16.msra.mxu0 %v7195
        %7307 = vmatprep.subr.bf16.mxu0 0
        %7308 = vmatpush1.bf16.msra.mxu0 %v7196
        %7309 = vmatprep.subr.bf16.mxu0 0
        %7310 = vmatpush1.bf16.msra.mxu0 0
        %7311 = vmatprep.subr.bf16.mxu0 0
        %7312 = vmatpush1.bf16.msra.mxu0 0
        %7313 = vmatprep.subr.bf16.mxu0 0
        %7314 = vmatpush1.bf16.msra.mxu0 0
        %7315 = vmatprep.subr.bf16.mxu0 0
        %7316 = vmatpush1.bf16.msra.mxu0 0
        %7317 = vmatprep.subr.bf16.mxu0 0
        %7318 = vmatpush1.bf16.msra.mxu0 0
        %7319 = vmatprep.subr.bf16.mxu0 0
        %7320 = vmatpush1.bf16.msra.mxu0 0
        %7321 = vmatprep.subr.bf16.mxu0 0
        %7322 = vmatpush1.bf16.msra.mxu0 0
        %7323 = vmatprep.subr.bf16.mxu0 0
        %7324 = vmatpush1.bf16.msra.mxu0 0
        %7325 = vmatprep.mubr.bf16.mxu0 0
        %7326 = vmatmul.mubr.bf16.gmra.mrb[0].mxu0 %v6555
        %v7327 = vpop.f32.mrb[0].mxu0
        %v7328 = vadd.f32 %v7256, %v7327
        %v7329 = vpop.f32.mrb[0].mxu0
        %v7330 = vpop.f32.mrb[0].mxu0
        %v7331 = vadd.f32 %v7259, %v7330
        %v7332 = vpop.f32.mrb[0].mxu0
        %7333 = vmatprep.mubr.bf16.mxu0 0
        %7334 = vmatmul.mubr.bf16.gmra.mrb[0].mxu0 %v6520
        %v7335 = vpop.f32.mrb[0].mxu0
        %v7336 = vadd.f32 %v7264, %v7335
        %v7337 = vpop.f32.mrb[0].mxu0
        %v7338 = vpop.f32.mrb[0].mxu0
        %v7339 = vadd.f32 %v7267, %v7338
        %v7340 = vpop.f32.mrb[0].mxu0
        %7341 = vmatprep.mubr.bf16.mxu0 0
        %7342 = vmatmul.mubr.bf16.gmra.mrb[0].mxu0 %v6526
        %v7343 = vpop.f32.mrb[0].mxu0
        %v7344 = vadd.f32 %v7272, %v7343
        %v7345 = vpop.f32.mrb[0].mxu0
        %v7346 = vpop.f32.mrb[0].mxu0
        %v7347 = vadd.f32 %v7275, %v7346
        %v7348 = vpop.f32.mrb[0].mxu0
        %7349 = vmatprep.mubr.bf16.mxu0 0
        %7350 = vmatmul.mubr.bf16.gmra.mrb[0].mxu0 %v6532
        %v7351 = vpop.f32.mrb[0].mxu0
        %v7352 = vadd.f32 %v7280, %v7351
        %v7353 = vpop.f32.mrb[0].mxu0
        %v7354 = vpop.f32.mrb[0].mxu0
        %v7355 = vadd.f32 %v7283, %v7354
        %v7356 = vpop.f32.mrb[0].mxu0
        %7357 = vmatprep.mubr.bf16.mxu0 0
        %7358 = vmatmul.mubr.bf16.gmra.mrb[0].mxu0 %v6564
        %v7359 = vpop.f32.mrb[0].mxu0
        %v7360 = vadd.f32 %v7288, %v7359
        %v7361 = vpop.f32.mrb[0].mxu0
        %v7362 = vpop.f32.mrb[0].mxu0
        %v7363 = vpop.f32.mrb[0].mxu0
        %7364 = vdwg.mxu0
        %s7365 = scalar_lea.vmem %s12, 384
        %v7366 = vld [vmem:[%s7365] sm:$0xf]
        %v7367 = vld [vmem:[%s7365 + $0x4] sm:$0xf]
        %v7368 = vld [vmem:[%s7365 + $0x8] sm:$0xf]
        %v7369 = vld [vmem:[%s7365 + $0xc] sm:$0xf]
        %v7370 = vld [vmem:[%s7365 + $0x10] sm:$0xf]
        %v7371 = vld [vmem:[%s7365 + $0x14] sm:$0xf]
        %v7372 = vld [vmem:[%s7365 + $0x18] sm:$0xf]
        %v7373 = vld [vmem:[%s7365 + $0x1c] sm:$0xf]
        %v7374 = vld [vmem:[%s7365 + $0x20] sm:$0xf]
        %v7375 = vld [vmem:[%s7365 + $0x24] sm:$0xf]
        %v7376 = vld [vmem:[%s7365 + $0x28] sm:$0xf]
        %v7377 = vld [vmem:[%s7365 + $0x2c] sm:$0xf]
        %v7378 = vld [vmem:[%s7365 + $0x30] sm:$0xf]
        %v7379 = vld [vmem:[%s7365 + $0x34] sm:$0xf]
        %v7380 = vld [vmem:[%s7365 + $0x38] sm:$0xf]
        %v7381 = vld [vmem:[%s7365 + $0x3c] sm:$0xf]
        %v7382 = vld [vmem:[%s7365 + $0x40] sm:$0xf]
        %v7383 = vld [vmem:[%s7365 + $0x44] sm:$0xf]
        %v7384 = vld [vmem:[%s7365 + $0x48] sm:$0xf]
        %v7385 = vld [vmem:[%s7365 + $0x4c] sm:$0xf]
        %v7386 = vld [vmem:[%s7365 + $0x50] sm:$0xf]
        %v7387 = vld [vmem:[%s7365 + $0x54] sm:$0xf]
        %v7388 = vld [vmem:[%s7365 + $0x58] sm:$0xf]
        %v7389 = vld [vmem:[%s7365 + $0x5c] sm:$0xf]
        %v7390 = vld [vmem:[%s7365 + $0x60] sm:$0xf]
        %v7391 = vld [vmem:[%s7365 + $0x64] sm:$0xf]
        %v7392 = vld [vmem:[%s7365 + $0x68] sm:$0xf]
        %v7393 = vld [vmem:[%s7365 + $0x6c] sm:$0xf]
        %v7394 = vld [vmem:[%s7365 + $0x70] sm:$0xf]
        %v7395 = vld [vmem:[%s7365 + $0x74] sm:$0xf]
        %v7396 = vld [vmem:[%s7365 + $0x78] sm:$0xf]
        %v7397 = vld [vmem:[%s7365 + $0x7c] sm:$0xf]
        %v7398 = vld [vmem:[%s7365 + $0x80] sm:$0xf]
        %v7399 = vld [vmem:[%s7365 + $0x84] sm:$0xf]
        %v7400 = vld [vmem:[%s7365 + $0x88] sm:$0xf]
        %v7401 = vld [vmem:[%s7365 + $0x8c] sm:$0xf]
        %v7402 = vld [vmem:[%s7365 + $0x90] sm:$0xf]
        %v7403 = vld [vmem:[%s7365 + $0x94] sm:$0xf]
        %v7404 = vld [vmem:[%s7365 + $0x98] sm:$0xf]
        %v7405 = vld [vmem:[%s7365 + $0x9c] sm:$0xf]
        %v7406 = vld [vmem:[%s7365 + $0xa0] sm:$0xf]
        %v7407 = vld [vmem:[%s7365 + $0xa4] sm:$0xf]
        %v7408 = vld [vmem:[%s7365 + $0xa8] sm:$0xf]
        %v7409 = vld [vmem:[%s7365 + $0xac] sm:$0xf]
        %v7410 = vld [vmem:[%s7365 + $0xb0] sm:$0xf]
        %v7411 = vld [vmem:[%s7365 + $0xb4] sm:$0xf]
        %v7412 = vld [vmem:[%s7365 + $0xb8] sm:$0xf]
        %v7413 = vld [vmem:[%s7365 + $0xbc] sm:$0xf]
        %v7462 = vunpack.c.l.b16 %v7366
        %v7463 = vunpack.c.l.b16 %v7367
        %v7464 = vunpack.c.l.b16 %v7368
        %v7465 = vunpack.c.l.b16 %v7369
        %v7466 = vunpack.c.l.b16 %v7370
        %v7467 = vunpack.c.l.b16 %v7371
        %v7468 = vunpack.c.l.b16 %v7372
        %v7469 = vunpack.c.l.b16 %v7373
        %v7470 = vunpack.c.l.b16 %v7374
        %v7471 = vunpack.c.l.b16 %v7375
        %v7472 = vunpack.c.l.b16 %v7376
        %v7473 = vunpack.c.l.b16 %v7377
        %v7474 = vunpack.c.l.b16 %v7378
        %v7475 = vunpack.c.l.b16 %v7379
        %v7476 = vunpack.c.l.b16 %v7380
        %v7477 = vunpack.c.l.b16 %v7381
        %v7478 = vunpack.c.l.b16 %v7382
        %v7479 = vunpack.c.l.b16 %v7383
        %v7480 = vunpack.c.l.b16 %v7384
        %v7481 = vunpack.c.l.b16 %v7385
        %v7482 = vunpack.c.l.b16 %v7386
        %v7483 = vunpack.c.l.b16 %v7387
        %v7484 = vunpack.c.l.b16 %v7388
        %v7485 = vunpack.c.l.b16 %v7389
        %v7486 = vunpack.c.l.b16 %v7390
        %v7487 = vunpack.c.l.b16 %v7391
        %v7488 = vunpack.c.l.b16 %v7392
        %v7489 = vunpack.c.l.b16 %v7393
        %v7490 = vunpack.c.l.b16 %v7394
        %v7491 = vunpack.c.l.b16 %v7395
        %v7492 = vunpack.c.l.b16 %v7396
        %v7493 = vunpack.c.l.b16 %v7397
        %v7494 = vunpack.c.l.b16 %v7398
        %v7495 = vunpack.c.l.b16 %v7399
        %v7496 = vunpack.c.l.b16 %v7400
        %v7497 = vunpack.c.l.b16 %v7401
        %v7498 = vunpack.c.l.b16 %v7402
        %v7499 = vunpack.c.l.b16 %v7403
        %v7500 = vunpack.c.l.b16 %v7404
        %v7501 = vunpack.c.l.b16 %v7405
        %v7502 = vunpack.c.l.b16 %v7406
        %v7503 = vunpack.c.l.b16 %v7407
        %v7504 = vunpack.c.l.b16 %v7408
        %v7505 = vunpack.c.l.b16 %v7409
        %v7506 = vunpack.c.l.b16 %v7410
        %v7507 = vunpack.c.l.b16 %v7411
        %v7508 = vunpack.c.l.b16 %v7412
        %v7509 = vunpack.c.l.b16 %v7413
        %v7510 = vpack.c.b16 %v7463, %v7462
        %v7511 = vpack.c.b16 %v7465, %v7464
        %v7512 = vpack.c.b16 %v7467, %v7466
        %v7513 = vpack.c.b16 %v7469, %v7468
        %v7514 = vpack.c.b16 %v7471, %v7470
        %v7515 = vpack.c.b16 %v7473, %v7472
        %v7516 = vpack.c.b16 %v7475, %v7474
        %v7517 = vpack.c.b16 %v7477, %v7476
        %v7518 = vpack.c.b16 %v7479, %v7478
        %v7519 = vpack.c.b16 %v7481, %v7480
        %v7520 = vpack.c.b16 %v7483, %v7482
        %v7521 = vpack.c.b16 %v7485, %v7484
        %v7522 = vpack.c.b16 %v7487, %v7486
        %v7523 = vpack.c.b16 %v7489, %v7488
        %v7524 = vpack.c.b16 %v7491, %v7490
        %v7525 = vpack.c.b16 %v7493, %v7492
        %v7526 = vpack.c.b16 %v7495, %v7494
        %v7527 = vpack.c.b16 %v7497, %v7496
        %v7528 = vpack.c.b16 %v7499, %v7498
        %v7529 = vpack.c.b16 %v7501, %v7500
        %v7530 = vpack.c.b16 %v7503, %v7502
        %v7531 = vpack.c.b16 %v7505, %v7504
        %v7532 = vpack.c.b16 %v7507, %v7506
        %v7533 = vpack.c.b16 %v7509, %v7508
        %7558 = vmatprep.subr.bf16.mxu0 0
        %7559 = vmatpush1.bf16.msra.mxu0 %v7510
        %7560 = vmatprep.subr.bf16.mxu0 0
        %7561 = vmatpush1.bf16.msra.mxu0 %v7511
        %7562 = vmatprep.subr.bf16.mxu0 0
        %7563 = vmatpush1.bf16.msra.mxu0 %v7512
        %7564 = vmatprep.subr.bf16.mxu0 0
        %7565 = vmatpush1.bf16.msra.mxu0 %v7513
        %7566 = vmatprep.subr.bf16.mxu0 0
        %7567 = vmatpush1.bf16.msra.mxu0 %v7514
        %7568 = vmatprep.subr.bf16.mxu0 0
        %7569 = vmatpush1.bf16.msra.mxu0 %v7515
        %7570 = vmatprep.subr.bf16.mxu0 0
        %7571 = vmatpush1.bf16.msra.mxu0 %v7516
        %7572 = vmatprep.subr.bf16.mxu0 0
        %7573 = vmatpush1.bf16.msra.mxu0 %v7517
        %7574 = vmatprep.subr.bf16.mxu0 0
        %7575 = vmatpush1.bf16.msra.mxu0 %v7518
        %7576 = vmatprep.subr.bf16.mxu0 0
        %7577 = vmatpush1.bf16.msra.mxu0 %v7519
        %7578 = vmatprep.subr.bf16.mxu0 0
        %7579 = vmatpush1.bf16.msra.mxu0 %v7520
        %7580 = vmatprep.subr.bf16.mxu0 0
        %7581 = vmatpush1.bf16.msra.mxu0 %v7521
        %7582 = vmatprep.subr.bf16.mxu0 0
        %7583 = vmatpush1.bf16.msra.mxu0 %v7522
        %7584 = vmatprep.subr.bf16.mxu0 0
        %7585 = vmatpush1.bf16.msra.mxu0 %v7523
        %7586 = vmatprep.subr.bf16.mxu0 0
        %7587 = vmatpush1.bf16.msra.mxu0 %v7524
        %7588 = vmatprep.subr.bf16.mxu0 0
        %7589 = vmatpush1.bf16.msra.mxu0 %v7525
        %7590 = vmatprep.mubr.bf16.mxu0 %v6483
        %7591 = vmatmul.mubr.bf16.gmra.mrb[0].mxu0 %v6482
        %v7592 = vpop.f32.mrb[0].mxu0
        %v7593 = vadd.f32 0.0, %v7592
        %v7594 = vpop.f32.mrb[0].mxu0
        %v7595 = vpop.f32.mrb[0].mxu0
        %v7596 = vadd.f32 0.0, %v7595
        %v7597 = vpop.f32.mrb[0].mxu0
        %7598 = vmatprep.mubr.bf16.mxu0 %v6486
        %7599 = vmatmul.mubr.bf16.gmra.mrb[0].mxu0 %v6485
        %v7600 = vpop.f32.mrb[0].mxu0
        %v7601 = vadd.f32 0.0, %v7600
        %v7602 = vpop.f32.mrb[0].mxu0
        %v7603 = vpop.f32.mrb[0].mxu0
        %v7604 = vadd.f32 0.0, %v7603
        %v7605 = vpop.f32.mrb[0].mxu0
        %7606 = vmatprep.mubr.bf16.mxu0 %v6489
        %7607 = vmatmul.mubr.bf16.gmra.mrb[0].mxu0 %v6488
        %v7608 = vpop.f32.mrb[0].mxu0
        %v7609 = vadd.f32 0.0, %v7608
        %v7610 = vpop.f32.mrb[0].mxu0
        %v7611 = vpop.f32.mrb[0].mxu0
        %v7612 = vadd.f32 0.0, %v7611
        %v7613 = vpop.f32.mrb[0].mxu0
        %7614 = vmatprep.mubr.bf16.mxu0 %v6492
        %7615 = vmatmul.mubr.bf16.gmra.mrb[0].mxu0 %v6491
        %v7616 = vpop.f32.mrb[0].mxu0
        %v7617 = vadd.f32 0.0, %v7616
        %v7618 = vpop.f32.mrb[0].mxu0
        %v7619 = vpop.f32.mrb[0].mxu0
        %v7620 = vadd.f32 0.0, %v7619
        %v7621 = vpop.f32.mrb[0].mxu0
        %7622 = vmatprep.mubr.bf16.mxu0 %v6495
        %7623 = vmatmul.mubr.bf16.gmra.mrb[0].mxu0 %v6494
        %v7624 = vpop.f32.mrb[0].mxu0
        %v7625 = vadd.f32 0.0, %v7624
        %v7626 = vpop.f32.mrb[0].mxu0
        %v7627 = vpop.f32.mrb[0].mxu0
        %v7628 = vpop.f32.mrb[0].mxu0
        %7629 = vdwg.mxu0
        %7630 = vmatprep.subr.bf16.mxu0 0
        %7631 = vmatpush1.bf16.msra.mxu0 %v7526
        %7632 = vmatprep.subr.bf16.mxu0 0
        %7633 = vmatpush1.bf16.msra.mxu0 %v7527
        %7634 = vmatprep.subr.bf16.mxu0 0
        %7635 = vmatpush1.bf16.msra.mxu0 %v7528
        %7636 = vmatprep.subr.bf16.mxu0 0
        %7637 = vmatpush1.bf16.msra.mxu0 %v7529
        %7638 = vmatprep.subr.bf16.mxu0 0
        %7639 = vmatpush1.bf16.msra.mxu0 %v7530
        %7640 = vmatprep.subr.bf16.mxu0 0
        %7641 = vmatpush1.bf16.msra.mxu0 %v7531
        %7642 = vmatprep.subr.bf16.mxu0 0
        %7643 = vmatpush1.bf16.msra.mxu0 %v7532
        %7644 = vmatprep.subr.bf16.mxu0 0
        %7645 = vmatpush1.bf16.msra.mxu0 %v7533
        %7646 = vmatprep.subr.bf16.mxu0 0
        %7647 = vmatpush1.bf16.msra.mxu0 0
        %7648 = vmatprep.subr.bf16.mxu0 0
        %7649 = vmatpush1.bf16.msra.mxu0 0
        %7650 = vmatprep.subr.bf16.mxu0 0
        %7651 = vmatpush1.bf16.msra.mxu0 0
        %7652 = vmatprep.subr.bf16.mxu0 0
        %7653 = vmatpush1.bf16.msra.mxu0 0
        %7654 = vmatprep.subr.bf16.mxu0 0
        %7655 = vmatpush1.bf16.msra.mxu0 0
        %7656 = vmatprep.subr.bf16.mxu0 0
        %7657 = vmatpush1.bf16.msra.mxu0 0
        %7658 = vmatprep.subr.bf16.mxu0 0
        %7659 = vmatpush1.bf16.msra.mxu0 0
        %7660 = vmatprep.subr.bf16.mxu0 0
        %7661 = vmatpush1.bf16.msra.mxu0 0
        %7662 = vmatprep.mubr.bf16.mxu0 0
        %7663 = vmatmul.mubr.bf16.gmra.mrb[0].mxu0 %v6484
        %v7664 = vpop.f32.mrb[0].mxu0
        %v7665 = vadd.f32 %v7593, %v7664
        %v7666 = vpop.f32.mrb[0].mxu0
        %v7667 = vpop.f32.mrb[0].mxu0
        %v7668 = vadd.f32 %v7596, %v7667
        %v7669 = vpop.f32.mrb[0].mxu0
        %7670 = vmatprep.mubr.bf16.mxu0 0
        %7671 = vmatmul.mubr.bf16.gmra.mrb[0].mxu0 %v6487
        %v7672 = vpop.f32.mrb[0].mxu0
        %v7673 = vadd.f32 %v7601, %v7672
        %v7674 = vpop.f32.mrb[0].mxu0
        %v7675 = vpop.f32.mrb[0].mxu0
        %v7676 = vadd.f32 %v7604, %v7675
        %v7677 = vpop.f32.mrb[0].mxu0
        %7678 = vmatprep.mubr.bf16.mxu0 0
        %7679 = vmatmul.mubr.bf16.gmra.mrb[0].mxu0 %v6490
        %v7680 = vpop.f32.mrb[0].mxu0
        %v7681 = vadd.f32 %v7609, %v7680
        %v7682 = vpop.f32.mrb[0].mxu0
        %v7683 = vpop.f32.mrb[0].mxu0
        %v7684 = vadd.f32 %v7612, %v7683
        %v7685 = vpop.f32.mrb[0].mxu0
        %7686 = vmatprep.mubr.bf16.mxu0 0
        %7687 = vmatmul.mubr.bf16.gmra.mrb[0].mxu0 %v6493
        %v7688 = vpop.f32.mrb[0].mxu0
        %v7689 = vadd.f32 %v7617, %v7688
        %v7690 = vpop.f32.mrb[0].mxu0
        %v7691 = vpop.f32.mrb[0].mxu0
        %v7692 = vadd.f32 %v7620, %v7691
        %v7693 = vpop.f32.mrb[0].mxu0
        %7694 = vmatprep.mubr.bf16.mxu0 0
        %7695 = vmatmul.mubr.bf16.gmra.mrb[0].mxu0 %v6496
        %v7696 = vpop.f32.mrb[0].mxu0
        %v7697 = vadd.f32 %v7625, %v7696
        %v7698 = vpop.f32.mrb[0].mxu0
        %v7699 = vpop.f32.mrb[0].mxu0
        %v7700 = vpop.f32.mrb[0].mxu0
        %7701 = vdwg.mxu0
        %v7702 = vadd.f32 %v7328, %v7665
        %v7703 = vadd.f32 %v7331, %v7668
        %v7704 = vadd.f32 %v7336, %v7673
        %v7705 = vadd.f32 %v7339, %v7676
        %v7706 = vadd.f32 %v7344, %v7681
        %v7707 = vadd.f32 %v7347, %v7684
        %v7708 = vadd.f32 %v7352, %v7689
        %v7709 = vadd.f32 %v7355, %v7692
        %v7710 = vadd.f32 %v7360, %v7697
        %s7711 = scalar_lea.vmem %s12, 576
        %v7712 = vld [vmem:[%s7711] sm:$0xf]
        %v7713 = vld [vmem:[%s7711 + $0x4] sm:$0xf]
        %v7714 = vld [vmem:[%s7711 + $0x8] sm:$0xf]
        %v7715 = vld [vmem:[%s7711 + $0xc] sm:$0xf]
        %v7716 = vld [vmem:[%s7711 + $0x10] sm:$0xf]
        %v7717 = vld [vmem:[%s7711 + $0x14] sm:$0xf]
        %v7718 = vld [vmem:[%s7711 + $0x18] sm:$0xf]
        %v7719 = vld [vmem:[%s7711 + $0x1c] sm:$0xf]
        %v7720 = vld [vmem:[%s7711 + $0x20] sm:$0xf]
        %v7721 = vld [vmem:[%s7711 + $0x24] sm:$0xf]
        %v7722 = vld [vmem:[%s7711 + $0x28] sm:$0xf]
        %v7723 = vld [vmem:[%s7711 + $0x2c] sm:$0xf]
        %v7724 = vld [vmem:[%s7711 + $0x30] sm:$0xf]
        %v7725 = vld [vmem:[%s7711 + $0x34] sm:$0xf]
        %v7726 = vld [vmem:[%s7711 + $0x38] sm:$0xf]
        %v7727 = vld [vmem:[%s7711 + $0x3c] sm:$0xf]
        %v7728 = vld [vmem:[%s7711 + $0x40] sm:$0xf]
        %v7729 = vld [vmem:[%s7711 + $0x44] sm:$0xf]
        %v7730 = vld [vmem:[%s7711 + $0x48] sm:$0xf]
        %v7731 = vld [vmem:[%s7711 + $0x4c] sm:$0xf]
        %v7732 = vld [vmem:[%s7711 + $0x50] sm:$0xf]
        %v7733 = vld [vmem:[%s7711 + $0x54] sm:$0xf]
        %v7734 = vld [vmem:[%s7711 + $0x58] sm:$0xf]
        %v7735 = vld [vmem:[%s7711 + $0x5c] sm:$0xf]
        %v7736 = vld [vmem:[%s7711 + $0x60] sm:$0xf]
        %v7737 = vld [vmem:[%s7711 + $0x64] sm:$0xf]
        %v7738 = vld [vmem:[%s7711 + $0x68] sm:$0xf]
        %v7739 = vld [vmem:[%s7711 + $0x6c] sm:$0xf]
        %v7740 = vld [vmem:[%s7711 + $0x70] sm:$0xf]
        %v7741 = vld [vmem:[%s7711 + $0x74] sm:$0xf]
        %v7742 = vld [vmem:[%s7711 + $0x78] sm:$0xf]
        %v7743 = vld [vmem:[%s7711 + $0x7c] sm:$0xf]
        %v7744 = vld [vmem:[%s7711 + $0x80] sm:$0xf]
        %v7745 = vld [vmem:[%s7711 + $0x84] sm:$0xf]
        %v7746 = vld [vmem:[%s7711 + $0x88] sm:$0xf]
        %v7747 = vld [vmem:[%s7711 + $0x8c] sm:$0xf]
        %v7748 = vld [vmem:[%s7711 + $0x90] sm:$0xf]
        %v7749 = vld [vmem:[%s7711 + $0x94] sm:$0xf]
        %v7750 = vld [vmem:[%s7711 + $0x98] sm:$0xf]
        %v7751 = vld [vmem:[%s7711 + $0x9c] sm:$0xf]
        %v7752 = vld [vmem:[%s7711 + $0xa0] sm:$0xf]
        %v7753 = vld [vmem:[%s7711 + $0xa4] sm:$0xf]
        %v7754 = vld [vmem:[%s7711 + $0xa8] sm:$0xf]
        %v7755 = vld [vmem:[%s7711 + $0xac] sm:$0xf]
        %v7756 = vld [vmem:[%s7711 + $0xb0] sm:$0xf]
        %v7757 = vld [vmem:[%s7711 + $0xb4] sm:$0xf]
        %v7758 = vld [vmem:[%s7711 + $0xb8] sm:$0xf]
        %v7759 = vld [vmem:[%s7711 + $0xbc] sm:$0xf]
        %v7760 = vrot.slane %v6663, 1
        %v7761 = vrot.slane %v6665, 2
        %v7762 = vor.u32 %v7760, %v7761
        %v7763 = vrot.slane %v6696, 1
        %v7764 = vrot.slane %v6670, 2
        %v7765 = vor.u32 %v7763, %v7764
        %v7766 = vsel %vm1496, %v7762, %v7765
        %v7767 = vrot.slane %v6674, 1
        %v7768 = vrot.slane %v6676, 2
        %v7769 = vor.u32 %v7767, %v7768
        %v7770 = vrot.slane %v6704, 1
        %v7771 = vrot.slane %v6681, 2
        %v7772 = vor.u32 %v7770, %v7771
        %v7773 = vsel %vm1496, %v7769, %v7772
        %v7774 = vrot.slane %v6685, 1
        %v7775 = vrot.slane %v6687, 2
        %v7776 = vor.u32 %v7774, %v7775
        %v7777 = vrot.slane %v6712, 1
        %v7778 = vrot.slane %v6692, 2
        %v7779 = vor.u32 %v7777, %v7778
        %v7780 = vsel %vm1496, %v7776, %v7779
        %v7781 = vrot.slane %v6720, 1
        %v7782 = vrot.slane %v6700, 2
        %v7783 = vor.u32 %v7781, %v7782
        %v7784 = vsel %vm1496, %v7765, %v7783
        %v7785 = vrot.slane %v6728, 1
        %v7786 = vrot.slane %v6708, 2
        %v7787 = vor.u32 %v7785, %v7786
        %v7788 = vsel %vm1496, %v7772, %v7787
        %v7789 = vrot.slane %v6736, 1
        %v7790 = vrot.slane %v6716, 2
        %v7791 = vor.u32 %v7789, %v7790
        %v7792 = vsel %vm1496, %v7779, %v7791
        %v7793 = vrot.slane %v6744, 1
        %v7794 = vrot.slane %v6724, 2
        %v7795 = vor.u32 %v7793, %v7794
        %v7796 = vsel %vm1496, %v7783, %v7795
        %v7797 = vrot.slane %v6751, 1
        %v7798 = vrot.slane %v6732, 2
        %v7799 = vor.u32 %v7797, %v7798
        %v7800 = vsel %vm1496, %v7787, %v7799
        %v7801 = vrot.slane %v6758, 1
        %v7802 = vrot.slane %v6740, 2
        %v7803 = vor.u32 %v7801, %v7802
        %v7804 = vsel %vm1496, %v7791, %v7803
        %v7805 = vrot.slane %v6765, 1
        %v7806 = vrot.slane %v6747, 2
        %v7807 = vor.u32 %v7805, %v7806
        %v7808 = vsel %vm1496, %v7795, %v7807
        %v7809 = vrot.slane %v6768, 1
        %v7810 = vrot.slane %v6754, 2
        %v7811 = vor.u32 %v7809, %v7810
        %v7812 = vsel %vm1496, %v7799, %v7811
        %v7813 = vrot.slane %v6771, 1
        %v7814 = vrot.slane %v6761, 2
        %v7815 = vor.u32 %v7813, %v7814
        %v7816 = vsel %vm1496, %v7803, %v7815
        %v7880 = vunpack.c.l.b16 %v7712
        %v7881 = vunpack.c.l.b16 %v7713
        %v7882 = vunpack.c.l.b16 %v7714
        %v7883 = vunpack.c.l.b16 %v7715
        %v7884 = vunpack.c.l.b16 %v7716
        %v7885 = vunpack.c.l.b16 %v7717
        %v7886 = vunpack.c.l.b16 %v7718
        %v7887 = vunpack.c.l.b16 %v7719
        %v7888 = vunpack.c.l.b16 %v7720
        %v7889 = vunpack.c.l.b16 %v7721
        %v7890 = vunpack.c.l.b16 %v7722
        %v7891 = vunpack.c.l.b16 %v7723
        %v7892 = vunpack.c.l.b16 %v7724
        %v7893 = vunpack.c.l.b16 %v7725
        %v7894 = vunpack.c.l.b16 %v7726
        %v7895 = vunpack.c.l.b16 %v7727
        %v7896 = vunpack.c.l.b16 %v7728
        %v7897 = vunpack.c.l.b16 %v7729
        %v7898 = vunpack.c.l.b16 %v7730
        %v7899 = vunpack.c.l.b16 %v7731
        %v7900 = vunpack.c.l.b16 %v7732
        %v7901 = vunpack.c.l.b16 %v7733
        %v7902 = vunpack.c.l.b16 %v7734
        %v7903 = vunpack.c.l.b16 %v7735
        %v7904 = vunpack.c.l.b16 %v7736
        %v7905 = vunpack.c.l.b16 %v7737
        %v7906 = vunpack.c.l.b16 %v7738
        %v7907 = vunpack.c.l.b16 %v7739
        %v7908 = vunpack.c.l.b16 %v7740
        %v7909 = vunpack.c.l.b16 %v7741
        %v7910 = vunpack.c.l.b16 %v7742
        %v7911 = vunpack.c.l.b16 %v7743
        %v7912 = vunpack.c.l.b16 %v7744
        %v7913 = vunpack.c.l.b16 %v7745
        %v7914 = vunpack.c.l.b16 %v7746
        %v7915 = vunpack.c.l.b16 %v7747
        %v7916 = vunpack.c.l.b16 %v7748
        %v7917 = vunpack.c.l.b16 %v7749
        %v7918 = vunpack.c.l.b16 %v7750
        %v7919 = vunpack.c.l.b16 %v7751
        %v7920 = vunpack.c.l.b16 %v7752
        %v7921 = vunpack.c.l.b16 %v7753
        %v7922 = vunpack.c.l.b16 %v7754
        %v7923 = vunpack.c.l.b16 %v7755
        %v7924 = vunpack.c.l.b16 %v7756
        %v7925 = vunpack.c.l.b16 %v7757
        %v7926 = vunpack.c.l.b16 %v7758
        %v7927 = vunpack.c.l.b16 %v7759
        %v7928 = vpack.c.b16 %v7881, %v7880
        %v7929 = vpack.c.b16 %v7883, %v7882
        %v7930 = vpack.c.b16 %v7885, %v7884
        %v7931 = vpack.c.b16 %v7887, %v7886
        %v7932 = vpack.c.b16 %v7889, %v7888
        %v7933 = vpack.c.b16 %v7891, %v7890
        %v7934 = vpack.c.b16 %v7893, %v7892
        %v7935 = vpack.c.b16 %v7895, %v7894
        %v7936 = vpack.c.b16 %v7897, %v7896
        %v7937 = vpack.c.b16 %v7899, %v7898
        %v7938 = vpack.c.b16 %v7901, %v7900
        %v7939 = vpack.c.b16 %v7903, %v7902
        %v7940 = vpack.c.b16 %v7905, %v7904
        %v7941 = vpack.c.b16 %v7907, %v7906
        %v7942 = vpack.c.b16 %v7909, %v7908
        %v7943 = vpack.c.b16 %v7911, %v7910
        %v7944 = vpack.c.b16 %v7913, %v7912
        %v7945 = vpack.c.b16 %v7915, %v7914
        %v7946 = vpack.c.b16 %v7917, %v7916
        %v7947 = vpack.c.b16 %v7919, %v7918
        %v7948 = vpack.c.b16 %v7921, %v7920
        %v7949 = vpack.c.b16 %v7923, %v7922
        %v7950 = vpack.c.b16 %v7925, %v7924
        %v7951 = vpack.c.b16 %v7927, %v7926
        %7976 = vmatprep.subr.bf16.mxu0 0
        %7977 = vmatpush1.bf16.msra.mxu0 %v7928
        %7978 = vmatprep.subr.bf16.mxu0 0
        %7979 = vmatpush1.bf16.msra.mxu0 %v7929
        %7980 = vmatprep.subr.bf16.mxu0 0
        %7981 = vmatpush1.bf16.msra.mxu0 %v7930
        %7982 = vmatprep.subr.bf16.mxu0 0
        %7983 = vmatpush1.bf16.msra.mxu0 %v7931
        %7984 = vmatprep.subr.bf16.mxu0 0
        %7985 = vmatpush1.bf16.msra.mxu0 %v7932
        %7986 = vmatprep.subr.bf16.mxu0 0
        %7987 = vmatpush1.bf16.msra.mxu0 %v7933
        %7988 = vmatprep.subr.bf16.mxu0 0
        %7989 = vmatpush1.bf16.msra.mxu0 %v7934
        %7990 = vmatprep.subr.bf16.mxu0 0
        %7991 = vmatpush1.bf16.msra.mxu0 %v7935
        %7992 = vmatprep.subr.bf16.mxu0 0
        %7993 = vmatpush1.bf16.msra.mxu0 %v7936
        %7994 = vmatprep.subr.bf16.mxu0 0
        %7995 = vmatpush1.bf16.msra.mxu0 %v7937
        %7996 = vmatprep.subr.bf16.mxu0 0
        %7997 = vmatpush1.bf16.msra.mxu0 %v7938
        %7998 = vmatprep.subr.bf16.mxu0 0
        %7999 = vmatpush1.bf16.msra.mxu0 %v7939
        %8000 = vmatprep.subr.bf16.mxu0 0
        %8001 = vmatpush1.bf16.msra.mxu0 %v7940
        %8002 = vmatprep.subr.bf16.mxu0 0
        %8003 = vmatpush1.bf16.msra.mxu0 %v7941
        %8004 = vmatprep.subr.bf16.mxu0 0
        %8005 = vmatpush1.bf16.msra.mxu0 %v7942
        %8006 = vmatprep.subr.bf16.mxu0 0
        %8007 = vmatpush1.bf16.msra.mxu0 %v7943
        %8008 = vmatprep.mubr.bf16.mxu0 %v7773
        %8009 = vmatmul.mubr.bf16.gmra.mrb[0].mxu0 %v7766
        %v8010 = vpop.f32.mrb[0].mxu0
        %v8011 = vadd.f32 0.0, %v8010
        %v8012 = vpop.f32.mrb[0].mxu0
        %v8013 = vpop.f32.mrb[0].mxu0
        %v8014 = vadd.f32 0.0, %v8013
        %v8015 = vpop.f32.mrb[0].mxu0
        %8016 = vmatprep.mubr.bf16.mxu0 %v7788
        %8017 = vmatmul.mubr.bf16.gmra.mrb[0].mxu0 %v7784
        %v8018 = vpop.f32.mrb[0].mxu0
        %v8019 = vadd.f32 0.0, %v8018
        %v8020 = vpop.f32.mrb[0].mxu0
        %v8021 = vpop.f32.mrb[0].mxu0
        %v8022 = vadd.f32 0.0, %v8021
        %v8023 = vpop.f32.mrb[0].mxu0
        %8024 = vmatprep.mubr.bf16.mxu0 %v7800
        %8025 = vmatmul.mubr.bf16.gmra.mrb[0].mxu0 %v7796
        %v8026 = vpop.f32.mrb[0].mxu0
        %v8027 = vadd.f32 0.0, %v8026
        %v8028 = vpop.f32.mrb[0].mxu0
        %v8029 = vpop.f32.mrb[0].mxu0
        %v8030 = vadd.f32 0.0, %v8029
        %v8031 = vpop.f32.mrb[0].mxu0
        %8032 = vmatprep.mubr.bf16.mxu0 %v7812
        %8033 = vmatmul.mubr.bf16.gmra.mrb[0].mxu0 %v7808
        %v8034 = vpop.f32.mrb[0].mxu0
        %v8035 = vadd.f32 0.0, %v8034
        %v8036 = vpop.f32.mrb[0].mxu0
        %v8037 = vpop.f32.mrb[0].mxu0
        %v8038 = vadd.f32 0.0, %v8037
        %v8039 = vpop.f32.mrb[0].mxu0
        %8040 = vmatprep.mubr.bf16.mxu0 %v7811
        %8041 = vmatmul.mubr.bf16.gmra.mrb[0].mxu0 %v7807
        %v8042 = vpop.f32.mrb[0].mxu0
        %v8043 = vadd.f32 0.0, %v8042
        %v8044 = vpop.f32.mrb[0].mxu0
        %v8045 = vpop.f32.mrb[0].mxu0
        %v8046 = vpop.f32.mrb[0].mxu0
        %8047 = vdwg.mxu0
        %8048 = vmatprep.subr.bf16.mxu0 0
        %8049 = vmatpush1.bf16.msra.mxu0 %v7944
        %8050 = vmatprep.subr.bf16.mxu0 0
        %8051 = vmatpush1.bf16.msra.mxu0 %v7945
        %8052 = vmatprep.subr.bf16.mxu0 0
        %8053 = vmatpush1.bf16.msra.mxu0 %v7946
        %8054 = vmatprep.subr.bf16.mxu0 0
        %8055 = vmatpush1.bf16.msra.mxu0 %v7947
        %8056 = vmatprep.subr.bf16.mxu0 0
        %8057 = vmatpush1.bf16.msra.mxu0 %v7948
        %8058 = vmatprep.subr.bf16.mxu0 0
        %8059 = vmatpush1.bf16.msra.mxu0 %v7949
        %8060 = vmatprep.subr.bf16.mxu0 0
        %8061 = vmatpush1.bf16.msra.mxu0 %v7950
        %8062 = vmatprep.subr.bf16.mxu0 0
        %8063 = vmatpush1.bf16.msra.mxu0 %v7951
        %8064 = vmatprep.subr.bf16.mxu0 0
        %8065 = vmatpush1.bf16.msra.mxu0 0
        %8066 = vmatprep.subr.bf16.mxu0 0
        %8067 = vmatpush1.bf16.msra.mxu0 0
        %8068 = vmatprep.subr.bf16.mxu0 0
        %8069 = vmatpush1.bf16.msra.mxu0 0
        %8070 = vmatprep.subr.bf16.mxu0 0
        %8071 = vmatpush1.bf16.msra.mxu0 0
        %8072 = vmatprep.subr.bf16.mxu0 0
        %8073 = vmatpush1.bf16.msra.mxu0 0
        %8074 = vmatprep.subr.bf16.mxu0 0
        %8075 = vmatpush1.bf16.msra.mxu0 0
        %8076 = vmatprep.subr.bf16.mxu0 0
        %8077 = vmatpush1.bf16.msra.mxu0 0
        %8078 = vmatprep.subr.bf16.mxu0 0
        %8079 = vmatpush1.bf16.msra.mxu0 0
        %8080 = vmatprep.mubr.bf16.mxu0 0
        %8081 = vmatmul.mubr.bf16.gmra.mrb[0].mxu0 %v7780
        %v8082 = vpop.f32.mrb[0].mxu0
        %v8083 = vadd.f32 %v8011, %v8082
        %v8084 = vpop.f32.mrb[0].mxu0
        %v8085 = vpop.f32.mrb[0].mxu0
        %v8086 = vadd.f32 %v8014, %v8085
        %v8087 = vpop.f32.mrb[0].mxu0
        %8088 = vmatprep.mubr.bf16.mxu0 0
        %8089 = vmatmul.mubr.bf16.gmra.mrb[0].mxu0 %v7792
        %v8090 = vpop.f32.mrb[0].mxu0
        %v8091 = vadd.f32 %v8019, %v8090
        %v8092 = vpop.f32.mrb[0].mxu0
        %v8093 = vpop.f32.mrb[0].mxu0
        %v8094 = vadd.f32 %v8022, %v8093
        %v8095 = vpop.f32.mrb[0].mxu0
        %8096 = vmatprep.mubr.bf16.mxu0 0
        %8097 = vmatmul.mubr.bf16.gmra.mrb[0].mxu0 %v7804
        %v8098 = vpop.f32.mrb[0].mxu0
        %v8099 = vadd.f32 %v8027, %v8098
        %v8100 = vpop.f32.mrb[0].mxu0
        %v8101 = vpop.f32.mrb[0].mxu0
        %v8102 = vadd.f32 %v8030, %v8101
        %v8103 = vpop.f32.mrb[0].mxu0
        %8104 = vmatprep.mubr.bf16.mxu0 0
        %8105 = vmatmul.mubr.bf16.gmra.mrb[0].mxu0 %v7816
        %v8106 = vpop.f32.mrb[0].mxu0
        %v8107 = vadd.f32 %v8035, %v8106
        %v8108 = vpop.f32.mrb[0].mxu0
        %v8109 = vpop.f32.mrb[0].mxu0
        %v8110 = vadd.f32 %v8038, %v8109
        %v8111 = vpop.f32.mrb[0].mxu0
        %8112 = vmatprep.mubr.bf16.mxu0 0
        %8113 = vmatmul.mubr.bf16.gmra.mrb[0].mxu0 %v7815
        %v8114 = vpop.f32.mrb[0].mxu0
        %v8115 = vadd.f32 %v8043, %v8114
        %v8116 = vpop.f32.mrb[0].mxu0
        %v8117 = vpop.f32.mrb[0].mxu0
        %v8118 = vpop.f32.mrb[0].mxu0
        %8119 = vdwg.mxu0
        %v8120 = vadd.f32 %v7702, %v8083
        %v8121 = vadd.f32 %v7703, %v8086
        %v8122 = vadd.f32 %v7704, %v8091
        %v8123 = vadd.f32 %v7705, %v8094
        %v8124 = vadd.f32 %v7706, %v8099
        %v8125 = vadd.f32 %v7707, %v8102
        %v8126 = vadd.f32 %v7708, %v8107
        %v8127 = vadd.f32 %v7709, %v8110
        %v8128 = vadd.f32 %v7710, %v8115
        %s8129 = scalar_lea.vmem %s12, 768
        %v8130 = vld [vmem:[%s8129] sm:$0xf]
        %v8131 = vld [vmem:[%s8129 + $0x4] sm:$0xf]
        %v8132 = vld [vmem:[%s8129 + $0x8] sm:$0xf]
        %v8133 = vld [vmem:[%s8129 + $0xc] sm:$0xf]
        %v8134 = vld [vmem:[%s8129 + $0x10] sm:$0xf]
        %v8135 = vld [vmem:[%s8129 + $0x14] sm:$0xf]
        %v8136 = vld [vmem:[%s8129 + $0x18] sm:$0xf]
        %v8137 = vld [vmem:[%s8129 + $0x1c] sm:$0xf]
        %v8138 = vld [vmem:[%s8129 + $0x20] sm:$0xf]
        %v8139 = vld [vmem:[%s8129 + $0x24] sm:$0xf]
        %v8140 = vld [vmem:[%s8129 + $0x28] sm:$0xf]
        %v8141 = vld [vmem:[%s8129 + $0x2c] sm:$0xf]
        %v8142 = vld [vmem:[%s8129 + $0x30] sm:$0xf]
        %v8143 = vld [vmem:[%s8129 + $0x34] sm:$0xf]
        %v8144 = vld [vmem:[%s8129 + $0x38] sm:$0xf]
        %v8145 = vld [vmem:[%s8129 + $0x3c] sm:$0xf]
        %v8146 = vld [vmem:[%s8129 + $0x40] sm:$0xf]
        %v8147 = vld [vmem:[%s8129 + $0x44] sm:$0xf]
        %v8148 = vld [vmem:[%s8129 + $0x48] sm:$0xf]
        %v8149 = vld [vmem:[%s8129 + $0x4c] sm:$0xf]
        %v8150 = vld [vmem:[%s8129 + $0x50] sm:$0xf]
        %v8151 = vld [vmem:[%s8129 + $0x54] sm:$0xf]
        %v8152 = vld [vmem:[%s8129 + $0x58] sm:$0xf]
        %v8153 = vld [vmem:[%s8129 + $0x5c] sm:$0xf]
        %v8154 = vld [vmem:[%s8129 + $0x60] sm:$0xf]
        %v8155 = vld [vmem:[%s8129 + $0x64] sm:$0xf]
        %v8156 = vld [vmem:[%s8129 + $0x68] sm:$0xf]
        %v8157 = vld [vmem:[%s8129 + $0x6c] sm:$0xf]
        %v8158 = vld [vmem:[%s8129 + $0x70] sm:$0xf]
        %v8159 = vld [vmem:[%s8129 + $0x74] sm:$0xf]
        %v8160 = vld [vmem:[%s8129 + $0x78] sm:$0xf]
        %v8161 = vld [vmem:[%s8129 + $0x7c] sm:$0xf]
        %v8162 = vld [vmem:[%s8129 + $0x80] sm:$0xf]
        %v8163 = vld [vmem:[%s8129 + $0x84] sm:$0xf]
        %v8164 = vld [vmem:[%s8129 + $0x88] sm:$0xf]
        %v8165 = vld [vmem:[%s8129 + $0x8c] sm:$0xf]
        %v8166 = vld [vmem:[%s8129 + $0x90] sm:$0xf]
        %v8167 = vld [vmem:[%s8129 + $0x94] sm:$0xf]
        %v8168 = vld [vmem:[%s8129 + $0x98] sm:$0xf]
        %v8169 = vld [vmem:[%s8129 + $0x9c] sm:$0xf]
        %v8170 = vld [vmem:[%s8129 + $0xa0] sm:$0xf]
        %v8171 = vld [vmem:[%s8129 + $0xa4] sm:$0xf]
        %v8172 = vld [vmem:[%s8129 + $0xa8] sm:$0xf]
        %v8173 = vld [vmem:[%s8129 + $0xac] sm:$0xf]
        %v8174 = vld [vmem:[%s8129 + $0xb0] sm:$0xf]
        %v8175 = vld [vmem:[%s8129 + $0xb4] sm:$0xf]
        %v8176 = vld [vmem:[%s8129 + $0xb8] sm:$0xf]
        %v8177 = vld [vmem:[%s8129 + $0xbc] sm:$0xf]
        %v8184 = vrot.slane %v6549, 2
        %v8185 = vrot.slane %v6516, 2
        %v8186 = vsel %vm1687, %v8184, %v8185
        %v8187 = vrot.slane %v6552, 2
        %v8188 = vrot.slane %v6518, 2
        %v8189 = vsel %vm1687, %v8187, %v8188
        %v8190 = vrot.slane %v6555, 2
        %v8191 = vrot.slane %v6520, 2
        %v8192 = vsel %vm1687, %v8190, %v8191
        %v8193 = vrot.slane %v6522, 2
        %v8194 = vsel %vm1687, %v8185, %v8193
        %v8195 = vrot.slane %v6524, 2
        %v8196 = vsel %vm1687, %v8188, %v8195
        %v8197 = vrot.slane %v6526, 2
        %v8198 = vsel %vm1687, %v8191, %v8197
        %v8199 = vrot.slane %v6528, 2
        %v8200 = vsel %vm1687, %v8193, %v8199
        %v8201 = vrot.slane %v6530, 2
        %v8202 = vsel %vm1687, %v8195, %v8201
        %v8203 = vrot.slane %v6532, 2
        %v8204 = vsel %vm1687, %v8197, %v8203
        %v8205 = vrot.slane %v6558, 2
        %v8206 = vsel %vm1687, %v8199, %v8205
        %v8207 = vrot.slane %v6561, 2
        %v8208 = vsel %vm1687, %v8201, %v8207
        %v8209 = vrot.slane %v6564, 2
        %v8210 = vsel %vm1687, %v8203, %v8209
        %v8274 = vunpack.c.l.b16 %v8130
        %v8275 = vunpack.c.l.b16 %v8131
        %v8276 = vunpack.c.l.b16 %v8132
        %v8277 = vunpack.c.l.b16 %v8133
        %v8278 = vunpack.c.l.b16 %v8134
        %v8279 = vunpack.c.l.b16 %v8135
        %v8280 = vunpack.c.l.b16 %v8136
        %v8281 = vunpack.c.l.b16 %v8137
        %v8282 = vunpack.c.l.b16 %v8138
        %v8283 = vunpack.c.l.b16 %v8139
        %v8284 = vunpack.c.l.b16 %v8140
        %v8285 = vunpack.c.l.b16 %v8141
        %v8286 = vunpack.c.l.b16 %v8142
        %v8287 = vunpack.c.l.b16 %v8143
        %v8288 = vunpack.c.l.b16 %v8144
        %v8289 = vunpack.c.l.b16 %v8145
        %v8290 = vunpack.c.l.b16 %v8146
        %v8291 = vunpack.c.l.b16 %v8147
        %v8292 = vunpack.c.l.b16 %v8148
        %v8293 = vunpack.c.l.b16 %v8149
        %v8294 = vunpack.c.l.b16 %v8150
        %v8295 = vunpack.c.l.b16 %v8151
        %v8296 = vunpack.c.l.b16 %v8152
        %v8297 = vunpack.c.l.b16 %v8153
        %v8298 = vunpack.c.l.b16 %v8154
        %v8299 = vunpack.c.l.b16 %v8155
        %v8300 = vunpack.c.l.b16 %v8156
        %v8301 = vunpack.c.l.b16 %v8157
        %v8302 = vunpack.c.l.b16 %v8158
        %v8303 = vunpack.c.l.b16 %v8159
        %v8304 = vunpack.c.l.b16 %v8160
        %v8305 = vunpack.c.l.b16 %v8161
        %v8306 = vunpack.c.l.b16 %v8162
        %v8307 = vunpack.c.l.b16 %v8163
        %v8308 = vunpack.c.l.b16 %v8164
        %v8309 = vunpack.c.l.b16 %v8165
        %v8310 = vunpack.c.l.b16 %v8166
        %v8311 = vunpack.c.l.b16 %v8167
        %v8312 = vunpack.c.l.b16 %v8168
        %v8313 = vunpack.c.l.b16 %v8169
        %v8314 = vunpack.c.l.b16 %v8170
        %v8315 = vunpack.c.l.b16 %v8171
        %v8316 = vunpack.c.l.b16 %v8172
        %v8317 = vunpack.c.l.b16 %v8173
        %v8318 = vunpack.c.l.b16 %v8174
        %v8319 = vunpack.c.l.b16 %v8175
        %v8320 = vunpack.c.l.b16 %v8176
        %v8321 = vunpack.c.l.b16 %v8177
        %v8322 = vpack.c.b16 %v8275, %v8274
        %v8323 = vpack.c.b16 %v8277, %v8276
        %v8324 = vpack.c.b16 %v8279, %v8278
        %v8325 = vpack.c.b16 %v8281, %v8280
        %v8326 = vpack.c.b16 %v8283, %v8282
        %v8327 = vpack.c.b16 %v8285, %v8284
        %v8328 = vpack.c.b16 %v8287, %v8286
        %v8329 = vpack.c.b16 %v8289, %v8288
        %v8330 = vpack.c.b16 %v8291, %v8290
        %v8331 = vpack.c.b16 %v8293, %v8292
        %v8332 = vpack.c.b16 %v8295, %v8294
        %v8333 = vpack.c.b16 %v8297, %v8296
        %v8334 = vpack.c.b16 %v8299, %v8298
        %v8335 = vpack.c.b16 %v8301, %v8300
        %v8336 = vpack.c.b16 %v8303, %v8302
        %v8337 = vpack.c.b16 %v8305, %v8304
        %v8338 = vpack.c.b16 %v8307, %v8306
        %v8339 = vpack.c.b16 %v8309, %v8308
        %v8340 = vpack.c.b16 %v8311, %v8310
        %v8341 = vpack.c.b16 %v8313, %v8312
        %v8342 = vpack.c.b16 %v8315, %v8314
        %v8343 = vpack.c.b16 %v8317, %v8316
        %v8344 = vpack.c.b16 %v8319, %v8318
        %v8345 = vpack.c.b16 %v8321, %v8320
        %8370 = vmatprep.subr.bf16.mxu0 0
        %8371 = vmatpush1.bf16.msra.mxu0 %v8322
        %8372 = vmatprep.subr.bf16.mxu0 0
        %8373 = vmatpush1.bf16.msra.mxu0 %v8323
        %8374 = vmatprep.subr.bf16.mxu0 0
        %8375 = vmatpush1.bf16.msra.mxu0 %v8324
        %8376 = vmatprep.subr.bf16.mxu0 0
        %8377 = vmatpush1.bf16.msra.mxu0 %v8325
        %8378 = vmatprep.subr.bf16.mxu0 0
        %8379 = vmatpush1.bf16.msra.mxu0 %v8326
        %8380 = vmatprep.subr.bf16.mxu0 0
        %8381 = vmatpush1.bf16.msra.mxu0 %v8327
        %8382 = vmatprep.subr.bf16.mxu0 0
        %8383 = vmatpush1.bf16.msra.mxu0 %v8328
        %8384 = vmatprep.subr.bf16.mxu0 0
        %8385 = vmatpush1.bf16.msra.mxu0 %v8329
        %8386 = vmatprep.subr.bf16.mxu0 0
        %8387 = vmatpush1.bf16.msra.mxu0 %v8330
        %8388 = vmatprep.subr.bf16.mxu0 0
        %8389 = vmatpush1.bf16.msra.mxu0 %v8331
        %8390 = vmatprep.subr.bf16.mxu0 0
        %8391 = vmatpush1.bf16.msra.mxu0 %v8332
        %8392 = vmatprep.subr.bf16.mxu0 0
        %8393 = vmatpush1.bf16.msra.mxu0 %v8333
        %8394 = vmatprep.subr.bf16.mxu0 0
        %8395 = vmatpush1.bf16.msra.mxu0 %v8334
        %8396 = vmatprep.subr.bf16.mxu0 0
        %8397 = vmatpush1.bf16.msra.mxu0 %v8335
        %8398 = vmatprep.subr.bf16.mxu0 0
        %8399 = vmatpush1.bf16.msra.mxu0 %v8336
        %8400 = vmatprep.subr.bf16.mxu0 0
        %8401 = vmatpush1.bf16.msra.mxu0 %v8337
        %8402 = vmatprep.mubr.bf16.mxu0 %v8189
        %8403 = vmatmul.mubr.bf16.gmra.mrb[0].mxu0 %v8186
        %v8404 = vpop.f32.mrb[0].mxu0
        %v8405 = vadd.f32 0.0, %v8404
        %v8406 = vpop.f32.mrb[0].mxu0
        %v8407 = vpop.f32.mrb[0].mxu0
        %v8408 = vadd.f32 0.0, %v8407
        %v8409 = vpop.f32.mrb[0].mxu0
        %8410 = vmatprep.mubr.bf16.mxu0 %v8196
        %8411 = vmatmul.mubr.bf16.gmra.mrb[0].mxu0 %v8194
        %v8412 = vpop.f32.mrb[0].mxu0
        %v8413 = vadd.f32 0.0, %v8412
        %v8414 = vpop.f32.mrb[0].mxu0
        %v8415 = vpop.f32.mrb[0].mxu0
        %v8416 = vadd.f32 0.0, %v8415
        %v8417 = vpop.f32.mrb[0].mxu0
        %8418 = vmatprep.mubr.bf16.mxu0 %v8202
        %8419 = vmatmul.mubr.bf16.gmra.mrb[0].mxu0 %v8200
        %v8420 = vpop.f32.mrb[0].mxu0
        %v8421 = vadd.f32 0.0, %v8420
        %v8422 = vpop.f32.mrb[0].mxu0
        %v8423 = vpop.f32.mrb[0].mxu0
        %v8424 = vadd.f32 0.0, %v8423
        %v8425 = vpop.f32.mrb[0].mxu0
        %8426 = vmatprep.mubr.bf16.mxu0 %v8208
        %8427 = vmatmul.mubr.bf16.gmra.mrb[0].mxu0 %v8206
        %v8428 = vpop.f32.mrb[0].mxu0
        %v8429 = vadd.f32 0.0, %v8428
        %v8430 = vpop.f32.mrb[0].mxu0
        %v8431 = vpop.f32.mrb[0].mxu0
        %v8432 = vadd.f32 0.0, %v8431
        %v8433 = vpop.f32.mrb[0].mxu0
        %8434 = vmatprep.mubr.bf16.mxu0 %v8207
        %8435 = vmatmul.mubr.bf16.gmra.mrb[0].mxu0 %v8205
        %v8436 = vpop.f32.mrb[0].mxu0
        %v8437 = vadd.f32 0.0, %v8436
        %v8438 = vpop.f32.mrb[0].mxu0
        %v8439 = vpop.f32.mrb[0].mxu0
        %v8440 = vpop.f32.mrb[0].mxu0
        %8441 = vdwg.mxu0
        %8442 = vmatprep.subr.bf16.mxu0 0
        %8443 = vmatpush1.bf16.msra.mxu0 %v8338
        %8444 = vmatprep.subr.bf16.mxu0 0
        %8445 = vmatpush1.bf16.msra.mxu0 %v8339
        %8446 = vmatprep.subr.bf16.mxu0 0
        %8447 = vmatpush1.bf16.msra.mxu0 %v8340
        %8448 = vmatprep.subr.bf16.mxu0 0
        %8449 = vmatpush1.bf16.msra.mxu0 %v8341
        %8450 = vmatprep.subr.bf16.mxu0 0
        %8451 = vmatpush1.bf16.msra.mxu0 %v8342
        %8452 = vmatprep.subr.bf16.mxu0 0
        %8453 = vmatpush1.bf16.msra.mxu0 %v8343
        %8454 = vmatprep.subr.bf16.mxu0 0
        %8455 = vmatpush1.bf16.msra.mxu0 %v8344
        %8456 = vmatprep.subr.bf16.mxu0 0
        %8457 = vmatpush1.bf16.msra.mxu0 %v8345
        %8458 = vmatprep.subr.bf16.mxu0 0
        %8459 = vmatpush1.bf16.msra.mxu0 0
        %8460 = vmatprep.subr.bf16.mxu0 0
        %8461 = vmatpush1.bf16.msra.mxu0 0
        %8462 = vmatprep.subr.bf16.mxu0 0
        %8463 = vmatpush1.bf16.msra.mxu0 0
        %8464 = vmatprep.subr.bf16.mxu0 0
        %8465 = vmatpush1.bf16.msra.mxu0 0
        %8466 = vmatprep.subr.bf16.mxu0 0
        %8467 = vmatpush1.bf16.msra.mxu0 0
        %8468 = vmatprep.subr.bf16.mxu0 0
        %8469 = vmatpush1.bf16.msra.mxu0 0
        %8470 = vmatprep.subr.bf16.mxu0 0
        %8471 = vmatpush1.bf16.msra.mxu0 0
        %8472 = vmatprep.subr.bf16.mxu0 0
        %8473 = vmatpush1.bf16.msra.mxu0 0
        %8474 = vmatprep.mubr.bf16.mxu0 0
        %8475 = vmatmul.mubr.bf16.gmra.mrb[0].mxu0 %v8192
        %v8476 = vpop.f32.mrb[0].mxu0
        %v8477 = vadd.f32 %v8405, %v8476
        %v8478 = vpop.f32.mrb[0].mxu0
        %v8479 = vpop.f32.mrb[0].mxu0
        %v8480 = vadd.f32 %v8408, %v8479
        %v8481 = vpop.f32.mrb[0].mxu0
        %8482 = vmatprep.mubr.bf16.mxu0 0
        %8483 = vmatmul.mubr.bf16.gmra.mrb[0].mxu0 %v8198
        %v8484 = vpop.f32.mrb[0].mxu0
        %v8485 = vadd.f32 %v8413, %v8484
        %v8486 = vpop.f32.mrb[0].mxu0
        %v8487 = vpop.f32.mrb[0].mxu0
        %v8488 = vadd.f32 %v8416, %v8487
        %v8489 = vpop.f32.mrb[0].mxu0
        %8490 = vmatprep.mubr.bf16.mxu0 0
        %8491 = vmatmul.mubr.bf16.gmra.mrb[0].mxu0 %v8204
        %v8492 = vpop.f32.mrb[0].mxu0
        %v8493 = vadd.f32 %v8421, %v8492
        %v8494 = vpop.f32.mrb[0].mxu0
        %v8495 = vpop.f32.mrb[0].mxu0
        %v8496 = vadd.f32 %v8424, %v8495
        %v8497 = vpop.f32.mrb[0].mxu0
        %8498 = vmatprep.mubr.bf16.mxu0 0
        %8499 = vmatmul.mubr.bf16.gmra.mrb[0].mxu0 %v8210
        %v8500 = vpop.f32.mrb[0].mxu0
        %v8501 = vadd.f32 %v8429, %v8500
        %v8502 = vpop.f32.mrb[0].mxu0
        %v8503 = vpop.f32.mrb[0].mxu0
        %v8504 = vadd.f32 %v8432, %v8503
        %v8505 = vpop.f32.mrb[0].mxu0
        %8506 = vmatprep.mubr.bf16.mxu0 0
        %8507 = vmatmul.mubr.bf16.gmra.mrb[0].mxu0 %v8209
        %v8508 = vpop.f32.mrb[0].mxu0
        %v8509 = vadd.f32 %v8437, %v8508
        %v8510 = vpop.f32.mrb[0].mxu0
        %v8511 = vpop.f32.mrb[0].mxu0
        %v8512 = vpop.f32.mrb[0].mxu0
        %8513 = vdwg.mxu0
        %v8514 = vadd.f32 %v8120, %v8477
        %v8515 = vadd.f32 %v8121, %v8480
        %v8516 = vadd.f32 %v8122, %v8485
        %v8517 = vadd.f32 %v8123, %v8488
        %v8518 = vadd.f32 %v8124, %v8493
        %v8519 = vadd.f32 %v8125, %v8496
        %v8520 = vadd.f32 %v8126, %v8501
        %v8521 = vadd.f32 %v8127, %v8504
        %v8522 = vadd.f32 %v8128, %v8509
        %v8523 = vld [vmem:[#allocation17] sm:$0x1]
        %v8525 = vlaneseq
        %v8526 = vshrl.u32 %v8525, 7
        %v8527 = vsub.s32 0, %v8526
        %v8528 = vrot.slane %v8523, %v8527
        %v8530 = vadd.f32 %v8514, %v8528
        %v8531 = vadd.f32 %v8515, %v8528
        %v8532 = vadd.f32 %v8516, %v8528
        %v8533 = vadd.f32 %v8517, %v8528
        %v8534 = vadd.f32 %v8518, %v8528
        %v8535 = vadd.f32 %v8519, %v8528
        %v8536 = vadd.f32 %v8520, %v8528
        %v8537 = vadd.f32 %v8521, %v8528
        %v8538 = vadd.f32 %v8522, %v8528
        %v8539 = vmax.f32 %v8530, 0.0
        %v8540 = vmax.f32 %v8531, 0.0
        %v8541 = vmax.f32 %v8532, 0.0
        %v8542 = vmax.f32 %v8533, 0.0
        %v8543 = vmax.f32 %v8534, 0.0
        %v8544 = vmax.f32 %v8535, 0.0
        %v8545 = vmax.f32 %v8536, 0.0
        %v8546 = vmax.f32 %v8537, 0.0
        %v8547 = vmax.f32 %v8538, 0.0
        %v8548 = vld [vmem:[#allocation23] sm:$0xf]
        %v8549 = vld [vmem:[#allocation23 + $0x4] sm:$0xf]
        %v8550 = vld [vmem:[#allocation23 + $0x8] sm:$0xf]
        %v8551 = vld [vmem:[#allocation23 + $0xc] sm:$0xf]
        %v8552 = vld [vmem:[#allocation23 + $0x10] sm:$0xf]
        %v8553 = vld [vmem:[#allocation23 + $0x14] sm:$0xf]
        %v8554 = vld [vmem:[#allocation23 + $0x18] sm:$0xf]
        %v8555 = vld [vmem:[#allocation23 + $0x1c] sm:$0xf]
        %v8556 = vld [vmem:[#allocation23 + $0x20] sm:$0xf]
        %v8557 = vld [vmem:[#allocation23 + $0x24] sm:$0xf]
        %v8558 = vld [vmem:[#allocation23 + $0x28] sm:$0xf]
        %v8559 = vld [vmem:[#allocation23 + $0x2c] sm:$0xf]
        %v8560 = vld [vmem:[#allocation23 + $0x30] sm:$0xf]
        %v8561 = vld [vmem:[#allocation23 + $0x34] sm:$0xf]
        %v8562 = vld [vmem:[#allocation23 + $0x38] sm:$0xf]
        %v8563 = vld [vmem:[#allocation23 + $0x3c] sm:$0xf]
        %v8564 = vld [vmem:[#allocation23 + $0x40] sm:$0xf]
        %v8565 = vpack.c.bf16 %v8540, %v8539
        %v8566 = vpack.c.bf16 %v8542, %v8541
        %v8567 = vpack.c.bf16 %v8544, %v8543
        %v8568 = vpack.c.bf16 %v8546, %v8545
        %v8569 = vpack.c.bf16 %v8547, %v8547
        %v8587 = vunpack.c.l.b16 %v8548
        %v8588 = vunpack.c.l.b16 %v8549
        %v8589 = vunpack.c.l.b16 %v8550
        %v8590 = vunpack.c.l.b16 %v8551
        %v8591 = vunpack.c.l.b16 %v8552
        %v8592 = vunpack.c.l.b16 %v8553
        %v8593 = vunpack.c.l.b16 %v8554
        %v8594 = vunpack.c.l.b16 %v8555
        %v8595 = vunpack.c.l.b16 %v8556
        %v8596 = vunpack.c.l.b16 %v8557
        %v8597 = vunpack.c.l.b16 %v8558
        %v8598 = vunpack.c.l.b16 %v8559
        %v8599 = vunpack.c.l.b16 %v8560
        %v8600 = vunpack.c.l.b16 %v8561
        %v8601 = vunpack.c.l.b16 %v8562
        %v8602 = vunpack.c.l.b16 %v8563
        %v8603 = vunpack.c.l.b16 %v8564
        %v8604 = vpack.c.b16 %v8588, %v8587
        %v8605 = vpack.c.b16 %v8590, %v8589
        %v8606 = vpack.c.b16 %v8592, %v8591
        %v8607 = vpack.c.b16 %v8594, %v8593
        %v8608 = vpack.c.b16 %v8596, %v8595
        %v8609 = vpack.c.b16 %v8598, %v8597
        %v8610 = vpack.c.b16 %v8600, %v8599
        %v8611 = vpack.c.b16 %v8602, %v8601
        %v8612 = vpack.c.b16 %v8603, %v8603
        %v8614 = vsel %vm2941, %v8604, 0
        %v8617 = vsel %vm2941, %v8605, 0
        %v8620 = vsel %vm2941, %v8606, 0
        %v8623 = vsel %vm2941, %v8607, 0
        %v8626 = vsel %vm2941, %v8608, 0
        %v8629 = vsel %vm2941, %v8609, 0
        %v8632 = vsel %vm2941, %v8610, 0
        %v8635 = vsel %vm2941, %v8611, 0
        %v8638 = vsel %vm2941, %v8612, 0
        %v8641 = vsel %vm2951, %v8569, 0
        %8643 = vmatprep.subr.bf16.mxu0 0
        %8644 = vmatpush1.bf16.msra.mxu0 %v8565
        %8645 = vmatprep.subr.bf16.mxu0 0
        %8646 = vmatpush1.bf16.msra.mxu0 %v8566
        %8647 = vmatprep.subr.bf16.mxu0 0
        %8648 = vmatpush1.bf16.msra.mxu0 %v8567
        %8649 = vmatprep.subr.bf16.mxu0 0
        %8650 = vmatpush1.bf16.msra.mxu0 %v8568
        %8651 = vmatprep.subr.bf16.mxu0 0
        %8652 = vmatpush1.bf16.msra.mxu0 %v8641
        %8653 = vmatprep.subr.bf16.mxu0 0
        %8654 = vmatpush1.bf16.msra.mxu0 0
        %8655 = vmatprep.subr.bf16.mxu0 0
        %8656 = vmatpush1.bf16.msra.mxu0 0
        %8657 = vmatprep.subr.bf16.mxu0 0
        %8658 = vmatpush1.bf16.msra.mxu0 0
        %8659 = vmatprep.subr.bf16.mxu0 0
        %8660 = vmatpush1.bf16.msra.mxu0 0
        %8661 = vmatprep.subr.bf16.mxu0 0
        %8662 = vmatpush1.bf16.msra.mxu0 0
        %8663 = vmatprep.subr.bf16.mxu0 0
        %8664 = vmatpush1.bf16.msra.mxu0 0
        %8665 = vmatprep.subr.bf16.mxu0 0
        %8666 = vmatpush1.bf16.msra.mxu0 0
        %8667 = vmatprep.subr.bf16.mxu0 0
        %8668 = vmatpush1.bf16.msra.mxu0 0
        %8669 = vmatprep.subr.bf16.mxu0 0
        %8670 = vmatpush1.bf16.msra.mxu0 0
        %8671 = vmatprep.subr.bf16.mxu0 0
        %8672 = vmatpush1.bf16.msra.mxu0 0
        %8673 = vmatprep.subr.bf16.mxu0 0
        %8674 = vmatpush1.bf16.msra.mxu0 0
        %8675 = vmatprep.mubr.bf16.mxu0 0
        %8676 = vmatmul.mubr.bf16.gmra.mrb[0].mxu0 %v8614
        %v8677 = vpop.f32.mrb[0].mxu0
        %v8678 = vadd.f32 0.0, %v8677
        %v8679 = vpop.f32.mrb[0].mxu0
        %v8680 = vpop.f32.mrb[0].mxu0
        %v8681 = vadd.f32 0.0, %v8680
        %v8682 = vpop.f32.mrb[0].mxu0
        %8683 = vmatprep.mubr.bf16.mxu0 0
        %8684 = vmatmul.mubr.bf16.gmra.mrb[0].mxu0 %v8617
        %v8685 = vpop.f32.mrb[0].mxu0
        %v8686 = vadd.f32 0.0, %v8685
        %v8687 = vpop.f32.mrb[0].mxu0
        %v8688 = vpop.f32.mrb[0].mxu0
        %v8689 = vadd.f32 0.0, %v8688
        %v8690 = vpop.f32.mrb[0].mxu0
        %8691 = vmatprep.mubr.bf16.mxu0 0
        %8692 = vmatmul.mubr.bf16.gmra.mrb[0].mxu0 %v8620
        %v8693 = vpop.f32.mrb[0].mxu0
        %v8694 = vadd.f32 0.0, %v8693
        %v8695 = vpop.f32.mrb[0].mxu0
        %v8696 = vpop.f32.mrb[0].mxu0
        %v8697 = vadd.f32 0.0, %v8696
        %v8698 = vpop.f32.mrb[0].mxu0
        %8699 = vmatprep.mubr.bf16.mxu0 0
        %8700 = vmatmul.mubr.bf16.gmra.mrb[0].mxu0 %v8623
        %v8701 = vpop.f32.mrb[0].mxu0
        %v8702 = vadd.f32 0.0, %v8701
        %v8703 = vpop.f32.mrb[0].mxu0
        %v8704 = vpop.f32.mrb[0].mxu0
        %v8705 = vadd.f32 0.0, %v8704
        %v8706 = vpop.f32.mrb[0].mxu0
        %8707 = vmatprep.mubr.bf16.mxu0 0
        %8708 = vmatmul.mubr.bf16.gmra.mrb[0].mxu0 %v8626
        %v8709 = vpop.f32.mrb[0].mxu0
        %v8710 = vadd.f32 0.0, %v8709
        %v8711 = vpop.f32.mrb[0].mxu0
        %v8712 = vpop.f32.mrb[0].mxu0
        %v8713 = vadd.f32 0.0, %v8712
        %v8714 = vpop.f32.mrb[0].mxu0
        %8715 = vmatprep.mubr.bf16.mxu0 0
        %8716 = vmatmul.mubr.bf16.gmra.mrb[0].mxu0 %v8629
        %v8717 = vpop.f32.mrb[0].mxu0
        %v8718 = vadd.f32 0.0, %v8717
        %v8719 = vpop.f32.mrb[0].mxu0
        %v8720 = vpop.f32.mrb[0].mxu0
        %v8721 = vadd.f32 0.0, %v8720
        %v8722 = vpop.f32.mrb[0].mxu0
        %8723 = vmatprep.mubr.bf16.mxu0 0
        %8724 = vmatmul.mubr.bf16.gmra.mrb[0].mxu0 %v8632
        %v8725 = vpop.f32.mrb[0].mxu0
        %v8726 = vadd.f32 0.0, %v8725
        %v8727 = vpop.f32.mrb[0].mxu0
        %v8728 = vpop.f32.mrb[0].mxu0
        %v8729 = vadd.f32 0.0, %v8728
        %v8730 = vpop.f32.mrb[0].mxu0
        %8731 = vmatprep.mubr.bf16.mxu0 0
        %8732 = vmatmul.mubr.bf16.gmra.mrb[0].mxu0 %v8635
        %v8733 = vpop.f32.mrb[0].mxu0
        %v8734 = vadd.f32 0.0, %v8733
        %v8735 = vpop.f32.mrb[0].mxu0
        %v8736 = vpop.f32.mrb[0].mxu0
        %v8737 = vadd.f32 0.0, %v8736
        %v8738 = vpop.f32.mrb[0].mxu0
        %8739 = vmatprep.mubr.bf16.mxu0 0
        %8740 = vmatmul.mubr.bf16.gmra.mrb[0].mxu0 %v8638
        %v8741 = vpop.f32.mrb[0].mxu0
        %v8742 = vadd.f32 0.0, %v8741
        %v8743 = vpop.f32.mrb[0].mxu0
        %v8744 = vpop.f32.mrb[0].mxu0
        %v8745 = vpop.f32.mrb[0].mxu0
        %8746 = vdwg.mxu0
        %v8747 = vpack.c.bf16 %v8681, %v8678
        %v8748 = vpack.c.bf16 %v1881, %v1880
        %v8749 = vpack.c.bf16 %v8689, %v8686
        %v8750 = vpack.c.bf16 %v1883, %v1882
        %v8751 = vpack.c.bf16 %v8697, %v8694
        %v8752 = vpack.c.bf16 %v1885, %v1884
        %v8753 = vpack.c.bf16 %v8705, %v8702
        %v8754 = vpack.c.bf16 %v1887, %v1886
        %v8755 = vpack.c.bf16 %v8713, %v8710
        %v8756 = vpack.c.bf16 %v1889, %v1888
        %v8757 = vpack.c.bf16 %v8721, %v8718
        %v8758 = vpack.c.bf16 %v1891, %v1890
        %v8759 = vpack.c.bf16 %v8729, %v8726
        %v8760 = vpack.c.bf16 %v1893, %v1892
        %v8761 = vpack.c.bf16 %v8737, %v8734
        %v8762 = vpack.c.bf16 %v1895, %v1894
        %v8763 = vpack.c.bf16 %v8742, %v8742
        %v8764 = vpack.c.bf16 %v1896, %v1896
        %v8783 = vrot.slane %v8747, 7
        %v8784 = vrot.slane %v8748, 7
        %v8785 = vrot.slane %v8749, 7
        %v8786 = vsel %vm983, %v8783, %v8785
        %v8787 = vrot.slane %v8750, 7
        %v8788 = vsel %vm983, %v8784, %v8787
        %v8789 = vrot.slane %v8751, 7
        %v8790 = vsel %vm983, %v8785, %v8789
        %v8791 = vrot.slane %v8752, 7
        %v8792 = vsel %vm983, %v8787, %v8791
        %v8793 = vrot.slane %v8753, 7
        %v8794 = vsel %vm983, %v8789, %v8793
        %v8795 = vrot.slane %v8754, 7
        %v8796 = vsel %vm983, %v8791, %v8795
        %v8797 = vrot.slane %v8755, 7
        %v8798 = vsel %vm983, %v8793, %v8797
        %v8799 = vrot.slane %v8756, 7
        %v8800 = vsel %vm983, %v8795, %v8799
        %v8801 = vrot.slane %v8757, 7
        %v8802 = vsel %vm983, %v8797, %v8801
        %v8803 = vrot.slane %v8758, 7
        %v8804 = vsel %vm983, %v8799, %v8803
        %v8805 = vrot.slane %v8759, 7
        %v8806 = vsel %vm983, %v8801, %v8805
        %v8807 = vrot.slane %v8760, 7
        %v8808 = vsel %vm983, %v8803, %v8807
        %v8809 = vrot.slane %v8761, 7
        %v8810 = vsel %vm983, %v8805, %v8809
        %v8811 = vrot.slane %v8762, 7
        %v8812 = vsel %vm983, %v8807, %v8811
        %v8813 = vrot.slane %v8763, 7
        %v8814 = vsel %vm983, %v8809, %v8813
        %v8815 = vrot.slane %v8764, 7
        %v8816 = vsel %vm983, %v8811, %v8815
        %v8825 = vsel %vm1001, 0, %v8783
        %v8828 = vsel %vm1001, 0, %v8784
        %v8830 = vsel %vm1005, %v8814, 0
        %v8833 = vsel %vm1005, %v8816, 0
        %v8834 = vld [vmem:[%s14] sm:$0xf]
        %v8835 = vld [vmem:[%s14 + $0x4] sm:$0xf]
        %v8836 = vld [vmem:[%s14 + $0x8] sm:$0xf]
        %v8837 = vld [vmem:[%s14 + $0xc] sm:$0xf]
        %v8838 = vld [vmem:[%s14 + $0x10] sm:$0xf]
        %v8839 = vld [vmem:[%s14 + $0x14] sm:$0xf]
        %v8840 = vld [vmem:[%s14 + $0x18] sm:$0xf]
        %v8841 = vld [vmem:[%s14 + $0x1c] sm:$0xf]
        %v8842 = vld [vmem:[%s14 + $0x20] sm:$0xf]
        %v8843 = vld [vmem:[%s14 + $0x24] sm:$0xf]
        %v8844 = vld [vmem:[%s14 + $0x28] sm:$0xf]
        %v8845 = vld [vmem:[%s14 + $0x2c] sm:$0xf]
        %v8846 = vld [vmem:[%s14 + $0x30] sm:$0xf]
        %v8847 = vld [vmem:[%s14 + $0x34] sm:$0xf]
        %v8848 = vld [vmem:[%s14 + $0x38] sm:$0xf]
        %v8849 = vld [vmem:[%s14 + $0x3c] sm:$0xf]
        %v8850 = vld [vmem:[%s14 + $0x40] sm:$0xf]
        %v8851 = vld [vmem:[%s14 + $0x44] sm:$0xf]
        %v8852 = vld [vmem:[%s14 + $0x48] sm:$0xf]
        %v8853 = vld [vmem:[%s14 + $0x4c] sm:$0xf]
        %v8854 = vld [vmem:[%s14 + $0x50] sm:$0xf]
        %v8855 = vld [vmem:[%s14 + $0x54] sm:$0xf]
        %v8856 = vld [vmem:[%s14 + $0x58] sm:$0xf]
        %v8857 = vld [vmem:[%s14 + $0x5c] sm:$0xf]
        %s8858 = scalar_lea.vmem %s14, 96
        %v8859 = vld [vmem:[%s8858] sm:$0xf]
        %v8860 = vld [vmem:[%s8858 + $0x4] sm:$0xf]
        %v8861 = vld [vmem:[%s8858 + $0x8] sm:$0xf]
        %v8862 = vld [vmem:[%s8858 + $0xc] sm:$0xf]
        %v8863 = vld [vmem:[%s8858 + $0x10] sm:$0xf]
        %v8864 = vld [vmem:[%s8858 + $0x14] sm:$0xf]
        %v8865 = vld [vmem:[%s8858 + $0x18] sm:$0xf]
        %v8866 = vld [vmem:[%s8858 + $0x1c] sm:$0xf]
        %v8867 = vld [vmem:[%s8858 + $0x20] sm:$0xf]
        %v8868 = vld [vmem:[%s8858 + $0x24] sm:$0xf]
        %v8869 = vld [vmem:[%s8858 + $0x28] sm:$0xf]
        %v8870 = vld [vmem:[%s8858 + $0x2c] sm:$0xf]
        %v8871 = vld [vmem:[%s8858 + $0x30] sm:$0xf]
        %v8872 = vld [vmem:[%s8858 + $0x34] sm:$0xf]
        %v8873 = vld [vmem:[%s8858 + $0x38] sm:$0xf]
        %v8874 = vld [vmem:[%s8858 + $0x3c] sm:$0xf]
        %v8875 = vld [vmem:[%s8858 + $0x40] sm:$0xf]
        %v8876 = vld [vmem:[%s8858 + $0x44] sm:$0xf]
        %v8877 = vld [vmem:[%s8858 + $0x48] sm:$0xf]
        %v8878 = vld [vmem:[%s8858 + $0x4c] sm:$0xf]
        %v8879 = vld [vmem:[%s8858 + $0x50] sm:$0xf]
        %v8880 = vld [vmem:[%s8858 + $0x54] sm:$0xf]
        %v8881 = vld [vmem:[%s8858 + $0x58] sm:$0xf]
        %v8882 = vld [vmem:[%s8858 + $0x5c] sm:$0xf]
        %v8883 = vshrl.u32 %v8825, 16
        %v8885 = vshll.u32 %v8825, 16
        %v8887 = vrot.slane %v8885, 1
        %v8888 = vor.u32 %v8883, %v8887
        %v8890 = vshll.u32 %v8786, 16
        %v8892 = vrot.slane %v8890, 1
        %v8893 = vsel %vm1011, %v8888, %v8892
        %v8894 = vshrl.u32 %v8828, 16
        %v8896 = vshll.u32 %v8828, 16
        %v8898 = vrot.slane %v8896, 1
        %v8899 = vor.u32 %v8894, %v8898
        %v8901 = vshll.u32 %v8788, 16
        %v8903 = vrot.slane %v8901, 1
        %v8904 = vsel %vm1011, %v8899, %v8903
        %v8905 = vshrl.u32 %v8786, 16
        %v8907 = vor.u32 %v8905, %v8892
        %v8909 = vshll.u32 %v8790, 16
        %v8911 = vrot.slane %v8909, 1
        %v8912 = vsel %vm1011, %v8907, %v8911
        %v8913 = vshrl.u32 %v8788, 16
        %v8915 = vor.u32 %v8913, %v8903
        %v8917 = vshll.u32 %v8792, 16
        %v8919 = vrot.slane %v8917, 1
        %v8920 = vsel %vm1011, %v8915, %v8919
        %v8921 = vshrl.u32 %v8790, 16
        %v8923 = vor.u32 %v8921, %v8911
        %v8925 = vshll.u32 %v8794, 16
        %v8927 = vrot.slane %v8925, 1
        %v8928 = vsel %vm1011, %v8923, %v8927
        %v8929 = vshrl.u32 %v8792, 16
        %v8931 = vor.u32 %v8929, %v8919
        %v8933 = vshll.u32 %v8796, 16
        %v8935 = vrot.slane %v8933, 1
        %v8936 = vsel %vm1011, %v8931, %v8935
        %v8937 = vshrl.u32 %v8794, 16
        %v8939 = vor.u32 %v8937, %v8927
        %v8941 = vshll.u32 %v8798, 16
        %v8943 = vrot.slane %v8941, 1
        %v8944 = vsel %vm1011, %v8939, %v8943
        %v8945 = vshrl.u32 %v8796, 16
        %v8947 = vor.u32 %v8945, %v8935
        %v8949 = vshll.u32 %v8800, 16
        %v8951 = vrot.slane %v8949, 1
        %v8952 = vsel %vm1011, %v8947, %v8951
        %v8953 = vshrl.u32 %v8798, 16
        %v8955 = vor.u32 %v8953, %v8943
        %v8957 = vshll.u32 %v8802, 16
        %v8959 = vrot.slane %v8957, 1
        %v8960 = vsel %vm1011, %v8955, %v8959
        %v8961 = vshrl.u32 %v8800, 16
        %v8963 = vor.u32 %v8961, %v8951
        %v8965 = vshll.u32 %v8804, 16
        %v8967 = vrot.slane %v8965, 1
        %v8968 = vsel %vm1011, %v8963, %v8967
        %v8969 = vshrl.u32 %v8802, 16
        %v8971 = vor.u32 %v8969, %v8959
        %v8973 = vshll.u32 %v8806, 16
        %v8975 = vrot.slane %v8973, 1
        %v8976 = vsel %vm1011, %v8971, %v8975
        %v8977 = vshrl.u32 %v8804, 16
        %v8979 = vor.u32 %v8977, %v8967
        %v8981 = vshll.u32 %v8808, 16
        %v8983 = vrot.slane %v8981, 1
        %v8984 = vsel %vm1011, %v8979, %v8983
        %v8985 = vshrl.u32 %v8806, 16
        %v8987 = vor.u32 %v8985, %v8975
        %v8989 = vshll.u32 %v8810, 16
        %v8991 = vrot.slane %v8989, 1
        %v8992 = vsel %vm1011, %v8987, %v8991
        %v8993 = vshrl.u32 %v8808, 16
        %v8995 = vor.u32 %v8993, %v8983
        %v8997 = vshll.u32 %v8812, 16
        %v8999 = vrot.slane %v8997, 1
        %v9000 = vsel %vm1011, %v8995, %v8999
        %v9001 = vshrl.u32 %v8810, 16
        %v9003 = vor.u32 %v9001, %v8991
        %v9004 = vshll.u32 %v8830, 16
        %v9006 = vrot.slane %v9004, 1
        %v9007 = vsel %vm1011, %v9003, %v9006
        %v9008 = vshrl.u32 %v8812, 16
        %v9010 = vor.u32 %v9008, %v8999
        %v9011 = vshll.u32 %v8833, 16
        %v9013 = vrot.slane %v9011, 1
        %v9014 = vsel %vm1011, %v9010, %v9013
        %v9015 = vshrl.u32 %v8830, 16
        %v9017 = vor.u32 %v9015, %v9006
        %v9018 = vshrl.u32 %v8833, 16
        %v9020 = vor.u32 %v9018, %v9013
        %v9054 = vunpack.c.l.b16 %v8859
        %v9055 = vunpack.c.l.b16 %v8860
        %v9056 = vunpack.c.l.b16 %v8861
        %v9057 = vunpack.c.l.b16 %v8862
        %v9058 = vunpack.c.l.b16 %v8863
        %v9059 = vunpack.c.l.b16 %v8864
        %v9060 = vunpack.c.l.b16 %v8865
        %v9061 = vunpack.c.l.b16 %v8866
        %v9062 = vunpack.c.l.b16 %v8867
        %v9063 = vunpack.c.l.b16 %v8868
        %v9064 = vunpack.c.l.b16 %v8869
        %v9065 = vunpack.c.l.b16 %v8870
        %v9066 = vunpack.c.l.b16 %v8871
        %v9067 = vunpack.c.l.b16 %v8872
        %v9068 = vunpack.c.l.b16 %v8873
        %v9069 = vunpack.c.l.b16 %v8874
        %v9070 = vunpack.c.l.b16 %v8875
        %v9071 = vunpack.c.l.b16 %v8876
        %v9072 = vunpack.c.l.b16 %v8877
        %v9073 = vunpack.c.l.b16 %v8878
        %v9074 = vunpack.c.l.b16 %v8879
        %v9075 = vunpack.c.l.b16 %v8880
        %v9076 = vunpack.c.l.b16 %v8881
        %v9077 = vunpack.c.l.b16 %v8882
        %v9078 = vpack.c.b16 %v9055, %v9054
        %v9079 = vpack.c.b16 %v9057, %v9056
        %v9080 = vpack.c.b16 %v9059, %v9058
        %v9081 = vpack.c.b16 %v9061, %v9060
        %v9082 = vpack.c.b16 %v9063, %v9062
        %v9083 = vpack.c.b16 %v9065, %v9064
        %v9084 = vpack.c.b16 %v9067, %v9066
        %v9085 = vpack.c.b16 %v9069, %v9068
        %v9086 = vpack.c.b16 %v9071, %v9070
        %v9087 = vpack.c.b16 %v9073, %v9072
        %v9088 = vpack.c.b16 %v9075, %v9074
        %v9089 = vpack.c.b16 %v9077, %v9076
        %v9103 = vsel %vm2237, %v8904, 0
        %v9106 = vsel %vm2237, %v8920, 0
        %v9109 = vsel %vm2237, %v8936, 0
        %v9112 = vsel %vm2237, %v8952, 0
        %v9115 = vsel %vm2237, %v8968, 0
        %v9118 = vsel %vm2237, %v8984, 0
        %v9121 = vsel %vm2237, %v9000, 0
        %v9124 = vsel %vm2237, %v9014, 0
        %v9127 = vsel %vm2237, %v9020, 0
        %9129 = vmatprep.subr.bf16.mxu0 0
        %9130 = vmatpush1.bf16.msra.mxu0 %v9078
        %9131 = vmatprep.subr.bf16.mxu0 0
        %9132 = vmatpush1.bf16.msra.mxu0 %v9079
        %9133 = vmatprep.subr.bf16.mxu0 0
        %9134 = vmatpush1.bf16.msra.mxu0 %v9080
        %9135 = vmatprep.subr.bf16.mxu0 0
        %9136 = vmatpush1.bf16.msra.mxu0 %v9081
        %9137 = vmatprep.subr.bf16.mxu0 0
        %9138 = vmatpush1.bf16.msra.mxu0 %v9082
        %9139 = vmatprep.subr.bf16.mxu0 0
        %9140 = vmatpush1.bf16.msra.mxu0 %v9083
        %9141 = vmatprep.subr.bf16.mxu0 0
        %9142 = vmatpush1.bf16.msra.mxu0 %v9084
        %9143 = vmatprep.subr.bf16.mxu0 0
        %9144 = vmatpush1.bf16.msra.mxu0 %v9085
        %9145 = vmatprep.subr.bf16.mxu0 0
        %9146 = vmatpush1.bf16.msra.mxu0 %v9086
        %9147 = vmatprep.subr.bf16.mxu0 0
        %9148 = vmatpush1.bf16.msra.mxu0 %v9087
        %9149 = vmatprep.subr.bf16.mxu0 0
        %9150 = vmatpush1.bf16.msra.mxu0 %v9088
        %9151 = vmatprep.subr.bf16.mxu0 0
        %9152 = vmatpush1.bf16.msra.mxu0 %v9089
        %9153 = vmatprep.subr.bf16.mxu0 0
        %9154 = vmatpush1.bf16.msra.mxu0 0
        %9155 = vmatprep.subr.bf16.mxu0 0
        %9156 = vmatpush1.bf16.msra.mxu0 0
        %9157 = vmatprep.subr.bf16.mxu0 0
        %9158 = vmatpush1.bf16.msra.mxu0 0
        %9159 = vmatprep.subr.bf16.mxu0 0
        %9160 = vmatpush1.bf16.msra.mxu0 0
        %9161 = vmatprep.mubr.bf16.mxu0 %v9103
        %9162 = vmatmul.mubr.bf16.gmra.mrb[0].mxu0 %v8893
        %v9163 = vpop.f32.mrb[0].mxu0
        %v9164 = vadd.f32 0.0, %v9163
        %v9165 = vpop.f32.mrb[0].mxu0
        %v9166 = vpop.f32.mrb[0].mxu0
        %v9167 = vadd.f32 0.0, %v9166
        %v9168 = vpop.f32.mrb[0].mxu0
        %9169 = vmatprep.mubr.bf16.mxu0 %v9106
        %9170 = vmatmul.mubr.bf16.gmra.mrb[0].mxu0 %v8912
        %v9171 = vpop.f32.mrb[0].mxu0
        %v9172 = vadd.f32 0.0, %v9171
        %v9173 = vpop.f32.mrb[0].mxu0
        %v9174 = vpop.f32.mrb[0].mxu0
        %v9175 = vadd.f32 0.0, %v9174
        %v9176 = vpop.f32.mrb[0].mxu0
        %9177 = vmatprep.mubr.bf16.mxu0 %v9109
        %9178 = vmatmul.mubr.bf16.gmra.mrb[0].mxu0 %v8928
        %v9179 = vpop.f32.mrb[0].mxu0
        %v9180 = vadd.f32 0.0, %v9179
        %v9181 = vpop.f32.mrb[0].mxu0
        %v9182 = vpop.f32.mrb[0].mxu0
        %v9183 = vadd.f32 0.0, %v9182
        %v9184 = vpop.f32.mrb[0].mxu0
        %9185 = vmatprep.mubr.bf16.mxu0 %v9112
        %9186 = vmatmul.mubr.bf16.gmra.mrb[0].mxu0 %v8944
        %v9187 = vpop.f32.mrb[0].mxu0
        %v9188 = vadd.f32 0.0, %v9187
        %v9189 = vpop.f32.mrb[0].mxu0
        %v9190 = vpop.f32.mrb[0].mxu0
        %v9191 = vadd.f32 0.0, %v9190
        %v9192 = vpop.f32.mrb[0].mxu0
        %9193 = vmatprep.mubr.bf16.mxu0 %v9115
        %9194 = vmatmul.mubr.bf16.gmra.mrb[0].mxu0 %v8960
        %v9195 = vpop.f32.mrb[0].mxu0
        %v9196 = vadd.f32 0.0, %v9195
        %v9197 = vpop.f32.mrb[0].mxu0
        %v9198 = vpop.f32.mrb[0].mxu0
        %v9199 = vadd.f32 0.0, %v9198
        %v9200 = vpop.f32.mrb[0].mxu0
        %9201 = vmatprep.mubr.bf16.mxu0 %v9118
        %9202 = vmatmul.mubr.bf16.gmra.mrb[0].mxu0 %v8976
        %v9203 = vpop.f32.mrb[0].mxu0
        %v9204 = vadd.f32 0.0, %v9203
        %v9205 = vpop.f32.mrb[0].mxu0
        %v9206 = vpop.f32.mrb[0].mxu0
        %v9207 = vadd.f32 0.0, %v9206
        %v9208 = vpop.f32.mrb[0].mxu0
        %9209 = vmatprep.mubr.bf16.mxu0 %v9121
        %9210 = vmatmul.mubr.bf16.gmra.mrb[0].mxu0 %v8992
        %v9211 = vpop.f32.mrb[0].mxu0
        %v9212 = vadd.f32 0.0, %v9211
        %v9213 = vpop.f32.mrb[0].mxu0
        %v9214 = vpop.f32.mrb[0].mxu0
        %v9215 = vadd.f32 0.0, %v9214
        %v9216 = vpop.f32.mrb[0].mxu0
        %9217 = vmatprep.mubr.bf16.mxu0 %v9124
        %9218 = vmatmul.mubr.bf16.gmra.mrb[0].mxu0 %v9007
        %v9219 = vpop.f32.mrb[0].mxu0
        %v9220 = vadd.f32 0.0, %v9219
        %v9221 = vpop.f32.mrb[0].mxu0
        %v9222 = vpop.f32.mrb[0].mxu0
        %v9223 = vadd.f32 0.0, %v9222
        %v9224 = vpop.f32.mrb[0].mxu0
        %9225 = vmatprep.mubr.bf16.mxu0 %v9127
        %9226 = vmatmul.mubr.bf16.gmra.mrb[0].mxu0 %v9017
        %v9227 = vpop.f32.mrb[0].mxu0
        %v9228 = vadd.f32 0.0, %v9227
        %v9229 = vpop.f32.mrb[0].mxu0
        %v9230 = vpop.f32.mrb[0].mxu0
        %v9231 = vpop.f32.mrb[0].mxu0
        %9232 = vdwg.mxu0
        %v9257 = vunpack.c.l.b16 %v8834
        %v9258 = vunpack.c.l.b16 %v8835
        %v9259 = vunpack.c.l.b16 %v8836
        %v9260 = vunpack.c.l.b16 %v8837
        %v9261 = vunpack.c.l.b16 %v8838
        %v9262 = vunpack.c.l.b16 %v8839
        %v9263 = vunpack.c.l.b16 %v8840
        %v9264 = vunpack.c.l.b16 %v8841
        %v9265 = vunpack.c.l.b16 %v8842
        %v9266 = vunpack.c.l.b16 %v8843
        %v9267 = vunpack.c.l.b16 %v8844
        %v9268 = vunpack.c.l.b16 %v8845
        %v9269 = vunpack.c.l.b16 %v8846
        %v9270 = vunpack.c.l.b16 %v8847
        %v9271 = vunpack.c.l.b16 %v8848
        %v9272 = vunpack.c.l.b16 %v8849
        %v9273 = vunpack.c.l.b16 %v8850
        %v9274 = vunpack.c.l.b16 %v8851
        %v9275 = vunpack.c.l.b16 %v8852
        %v9276 = vunpack.c.l.b16 %v8853
        %v9277 = vunpack.c.l.b16 %v8854
        %v9278 = vunpack.c.l.b16 %v8855
        %v9279 = vunpack.c.l.b16 %v8856
        %v9280 = vunpack.c.l.b16 %v8857
        %v9281 = vpack.c.b16 %v9258, %v9257
        %v9282 = vpack.c.b16 %v9260, %v9259
        %v9283 = vpack.c.b16 %v9262, %v9261
        %v9284 = vpack.c.b16 %v9264, %v9263
        %v9285 = vpack.c.b16 %v9266, %v9265
        %v9286 = vpack.c.b16 %v9268, %v9267
        %v9287 = vpack.c.b16 %v9270, %v9269
        %v9288 = vpack.c.b16 %v9272, %v9271
        %v9289 = vpack.c.b16 %v9274, %v9273
        %v9290 = vpack.c.b16 %v9276, %v9275
        %v9291 = vpack.c.b16 %v9278, %v9277
        %v9292 = vpack.c.b16 %v9280, %v9279
        %v9305 = vsel %vm2237, %v8828, 0
        %v9307 = vsel %vm2237, %v8788, 0
        %v9309 = vsel %vm2237, %v8792, 0
        %v9311 = vsel %vm2237, %v8796, 0
        %v9313 = vsel %vm2237, %v8800, 0
        %v9315 = vsel %vm2237, %v8804, 0
        %v9317 = vsel %vm2237, %v8808, 0
        %v9319 = vsel %vm2237, %v8812, 0
        %v9321 = vsel %vm2237, %v8833, 0
        %9323 = vmatprep.subr.bf16.mxu0 0
        %9324 = vmatpush1.bf16.msra.mxu0 %v9281
        %9325 = vmatprep.subr.bf16.mxu0 0
        %9326 = vmatpush1.bf16.msra.mxu0 %v9282
        %9327 = vmatprep.subr.bf16.mxu0 0
        %9328 = vmatpush1.bf16.msra.mxu0 %v9283
        %9329 = vmatprep.subr.bf16.mxu0 0
        %9330 = vmatpush1.bf16.msra.mxu0 %v9284
        %9331 = vmatprep.subr.bf16.mxu0 0
        %9332 = vmatpush1.bf16.msra.mxu0 %v9285
        %9333 = vmatprep.subr.bf16.mxu0 0
        %9334 = vmatpush1.bf16.msra.mxu0 %v9286
        %9335 = vmatprep.subr.bf16.mxu0 0
        %9336 = vmatpush1.bf16.msra.mxu0 %v9287
        %9337 = vmatprep.subr.bf16.mxu0 0
        %9338 = vmatpush1.bf16.msra.mxu0 %v9288
        %9339 = vmatprep.subr.bf16.mxu0 0
        %9340 = vmatpush1.bf16.msra.mxu0 %v9289
        %9341 = vmatprep.subr.bf16.mxu0 0
        %9342 = vmatpush1.bf16.msra.mxu0 %v9290
        %9343 = vmatprep.subr.bf16.mxu0 0
        %9344 = vmatpush1.bf16.msra.mxu0 %v9291
        %9345 = vmatprep.subr.bf16.mxu0 0
        %9346 = vmatpush1.bf16.msra.mxu0 %v9292
        %9347 = vmatprep.subr.bf16.mxu0 0
        %9348 = vmatpush1.bf16.msra.mxu0 0
        %9349 = vmatprep.subr.bf16.mxu0 0
        %9350 = vmatpush1.bf16.msra.mxu0 0
        %9351 = vmatprep.subr.bf16.mxu0 0
        %9352 = vmatpush1.bf16.msra.mxu0 0
        %9353 = vmatprep.subr.bf16.mxu0 0
        %9354 = vmatpush1.bf16.msra.mxu0 0
        %9355 = vmatprep.mubr.bf16.mxu0 %v9305
        %9356 = vmatmul.mubr.bf16.gmra.mrb[0].mxu0 %v8825
        %v9357 = vpop.f32.mrb[0].mxu0
        %v9358 = vadd.f32 %v9164, %v9357
        %v9359 = vpop.f32.mrb[0].mxu0
        %v9360 = vpop.f32.mrb[0].mxu0
        %v9361 = vadd.f32 %v9167, %v9360
        %v9362 = vpop.f32.mrb[0].mxu0
        %9363 = vmatprep.mubr.bf16.mxu0 %v9307
        %9364 = vmatmul.mubr.bf16.gmra.mrb[0].mxu0 %v8786
        %v9365 = vpop.f32.mrb[0].mxu0
        %v9366 = vadd.f32 %v9172, %v9365
        %v9367 = vpop.f32.mrb[0].mxu0
        %v9368 = vpop.f32.mrb[0].mxu0
        %v9369 = vadd.f32 %v9175, %v9368
        %v9370 = vpop.f32.mrb[0].mxu0
        %9371 = vmatprep.mubr.bf16.mxu0 %v9309
        %9372 = vmatmul.mubr.bf16.gmra.mrb[0].mxu0 %v8790
        %v9373 = vpop.f32.mrb[0].mxu0
        %v9374 = vadd.f32 %v9180, %v9373
        %v9375 = vpop.f32.mrb[0].mxu0
        %v9376 = vpop.f32.mrb[0].mxu0
        %v9377 = vadd.f32 %v9183, %v9376
        %v9378 = vpop.f32.mrb[0].mxu0
        %9379 = vmatprep.mubr.bf16.mxu0 %v9311
        %9380 = vmatmul.mubr.bf16.gmra.mrb[0].mxu0 %v8794
        %v9381 = vpop.f32.mrb[0].mxu0
        %v9382 = vadd.f32 %v9188, %v9381
        %v9383 = vpop.f32.mrb[0].mxu0
        %v9384 = vpop.f32.mrb[0].mxu0
        %v9385 = vadd.f32 %v9191, %v9384
        %v9386 = vpop.f32.mrb[0].mxu0
        %9387 = vmatprep.mubr.bf16.mxu0 %v9313
        %9388 = vmatmul.mubr.bf16.gmra.mrb[0].mxu0 %v8798
        %v9389 = vpop.f32.mrb[0].mxu0
        %v9390 = vadd.f32 %v9196, %v9389
        %v9391 = vpop.f32.mrb[0].mxu0
        %v9392 = vpop.f32.mrb[0].mxu0
        %v9393 = vadd.f32 %v9199, %v9392
        %v9394 = vpop.f32.mrb[0].mxu0
        %9395 = vmatprep.mubr.bf16.mxu0 %v9315
        %9396 = vmatmul.mubr.bf16.gmra.mrb[0].mxu0 %v8802
        %v9397 = vpop.f32.mrb[0].mxu0
        %v9398 = vadd.f32 %v9204, %v9397
        %v9399 = vpop.f32.mrb[0].mxu0
        %v9400 = vpop.f32.mrb[0].mxu0
        %v9401 = vadd.f32 %v9207, %v9400
        %v9402 = vpop.f32.mrb[0].mxu0
        %9403 = vmatprep.mubr.bf16.mxu0 %v9317
        %9404 = vmatmul.mubr.bf16.gmra.mrb[0].mxu0 %v8806
        %v9405 = vpop.f32.mrb[0].mxu0
        %v9406 = vadd.f32 %v9212, %v9405
        %v9407 = vpop.f32.mrb[0].mxu0
        %v9408 = vpop.f32.mrb[0].mxu0
        %v9409 = vadd.f32 %v9215, %v9408
        %v9410 = vpop.f32.mrb[0].mxu0
        %9411 = vmatprep.mubr.bf16.mxu0 %v9319
        %9412 = vmatmul.mubr.bf16.gmra.mrb[0].mxu0 %v8810
        %v9413 = vpop.f32.mrb[0].mxu0
        %v9414 = vadd.f32 %v9220, %v9413
        %v9415 = vpop.f32.mrb[0].mxu0
        %v9416 = vpop.f32.mrb[0].mxu0
        %v9417 = vadd.f32 %v9223, %v9416
        %v9418 = vpop.f32.mrb[0].mxu0
        %9419 = vmatprep.mubr.bf16.mxu0 %v9321
        %9420 = vmatmul.mubr.bf16.gmra.mrb[0].mxu0 %v8830
        %v9421 = vpop.f32.mrb[0].mxu0
        %v9422 = vadd.f32 %v9228, %v9421
        %v9423 = vpop.f32.mrb[0].mxu0
        %v9424 = vpop.f32.mrb[0].mxu0
        %v9425 = vpop.f32.mrb[0].mxu0
        %9426 = vdwg.mxu0
        %s9427 = scalar_lea.vmem %s14, 192
        %v9428 = vld [vmem:[%s9427] sm:$0xf]
        %v9429 = vld [vmem:[%s9427 + $0x4] sm:$0xf]
        %v9430 = vld [vmem:[%s9427 + $0x8] sm:$0xf]
        %v9431 = vld [vmem:[%s9427 + $0xc] sm:$0xf]
        %v9432 = vld [vmem:[%s9427 + $0x10] sm:$0xf]
        %v9433 = vld [vmem:[%s9427 + $0x14] sm:$0xf]
        %v9434 = vld [vmem:[%s9427 + $0x18] sm:$0xf]
        %v9435 = vld [vmem:[%s9427 + $0x1c] sm:$0xf]
        %v9436 = vld [vmem:[%s9427 + $0x20] sm:$0xf]
        %v9437 = vld [vmem:[%s9427 + $0x24] sm:$0xf]
        %v9438 = vld [vmem:[%s9427 + $0x28] sm:$0xf]
        %v9439 = vld [vmem:[%s9427 + $0x2c] sm:$0xf]
        %v9440 = vld [vmem:[%s9427 + $0x30] sm:$0xf]
        %v9441 = vld [vmem:[%s9427 + $0x34] sm:$0xf]
        %v9442 = vld [vmem:[%s9427 + $0x38] sm:$0xf]
        %v9443 = vld [vmem:[%s9427 + $0x3c] sm:$0xf]
        %v9444 = vld [vmem:[%s9427 + $0x40] sm:$0xf]
        %v9445 = vld [vmem:[%s9427 + $0x44] sm:$0xf]
        %v9446 = vld [vmem:[%s9427 + $0x48] sm:$0xf]
        %v9447 = vld [vmem:[%s9427 + $0x4c] sm:$0xf]
        %v9448 = vld [vmem:[%s9427 + $0x50] sm:$0xf]
        %v9449 = vld [vmem:[%s9427 + $0x54] sm:$0xf]
        %v9450 = vld [vmem:[%s9427 + $0x58] sm:$0xf]
        %v9451 = vld [vmem:[%s9427 + $0x5c] sm:$0xf]
        %v9476 = vunpack.c.l.b16 %v9428
        %v9477 = vunpack.c.l.b16 %v9429
        %v9478 = vunpack.c.l.b16 %v9430
        %v9479 = vunpack.c.l.b16 %v9431
        %v9480 = vunpack.c.l.b16 %v9432
        %v9481 = vunpack.c.l.b16 %v9433
        %v9482 = vunpack.c.l.b16 %v9434
        %v9483 = vunpack.c.l.b16 %v9435
        %v9484 = vunpack.c.l.b16 %v9436
        %v9485 = vunpack.c.l.b16 %v9437
        %v9486 = vunpack.c.l.b16 %v9438
        %v9487 = vunpack.c.l.b16 %v9439
        %v9488 = vunpack.c.l.b16 %v9440
        %v9489 = vunpack.c.l.b16 %v9441
        %v9490 = vunpack.c.l.b16 %v9442
        %v9491 = vunpack.c.l.b16 %v9443
        %v9492 = vunpack.c.l.b16 %v9444
        %v9493 = vunpack.c.l.b16 %v9445
        %v9494 = vunpack.c.l.b16 %v9446
        %v9495 = vunpack.c.l.b16 %v9447
        %v9496 = vunpack.c.l.b16 %v9448
        %v9497 = vunpack.c.l.b16 %v9449
        %v9498 = vunpack.c.l.b16 %v9450
        %v9499 = vunpack.c.l.b16 %v9451
        %v9500 = vpack.c.b16 %v9477, %v9476
        %v9501 = vpack.c.b16 %v9479, %v9478
        %v9502 = vpack.c.b16 %v9481, %v9480
        %v9503 = vpack.c.b16 %v9483, %v9482
        %v9504 = vpack.c.b16 %v9485, %v9484
        %v9505 = vpack.c.b16 %v9487, %v9486
        %v9506 = vpack.c.b16 %v9489, %v9488
        %v9507 = vpack.c.b16 %v9491, %v9490
        %v9508 = vpack.c.b16 %v9493, %v9492
        %v9509 = vpack.c.b16 %v9495, %v9494
        %v9510 = vpack.c.b16 %v9497, %v9496
        %v9511 = vpack.c.b16 %v9499, %v9498
        %v9525 = vsel %vm2237, %v8748, 0
        %v9528 = vsel %vm2237, %v8750, 0
        %v9531 = vsel %vm2237, %v8752, 0
        %v9534 = vsel %vm2237, %v8754, 0
        %v9537 = vsel %vm2237, %v8756, 0
        %v9540 = vsel %vm2237, %v8758, 0
        %v9543 = vsel %vm2237, %v8760, 0
        %v9546 = vsel %vm2237, %v8762, 0
        %v9549 = vsel %vm2237, %v8764, 0
        %9551 = vmatprep.subr.bf16.mxu0 0
        %9552 = vmatpush1.bf16.msra.mxu0 %v9500
        %9553 = vmatprep.subr.bf16.mxu0 0
        %9554 = vmatpush1.bf16.msra.mxu0 %v9501
        %9555 = vmatprep.subr.bf16.mxu0 0
        %9556 = vmatpush1.bf16.msra.mxu0 %v9502
        %9557 = vmatprep.subr.bf16.mxu0 0
        %9558 = vmatpush1.bf16.msra.mxu0 %v9503
        %9559 = vmatprep.subr.bf16.mxu0 0
        %9560 = vmatpush1.bf16.msra.mxu0 %v9504
        %9561 = vmatprep.subr.bf16.mxu0 0
        %9562 = vmatpush1.bf16.msra.mxu0 %v9505
        %9563 = vmatprep.subr.bf16.mxu0 0
        %9564 = vmatpush1.bf16.msra.mxu0 %v9506
        %9565 = vmatprep.subr.bf16.mxu0 0
        %9566 = vmatpush1.bf16.msra.mxu0 %v9507
        %9567 = vmatprep.subr.bf16.mxu0 0
        %9568 = vmatpush1.bf16.msra.mxu0 %v9508
        %9569 = vmatprep.subr.bf16.mxu0 0
        %9570 = vmatpush1.bf16.msra.mxu0 %v9509
        %9571 = vmatprep.subr.bf16.mxu0 0
        %9572 = vmatpush1.bf16.msra.mxu0 %v9510
        %9573 = vmatprep.subr.bf16.mxu0 0
        %9574 = vmatpush1.bf16.msra.mxu0 %v9511
        %9575 = vmatprep.subr.bf16.mxu0 0
        %9576 = vmatpush1.bf16.msra.mxu0 0
        %9577 = vmatprep.subr.bf16.mxu0 0
        %9578 = vmatpush1.bf16.msra.mxu0 0
        %9579 = vmatprep.subr.bf16.mxu0 0
        %9580 = vmatpush1.bf16.msra.mxu0 0
        %9581 = vmatprep.subr.bf16.mxu0 0
        %9582 = vmatpush1.bf16.msra.mxu0 0
        %9583 = vmatprep.mubr.bf16.mxu0 %v9525
        %9584 = vmatmul.mubr.bf16.gmra.mrb[0].mxu0 %v8747
        %v9585 = vpop.f32.mrb[0].mxu0
        %v9586 = vadd.f32 0.0, %v9585
        %v9587 = vpop.f32.mrb[0].mxu0
        %v9588 = vpop.f32.mrb[0].mxu0
        %v9589 = vadd.f32 0.0, %v9588
        %v9590 = vpop.f32.mrb[0].mxu0
        %9591 = vmatprep.mubr.bf16.mxu0 %v9528
        %9592 = vmatmul.mubr.bf16.gmra.mrb[0].mxu0 %v8749
        %v9593 = vpop.f32.mrb[0].mxu0
        %v9594 = vadd.f32 0.0, %v9593
        %v9595 = vpop.f32.mrb[0].mxu0
        %v9596 = vpop.f32.mrb[0].mxu0
        %v9597 = vadd.f32 0.0, %v9596
        %v9598 = vpop.f32.mrb[0].mxu0
        %9599 = vmatprep.mubr.bf16.mxu0 %v9531
        %9600 = vmatmul.mubr.bf16.gmra.mrb[0].mxu0 %v8751
        %v9601 = vpop.f32.mrb[0].mxu0
        %v9602 = vadd.f32 0.0, %v9601
        %v9603 = vpop.f32.mrb[0].mxu0
        %v9604 = vpop.f32.mrb[0].mxu0
        %v9605 = vadd.f32 0.0, %v9604
        %v9606 = vpop.f32.mrb[0].mxu0
        %9607 = vmatprep.mubr.bf16.mxu0 %v9534
        %9608 = vmatmul.mubr.bf16.gmra.mrb[0].mxu0 %v8753
        %v9609 = vpop.f32.mrb[0].mxu0
        %v9610 = vadd.f32 0.0, %v9609
        %v9611 = vpop.f32.mrb[0].mxu0
        %v9612 = vpop.f32.mrb[0].mxu0
        %v9613 = vadd.f32 0.0, %v9612
        %v9614 = vpop.f32.mrb[0].mxu0
        %9615 = vmatprep.mubr.bf16.mxu0 %v9537
        %9616 = vmatmul.mubr.bf16.gmra.mrb[0].mxu0 %v8755
        %v9617 = vpop.f32.mrb[0].mxu0
        %v9618 = vadd.f32 0.0, %v9617
        %v9619 = vpop.f32.mrb[0].mxu0
        %v9620 = vpop.f32.mrb[0].mxu0
        %v9621 = vadd.f32 0.0, %v9620
        %v9622 = vpop.f32.mrb[0].mxu0
        %9623 = vmatprep.mubr.bf16.mxu0 %v9540
        %9624 = vmatmul.mubr.bf16.gmra.mrb[0].mxu0 %v8757
        %v9625 = vpop.f32.mrb[0].mxu0
        %v9626 = vadd.f32 0.0, %v9625
        %v9627 = vpop.f32.mrb[0].mxu0
        %v9628 = vpop.f32.mrb[0].mxu0
        %v9629 = vadd.f32 0.0, %v9628
        %v9630 = vpop.f32.mrb[0].mxu0
        %9631 = vmatprep.mubr.bf16.mxu0 %v9543
        %9632 = vmatmul.mubr.bf16.gmra.mrb[0].mxu0 %v8759
        %v9633 = vpop.f32.mrb[0].mxu0
        %v9634 = vadd.f32 0.0, %v9633
        %v9635 = vpop.f32.mrb[0].mxu0
        %v9636 = vpop.f32.mrb[0].mxu0
        %v9637 = vadd.f32 0.0, %v9636
        %v9638 = vpop.f32.mrb[0].mxu0
        %9639 = vmatprep.mubr.bf16.mxu0 %v9546
        %9640 = vmatmul.mubr.bf16.gmra.mrb[0].mxu0 %v8761
        %v9641 = vpop.f32.mrb[0].mxu0
        %v9642 = vadd.f32 0.0, %v9641
        %v9643 = vpop.f32.mrb[0].mxu0
        %v9644 = vpop.f32.mrb[0].mxu0
        %v9645 = vadd.f32 0.0, %v9644
        %v9646 = vpop.f32.mrb[0].mxu0
        %9647 = vmatprep.mubr.bf16.mxu0 %v9549
        %9648 = vmatmul.mubr.bf16.gmra.mrb[0].mxu0 %v8763
        %v9649 = vpop.f32.mrb[0].mxu0
        %v9650 = vadd.f32 0.0, %v9649
        %v9651 = vpop.f32.mrb[0].mxu0
        %v9652 = vpop.f32.mrb[0].mxu0
        %v9653 = vpop.f32.mrb[0].mxu0
        %9654 = vdwg.mxu0
        %v9655 = vadd.f32 %v9358, %v9586
        %v9656 = vadd.f32 %v9361, %v9589
        %v9657 = vadd.f32 %v9366, %v9594
        %v9658 = vadd.f32 %v9369, %v9597
        %v9659 = vadd.f32 %v9374, %v9602
        %v9660 = vadd.f32 %v9377, %v9605
        %v9661 = vadd.f32 %v9382, %v9610
        %v9662 = vadd.f32 %v9385, %v9613
        %v9663 = vadd.f32 %v9390, %v9618
        %v9664 = vadd.f32 %v9393, %v9621
        %v9665 = vadd.f32 %v9398, %v9626
        %v9666 = vadd.f32 %v9401, %v9629
        %v9667 = vadd.f32 %v9406, %v9634
        %v9668 = vadd.f32 %v9409, %v9637
        %v9669 = vadd.f32 %v9414, %v9642
        %v9670 = vadd.f32 %v9417, %v9645
        %v9671 = vadd.f32 %v9422, %v9650
        %s9672 = scalar_lea.vmem %s14, 288
        %v9673 = vld [vmem:[%s9672] sm:$0xf]
        %v9674 = vld [vmem:[%s9672 + $0x4] sm:$0xf]
        %v9675 = vld [vmem:[%s9672 + $0x8] sm:$0xf]
        %v9676 = vld [vmem:[%s9672 + $0xc] sm:$0xf]
        %v9677 = vld [vmem:[%s9672 + $0x10] sm:$0xf]
        %v9678 = vld [vmem:[%s9672 + $0x14] sm:$0xf]
        %v9679 = vld [vmem:[%s9672 + $0x18] sm:$0xf]
        %v9680 = vld [vmem:[%s9672 + $0x1c] sm:$0xf]
        %v9681 = vld [vmem:[%s9672 + $0x20] sm:$0xf]
        %v9682 = vld [vmem:[%s9672 + $0x24] sm:$0xf]
        %v9683 = vld [vmem:[%s9672 + $0x28] sm:$0xf]
        %v9684 = vld [vmem:[%s9672 + $0x2c] sm:$0xf]
        %v9685 = vld [vmem:[%s9672 + $0x30] sm:$0xf]
        %v9686 = vld [vmem:[%s9672 + $0x34] sm:$0xf]
        %v9687 = vld [vmem:[%s9672 + $0x38] sm:$0xf]
        %v9688 = vld [vmem:[%s9672 + $0x3c] sm:$0xf]
        %v9689 = vld [vmem:[%s9672 + $0x40] sm:$0xf]
        %v9690 = vld [vmem:[%s9672 + $0x44] sm:$0xf]
        %v9691 = vld [vmem:[%s9672 + $0x48] sm:$0xf]
        %v9692 = vld [vmem:[%s9672 + $0x4c] sm:$0xf]
        %v9693 = vld [vmem:[%s9672 + $0x50] sm:$0xf]
        %v9694 = vld [vmem:[%s9672 + $0x54] sm:$0xf]
        %v9695 = vld [vmem:[%s9672 + $0x58] sm:$0xf]
        %v9696 = vld [vmem:[%s9672 + $0x5c] sm:$0xf]
        %v9697 = vrot.slane %v8883, 1
        %v9698 = vrot.slane %v8885, 2
        %v9699 = vor.u32 %v9697, %v9698
        %v9700 = vrot.slane %v8905, 1
        %v9701 = vrot.slane %v8890, 2
        %v9702 = vor.u32 %v9700, %v9701
        %v9703 = vsel %vm1496, %v9699, %v9702
        %v9704 = vrot.slane %v8894, 1
        %v9705 = vrot.slane %v8896, 2
        %v9706 = vor.u32 %v9704, %v9705
        %v9707 = vrot.slane %v8913, 1
        %v9708 = vrot.slane %v8901, 2
        %v9709 = vor.u32 %v9707, %v9708
        %v9710 = vsel %vm1496, %v9706, %v9709
        %v9711 = vrot.slane %v8921, 1
        %v9712 = vrot.slane %v8909, 2
        %v9713 = vor.u32 %v9711, %v9712
        %v9714 = vsel %vm1496, %v9702, %v9713
        %v9715 = vrot.slane %v8929, 1
        %v9716 = vrot.slane %v8917, 2
        %v9717 = vor.u32 %v9715, %v9716
        %v9718 = vsel %vm1496, %v9709, %v9717
        %v9719 = vrot.slane %v8937, 1
        %v9720 = vrot.slane %v8925, 2
        %v9721 = vor.u32 %v9719, %v9720
        %v9722 = vsel %vm1496, %v9713, %v9721
        %v9723 = vrot.slane %v8945, 1
        %v9724 = vrot.slane %v8933, 2
        %v9725 = vor.u32 %v9723, %v9724
        %v9726 = vsel %vm1496, %v9717, %v9725
        %v9727 = vrot.slane %v8953, 1
        %v9728 = vrot.slane %v8941, 2
        %v9729 = vor.u32 %v9727, %v9728
        %v9730 = vsel %vm1496, %v9721, %v9729
        %v9731 = vrot.slane %v8961, 1
        %v9732 = vrot.slane %v8949, 2
        %v9733 = vor.u32 %v9731, %v9732
        %v9734 = vsel %vm1496, %v9725, %v9733
        %v9735 = vrot.slane %v8969, 1
        %v9736 = vrot.slane %v8957, 2
        %v9737 = vor.u32 %v9735, %v9736
        %v9738 = vsel %vm1496, %v9729, %v9737
        %v9739 = vrot.slane %v8977, 1
        %v9740 = vrot.slane %v8965, 2
        %v9741 = vor.u32 %v9739, %v9740
        %v9742 = vsel %vm1496, %v9733, %v9741
        %v9743 = vrot.slane %v8985, 1
        %v9744 = vrot.slane %v8973, 2
        %v9745 = vor.u32 %v9743, %v9744
        %v9746 = vsel %vm1496, %v9737, %v9745
        %v9747 = vrot.slane %v8993, 1
        %v9748 = vrot.slane %v8981, 2
        %v9749 = vor.u32 %v9747, %v9748
        %v9750 = vsel %vm1496, %v9741, %v9749
        %v9751 = vrot.slane %v9001, 1
        %v9752 = vrot.slane %v8989, 2
        %v9753 = vor.u32 %v9751, %v9752
        %v9754 = vsel %vm1496, %v9745, %v9753
        %v9755 = vrot.slane %v9008, 1
        %v9756 = vrot.slane %v8997, 2
        %v9757 = vor.u32 %v9755, %v9756
        %v9758 = vsel %vm1496, %v9749, %v9757
        %v9759 = vrot.slane %v9015, 1
        %v9760 = vrot.slane %v9004, 2
        %v9761 = vor.u32 %v9759, %v9760
        %v9762 = vsel %vm1496, %v9753, %v9761
        %v9763 = vrot.slane %v9018, 1
        %v9764 = vrot.slane %v9011, 2
        %v9765 = vor.u32 %v9763, %v9764
        %v9766 = vsel %vm1496, %v9757, %v9765
        %v9800 = vunpack.c.l.b16 %v9673
        %v9801 = vunpack.c.l.b16 %v9674
        %v9802 = vunpack.c.l.b16 %v9675
        %v9803 = vunpack.c.l.b16 %v9676
        %v9804 = vunpack.c.l.b16 %v9677
        %v9805 = vunpack.c.l.b16 %v9678
        %v9806 = vunpack.c.l.b16 %v9679
        %v9807 = vunpack.c.l.b16 %v9680
        %v9808 = vunpack.c.l.b16 %v9681
        %v9809 = vunpack.c.l.b16 %v9682
        %v9810 = vunpack.c.l.b16 %v9683
        %v9811 = vunpack.c.l.b16 %v9684
        %v9812 = vunpack.c.l.b16 %v9685
        %v9813 = vunpack.c.l.b16 %v9686
        %v9814 = vunpack.c.l.b16 %v9687
        %v9815 = vunpack.c.l.b16 %v9688
        %v9816 = vunpack.c.l.b16 %v9689
        %v9817 = vunpack.c.l.b16 %v9690
        %v9818 = vunpack.c.l.b16 %v9691
        %v9819 = vunpack.c.l.b16 %v9692
        %v9820 = vunpack.c.l.b16 %v9693
        %v9821 = vunpack.c.l.b16 %v9694
        %v9822 = vunpack.c.l.b16 %v9695
        %v9823 = vunpack.c.l.b16 %v9696
        %v9824 = vpack.c.b16 %v9801, %v9800
        %v9825 = vpack.c.b16 %v9803, %v9802
        %v9826 = vpack.c.b16 %v9805, %v9804
        %v9827 = vpack.c.b16 %v9807, %v9806
        %v9828 = vpack.c.b16 %v9809, %v9808
        %v9829 = vpack.c.b16 %v9811, %v9810
        %v9830 = vpack.c.b16 %v9813, %v9812
        %v9831 = vpack.c.b16 %v9815, %v9814
        %v9832 = vpack.c.b16 %v9817, %v9816
        %v9833 = vpack.c.b16 %v9819, %v9818
        %v9834 = vpack.c.b16 %v9821, %v9820
        %v9835 = vpack.c.b16 %v9823, %v9822
        %v9849 = vsel %vm2237, %v9710, 0
        %v9852 = vsel %vm2237, %v9718, 0
        %v9855 = vsel %vm2237, %v9726, 0
        %v9858 = vsel %vm2237, %v9734, 0
        %v9861 = vsel %vm2237, %v9742, 0
        %v9864 = vsel %vm2237, %v9750, 0
        %v9867 = vsel %vm2237, %v9758, 0
        %v9870 = vsel %vm2237, %v9766, 0
        %v9873 = vsel %vm2237, %v9765, 0
        %9875 = vmatprep.subr.bf16.mxu0 0
        %9876 = vmatpush1.bf16.msra.mxu0 %v9824
        %9877 = vmatprep.subr.bf16.mxu0 0
        %9878 = vmatpush1.bf16.msra.mxu0 %v9825
        %9879 = vmatprep.subr.bf16.mxu0 0
        %9880 = vmatpush1.bf16.msra.mxu0 %v9826
        %9881 = vmatprep.subr.bf16.mxu0 0
        %9882 = vmatpush1.bf16.msra.mxu0 %v9827
        %9883 = vmatprep.subr.bf16.mxu0 0
        %9884 = vmatpush1.bf16.msra.mxu0 %v9828
        %9885 = vmatprep.subr.bf16.mxu0 0
        %9886 = vmatpush1.bf16.msra.mxu0 %v9829
        %9887 = vmatprep.subr.bf16.mxu0 0
        %9888 = vmatpush1.bf16.msra.mxu0 %v9830
        %9889 = vmatprep.subr.bf16.mxu0 0
        %9890 = vmatpush1.bf16.msra.mxu0 %v9831
        %9891 = vmatprep.subr.bf16.mxu0 0
        %9892 = vmatpush1.bf16.msra.mxu0 %v9832
        %9893 = vmatprep.subr.bf16.mxu0 0
        %9894 = vmatpush1.bf16.msra.mxu0 %v9833
        %9895 = vmatprep.subr.bf16.mxu0 0
        %9896 = vmatpush1.bf16.msra.mxu0 %v9834
        %9897 = vmatprep.subr.bf16.mxu0 0
        %9898 = vmatpush1.bf16.msra.mxu0 %v9835
        %9899 = vmatprep.subr.bf16.mxu0 0
        %9900 = vmatpush1.bf16.msra.mxu0 0
        %9901 = vmatprep.subr.bf16.mxu0 0
        %9902 = vmatpush1.bf16.msra.mxu0 0
        %9903 = vmatprep.subr.bf16.mxu0 0
        %9904 = vmatpush1.bf16.msra.mxu0 0
        %9905 = vmatprep.subr.bf16.mxu0 0
        %9906 = vmatpush1.bf16.msra.mxu0 0
        %9907 = vmatprep.mubr.bf16.mxu0 %v9849
        %9908 = vmatmul.mubr.bf16.gmra.mrb[0].mxu0 %v9703
        %v9909 = vpop.f32.mrb[0].mxu0
        %v9910 = vadd.f32 0.0, %v9909
        %v9911 = vpop.f32.mrb[0].mxu0
        %v9912 = vpop.f32.mrb[0].mxu0
        %v9913 = vadd.f32 0.0, %v9912
        %v9914 = vpop.f32.mrb[0].mxu0
        %9915 = vmatprep.mubr.bf16.mxu0 %v9852
        %9916 = vmatmul.mubr.bf16.gmra.mrb[0].mxu0 %v9714
        %v9917 = vpop.f32.mrb[0].mxu0
        %v9918 = vadd.f32 0.0, %v9917
        %v9919 = vpop.f32.mrb[0].mxu0
        %v9920 = vpop.f32.mrb[0].mxu0
        %v9921 = vadd.f32 0.0, %v9920
        %v9922 = vpop.f32.mrb[0].mxu0
        %9923 = vmatprep.mubr.bf16.mxu0 %v9855
        %9924 = vmatmul.mubr.bf16.gmra.mrb[0].mxu0 %v9722
        %v9925 = vpop.f32.mrb[0].mxu0
        %v9926 = vadd.f32 0.0, %v9925
        %v9927 = vpop.f32.mrb[0].mxu0
        %v9928 = vpop.f32.mrb[0].mxu0
        %v9929 = vadd.f32 0.0, %v9928
        %v9930 = vpop.f32.mrb[0].mxu0
        %9931 = vmatprep.mubr.bf16.mxu0 %v9858
        %9932 = vmatmul.mubr.bf16.gmra.mrb[0].mxu0 %v9730
        %v9933 = vpop.f32.mrb[0].mxu0
        %v9934 = vadd.f32 0.0, %v9933
        %v9935 = vpop.f32.mrb[0].mxu0
        %v9936 = vpop.f32.mrb[0].mxu0
        %v9937 = vadd.f32 0.0, %v9936
        %v9938 = vpop.f32.mrb[0].mxu0
        %9939 = vmatprep.mubr.bf16.mxu0 %v9861
        %9940 = vmatmul.mubr.bf16.gmra.mrb[0].mxu0 %v9738
        %v9941 = vpop.f32.mrb[0].mxu0
        %v9942 = vadd.f32 0.0, %v9941
        %v9943 = vpop.f32.mrb[0].mxu0
        %v9944 = vpop.f32.mrb[0].mxu0
        %v9945 = vadd.f32 0.0, %v9944
        %v9946 = vpop.f32.mrb[0].mxu0
        %9947 = vmatprep.mubr.bf16.mxu0 %v9864
        %9948 = vmatmul.mubr.bf16.gmra.mrb[0].mxu0 %v9746
        %v9949 = vpop.f32.mrb[0].mxu0
        %v9950 = vadd.f32 0.0, %v9949
        %v9951 = vpop.f32.mrb[0].mxu0
        %v9952 = vpop.f32.mrb[0].mxu0
        %v9953 = vadd.f32 0.0, %v9952
        %v9954 = vpop.f32.mrb[0].mxu0
        %9955 = vmatprep.mubr.bf16.mxu0 %v9867
        %9956 = vmatmul.mubr.bf16.gmra.mrb[0].mxu0 %v9754
        %v9957 = vpop.f32.mrb[0].mxu0
        %v9958 = vadd.f32 0.0, %v9957
        %v9959 = vpop.f32.mrb[0].mxu0
        %v9960 = vpop.f32.mrb[0].mxu0
        %v9961 = vadd.f32 0.0, %v9960
        %v9962 = vpop.f32.mrb[0].mxu0
        %9963 = vmatprep.mubr.bf16.mxu0 %v9870
        %9964 = vmatmul.mubr.bf16.gmra.mrb[0].mxu0 %v9762
        %v9965 = vpop.f32.mrb[0].mxu0
        %v9966 = vadd.f32 0.0, %v9965
        %v9967 = vpop.f32.mrb[0].mxu0
        %v9968 = vpop.f32.mrb[0].mxu0
        %v9969 = vadd.f32 0.0, %v9968
        %v9970 = vpop.f32.mrb[0].mxu0
        %9971 = vmatprep.mubr.bf16.mxu0 %v9873
        %9972 = vmatmul.mubr.bf16.gmra.mrb[0].mxu0 %v9761
        %v9973 = vpop.f32.mrb[0].mxu0
        %v9974 = vadd.f32 0.0, %v9973
        %v9975 = vpop.f32.mrb[0].mxu0
        %v9976 = vpop.f32.mrb[0].mxu0
        %v9977 = vpop.f32.mrb[0].mxu0
        %9978 = vdwg.mxu0
        %v9979 = vadd.f32 %v9655, %v9910
        %v9980 = vadd.f32 %v9656, %v9913
        %v9981 = vadd.f32 %v9657, %v9918
        %v9982 = vadd.f32 %v9658, %v9921
        %v9983 = vadd.f32 %v9659, %v9926
        %v9984 = vadd.f32 %v9660, %v9929
        %v9985 = vadd.f32 %v9661, %v9934
        %v9986 = vadd.f32 %v9662, %v9937
        %v9987 = vadd.f32 %v9663, %v9942
        %v9988 = vadd.f32 %v9664, %v9945
        %v9989 = vadd.f32 %v9665, %v9950
        %v9990 = vadd.f32 %v9666, %v9953
        %v9991 = vadd.f32 %v9667, %v9958
        %v9992 = vadd.f32 %v9668, %v9961
        %v9993 = vadd.f32 %v9669, %v9966
        %v9994 = vadd.f32 %v9670, %v9969
        %v9995 = vadd.f32 %v9671, %v9974
        %s9996 = scalar_lea.vmem %s14, 384
        %v9997 = vld [vmem:[%s9996] sm:$0xf]
        %v9998 = vld [vmem:[%s9996 + $0x4] sm:$0xf]
        %v9999 = vld [vmem:[%s9996 + $0x8] sm:$0xf]
        %v10000 = vld [vmem:[%s9996 + $0xc] sm:$0xf]
        %v10001 = vld [vmem:[%s9996 + $0x10] sm:$0xf]
        %v10002 = vld [vmem:[%s9996 + $0x14] sm:$0xf]
        %v10003 = vld [vmem:[%s9996 + $0x18] sm:$0xf]
        %v10004 = vld [vmem:[%s9996 + $0x1c] sm:$0xf]
        %v10005 = vld [vmem:[%s9996 + $0x20] sm:$0xf]
        %v10006 = vld [vmem:[%s9996 + $0x24] sm:$0xf]
        %v10007 = vld [vmem:[%s9996 + $0x28] sm:$0xf]
        %v10008 = vld [vmem:[%s9996 + $0x2c] sm:$0xf]
        %v10009 = vld [vmem:[%s9996 + $0x30] sm:$0xf]
        %v10010 = vld [vmem:[%s9996 + $0x34] sm:$0xf]
        %v10011 = vld [vmem:[%s9996 + $0x38] sm:$0xf]
        %v10012 = vld [vmem:[%s9996 + $0x3c] sm:$0xf]
        %v10013 = vld [vmem:[%s9996 + $0x40] sm:$0xf]
        %v10014 = vld [vmem:[%s9996 + $0x44] sm:$0xf]
        %v10015 = vld [vmem:[%s9996 + $0x48] sm:$0xf]
        %v10016 = vld [vmem:[%s9996 + $0x4c] sm:$0xf]
        %v10017 = vld [vmem:[%s9996 + $0x50] sm:$0xf]
        %v10018 = vld [vmem:[%s9996 + $0x54] sm:$0xf]
        %v10019 = vld [vmem:[%s9996 + $0x58] sm:$0xf]
        %v10020 = vld [vmem:[%s9996 + $0x5c] sm:$0xf]
        %v10025 = vrot.slane %v8825, 2
        %v10026 = vrot.slane %v8786, 2
        %v10027 = vsel %vm1687, %v10025, %v10026
        %v10028 = vrot.slane %v8828, 2
        %v10029 = vrot.slane %v8788, 2
        %v10030 = vsel %vm1687, %v10028, %v10029
        %v10031 = vrot.slane %v8790, 2
        %v10032 = vsel %vm1687, %v10026, %v10031
        %v10033 = vrot.slane %v8792, 2
        %v10034 = vsel %vm1687, %v10029, %v10033
        %v10035 = vrot.slane %v8794, 2
        %v10036 = vsel %vm1687, %v10031, %v10035
        %v10037 = vrot.slane %v8796, 2
        %v10038 = vsel %vm1687, %v10033, %v10037
        %v10039 = vrot.slane %v8798, 2
        %v10040 = vsel %vm1687, %v10035, %v10039
        %v10041 = vrot.slane %v8800, 2
        %v10042 = vsel %vm1687, %v10037, %v10041
        %v10043 = vrot.slane %v8802, 2
        %v10044 = vsel %vm1687, %v10039, %v10043
        %v10045 = vrot.slane %v8804, 2
        %v10046 = vsel %vm1687, %v10041, %v10045
        %v10047 = vrot.slane %v8806, 2
        %v10048 = vsel %vm1687, %v10043, %v10047
        %v10049 = vrot.slane %v8808, 2
        %v10050 = vsel %vm1687, %v10045, %v10049
        %v10051 = vrot.slane %v8810, 2
        %v10052 = vsel %vm1687, %v10047, %v10051
        %v10053 = vrot.slane %v8812, 2
        %v10054 = vsel %vm1687, %v10049, %v10053
        %v10055 = vrot.slane %v8830, 2
        %v10056 = vsel %vm1687, %v10051, %v10055
        %v10057 = vrot.slane %v8833, 2
        %v10058 = vsel %vm1687, %v10053, %v10057
        %v10092 = vunpack.c.l.b16 %v9997
        %v10093 = vunpack.c.l.b16 %v9998
        %v10094 = vunpack.c.l.b16 %v9999
        %v10095 = vunpack.c.l.b16 %v10000
        %v10096 = vunpack.c.l.b16 %v10001
        %v10097 = vunpack.c.l.b16 %v10002
        %v10098 = vunpack.c.l.b16 %v10003
        %v10099 = vunpack.c.l.b16 %v10004
        %v10100 = vunpack.c.l.b16 %v10005
        %v10101 = vunpack.c.l.b16 %v10006
        %v10102 = vunpack.c.l.b16 %v10007
        %v10103 = vunpack.c.l.b16 %v10008
        %v10104 = vunpack.c.l.b16 %v10009
        %v10105 = vunpack.c.l.b16 %v10010
        %v10106 = vunpack.c.l.b16 %v10011
        %v10107 = vunpack.c.l.b16 %v10012
        %v10108 = vunpack.c.l.b16 %v10013
        %v10109 = vunpack.c.l.b16 %v10014
        %v10110 = vunpack.c.l.b16 %v10015
        %v10111 = vunpack.c.l.b16 %v10016
        %v10112 = vunpack.c.l.b16 %v10017
        %v10113 = vunpack.c.l.b16 %v10018
        %v10114 = vunpack.c.l.b16 %v10019
        %v10115 = vunpack.c.l.b16 %v10020
        %v10116 = vpack.c.b16 %v10093, %v10092
        %v10117 = vpack.c.b16 %v10095, %v10094
        %v10118 = vpack.c.b16 %v10097, %v10096
        %v10119 = vpack.c.b16 %v10099, %v10098
        %v10120 = vpack.c.b16 %v10101, %v10100
        %v10121 = vpack.c.b16 %v10103, %v10102
        %v10122 = vpack.c.b16 %v10105, %v10104
        %v10123 = vpack.c.b16 %v10107, %v10106
        %v10124 = vpack.c.b16 %v10109, %v10108
        %v10125 = vpack.c.b16 %v10111, %v10110
        %v10126 = vpack.c.b16 %v10113, %v10112
        %v10127 = vpack.c.b16 %v10115, %v10114
        %v10141 = vsel %vm2237, %v10030, 0
        %v10144 = vsel %vm2237, %v10034, 0
        %v10147 = vsel %vm2237, %v10038, 0
        %v10150 = vsel %vm2237, %v10042, 0
        %v10153 = vsel %vm2237, %v10046, 0
        %v10156 = vsel %vm2237, %v10050, 0
        %v10159 = vsel %vm2237, %v10054, 0
        %v10162 = vsel %vm2237, %v10058, 0
        %v10165 = vsel %vm2237, %v10057, 0
        %10167 = vmatprep.subr.bf16.mxu0 0
        %10168 = vmatpush1.bf16.msra.mxu0 %v10116
        %10169 = vmatprep.subr.bf16.mxu0 0
        %10170 = vmatpush1.bf16.msra.mxu0 %v10117
        %10171 = vmatprep.subr.bf16.mxu0 0
        %10172 = vmatpush1.bf16.msra.mxu0 %v10118
        %10173 = vmatprep.subr.bf16.mxu0 0
        %10174 = vmatpush1.bf16.msra.mxu0 %v10119
        %10175 = vmatprep.subr.bf16.mxu0 0
        %10176 = vmatpush1.bf16.msra.mxu0 %v10120
        %10177 = vmatprep.subr.bf16.mxu0 0
        %10178 = vmatpush1.bf16.msra.mxu0 %v10121
        %10179 = vmatprep.subr.bf16.mxu0 0
        %10180 = vmatpush1.bf16.msra.mxu0 %v10122
        %10181 = vmatprep.subr.bf16.mxu0 0
        %10182 = vmatpush1.bf16.msra.mxu0 %v10123
        %10183 = vmatprep.subr.bf16.mxu0 0
        %10184 = vmatpush1.bf16.msra.mxu0 %v10124
        %10185 = vmatprep.subr.bf16.mxu0 0
        %10186 = vmatpush1.bf16.msra.mxu0 %v10125
        %10187 = vmatprep.subr.bf16.mxu0 0
        %10188 = vmatpush1.bf16.msra.mxu0 %v10126
        %10189 = vmatprep.subr.bf16.mxu0 0
        %10190 = vmatpush1.bf16.msra.mxu0 %v10127
        %10191 = vmatprep.subr.bf16.mxu0 0
        %10192 = vmatpush1.bf16.msra.mxu0 0
        %10193 = vmatprep.subr.bf16.mxu0 0
        %10194 = vmatpush1.bf16.msra.mxu0 0
        %10195 = vmatprep.subr.bf16.mxu0 0
        %10196 = vmatpush1.bf16.msra.mxu0 0
        %10197 = vmatprep.subr.bf16.mxu0 0
        %10198 = vmatpush1.bf16.msra.mxu0 0
        %10199 = vmatprep.mubr.bf16.mxu0 %v10141
        %10200 = vmatmul.mubr.bf16.gmra.mrb[0].mxu0 %v10027
        %v10201 = vpop.f32.mrb[0].mxu0
        %v10202 = vadd.f32 0.0, %v10201
        %v10203 = vpop.f32.mrb[0].mxu0
        %v10204 = vpop.f32.mrb[0].mxu0
        %v10205 = vadd.f32 0.0, %v10204
        %v10206 = vpop.f32.mrb[0].mxu0
        %10207 = vmatprep.mubr.bf16.mxu0 %v10144
        %10208 = vmatmul.mubr.bf16.gmra.mrb[0].mxu0 %v10032
        %v10209 = vpop.f32.mrb[0].mxu0
        %v10210 = vadd.f32 0.0, %v10209
        %v10211 = vpop.f32.mrb[0].mxu0
        %v10212 = vpop.f32.mrb[0].mxu0
        %v10213 = vadd.f32 0.0, %v10212
        %v10214 = vpop.f32.mrb[0].mxu0
        %10215 = vmatprep.mubr.bf16.mxu0 %v10147
        %10216 = vmatmul.mubr.bf16.gmra.mrb[0].mxu0 %v10036
        %v10217 = vpop.f32.mrb[0].mxu0
        %v10218 = vadd.f32 0.0, %v10217
        %v10219 = vpop.f32.mrb[0].mxu0
        %v10220 = vpop.f32.mrb[0].mxu0
        %v10221 = vadd.f32 0.0, %v10220
        %v10222 = vpop.f32.mrb[0].mxu0
        %10223 = vmatprep.mubr.bf16.mxu0 %v10150
        %10224 = vmatmul.mubr.bf16.gmra.mrb[0].mxu0 %v10040
        %v10225 = vpop.f32.mrb[0].mxu0
        %v10226 = vadd.f32 0.0, %v10225
        %v10227 = vpop.f32.mrb[0].mxu0
        %v10228 = vpop.f32.mrb[0].mxu0
        %v10229 = vadd.f32 0.0, %v10228
        %v10230 = vpop.f32.mrb[0].mxu0
        %10231 = vmatprep.mubr.bf16.mxu0 %v10153
        %10232 = vmatmul.mubr.bf16.gmra.mrb[0].mxu0 %v10044
        %v10233 = vpop.f32.mrb[0].mxu0
        %v10234 = vadd.f32 0.0, %v10233
        %v10235 = vpop.f32.mrb[0].mxu0
        %v10236 = vpop.f32.mrb[0].mxu0
        %v10237 = vadd.f32 0.0, %v10236
        %v10238 = vpop.f32.mrb[0].mxu0
        %10239 = vmatprep.mubr.bf16.mxu0 %v10156
        %10240 = vmatmul.mubr.bf16.gmra.mrb[0].mxu0 %v10048
        %v10241 = vpop.f32.mrb[0].mxu0
        %v10242 = vadd.f32 0.0, %v10241
        %v10243 = vpop.f32.mrb[0].mxu0
        %v10244 = vpop.f32.mrb[0].mxu0
        %v10245 = vadd.f32 0.0, %v10244
        %v10246 = vpop.f32.mrb[0].mxu0
        %10247 = vmatprep.mubr.bf16.mxu0 %v10159
        %10248 = vmatmul.mubr.bf16.gmra.mrb[0].mxu0 %v10052
        %v10249 = vpop.f32.mrb[0].mxu0
        %v10250 = vadd.f32 0.0, %v10249
        %v10251 = vpop.f32.mrb[0].mxu0
        %v10252 = vpop.f32.mrb[0].mxu0
        %v10253 = vadd.f32 0.0, %v10252
        %v10254 = vpop.f32.mrb[0].mxu0
        %10255 = vmatprep.mubr.bf16.mxu0 %v10162
        %10256 = vmatmul.mubr.bf16.gmra.mrb[0].mxu0 %v10056
        %v10257 = vpop.f32.mrb[0].mxu0
        %v10258 = vadd.f32 0.0, %v10257
        %v10259 = vpop.f32.mrb[0].mxu0
        %v10260 = vpop.f32.mrb[0].mxu0
        %v10261 = vadd.f32 0.0, %v10260
        %v10262 = vpop.f32.mrb[0].mxu0
        %10263 = vmatprep.mubr.bf16.mxu0 %v10165
        %10264 = vmatmul.mubr.bf16.gmra.mrb[0].mxu0 %v10055
        %v10265 = vpop.f32.mrb[0].mxu0
        %v10266 = vadd.f32 0.0, %v10265
        %v10267 = vpop.f32.mrb[0].mxu0
        %v10268 = vpop.f32.mrb[0].mxu0
        %v10269 = vpop.f32.mrb[0].mxu0
        %10270 = vdwg.mxu0
        %v10271 = vadd.f32 %v9979, %v10202
        %v10272 = vadd.f32 %v9980, %v10205
        %v10273 = vadd.f32 %v9981, %v10210
        %v10274 = vadd.f32 %v9982, %v10213
        %v10275 = vadd.f32 %v9983, %v10218
        %v10276 = vadd.f32 %v9984, %v10221
        %v10277 = vadd.f32 %v9985, %v10226
        %v10278 = vadd.f32 %v9986, %v10229
        %v10279 = vadd.f32 %v9987, %v10234
        %v10280 = vadd.f32 %v9988, %v10237
        %v10281 = vadd.f32 %v9989, %v10242
        %v10282 = vadd.f32 %v9990, %v10245
        %v10283 = vadd.f32 %v9991, %v10250
        %v10284 = vadd.f32 %v9992, %v10253
        %v10285 = vadd.f32 %v9993, %v10258
        %v10286 = vadd.f32 %v9994, %v10261
        %v10287 = vadd.f32 %v9995, %v10266
        %v10288 = vld [vmem:[#allocation19] sm:$0x1]
        %v10290 = vlaneseq
        %v10291 = vshrl.u32 %v10290, 7
        %v10292 = vsub.s32 0, %v10291
        %v10293 = vrot.slane %v10288, %v10292
        %v10295 = vadd.f32 %v10271, %v10293
        %v10296 = vadd.f32 %v10272, %v10293
        %v10297 = vadd.f32 %v10273, %v10293
        %v10298 = vadd.f32 %v10274, %v10293
        %v10299 = vadd.f32 %v10275, %v10293
        %v10300 = vadd.f32 %v10276, %v10293
        %v10301 = vadd.f32 %v10277, %v10293
        %v10302 = vadd.f32 %v10278, %v10293
        %v10303 = vadd.f32 %v10279, %v10293
        %v10304 = vadd.f32 %v10280, %v10293
        %v10305 = vadd.f32 %v10281, %v10293
        %v10306 = vadd.f32 %v10282, %v10293
        %v10307 = vadd.f32 %v10283, %v10293
        %v10308 = vadd.f32 %v10284, %v10293
        %v10309 = vadd.f32 %v10285, %v10293
        %v10310 = vadd.f32 %v10286, %v10293
        %v10311 = vadd.f32 %v10287, %v10293
        %v10312 = vmax.f32 %v10295, 0.0
        %v10313 = vmax.f32 %v10296, 0.0
        %v10314 = vmax.f32 %v10297, 0.0
        %v10315 = vmax.f32 %v10298, 0.0
        %v10316 = vmax.f32 %v10299, 0.0
        %v10317 = vmax.f32 %v10300, 0.0
        %v10318 = vmax.f32 %v10301, 0.0
        %v10319 = vmax.f32 %v10302, 0.0
        %v10320 = vmax.f32 %v10303, 0.0
        %v10321 = vmax.f32 %v10304, 0.0
        %v10322 = vmax.f32 %v10305, 0.0
        %v10323 = vmax.f32 %v10306, 0.0
        %v10324 = vmax.f32 %v10307, 0.0
        %v10325 = vmax.f32 %v10308, 0.0
        %v10326 = vmax.f32 %v10309, 0.0
        %v10327 = vmax.f32 %v10310, 0.0
        %v10328 = vmax.f32 %v10311, 0.0
        %v10329 = vpack.c.bf16 %v10313, %v10312
        %v10330 = vpack.c.bf16 %v10315, %v10314
        %v10331 = vpack.c.bf16 %v10317, %v10316
        %v10332 = vpack.c.bf16 %v10319, %v10318
        %v10333 = vpack.c.bf16 %v10321, %v10320
        %v10334 = vpack.c.bf16 %v10323, %v10322
        %v10335 = vpack.c.bf16 %v10325, %v10324
        %v10336 = vpack.c.bf16 %v10327, %v10326
        %v10337 = vpack.c.bf16 %v10328, %v10328
        %v10347 = vrot.slane %v10329, 7
        %v10348 = vrot.slane %v10330, 7
        %v10349 = vsel %vm983, %v10347, %v10348
        %v10350 = vrot.slane %v10331, 7
        %v10351 = vsel %vm983, %v10348, %v10350
        %v10352 = vrot.slane %v10332, 7
        %v10353 = vsel %vm983, %v10350, %v10352
        %v10354 = vrot.slane %v10333, 7
        %v10355 = vsel %vm983, %v10352, %v10354
        %v10356 = vrot.slane %v10334, 7
        %v10357 = vsel %vm983, %v10354, %v10356
        %v10358 = vrot.slane %v10335, 7
        %v10359 = vsel %vm983, %v10356, %v10358
        %v10360 = vrot.slane %v10336, 7
        %v10361 = vsel %vm983, %v10358, %v10360
        %v10362 = vrot.slane %v10337, 7
        %v10363 = vsel %vm983, %v10360, %v10362
        %v10365 = vsel %vm1001, 0, %v10347
        %v10367 = vsel %vm1005, %v10363, 0
        %v10368 = vld [vmem:[%s16] sm:$0xf]
        %v10369 = vld [vmem:[%s16 + $0x4] sm:$0xf]
        %v10370 = vld [vmem:[%s16 + $0x8] sm:$0xf]
        %v10371 = vld [vmem:[%s16 + $0xc] sm:$0xf]
        %v10372 = vld [vmem:[%s16 + $0x10] sm:$0xf]
        %v10373 = vld [vmem:[%s16 + $0x14] sm:$0xf]
        %v10374 = vld [vmem:[%s16 + $0x18] sm:$0xf]
        %v10375 = vld [vmem:[%s16 + $0x1c] sm:$0xf]
        %s10376 = scalar_lea.vmem %s16, 32
        %v10377 = vld [vmem:[%s10376] sm:$0xf]
        %v10378 = vld [vmem:[%s10376 + $0x4] sm:$0xf]
        %v10379 = vld [vmem:[%s10376 + $0x8] sm:$0xf]
        %v10380 = vld [vmem:[%s10376 + $0xc] sm:$0xf]
        %v10381 = vld [vmem:[%s10376 + $0x10] sm:$0xf]
        %v10382 = vld [vmem:[%s10376 + $0x14] sm:$0xf]
        %v10383 = vld [vmem:[%s10376 + $0x18] sm:$0xf]
        %v10384 = vld [vmem:[%s10376 + $0x1c] sm:$0xf]
        %v10385 = vshrl.u32 %v10365, 16
        %v10387 = vshll.u32 %v10365, 16
        %v10389 = vrot.slane %v10387, 1
        %v10390 = vor.u32 %v10385, %v10389
        %v10392 = vshll.u32 %v10349, 16
        %v10394 = vrot.slane %v10392, 1
        %v10395 = vsel %vm1011, %v10390, %v10394
        %v10396 = vshrl.u32 %v10349, 16
        %v10398 = vor.u32 %v10396, %v10394
        %v10400 = vshll.u32 %v10351, 16
        %v10402 = vrot.slane %v10400, 1
        %v10403 = vsel %vm1011, %v10398, %v10402
        %v10404 = vshrl.u32 %v10351, 16
        %v10406 = vor.u32 %v10404, %v10402
        %v10408 = vshll.u32 %v10353, 16
        %v10410 = vrot.slane %v10408, 1
        %v10411 = vsel %vm1011, %v10406, %v10410
        %v10412 = vshrl.u32 %v10353, 16
        %v10414 = vor.u32 %v10412, %v10410
        %v10416 = vshll.u32 %v10355, 16
        %v10418 = vrot.slane %v10416, 1
        %v10419 = vsel %vm1011, %v10414, %v10418
        %v10420 = vshrl.u32 %v10355, 16
        %v10422 = vor.u32 %v10420, %v10418
        %v10424 = vshll.u32 %v10357, 16
        %v10426 = vrot.slane %v10424, 1
        %v10427 = vsel %vm1011, %v10422, %v10426
        %v10428 = vshrl.u32 %v10357, 16
        %v10430 = vor.u32 %v10428, %v10426
        %v10432 = vshll.u32 %v10359, 16
        %v10434 = vrot.slane %v10432, 1
        %v10435 = vsel %vm1011, %v10430, %v10434
        %v10436 = vshrl.u32 %v10359, 16
        %v10438 = vor.u32 %v10436, %v10434
        %v10440 = vshll.u32 %v10361, 16
        %v10442 = vrot.slane %v10440, 1
        %v10443 = vsel %vm1011, %v10438, %v10442
        %v10444 = vshrl.u32 %v10361, 16
        %v10446 = vor.u32 %v10444, %v10442
        %v10447 = vshll.u32 %v10367, 16
        %v10449 = vrot.slane %v10447, 1
        %v10450 = vsel %vm1011, %v10446, %v10449
        %v10451 = vshrl.u32 %v10367, 16
        %v10453 = vor.u32 %v10451, %v10449
        %v10462 = vunpack.c.l.b16 %v10377
        %v10463 = vunpack.c.l.b16 %v10378
        %v10464 = vunpack.c.l.b16 %v10379
        %v10465 = vunpack.c.l.b16 %v10380
        %v10466 = vunpack.c.l.b16 %v10381
        %v10467 = vunpack.c.l.b16 %v10382
        %v10468 = vunpack.c.l.b16 %v10383
        %v10469 = vunpack.c.l.b16 %v10384
        %v10470 = vpack.c.b16 %v10463, %v10462
        %v10471 = vpack.c.b16 %v10465, %v10464
        %v10472 = vpack.c.b16 %v10467, %v10466
        %v10473 = vpack.c.b16 %v10469, %v10468
        %v10479 = vsel %vm2237, %v10395, 0
        %v10482 = vsel %vm2237, %v10403, 0
        %v10485 = vsel %vm2237, %v10411, 0
        %v10488 = vsel %vm2237, %v10419, 0
        %v10491 = vsel %vm2237, %v10427, 0
        %v10494 = vsel %vm2237, %v10435, 0
        %v10497 = vsel %vm2237, %v10443, 0
        %v10500 = vsel %vm2237, %v10450, 0
        %v10503 = vsel %vm2237, %v10453, 0
        %10505 = vmatprep.subr.bf16.mxu0 0
        %10506 = vmatpush1.bf16.msra.mxu0 %v10470
        %10507 = vmatprep.subr.bf16.mxu0 0
        %10508 = vmatpush1.bf16.msra.mxu0 %v10471
        %10509 = vmatprep.subr.bf16.mxu0 0
        %10510 = vmatpush1.bf16.msra.mxu0 %v10472
        %10511 = vmatprep.subr.bf16.mxu0 0
        %10512 = vmatpush1.bf16.msra.mxu0 %v10473
        %10513 = vmatprep.subr.bf16.mxu0 0
        %10514 = vmatpush1.bf16.msra.mxu0 0
        %10515 = vmatprep.subr.bf16.mxu0 0
        %10516 = vmatpush1.bf16.msra.mxu0 0
        %10517 = vmatprep.subr.bf16.mxu0 0
        %10518 = vmatpush1.bf16.msra.mxu0 0
        %10519 = vmatprep.subr.bf16.mxu0 0
        %10520 = vmatpush1.bf16.msra.mxu0 0
        %10521 = vmatprep.subr.bf16.mxu0 0
        %10522 = vmatpush1.bf16.msra.mxu0 0
        %10523 = vmatprep.subr.bf16.mxu0 0
        %10524 = vmatpush1.bf16.msra.mxu0 0
        %10525 = vmatprep.subr.bf16.mxu0 0
        %10526 = vmatpush1.bf16.msra.mxu0 0
        %10527 = vmatprep.subr.bf16.mxu0 0
        %10528 = vmatpush1.bf16.msra.mxu0 0
        %10529 = vmatprep.subr.bf16.mxu0 0
        %10530 = vmatpush1.bf16.msra.mxu0 0
        %10531 = vmatprep.subr.bf16.mxu0 0
        %10532 = vmatpush1.bf16.msra.mxu0 0
        %10533 = vmatprep.subr.bf16.mxu0 0
        %10534 = vmatpush1.bf16.msra.mxu0 0
        %10535 = vmatprep.subr.bf16.mxu0 0
        %10536 = vmatpush1.bf16.msra.mxu0 0
        %10537 = vmatprep.mubr.bf16.mxu0 0
        %10538 = vmatmul.mubr.bf16.gmra.mrb[0].mxu0 %v10479
        %v10539 = vpop.f32.mrb[0].mxu0
        %v10540 = vadd.f32 0.0, %v10539
        %v10541 = vpop.f32.mrb[0].mxu0
        %v10542 = vpop.f32.mrb[0].mxu0
        %v10543 = vadd.f32 0.0, %v10542
        %v10544 = vpop.f32.mrb[0].mxu0
        %10545 = vmatprep.mubr.bf16.mxu0 0
        %10546 = vmatmul.mubr.bf16.gmra.mrb[0].mxu0 %v10482
        %v10547 = vpop.f32.mrb[0].mxu0
        %v10548 = vadd.f32 0.0, %v10547
        %v10549 = vpop.f32.mrb[0].mxu0
        %v10550 = vpop.f32.mrb[0].mxu0
        %v10551 = vadd.f32 0.0, %v10550
        %v10552 = vpop.f32.mrb[0].mxu0
        %10553 = vmatprep.mubr.bf16.mxu0 0
        %10554 = vmatmul.mubr.bf16.gmra.mrb[0].mxu0 %v10485
        %v10555 = vpop.f32.mrb[0].mxu0
        %v10556 = vadd.f32 0.0, %v10555
        %v10557 = vpop.f32.mrb[0].mxu0
        %v10558 = vpop.f32.mrb[0].mxu0
        %v10559 = vadd.f32 0.0, %v10558
        %v10560 = vpop.f32.mrb[0].mxu0
        %10561 = vmatprep.mubr.bf16.mxu0 0
        %10562 = vmatmul.mubr.bf16.gmra.mrb[0].mxu0 %v10488
        %v10563 = vpop.f32.mrb[0].mxu0
        %v10564 = vadd.f32 0.0, %v10563
        %v10565 = vpop.f32.mrb[0].mxu0
        %v10566 = vpop.f32.mrb[0].mxu0
        %v10567 = vadd.f32 0.0, %v10566
        %v10568 = vpop.f32.mrb[0].mxu0
        %10569 = vmatprep.mubr.bf16.mxu0 0
        %10570 = vmatmul.mubr.bf16.gmra.mrb[0].mxu0 %v10491
        %v10571 = vpop.f32.mrb[0].mxu0
        %v10572 = vadd.f32 0.0, %v10571
        %v10573 = vpop.f32.mrb[0].mxu0
        %v10574 = vpop.f32.mrb[0].mxu0
        %v10575 = vadd.f32 0.0, %v10574
        %v10576 = vpop.f32.mrb[0].mxu0
        %10577 = vmatprep.mubr.bf16.mxu0 0
        %10578 = vmatmul.mubr.bf16.gmra.mrb[0].mxu0 %v10494
        %v10579 = vpop.f32.mrb[0].mxu0
        %v10580 = vadd.f32 0.0, %v10579
        %v10581 = vpop.f32.mrb[0].mxu0
        %v10582 = vpop.f32.mrb[0].mxu0
        %v10583 = vadd.f32 0.0, %v10582
        %v10584 = vpop.f32.mrb[0].mxu0
        %10585 = vmatprep.mubr.bf16.mxu0 0
        %10586 = vmatmul.mubr.bf16.gmra.mrb[0].mxu0 %v10497
        %v10587 = vpop.f32.mrb[0].mxu0
        %v10588 = vadd.f32 0.0, %v10587
        %v10589 = vpop.f32.mrb[0].mxu0
        %v10590 = vpop.f32.mrb[0].mxu0
        %v10591 = vadd.f32 0.0, %v10590
        %v10592 = vpop.f32.mrb[0].mxu0
        %10593 = vmatprep.mubr.bf16.mxu0 0
        %10594 = vmatmul.mubr.bf16.gmra.mrb[0].mxu0 %v10500
        %v10595 = vpop.f32.mrb[0].mxu0
        %v10596 = vadd.f32 0.0, %v10595
        %v10597 = vpop.f32.mrb[0].mxu0
        %v10598 = vpop.f32.mrb[0].mxu0
        %v10599 = vadd.f32 0.0, %v10598
        %v10600 = vpop.f32.mrb[0].mxu0
        %10601 = vmatprep.mubr.bf16.mxu0 0
        %10602 = vmatmul.mubr.bf16.gmra.mrb[0].mxu0 %v10503
        %v10603 = vpop.f32.mrb[0].mxu0
        %v10604 = vadd.f32 0.0, %v10603
        %v10605 = vpop.f32.mrb[0].mxu0
        %v10606 = vpop.f32.mrb[0].mxu0
        %v10607 = vpop.f32.mrb[0].mxu0
        %10608 = vdwg.mxu0
        %v10617 = vunpack.c.l.b16 %v10368
        %v10618 = vunpack.c.l.b16 %v10369
        %v10619 = vunpack.c.l.b16 %v10370
        %v10620 = vunpack.c.l.b16 %v10371
        %v10621 = vunpack.c.l.b16 %v10372
        %v10622 = vunpack.c.l.b16 %v10373
        %v10623 = vunpack.c.l.b16 %v10374
        %v10624 = vunpack.c.l.b16 %v10375
        %v10625 = vpack.c.b16 %v10618, %v10617
        %v10626 = vpack.c.b16 %v10620, %v10619
        %v10627 = vpack.c.b16 %v10622, %v10621
        %v10628 = vpack.c.b16 %v10624, %v10623
        %v10633 = vsel %vm2237, %v10365, 0
        %v10635 = vsel %vm2237, %v10349, 0
        %v10637 = vsel %vm2237, %v10351, 0
        %v10639 = vsel %vm2237, %v10353, 0
        %v10641 = vsel %vm2237, %v10355, 0
        %v10643 = vsel %vm2237, %v10357, 0
        %v10645 = vsel %vm2237, %v10359, 0
        %v10647 = vsel %vm2237, %v10361, 0
        %v10649 = vsel %vm2237, %v10367, 0
        %10651 = vmatprep.subr.bf16.mxu0 0
        %10652 = vmatpush1.bf16.msra.mxu0 %v10625
        %10653 = vmatprep.subr.bf16.mxu0 0
        %10654 = vmatpush1.bf16.msra.mxu0 %v10626
        %10655 = vmatprep.subr.bf16.mxu0 0
        %10656 = vmatpush1.bf16.msra.mxu0 %v10627
        %10657 = vmatprep.subr.bf16.mxu0 0
        %10658 = vmatpush1.bf16.msra.mxu0 %v10628
        %10659 = vmatprep.subr.bf16.mxu0 0
        %10660 = vmatpush1.bf16.msra.mxu0 0
        %10661 = vmatprep.subr.bf16.mxu0 0
        %10662 = vmatpush1.bf16.msra.mxu0 0
        %10663 = vmatprep.subr.bf16.mxu0 0
        %10664 = vmatpush1.bf16.msra.mxu0 0
        %10665 = vmatprep.subr.bf16.mxu0 0
        %10666 = vmatpush1.bf16.msra.mxu0 0
        %10667 = vmatprep.subr.bf16.mxu0 0
        %10668 = vmatpush1.bf16.msra.mxu0 0
        %10669 = vmatprep.subr.bf16.mxu0 0
        %10670 = vmatpush1.bf16.msra.mxu0 0
        %10671 = vmatprep.subr.bf16.mxu0 0
        %10672 = vmatpush1.bf16.msra.mxu0 0
        %10673 = vmatprep.subr.bf16.mxu0 0
        %10674 = vmatpush1.bf16.msra.mxu0 0
        %10675 = vmatprep.subr.bf16.mxu0 0
        %10676 = vmatpush1.bf16.msra.mxu0 0
        %10677 = vmatprep.subr.bf16.mxu0 0
        %10678 = vmatpush1.bf16.msra.mxu0 0
        %10679 = vmatprep.subr.bf16.mxu0 0
        %10680 = vmatpush1.bf16.msra.mxu0 0
        %10681 = vmatprep.subr.bf16.mxu0 0
        %10682 = vmatpush1.bf16.msra.mxu0 0
        %10683 = vmatprep.mubr.bf16.mxu0 0
        %10684 = vmatmul.mubr.bf16.gmra.mrb[0].mxu0 %v10633
        %v10685 = vpop.f32.mrb[0].mxu0
        %v10686 = vadd.f32 %v10540, %v10685
        %v10687 = vpop.f32.mrb[0].mxu0
        %v10688 = vpop.f32.mrb[0].mxu0
        %v10689 = vadd.f32 %v10543, %v10688
        %v10690 = vpop.f32.mrb[0].mxu0
        %10691 = vmatprep.mubr.bf16.mxu0 0
        %10692 = vmatmul.mubr.bf16.gmra.mrb[0].mxu0 %v10635
        %v10693 = vpop.f32.mrb[0].mxu0
        %v10694 = vadd.f32 %v10548, %v10693
        %v10695 = vpop.f32.mrb[0].mxu0
        %v10696 = vpop.f32.mrb[0].mxu0
        %v10697 = vadd.f32 %v10551, %v10696
        %v10698 = vpop.f32.mrb[0].mxu0
        %10699 = vmatprep.mubr.bf16.mxu0 0
        %10700 = vmatmul.mubr.bf16.gmra.mrb[0].mxu0 %v10637
        %v10701 = vpop.f32.mrb[0].mxu0
        %v10702 = vadd.f32 %v10556, %v10701
        %v10703 = vpop.f32.mrb[0].mxu0
        %v10704 = vpop.f32.mrb[0].mxu0
        %v10705 = vadd.f32 %v10559, %v10704
        %v10706 = vpop.f32.mrb[0].mxu0
        %10707 = vmatprep.mubr.bf16.mxu0 0
        %10708 = vmatmul.mubr.bf16.gmra.mrb[0].mxu0 %v10639
        %v10709 = vpop.f32.mrb[0].mxu0
        %v10710 = vadd.f32 %v10564, %v10709
        %v10711 = vpop.f32.mrb[0].mxu0
        %v10712 = vpop.f32.mrb[0].mxu0
        %v10713 = vadd.f32 %v10567, %v10712
        %v10714 = vpop.f32.mrb[0].mxu0
        %10715 = vmatprep.mubr.bf16.mxu0 0
        %10716 = vmatmul.mubr.bf16.gmra.mrb[0].mxu0 %v10641
        %v10717 = vpop.f32.mrb[0].mxu0
        %v10718 = vadd.f32 %v10572, %v10717
        %v10719 = vpop.f32.mrb[0].mxu0
        %v10720 = vpop.f32.mrb[0].mxu0
        %v10721 = vadd.f32 %v10575, %v10720
        %v10722 = vpop.f32.mrb[0].mxu0
        %10723 = vmatprep.mubr.bf16.mxu0 0
        %10724 = vmatmul.mubr.bf16.gmra.mrb[0].mxu0 %v10643
        %v10725 = vpop.f32.mrb[0].mxu0
        %v10726 = vadd.f32 %v10580, %v10725
        %v10727 = vpop.f32.mrb[0].mxu0
        %v10728 = vpop.f32.mrb[0].mxu0
        %v10729 = vadd.f32 %v10583, %v10728
        %v10730 = vpop.f32.mrb[0].mxu0
        %10731 = vmatprep.mubr.bf16.mxu0 0
        %10732 = vmatmul.mubr.bf16.gmra.mrb[0].mxu0 %v10645
        %v10733 = vpop.f32.mrb[0].mxu0
        %v10734 = vadd.f32 %v10588, %v10733
        %v10735 = vpop.f32.mrb[0].mxu0
        %v10736 = vpop.f32.mrb[0].mxu0
        %v10737 = vadd.f32 %v10591, %v10736
        %v10738 = vpop.f32.mrb[0].mxu0
        %10739 = vmatprep.mubr.bf16.mxu0 0
        %10740 = vmatmul.mubr.bf16.gmra.mrb[0].mxu0 %v10647
        %v10741 = vpop.f32.mrb[0].mxu0
        %v10742 = vadd.f32 %v10596, %v10741
        %v10743 = vpop.f32.mrb[0].mxu0
        %v10744 = vpop.f32.mrb[0].mxu0
        %v10745 = vadd.f32 %v10599, %v10744
        %v10746 = vpop.f32.mrb[0].mxu0
        %10747 = vmatprep.mubr.bf16.mxu0 0
        %10748 = vmatmul.mubr.bf16.gmra.mrb[0].mxu0 %v10649
        %v10749 = vpop.f32.mrb[0].mxu0
        %v10750 = vadd.f32 %v10604, %v10749
        %v10751 = vpop.f32.mrb[0].mxu0
        %v10752 = vpop.f32.mrb[0].mxu0
        %v10753 = vpop.f32.mrb[0].mxu0
        %10754 = vdwg.mxu0
        %s10755 = scalar_lea.vmem %s16, 64
        %v10756 = vld [vmem:[%s10755] sm:$0xf]
        %v10757 = vld [vmem:[%s10755 + $0x4] sm:$0xf]
        %v10758 = vld [vmem:[%s10755 + $0x8] sm:$0xf]
        %v10759 = vld [vmem:[%s10755 + $0xc] sm:$0xf]
        %v10760 = vld [vmem:[%s10755 + $0x10] sm:$0xf]
        %v10761 = vld [vmem:[%s10755 + $0x14] sm:$0xf]
        %v10762 = vld [vmem:[%s10755 + $0x18] sm:$0xf]
        %v10763 = vld [vmem:[%s10755 + $0x1c] sm:$0xf]
        %v10772 = vunpack.c.l.b16 %v10756
        %v10773 = vunpack.c.l.b16 %v10757
        %v10774 = vunpack.c.l.b16 %v10758
        %v10775 = vunpack.c.l.b16 %v10759
        %v10776 = vunpack.c.l.b16 %v10760
        %v10777 = vunpack.c.l.b16 %v10761
        %v10778 = vunpack.c.l.b16 %v10762
        %v10779 = vunpack.c.l.b16 %v10763
        %v10780 = vpack.c.b16 %v10773, %v10772
        %v10781 = vpack.c.b16 %v10775, %v10774
        %v10782 = vpack.c.b16 %v10777, %v10776
        %v10783 = vpack.c.b16 %v10779, %v10778
        %v10789 = vsel %vm2237, %v10329, 0
        %v10792 = vsel %vm2237, %v10330, 0
        %v10795 = vsel %vm2237, %v10331, 0
        %v10798 = vsel %vm2237, %v10332, 0
        %v10801 = vsel %vm2237, %v10333, 0
        %v10804 = vsel %vm2237, %v10334, 0
        %v10807 = vsel %vm2237, %v10335, 0
        %v10810 = vsel %vm2237, %v10336, 0
        %v10813 = vsel %vm2237, %v10337, 0
        %10815 = vmatprep.subr.bf16.mxu0 0
        %10816 = vmatpush1.bf16.msra.mxu0 %v10780
        %10817 = vmatprep.subr.bf16.mxu0 0
        %10818 = vmatpush1.bf16.msra.mxu0 %v10781
        %10819 = vmatprep.subr.bf16.mxu0 0
        %10820 = vmatpush1.bf16.msra.mxu0 %v10782
        %10821 = vmatprep.subr.bf16.mxu0 0
        %10822 = vmatpush1.bf16.msra.mxu0 %v10783
        %10823 = vmatprep.subr.bf16.mxu0 0
        %10824 = vmatpush1.bf16.msra.mxu0 0
        %10825 = vmatprep.subr.bf16.mxu0 0
        %10826 = vmatpush1.bf16.msra.mxu0 0
        %10827 = vmatprep.subr.bf16.mxu0 0
        %10828 = vmatpush1.bf16.msra.mxu0 0
        %10829 = vmatprep.subr.bf16.mxu0 0
        %10830 = vmatpush1.bf16.msra.mxu0 0
        %10831 = vmatprep.subr.bf16.mxu0 0
        %10832 = vmatpush1.bf16.msra.mxu0 0
        %10833 = vmatprep.subr.bf16.mxu0 0
        %10834 = vmatpush1.bf16.msra.mxu0 0
        %10835 = vmatprep.subr.bf16.mxu0 0
        %10836 = vmatpush1.bf16.msra.mxu0 0
        %10837 = vmatprep.subr.bf16.mxu0 0
        %10838 = vmatpush1.bf16.msra.mxu0 0
        %10839 = vmatprep.subr.bf16.mxu0 0
        %10840 = vmatpush1.bf16.msra.mxu0 0
        %10841 = vmatprep.subr.bf16.mxu0 0
        %10842 = vmatpush1.bf16.msra.mxu0 0
        %10843 = vmatprep.subr.bf16.mxu0 0
        %10844 = vmatpush1.bf16.msra.mxu0 0
        %10845 = vmatprep.subr.bf16.mxu0 0
        %10846 = vmatpush1.bf16.msra.mxu0 0
        %10847 = vmatprep.mubr.bf16.mxu0 0
        %10848 = vmatmul.mubr.bf16.gmra.mrb[0].mxu0 %v10789
        %v10849 = vpop.f32.mrb[0].mxu0
        %v10850 = vadd.f32 0.0, %v10849
        %v10851 = vpop.f32.mrb[0].mxu0
        %v10852 = vpop.f32.mrb[0].mxu0
        %v10853 = vadd.f32 0.0, %v10852
        %v10854 = vpop.f32.mrb[0].mxu0
        %10855 = vmatprep.mubr.bf16.mxu0 0
        %10856 = vmatmul.mubr.bf16.gmra.mrb[0].mxu0 %v10792
        %v10857 = vpop.f32.mrb[0].mxu0
        %v10858 = vadd.f32 0.0, %v10857
        %v10859 = vpop.f32.mrb[0].mxu0
        %v10860 = vpop.f32.mrb[0].mxu0
        %v10861 = vadd.f32 0.0, %v10860
        %v10862 = vpop.f32.mrb[0].mxu0
        %10863 = vmatprep.mubr.bf16.mxu0 0
        %10864 = vmatmul.mubr.bf16.gmra.mrb[0].mxu0 %v10795
        %v10865 = vpop.f32.mrb[0].mxu0
        %v10866 = vadd.f32 0.0, %v10865
        %v10867 = vpop.f32.mrb[0].mxu0
        %v10868 = vpop.f32.mrb[0].mxu0
        %v10869 = vadd.f32 0.0, %v10868
        %v10870 = vpop.f32.mrb[0].mxu0
        %10871 = vmatprep.mubr.bf16.mxu0 0
        %10872 = vmatmul.mubr.bf16.gmra.mrb[0].mxu0 %v10798
        %v10873 = vpop.f32.mrb[0].mxu0
        %v10874 = vadd.f32 0.0, %v10873
        %v10875 = vpop.f32.mrb[0].mxu0
        %v10876 = vpop.f32.mrb[0].mxu0
        %v10877 = vadd.f32 0.0, %v10876
        %v10878 = vpop.f32.mrb[0].mxu0
        %10879 = vmatprep.mubr.bf16.mxu0 0
        %10880 = vmatmul.mubr.bf16.gmra.mrb[0].mxu0 %v10801
        %v10881 = vpop.f32.mrb[0].mxu0
        %v10882 = vadd.f32 0.0, %v10881
        %v10883 = vpop.f32.mrb[0].mxu0
        %v10884 = vpop.f32.mrb[0].mxu0
        %v10885 = vadd.f32 0.0, %v10884
        %v10886 = vpop.f32.mrb[0].mxu0
        %10887 = vmatprep.mubr.bf16.mxu0 0
        %10888 = vmatmul.mubr.bf16.gmra.mrb[0].mxu0 %v10804
        %v10889 = vpop.f32.mrb[0].mxu0
        %v10890 = vadd.f32 0.0, %v10889
        %v10891 = vpop.f32.mrb[0].mxu0
        %v10892 = vpop.f32.mrb[0].mxu0
        %v10893 = vadd.f32 0.0, %v10892
        %v10894 = vpop.f32.mrb[0].mxu0
        %10895 = vmatprep.mubr.bf16.mxu0 0
        %10896 = vmatmul.mubr.bf16.gmra.mrb[0].mxu0 %v10807
        %v10897 = vpop.f32.mrb[0].mxu0
        %v10898 = vadd.f32 0.0, %v10897
        %v10899 = vpop.f32.mrb[0].mxu0
        %v10900 = vpop.f32.mrb[0].mxu0
        %v10901 = vadd.f32 0.0, %v10900
        %v10902 = vpop.f32.mrb[0].mxu0
        %10903 = vmatprep.mubr.bf16.mxu0 0
        %10904 = vmatmul.mubr.bf16.gmra.mrb[0].mxu0 %v10810
        %v10905 = vpop.f32.mrb[0].mxu0
        %v10906 = vadd.f32 0.0, %v10905
        %v10907 = vpop.f32.mrb[0].mxu0
        %v10908 = vpop.f32.mrb[0].mxu0
        %v10909 = vadd.f32 0.0, %v10908
        %v10910 = vpop.f32.mrb[0].mxu0
        %10911 = vmatprep.mubr.bf16.mxu0 0
        %10912 = vmatmul.mubr.bf16.gmra.mrb[0].mxu0 %v10813
        %v10913 = vpop.f32.mrb[0].mxu0
        %v10914 = vadd.f32 0.0, %v10913
        %v10915 = vpop.f32.mrb[0].mxu0
        %v10916 = vpop.f32.mrb[0].mxu0
        %v10917 = vpop.f32.mrb[0].mxu0
        %10918 = vdwg.mxu0
        %v10919 = vadd.f32 %v10686, %v10850
        %v10920 = vadd.f32 %v10689, %v10853
        %v10921 = vadd.f32 %v10694, %v10858
        %v10922 = vadd.f32 %v10697, %v10861
        %v10923 = vadd.f32 %v10702, %v10866
        %v10924 = vadd.f32 %v10705, %v10869
        %v10925 = vadd.f32 %v10710, %v10874
        %v10926 = vadd.f32 %v10713, %v10877
        %v10927 = vadd.f32 %v10718, %v10882
        %v10928 = vadd.f32 %v10721, %v10885
        %v10929 = vadd.f32 %v10726, %v10890
        %v10930 = vadd.f32 %v10729, %v10893
        %v10931 = vadd.f32 %v10734, %v10898
        %v10932 = vadd.f32 %v10737, %v10901
        %v10933 = vadd.f32 %v10742, %v10906
        %v10934 = vadd.f32 %v10745, %v10909
        %v10935 = vadd.f32 %v10750, %v10914
        %s10936 = scalar_lea.vmem %s16, 96
        %v10937 = vld [vmem:[%s10936] sm:$0xf]
        %v10938 = vld [vmem:[%s10936 + $0x4] sm:$0xf]
        %v10939 = vld [vmem:[%s10936 + $0x8] sm:$0xf]
        %v10940 = vld [vmem:[%s10936 + $0xc] sm:$0xf]
        %v10941 = vld [vmem:[%s10936 + $0x10] sm:$0xf]
        %v10942 = vld [vmem:[%s10936 + $0x14] sm:$0xf]
        %v10943 = vld [vmem:[%s10936 + $0x18] sm:$0xf]
        %v10944 = vld [vmem:[%s10936 + $0x1c] sm:$0xf]
        %v10945 = vrot.slane %v10385, 1
        %v10946 = vrot.slane %v10387, 2
        %v10947 = vor.u32 %v10945, %v10946
        %v10948 = vrot.slane %v10396, 1
        %v10949 = vrot.slane %v10392, 2
        %v10950 = vor.u32 %v10948, %v10949
        %v10951 = vsel %vm1496, %v10947, %v10950
        %v10952 = vrot.slane %v10404, 1
        %v10953 = vrot.slane %v10400, 2
        %v10954 = vor.u32 %v10952, %v10953
        %v10955 = vsel %vm1496, %v10950, %v10954
        %v10956 = vrot.slane %v10412, 1
        %v10957 = vrot.slane %v10408, 2
        %v10958 = vor.u32 %v10956, %v10957
        %v10959 = vsel %vm1496, %v10954, %v10958
        %v10960 = vrot.slane %v10420, 1
        %v10961 = vrot.slane %v10416, 2
        %v10962 = vor.u32 %v10960, %v10961
        %v10963 = vsel %vm1496, %v10958, %v10962
        %v10964 = vrot.slane %v10428, 1
        %v10965 = vrot.slane %v10424, 2
        %v10966 = vor.u32 %v10964, %v10965
        %v10967 = vsel %vm1496, %v10962, %v10966
        %v10968 = vrot.slane %v10436, 1
        %v10969 = vrot.slane %v10432, 2
        %v10970 = vor.u32 %v10968, %v10969
        %v10971 = vsel %vm1496, %v10966, %v10970
        %v10972 = vrot.slane %v10444, 1
        %v10973 = vrot.slane %v10440, 2
        %v10974 = vor.u32 %v10972, %v10973
        %v10975 = vsel %vm1496, %v10970, %v10974
        %v10976 = vrot.slane %v10451, 1
        %v10977 = vrot.slane %v10447, 2
        %v10978 = vor.u32 %v10976, %v10977
        %v10979 = vsel %vm1496, %v10974, %v10978
        %v10988 = vunpack.c.l.b16 %v10937
        %v10989 = vunpack.c.l.b16 %v10938
        %v10990 = vunpack.c.l.b16 %v10939
        %v10991 = vunpack.c.l.b16 %v10940
        %v10992 = vunpack.c.l.b16 %v10941
        %v10993 = vunpack.c.l.b16 %v10942
        %v10994 = vunpack.c.l.b16 %v10943
        %v10995 = vunpack.c.l.b16 %v10944
        %v10996 = vpack.c.b16 %v10989, %v10988
        %v10997 = vpack.c.b16 %v10991, %v10990
        %v10998 = vpack.c.b16 %v10993, %v10992
        %v10999 = vpack.c.b16 %v10995, %v10994
        %v11005 = vsel %vm2237, %v10951, 0
        %v11008 = vsel %vm2237, %v10955, 0
        %v11011 = vsel %vm2237, %v10959, 0
        %v11014 = vsel %vm2237, %v10963, 0
        %v11017 = vsel %vm2237, %v10967, 0
        %v11020 = vsel %vm2237, %v10971, 0
        %v11023 = vsel %vm2237, %v10975, 0
        %v11026 = vsel %vm2237, %v10979, 0
        %v11029 = vsel %vm2237, %v10978, 0
        %11031 = vmatprep.subr.bf16.mxu0 0
        %11032 = vmatpush1.bf16.msra.mxu0 %v10996
        %11033 = vmatprep.subr.bf16.mxu0 0
        %11034 = vmatpush1.bf16.msra.mxu0 %v10997
        %11035 = vmatprep.subr.bf16.mxu0 0
        %11036 = vmatpush1.bf16.msra.mxu0 %v10998
        %11037 = vmatprep.subr.bf16.mxu0 0
        %11038 = vmatpush1.bf16.msra.mxu0 %v10999
        %11039 = vmatprep.subr.bf16.mxu0 0
        %11040 = vmatpush1.bf16.msra.mxu0 0
        %11041 = vmatprep.subr.bf16.mxu0 0
        %11042 = vmatpush1.bf16.msra.mxu0 0
        %11043 = vmatprep.subr.bf16.mxu0 0
        %11044 = vmatpush1.bf16.msra.mxu0 0
        %11045 = vmatprep.subr.bf16.mxu0 0
        %11046 = vmatpush1.bf16.msra.mxu0 0
        %11047 = vmatprep.subr.bf16.mxu0 0
        %11048 = vmatpush1.bf16.msra.mxu0 0
        %11049 = vmatprep.subr.bf16.mxu0 0
        %11050 = vmatpush1.bf16.msra.mxu0 0
        %11051 = vmatprep.subr.bf16.mxu0 0
        %11052 = vmatpush1.bf16.msra.mxu0 0
        %11053 = vmatprep.subr.bf16.mxu0 0
        %11054 = vmatpush1.bf16.msra.mxu0 0
        %11055 = vmatprep.subr.bf16.mxu0 0
        %11056 = vmatpush1.bf16.msra.mxu0 0
        %11057 = vmatprep.subr.bf16.mxu0 0
        %11058 = vmatpush1.bf16.msra.mxu0 0
        %11059 = vmatprep.subr.bf16.mxu0 0
        %11060 = vmatpush1.bf16.msra.mxu0 0
        %11061 = vmatprep.subr.bf16.mxu0 0
        %11062 = vmatpush1.bf16.msra.mxu0 0
        %11063 = vmatprep.mubr.bf16.mxu0 0
        %11064 = vmatmul.mubr.bf16.gmra.mrb[0].mxu0 %v11005
        %v11065 = vpop.f32.mrb[0].mxu0
        %v11066 = vadd.f32 0.0, %v11065
        %v11067 = vpop.f32.mrb[0].mxu0
        %v11068 = vpop.f32.mrb[0].mxu0
        %v11069 = vadd.f32 0.0, %v11068
        %v11070 = vpop.f32.mrb[0].mxu0
        %11071 = vmatprep.mubr.bf16.mxu0 0
        %11072 = vmatmul.mubr.bf16.gmra.mrb[0].mxu0 %v11008
        %v11073 = vpop.f32.mrb[0].mxu0
        %v11074 = vadd.f32 0.0, %v11073
        %v11075 = vpop.f32.mrb[0].mxu0
        %v11076 = vpop.f32.mrb[0].mxu0
        %v11077 = vadd.f32 0.0, %v11076
        %v11078 = vpop.f32.mrb[0].mxu0
        %11079 = vmatprep.mubr.bf16.mxu0 0
        %11080 = vmatmul.mubr.bf16.gmra.mrb[0].mxu0 %v11011
        %v11081 = vpop.f32.mrb[0].mxu0
        %v11082 = vadd.f32 0.0, %v11081
        %v11083 = vpop.f32.mrb[0].mxu0
        %v11084 = vpop.f32.mrb[0].mxu0
        %v11085 = vadd.f32 0.0, %v11084
        %v11086 = vpop.f32.mrb[0].mxu0
        %11087 = vmatprep.mubr.bf16.mxu0 0
        %11088 = vmatmul.mubr.bf16.gmra.mrb[0].mxu0 %v11014
        %v11089 = vpop.f32.mrb[0].mxu0
        %v11090 = vadd.f32 0.0, %v11089
        %v11091 = vpop.f32.mrb[0].mxu0
        %v11092 = vpop.f32.mrb[0].mxu0
        %v11093 = vadd.f32 0.0, %v11092
        %v11094 = vpop.f32.mrb[0].mxu0
        %11095 = vmatprep.mubr.bf16.mxu0 0
        %11096 = vmatmul.mubr.bf16.gmra.mrb[0].mxu0 %v11017
        %v11097 = vpop.f32.mrb[0].mxu0
        %v11098 = vadd.f32 0.0, %v11097
        %v11099 = vpop.f32.mrb[0].mxu0
        %v11100 = vpop.f32.mrb[0].mxu0
        %v11101 = vadd.f32 0.0, %v11100
        %v11102 = vpop.f32.mrb[0].mxu0
        %11103 = vmatprep.mubr.bf16.mxu0 0
        %11104 = vmatmul.mubr.bf16.gmra.mrb[0].mxu0 %v11020
        %v11105 = vpop.f32.mrb[0].mxu0
        %v11106 = vadd.f32 0.0, %v11105
        %v11107 = vpop.f32.mrb[0].mxu0
        %v11108 = vpop.f32.mrb[0].mxu0
        %v11109 = vadd.f32 0.0, %v11108
        %v11110 = vpop.f32.mrb[0].mxu0
        %11111 = vmatprep.mubr.bf16.mxu0 0
        %11112 = vmatmul.mubr.bf16.gmra.mrb[0].mxu0 %v11023
        %v11113 = vpop.f32.mrb[0].mxu0
        %v11114 = vadd.f32 0.0, %v11113
        %v11115 = vpop.f32.mrb[0].mxu0
        %v11116 = vpop.f32.mrb[0].mxu0
        %v11117 = vadd.f32 0.0, %v11116
        %v11118 = vpop.f32.mrb[0].mxu0
        %11119 = vmatprep.mubr.bf16.mxu0 0
        %11120 = vmatmul.mubr.bf16.gmra.mrb[0].mxu0 %v11026
        %v11121 = vpop.f32.mrb[0].mxu0
        %v11122 = vadd.f32 0.0, %v11121
        %v11123 = vpop.f32.mrb[0].mxu0
        %v11124 = vpop.f32.mrb[0].mxu0
        %v11125 = vadd.f32 0.0, %v11124
        %v11126 = vpop.f32.mrb[0].mxu0
        %11127 = vmatprep.mubr.bf16.mxu0 0
        %11128 = vmatmul.mubr.bf16.gmra.mrb[0].mxu0 %v11029
        %v11129 = vpop.f32.mrb[0].mxu0
        %v11130 = vadd.f32 0.0, %v11129
        %v11131 = vpop.f32.mrb[0].mxu0
        %v11132 = vpop.f32.mrb[0].mxu0
        %v11133 = vpop.f32.mrb[0].mxu0
        %11134 = vdwg.mxu0
        %v11135 = vadd.f32 %v10919, %v11066
        %v11136 = vadd.f32 %v10920, %v11069
        %v11137 = vadd.f32 %v10921, %v11074
        %v11138 = vadd.f32 %v10922, %v11077
        %v11139 = vadd.f32 %v10923, %v11082
        %v11140 = vadd.f32 %v10924, %v11085
        %v11141 = vadd.f32 %v10925, %v11090
        %v11142 = vadd.f32 %v10926, %v11093
        %v11143 = vadd.f32 %v10927, %v11098
        %v11144 = vadd.f32 %v10928, %v11101
        %v11145 = vadd.f32 %v10929, %v11106
        %v11146 = vadd.f32 %v10930, %v11109
        %v11147 = vadd.f32 %v10931, %v11114
        %v11148 = vadd.f32 %v10932, %v11117
        %v11149 = vadd.f32 %v10933, %v11122
        %v11150 = vadd.f32 %v10934, %v11125
        %v11151 = vadd.f32 %v10935, %v11130
        %s11152 = scalar_lea.vmem %s16, 128
        %v11153 = vld [vmem:[%s11152] sm:$0xf]
        %v11154 = vld [vmem:[%s11152 + $0x4] sm:$0xf]
        %v11155 = vld [vmem:[%s11152 + $0x8] sm:$0xf]
        %v11156 = vld [vmem:[%s11152 + $0xc] sm:$0xf]
        %v11157 = vld [vmem:[%s11152 + $0x10] sm:$0xf]
        %v11158 = vld [vmem:[%s11152 + $0x14] sm:$0xf]
        %v11159 = vld [vmem:[%s11152 + $0x18] sm:$0xf]
        %v11160 = vld [vmem:[%s11152 + $0x1c] sm:$0xf]
        %v11163 = vrot.slane %v10365, 2
        %v11164 = vrot.slane %v10349, 2
        %v11165 = vsel %vm1687, %v11163, %v11164
        %v11166 = vrot.slane %v10351, 2
        %v11167 = vsel %vm1687, %v11164, %v11166
        %v11168 = vrot.slane %v10353, 2
        %v11169 = vsel %vm1687, %v11166, %v11168
        %v11170 = vrot.slane %v10355, 2
        %v11171 = vsel %vm1687, %v11168, %v11170
        %v11172 = vrot.slane %v10357, 2
        %v11173 = vsel %vm1687, %v11170, %v11172
        %v11174 = vrot.slane %v10359, 2
        %v11175 = vsel %vm1687, %v11172, %v11174
        %v11176 = vrot.slane %v10361, 2
        %v11177 = vsel %vm1687, %v11174, %v11176
        %v11178 = vrot.slane %v10367, 2
        %v11179 = vsel %vm1687, %v11176, %v11178
        %v11188 = vunpack.c.l.b16 %v11153
        %v11189 = vunpack.c.l.b16 %v11154
        %v11190 = vunpack.c.l.b16 %v11155
        %v11191 = vunpack.c.l.b16 %v11156
        %v11192 = vunpack.c.l.b16 %v11157
        %v11193 = vunpack.c.l.b16 %v11158
        %v11194 = vunpack.c.l.b16 %v11159
        %v11195 = vunpack.c.l.b16 %v11160
        %v11196 = vpack.c.b16 %v11189, %v11188
        %v11197 = vpack.c.b16 %v11191, %v11190
        %v11198 = vpack.c.b16 %v11193, %v11192
        %v11199 = vpack.c.b16 %v11195, %v11194
        %v11205 = vsel %vm2237, %v11165, 0
        %v11208 = vsel %vm2237, %v11167, 0
        %v11211 = vsel %vm2237, %v11169, 0
        %v11214 = vsel %vm2237, %v11171, 0
        %v11217 = vsel %vm2237, %v11173, 0
        %v11220 = vsel %vm2237, %v11175, 0
        %v11223 = vsel %vm2237, %v11177, 0
        %v11226 = vsel %vm2237, %v11179, 0
        %v11229 = vsel %vm2237, %v11178, 0
        %11231 = vmatprep.subr.bf16.mxu0 0
        %11232 = vmatpush1.bf16.msra.mxu0 %v11196
        %11233 = vmatprep.subr.bf16.mxu0 0
        %11234 = vmatpush1.bf16.msra.mxu0 %v11197
        %11235 = vmatprep.subr.bf16.mxu0 0
        %11236 = vmatpush1.bf16.msra.mxu0 %v11198
        %11237 = vmatprep.subr.bf16.mxu0 0
        %11238 = vmatpush1.bf16.msra.mxu0 %v11199
        %11239 = vmatprep.subr.bf16.mxu0 0
        %11240 = vmatpush1.bf16.msra.mxu0 0
        %11241 = vmatprep.subr.bf16.mxu0 0
        %11242 = vmatpush1.bf16.msra.mxu0 0
        %11243 = vmatprep.subr.bf16.mxu0 0
        %11244 = vmatpush1.bf16.msra.mxu0 0
        %11245 = vmatprep.subr.bf16.mxu0 0
        %11246 = vmatpush1.bf16.msra.mxu0 0
        %11247 = vmatprep.subr.bf16.mxu0 0
        %11248 = vmatpush1.bf16.msra.mxu0 0
        %11249 = vmatprep.subr.bf16.mxu0 0
        %11250 = vmatpush1.bf16.msra.mxu0 0
        %11251 = vmatprep.subr.bf16.mxu0 0
        %11252 = vmatpush1.bf16.msra.mxu0 0
        %11253 = vmatprep.subr.bf16.mxu0 0
        %11254 = vmatpush1.bf16.msra.mxu0 0
        %11255 = vmatprep.subr.bf16.mxu0 0
        %11256 = vmatpush1.bf16.msra.mxu0 0
        %11257 = vmatprep.subr.bf16.mxu0 0
        %11258 = vmatpush1.bf16.msra.mxu0 0
        %11259 = vmatprep.subr.bf16.mxu0 0
        %11260 = vmatpush1.bf16.msra.mxu0 0
        %11261 = vmatprep.subr.bf16.mxu0 0
        %11262 = vmatpush1.bf16.msra.mxu0 0
        %11263 = vmatprep.mubr.bf16.mxu0 0
        %11264 = vmatmul.mubr.bf16.gmra.mrb[0].mxu0 %v11205
        %v11265 = vpop.f32.mrb[0].mxu0
        %v11266 = vadd.f32 0.0, %v11265
        %v11267 = vpop.f32.mrb[0].mxu0
        %v11268 = vpop.f32.mrb[0].mxu0
        %v11269 = vadd.f32 0.0, %v11268
        %v11270 = vpop.f32.mrb[0].mxu0
        %11271 = vmatprep.mubr.bf16.mxu0 0
        %11272 = vmatmul.mubr.bf16.gmra.mrb[0].mxu0 %v11208
        %v11273 = vpop.f32.mrb[0].mxu0
        %v11274 = vadd.f32 0.0, %v11273
        %v11275 = vpop.f32.mrb[0].mxu0
        %v11276 = vpop.f32.mrb[0].mxu0
        %v11277 = vadd.f32 0.0, %v11276
        %v11278 = vpop.f32.mrb[0].mxu0
        %11279 = vmatprep.mubr.bf16.mxu0 0
        %11280 = vmatmul.mubr.bf16.gmra.mrb[0].mxu0 %v11211
        %v11281 = vpop.f32.mrb[0].mxu0
        %v11282 = vadd.f32 0.0, %v11281
        %v11283 = vpop.f32.mrb[0].mxu0
        %v11284 = vpop.f32.mrb[0].mxu0
        %v11285 = vadd.f32 0.0, %v11284
        %v11286 = vpop.f32.mrb[0].mxu0
        %11287 = vmatprep.mubr.bf16.mxu0 0
        %11288 = vmatmul.mubr.bf16.gmra.mrb[0].mxu0 %v11214
        %v11289 = vpop.f32.mrb[0].mxu0
        %v11290 = vadd.f32 0.0, %v11289
        %v11291 = vpop.f32.mrb[0].mxu0
        %v11292 = vpop.f32.mrb[0].mxu0
        %v11293 = vadd.f32 0.0, %v11292
        %v11294 = vpop.f32.mrb[0].mxu0
        %11295 = vmatprep.mubr.bf16.mxu0 0
        %11296 = vmatmul.mubr.bf16.gmra.mrb[0].mxu0 %v11217
        %v11297 = vpop.f32.mrb[0].mxu0
        %v11298 = vadd.f32 0.0, %v11297
        %v11299 = vpop.f32.mrb[0].mxu0
        %v11300 = vpop.f32.mrb[0].mxu0
        %v11301 = vadd.f32 0.0, %v11300
        %v11302 = vpop.f32.mrb[0].mxu0
        %11303 = vmatprep.mubr.bf16.mxu0 0
        %11304 = vmatmul.mubr.bf16.gmra.mrb[0].mxu0 %v11220
        %v11305 = vpop.f32.mrb[0].mxu0
        %v11306 = vadd.f32 0.0, %v11305
        %v11307 = vpop.f32.mrb[0].mxu0
        %v11308 = vpop.f32.mrb[0].mxu0
        %v11309 = vadd.f32 0.0, %v11308
        %v11310 = vpop.f32.mrb[0].mxu0
        %11311 = vmatprep.mubr.bf16.mxu0 0
        %11312 = vmatmul.mubr.bf16.gmra.mrb[0].mxu0 %v11223
        %v11313 = vpop.f32.mrb[0].mxu0
        %v11314 = vadd.f32 0.0, %v11313
        %v11315 = vpop.f32.mrb[0].mxu0
        %v11316 = vpop.f32.mrb[0].mxu0
        %v11317 = vadd.f32 0.0, %v11316
        %v11318 = vpop.f32.mrb[0].mxu0
        %11319 = vmatprep.mubr.bf16.mxu0 0
        %11320 = vmatmul.mubr.bf16.gmra.mrb[0].mxu0 %v11226
        %v11321 = vpop.f32.mrb[0].mxu0
        %v11322 = vadd.f32 0.0, %v11321
        %v11323 = vpop.f32.mrb[0].mxu0
        %v11324 = vpop.f32.mrb[0].mxu0
        %v11325 = vadd.f32 0.0, %v11324
        %v11326 = vpop.f32.mrb[0].mxu0
        %11327 = vmatprep.mubr.bf16.mxu0 0
        %11328 = vmatmul.mubr.bf16.gmra.mrb[0].mxu0 %v11229
        %v11329 = vpop.f32.mrb[0].mxu0
        %v11330 = vadd.f32 0.0, %v11329
        %v11331 = vpop.f32.mrb[0].mxu0
        %v11332 = vpop.f32.mrb[0].mxu0
        %v11333 = vpop.f32.mrb[0].mxu0
        %11334 = vdwg.mxu0
        %v11335 = vadd.f32 %v11135, %v11266
        %v11336 = vadd.f32 %v11136, %v11269
        %v11337 = vadd.f32 %v11137, %v11274
        %v11338 = vadd.f32 %v11138, %v11277
        %v11339 = vadd.f32 %v11139, %v11282
        %v11340 = vadd.f32 %v11140, %v11285
        %v11341 = vadd.f32 %v11141, %v11290
        %v11342 = vadd.f32 %v11142, %v11293
        %v11343 = vadd.f32 %v11143, %v11298
        %v11344 = vadd.f32 %v11144, %v11301
        %v11345 = vadd.f32 %v11145, %v11306
        %v11346 = vadd.f32 %v11146, %v11309
        %v11347 = vadd.f32 %v11147, %v11314
        %v11348 = vadd.f32 %v11148, %v11317
        %v11349 = vadd.f32 %v11149, %v11322
        %v11350 = vadd.f32 %v11150, %v11325
        %v11351 = vadd.f32 %v11151, %v11330
        %v11352 = vld [vmem:[#allocation20] sm:$0x1]
        %v11354 = vlaneseq
        %v11355 = vshrl.u32 %v11354, 7
        %v11356 = vsub.s32 0, %v11355
        %v11357 = vrot.slane %v11352, %v11356
        %v11359 = vadd.f32 %v11335, %v11357
        %v11360 = vadd.f32 %v11336, %v11357
        %v11361 = vadd.f32 %v11337, %v11357
        %v11362 = vadd.f32 %v11338, %v11357
        %v11363 = vadd.f32 %v11339, %v11357
        %v11364 = vadd.f32 %v11340, %v11357
        %v11365 = vadd.f32 %v11341, %v11357
        %v11366 = vadd.f32 %v11342, %v11357
        %v11367 = vadd.f32 %v11343, %v11357
        %v11368 = vadd.f32 %v11344, %v11357
        %v11369 = vadd.f32 %v11345, %v11357
        %v11370 = vadd.f32 %v11346, %v11357
        %v11371 = vadd.f32 %v11347, %v11357
        %v11372 = vadd.f32 %v11348, %v11357
        %v11373 = vadd.f32 %v11349, %v11357
        %v11374 = vadd.f32 %v11350, %v11357
        %v11375 = vadd.f32 %v11351, %v11357
        %v11376 = vtanh.pop %v11359
        %v11377 = vtanh.pop %v11360
        %v11378 = vtanh.pop %v11361
        %v11379 = vtanh.pop %v11362
        %v11380 = vtanh.pop %v11363
        %v11381 = vtanh.pop %v11364
        %v11382 = vtanh.pop %v11365
        %v11383 = vtanh.pop %v11366
        %v11384 = vtanh.pop %v11367
        %v11385 = vtanh.pop %v11368
        %v11386 = vtanh.pop %v11369
        %v11387 = vtanh.pop %v11370
        %v11388 = vtanh.pop %v11371
        %v11389 = vtanh.pop %v11372
        %v11390 = vtanh.pop %v11373
        %v11391 = vtanh.pop %v11374
        %v11392 = vtanh.pop %v11375
        %11393 = vxpose.xlu0.b32.start [1/16] %v11376, 128
        %11394 = vxpose.xlu0.b32.cont [2/16] %v11377, 128
        %11395 = vxpose.xlu0.b32.cont [3/16] %v11378, 128
        %11396 = vxpose.xlu0.b32.cont [4/16] %v11379, 128
        %11397 = vxpose.xlu0.b32.cont [5/16] %v11380, 128
        %11398 = vxpose.xlu0.b32.cont [6/16] %v11381, 128
        %11399 = vxpose.xlu0.b32.cont [7/16] %v11382, 128
        %11400 = vxpose.xlu0.b32.cont [8/16] %v11383, 128
        %11401 = vxpose.xlu0.b32.cont [9/16] %v11384, 128
        %11402 = vxpose.xlu0.b32.cont [10/16] %v11385, 128
        %11403 = vxpose.xlu0.b32.cont [11/16] %v11386, 128
        %11404 = vxpose.xlu0.b32.cont [12/16] %v11387, 128
        %11405 = vxpose.xlu0.b32.cont [13/16] %v11388, 128
        %11406 = vxpose.xlu0.b32.cont [14/16] %v11389, 128
        %11407 = vxpose.xlu0.b32.cont [15/16] %v11390, 128
        %11408 = vxpose.xlu0.b32.end [16/16] %v11391, 128
        %v11409 = vpop.trf.xlu0
        %v11410 = vpop.trf.xlu0
        %v11411 = vpop.trf.xlu0
        %v11412 = vpop.trf.xlu0
        %v11413 = vpop.trf.xlu0
        %v11414 = vpop.trf.xlu0
        %v11415 = vpop.trf.xlu0
        %v11416 = vpop.trf.xlu0
        %v11417 = vpop.trf.xlu0
        %v11418 = vpop.trf.xlu0
        %v11419 = vpop.trf.xlu0
        %v11420 = vpop.trf.xlu0
        %v11421 = vpop.trf.xlu0
        %v11422 = vpop.trf.xlu0
        %v11423 = vpop.trf.xlu0
        %v11424 = vpop.trf.xlu0
        %11425 = vxpose.xlu0.b32.start [1/16] %v11392, 128
        %11426 = vxpose.xlu0.b32.cont [2/16] 0.0, 128
        %11427 = vxpose.xlu0.b32.cont [3/16] 0.0, 128
        %11428 = vxpose.xlu0.b32.cont [4/16] 0.0, 128
        %11429 = vxpose.xlu0.b32.cont [5/16] 0.0, 128
        %11430 = vxpose.xlu0.b32.cont [6/16] 0.0, 128
        %11431 = vxpose.xlu0.b32.cont [7/16] 0.0, 128
        %11432 = vxpose.xlu0.b32.cont [8/16] 0.0, 128
        %11433 = vxpose.xlu0.b32.cont [9/16] 0.0, 128
        %11434 = vxpose.xlu0.b32.cont [10/16] 0.0, 128
        %11435 = vxpose.xlu0.b32.cont [11/16] 0.0, 128
        %11436 = vxpose.xlu0.b32.cont [12/16] 0.0, 128
        %11437 = vxpose.xlu0.b32.cont [13/16] 0.0, 128
        %11438 = vxpose.xlu0.b32.cont [14/16] 0.0, 128
        %11439 = vxpose.xlu0.b32.cont [15/16] 0.0, 128
        %11440 = vxpose.xlu0.b32.end [16/16] 0.0, 128
        %v11441 = vpop.trf.xlu0
        %v11442 = vpop.trf.xlu0
        %v11443 = vpop.trf.xlu0
        %v11444 = vpop.trf.xlu0
        %v11445 = vpop.trf.xlu0
        %v11446 = vpop.trf.xlu0
        %v11447 = vpop.trf.xlu0
        %v11448 = vpop.trf.xlu0
        %v11449 = vpop.trf.xlu0
        %v11450 = vpop.trf.xlu0
        %v11451 = vpop.trf.xlu0
        %v11452 = vpop.trf.xlu0
        %v11453 = vpop.trf.xlu0
        %v11454 = vpop.trf.xlu0
        %v11455 = vpop.trf.xlu0
        %v11456 = vpop.trf.xlu0
        %v11457 = vadd.f32 %v11409, 1.0
        %v11458 = vadd.f32 %v11441, 1.0
        %v11459 = vmul.f32 %v11457, 0.5
        %v11460 = vmul.f32 %v11458, 0.5
        %v11461 = vld [vmem:[%s820] sm:$0xf]
        %v11464 = vcombine.low %v11409, %v11441
        %v11466 = vunpack.c.l.s4 1983009808
        %v11467 = vunpack.c.0.s8 %v11466
        %v11468 = vlaneseq
        %v11469 = vshrl.u32 %v11468, 7
        %v11470 = vsub.s32 %v11467, %v11469
        %v11471 = vrot.slane %v11464, %v11470
        %v11473 = vsub.f32 %v11461, %v11471
        %v11474 = vmul.f32 %v11409, 0.5
        %v11475 = vmul.f32 %v11441, 0.5
        %v11478 = vcombine.low %v11474, %v11475
        %v11480 = vunpack.c.l.s4 1983009808
        %v11481 = vunpack.c.0.s8 %v11480
        %v11482 = vlaneseq
        %v11483 = vshrl.u32 %v11482, 7
        %v11484 = vsub.s32 %v11481, %v11483
        %v11485 = vrot.slane %v11478, %v11484
        %v11486 = vrot.slane %v11485, 7
        %v11488 = vsub.f32 %v11461, %v11486
        %v11490 = vlaneseq
        %v11491 = vshrl.u32 %v11490, 7
        %v11492 = vsub.s32 0, %v11491
        %v11493 = vrot.slane %v11473, %v11492
        %v11494 = vlaneseq
        %v11495 = vshrl.u32 %v11494, 7
        %v11496 = vsub.s32 2, %v11495
        %v11497 = vrot.slane %v11473, %v11496
        %v11500 = vmul.f32 %v11459, %v11493
        %v11501 = vmul.f32 %v11460, %v11497
        %v11502 = vsub.f32 1.0, %v11459
        %v11503 = vsub.f32 1.0, %v11460
        %v11505 = vlaneseq
        %v11506 = vshrl.u32 %v11505, 7
        %v11507 = vsub.s32 1, %v11506
        %v11508 = vrot.slane %v11488, %v11507
        %v11509 = vlaneseq
        %v11510 = vshrl.u32 %v11509, 7
        %v11511 = vsub.s32 3, %v11510
        %v11512 = vrot.slane %v11488, %v11511
        %v11515 = vmul.f32 %v11502, %v11508
        %v11516 = vmul.f32 %v11503, %v11512
        %v11517 = vadd.f32 %v11500, %v11515
        %v11518 = vadd.f32 %v11501, %v11516
        %v11521 = vcombine.low %v11517, %v11518
        %v11523 = vunpack.c.l.s4 1966171168
        %v11524 = vunpack.c.0.s8 %v11523
        %v11525 = vlaneseq
        %v11526 = vshrl.u32 %v11525, 7
        %v11527 = vsub.s32 %v11524, %v11526
        %v11528 = vrot.slane %v11521, %v11527
        %v11529 = vcombine.high %v11528, %v11528
        %v11531 = vunpack.c.l.s4 1966171168
        %v11532 = vunpack.c.0.s8 %v11531
        %v11533 = vlaneseq
        %v11534 = vshrl.u32 %v11533, 7
        %v11535 = vsub.s32 %v11532, %v11534
        %v11536 = vrot.slane %v11529, %v11535
        %v11538 = vlaneseq
        %vm11539 = vcmp.ge.s32.totalorder %v11538, 0
        %vm11540 = vcmp.lt.s32.totalorder %v11538, 136
        %vm11541 = vmand %vm11539, %vm11540
        %11542 = vst.msk [vmem:[%s941] sm:$0x3] %vm11541, %v11536
        %s11543 = sand.u32 %s570, 1
        %s11544 = scalar_lea.sflag [#allocation4], %s11543
        %s11545 = sand.u32 %s570, 1
        %s11546 = smul.addr %s11545, 2
        %s11547 = scalar_lea.vmem [#allocation25], %s11546
        // Predicated region
        $region173: #{tpu_custom_call.1} parent=115 // pred_check
          %p11548 = pneg %p580
        $region174: #{tpu_custom_call.1} parent=115 // pred_check_branch
          %11550 = sbr.rel (%p11548) target = $region176
        $region175: #{tpu_custom_call.1} parent=115 // pred_region
          %s11552 = ssub.s32 32, 32
          %11553 = vsyncadd %s11544, %s11552
          %s11554 = smul.addr %s48, 2
          %s11555 = smul.addr %s11554, 16
          %s11556 = scalar_lea.hbm %s24, %s11555
          %s11558 = sshll.u32 %s11547, 4
          %s11559 = int_to_ptr.vmem [resolvable:$true] %s11558
          %11561 = dma.vmem_to_hbm [thread:$0]  %s11559, 32, %s11556, %s11544
        $region176: #{tpu_custom_call.1} parent=115 // pred_fallthru
          _
      $region116: #{tpu_custom_call.1} parent=5 // pred_fallthru
        _
      %p11562 = scmp.le.s32.totalorder 2, %s43
      // Predicated region
      $region177: #{tpu_custom_call.1} parent=5 // pred_check
        %p11563 = pneg %p11562
      $region178: #{tpu_custom_call.1} parent=5 // pred_check_branch
        %11565 = sbr.rel (%p11563) target = $region180
      $region179: #{tpu_custom_call.1} parent=5 // pred_region
        %s11566 = ssub.s32 %s43, 2
        // Predicated region
        $region181: #{tpu_custom_call.1} parent=179 // pred_check
          %p11567 = pneg %p586
        $region182: #{tpu_custom_call.1} parent=179 // pred_check_branch
          %11569 = sbr.rel (%p11567) target = $region184
        $region183: #{tpu_custom_call.1} parent=179 // pred_region
          %s11570 = sand.u32 %s571, 1
          %s11571 = scalar_lea.sflag [#allocation4], %s11570
          %s11572 = sand.u32 %s571, 1
          %s11573 = smul.addr %s11572, 2
          %s11574 = scalar_lea.vmem [#allocation25], %s11573
          %11575 = dma.done %s11571, 32
        $region184: #{tpu_custom_call.1} parent=179 // pred_fallthru
          _
      $region180: #{tpu_custom_call.1} parent=5 // pred_fallthru
        _
    $region6: #{tpu_custom_call.1} parent=1 // loop_footer
      %s47 = sadd.s32 1, %s43
    $region7: #{tpu_custom_call.1} parent=1 // loop_footer_branch
      %42 = sbr.rel target = $region3
    $region8: #{tpu_custom_call.1} parent=1 // loop_exit
      _
    %11576 = vsyncpa [#allocation3], 1
    %s11577 = scalar_lea.sflag [#allocation3], 1
    %11578 = vsyncpa %s11577, 1
    %11579 = vsyncpa [#allocation6], 1
    %11580 = vsyncpa [#allocation9], 1
    %11581 = vsyncpa [#allocation12], 1
    %11582 = vsyncpa [#allocation15], 1
    %11583 = vsyncpa [#allocation18], 1
    %11584 = vsyncpa [#allocation21], 1
    %11585 = vsyncpa [#allocation24], 1
    %11586 = vsyncpa [#allocation4], 1
    %s11587 = scalar_lea.sflag [#allocation4], 1
    %11588 = vsyncpa %s11587, 1

</llo_original>
